<compile_context>
chip_gen: v5e
topology: v5e:2x2
jax: 0.10.0
libtpu: 0.0.40
codegen_flags: <defaults>
</compile_context>

<pallas_src>
import functools

import jax
import jax.numpy as jnp
from jax import lax
from jax.experimental import pallas as pl
from jax.experimental.pallas import tpu as pltpu

PRIMITIVES = ["none", "skip_connect", "avg_pool_3x3", "max_pool_3x3", "conv_3x3"]
BN_EPS = 1e-5
VMEM_LIMIT = 48 * 1024 * 1024  # explicit scoped-VMEM budget (fits v7x's 64 MiB)


def _pick_tile(dim, candidates=(512, 256, 128)):
    """Largest candidate tile that divides `dim`, else the full dim (satisfies
    the (8,128)-or-full BlockSpec constraint)."""
    for c in candidates:
        if dim >= c and dim % c == 0:
            return c
    return dim


# ----------------------------------------------------------------------------
# Pallas kernels
# ----------------------------------------------------------------------------
def _matmul_bn_kernel(a_ref, b_ref, o_ref, acc_ref, *, relu_a):
    k = pl.program_id(1)

    @pl.when(k == 0)
    def _():
        acc_ref[...] = jnp.zeros_like(acc_ref)

    a = a_ref[...]
    if relu_a:
        a = jnp.maximum(a, 0)
    acc_ref[...] += jnp.dot(a, b_ref[...], preferred_element_type=jnp.float32)

    @pl.when(k == pl.num_programs(1) - 1)
    def _():
        acc = acc_ref[...]
        rows = acc.shape[0]
        mean = jnp.sum(acc, axis=0, keepdims=True) * (1.0 / rows)
        var = jnp.sum((acc - mean) ** 2, axis=0, keepdims=True) * (1.0 / rows)
        o_ref[...] = ((acc - mean) * lax.rsqrt(var + BN_EPS)).astype(o_ref.dtype)


def pallas_matmul_bn(a, b, relu_a=False):
    """[ReLU ->] (M,K)@(K,N) -> training-mode BatchNorm over rows, in ONE kernel.

    Operands are cast to bf16 for the MXU; accumulation and BN statistics stay
    in an f32 VMEM scratch.  Grid is (N tiles [parallel], K tiles [reduction]).
    # TODO(synk): for very large M the resident (M, tn) accumulator should also
    # be tiled over M with a two-pass BN reduction; not needed at these sizes.
    """
    M, K = a.shape
    N = b.shape[1]
    tk = _pick_tile(K)
    tn = _pick_tile(N, candidates=(256, 128))
    kern = functools.partial(_matmul_bn_kernel, relu_a=relu_a)
    return pl.pallas_call(
        kern,
        out_shape=jax.ShapeDtypeStruct((M, N), jnp.bfloat16),
        grid=(N // tn, K // tk),
        in_specs=[
            pl.BlockSpec((M, tk), lambda j, k: (0, k)),
            pl.BlockSpec((tk, tn), lambda j, k: (k, j)),
        ],
        out_specs=pl.BlockSpec((M, tn), lambda j, k: (0, j)),
        scratch_shapes=[pltpu.VMEM((M, tn), jnp.float32)],
        compiler_params=pltpu.CompilerParams(
            dimension_semantics=("parallel", "arbitrary"),
            vmem_limit_bytes=VMEM_LIMIT,
        ),
    )(a.astype(jnp.bfloat16), b.astype(jnp.bfloat16))


def _pool_bn_kernel(win_ref, scale_ref, o_ref, *, is_max):
    k = win_ref.shape[0]
    acc = win_ref[0].astype(jnp.float32)
    for i in range(1, k):
        w = win_ref[i].astype(jnp.float32)
        acc = jnp.maximum(acc, w) if is_max else acc + w
    if not is_max:
        acc = acc * scale_ref[...]
    rows = acc.shape[0]
    mean = jnp.sum(acc, axis=0, keepdims=True) * (1.0 / rows)
    var = jnp.sum((acc - mean) ** 2, axis=0, keepdims=True) * (1.0 / rows)
    o_ref[...] = ((acc - mean) * lax.rsqrt(var + BN_EPS)).astype(o_ref.dtype)


def pallas_pool_bn(windows, scale, is_max):
    """Fused 3x3 pool reduce + BatchNorm. windows: (9, R, C) bf16 shifted taps;
    scale: (R, 1) reciprocal counts (avg, count_include_pad=False)."""
    K, R, C = windows.shape
    kern = functools.partial(_pool_bn_kernel, is_max=is_max)
    return pl.pallas_call(
        kern,
        out_shape=jax.ShapeDtypeStruct((R, C), jnp.bfloat16),
        grid=(1,),
        in_specs=[
            pl.BlockSpec((K, R, C), lambda i: (0, 0, 0)),
            pl.BlockSpec((R, 1), lambda i: (0, 0)),
        ],
        out_specs=pl.BlockSpec((R, C), lambda i: (0, 0)),
        compiler_params=pltpu.CompilerParams(vmem_limit_bytes=VMEM_LIMIT),
    )(windows.astype(jnp.bfloat16), scale.astype(jnp.float32))


def _combine_kernel(ops_ref, w_ref, o_ref):
    k = ops_ref.shape[0]
    acc = w_ref[:, 0:1] * ops_ref[0].astype(jnp.float32)
    for i in range(1, k):
        acc = acc + w_ref[:, i:i + 1] * ops_ref[i].astype(jnp.float32)
    o_ref[...] = acc.astype(o_ref.dtype)


def pallas_mixed_combine(stack, w):
    """stack: (n_ops, B, M) op outputs (bf16); w: (B, n_ops) Gumbel weights (f32)."""
    K, B, M = stack.shape
    return pl.pallas_call(
        _combine_kernel,
        out_shape=jax.ShapeDtypeStruct((B, M), jnp.bfloat16),
        grid=(1,),
        in_specs=[
            pl.BlockSpec((K, B, M), lambda i: (0, 0, 0)),
            pl.BlockSpec((B, K), lambda i: (0, 0)),
        ],
        out_specs=pl.BlockSpec((B, M), lambda i: (0, 0)),
        compiler_params=pltpu.CompilerParams(vmem_limit_bytes=VMEM_LIMIT),
    )(stack.astype(jnp.bfloat16), w.astype(jnp.float32))


def _gap_linear_kernel(x_ref, w_ref, b_ref, o_ref):
    x = x_ref[...].astype(jnp.float32)
    pooled = jnp.sum(x, axis=1) * (1.0 / x.shape[1])
    o_ref[...] = jnp.dot(pooled, w_ref[...], preferred_element_type=jnp.float32) + b_ref[...]


def pallas_gap_linear(x3d, w, b):
    """Fused AdaptiveAvgPool2d(1) + flatten + Linear. x3d: (N, H*W, C) -> (N, n_classes)."""
    N, HW, C = x3d.shape
    ncls = w.shape[1]
    return pl.pallas_call(
        _gap_linear_kernel,
        out_shape=jax.ShapeDtypeStruct((N, ncls), jnp.float32),
        grid=(1,),
        in_specs=[
            pl.BlockSpec((N, HW, C), lambda i: (0, 0, 0)),
            pl.BlockSpec((C, ncls), lambda i: (0, 0)),
            pl.BlockSpec((1, ncls), lambda i: (0, 0)),
        ],
        out_specs=pl.BlockSpec((N, ncls), lambda i: (0, 0)),
        compiler_params=pltpu.CompilerParams(vmem_limit_bytes=VMEM_LIMIT),
    )(x3d.astype(jnp.bfloat16), w.astype(jnp.float32),
      b.reshape(1, -1).astype(jnp.float32))


# ----------------------------------------------------------------------------
# Glue: im2col conv+BN, pooling window extraction, ops, cells
# ----------------------------------------------------------------------------
def conv_bn_nhwc(x, w, stride=1, padding=0, relu_input=False):
    """x: (N,H,W,Cin); w: (kh,kw,Cin,Cout). bf16 im2col (glue) + fused matmul+BN kernel."""
    N, H, W, Cin = x.shape
    kh, kw, _, Cout = w.shape
    xp = jnp.pad(x, ((0, 0), (padding, padding), (padding, padding), (0, 0)))
    Ho = (H + 2 * padding - kh) // stride + 1
    Wo = (W + 2 * padding - kw) // stride + 1
    cols = []
    for dy in range(kh):
        for dx in range(kw):
            cols.append(xp[:, dy:dy + stride * (Ho - 1) + 1:stride,
                           dx:dx + stride * (Wo - 1) + 1:stride, :])
    # TODO(synk): the im2col matrix is still materialized through HBM (now bf16);
    # a tap-as-K-grid-axis formulation would avoid the 9x expansion entirely.
    a = jnp.concatenate(cols, axis=-1).astype(jnp.bfloat16).reshape(
        N * Ho * Wo, kh * kw * Cin)
    b = w.reshape(kh * kw * Cin, Cout)
    out = pallas_matmul_bn(a, b, relu_a=relu_input)
    return out.reshape(N, Ho, Wo, Cout)


def pool_bn_nhwc(x, stride, kind):
    """3x3 pool (pad 1) + BatchNorm, fused. avg uses count_include_pad=False."""
    N, H, W, C = x.shape
    Ho = (H + 2 - 3) // stride + 1
    Wo = (W + 2 - 3) // stride + 1
    pad_val = 0.0 if kind == "avg" else float(jnp.finfo(jnp.bfloat16).min)
    xp = jnp.pad(x.astype(jnp.bfloat16), ((0, 0), (1, 1), (1, 1), (0, 0)),
                 constant_values=pad_val)
    wins = []
    for dy in range(3):
        for dx in range(3):
            wins.append(xp[:, dy:dy + stride * (Ho - 1) + 1:stride,
                           dx:dx + stride * (Wo - 1) + 1:stride, :])
    # TODO(synk): the 9 shifted taps are still stacked through HBM (bf16);
    # in-kernel shifted slices of the padded tile would cut this traffic ~9x.
    wins = jnp.stack(wins, axis=0).reshape(9, N * Ho * Wo, C)
    if kind == "avg":
        ones = jnp.pad(jnp.ones((H, W), jnp.float32), ((1, 1), (1, 1)))
        cnt = 0.0
        for dy in range(3):
            for dx in range(3):
                cnt = cnt + ones[dy:dy + stride * (Ho - 1) + 1:stride,
                                 dx:dx + stride * (Wo - 1) + 1:stride]
        scale = jnp.broadcast_to((1.0 / cnt)[None, :, :, None],
                                 (N, Ho, Wo, 1)).reshape(-1, 1)
    else:
        scale = jnp.ones((N * Ho * Wo, 1), jnp.float32)
    out = pallas_pool_bn(wins, scale, is_max=(kind == "max"))
    return out.reshape(N, Ho, Wo, C)


def std_conv(x, w):  # ReLU -> 1x1 conv -> BN, fused in one kernel
    return conv_bn_nhwc(x, w, stride=1, padding=0, relu_input=True)


def relu_conv_bn_3x3(x, w, stride):  # ReLU -> 3x3 conv -> BN, fused
    return conv_bn_nhwc(x, w, stride=stride, padding=1, relu_input=True)


def factorized_reduce(x, w1, w2):
    # ReLU -> two strided 1x1 convs -> concat -> BN.  BN is per-channel with
    # identity affine, so BN(concat(y1, y2)) == concat(BN(y1), BN(y2)).
    y1 = conv_bn_nhwc(x, w1, stride=2, padding=0, relu_input=True)
    y2 = conv_bn_nhwc(x[:, 1:, 1:, :], w2, stride=2, padding=0, relu_input=True)
    return jnp.concatenate([y1, y2], axis=-1)


def mixed_op(x, w_edge, ep, stride):
    # "none" contributes exactly zero to the weighted sum, so it is dropped from
    # the combine (identical result, less HBM traffic and no zeros tensor).
    N = x.shape[0]
    outs = [
        x if stride == 1 else factorized_reduce(x, ep["fr_w1"], ep["fr_w2"]),  # skip_connect
        pool_bn_nhwc(x, stride, "avg"),                                        # avg_pool_3x3
        pool_bn_nhwc(x, stride, "max"),                                        # max_pool_3x3
        relu_conv_bn_3x3(x, ep["conv_w"], stride),                             # conv_3x3
    ]
    shp = outs[-1].shape
    stack = jnp.stack([o.reshape(N, -1) for o in outs], axis=0)
    return pallas_mixed_combine(stack, w_edge[:, 1:]).reshape(shp)


def cell_forward(cell, s0, s1, weights):
    if cell["reduction_p"]:
        s0 = factorized_reduce(s0, cell["pre0_w1"], cell["pre0_w2"])
    else:
        s0 = std_conv(s0, cell["pre0_w"])
    s1 = std_conv(s1, cell["pre1_w"])
    states = [s0, s1]
    for node, edges in enumerate(cell["dag"]):
        w_node = weights[node]  # (B, node+2, n_ops)
        s_cur = None
        for j, (h, ep) in enumerate(zip(states, edges)):
            stride = 2 if (cell["reduction"] and j < 2) else 1
            o = mixed_op(h, w_node[:, j, :], ep, stride)
            s_cur = o if s_cur is None else s_cur + o
        states.append(s_cur)
    return jnp.concatenate(states[2:], axis=-1)


# ----------------------------------------------------------------------------
# Parameter construction (deterministic, mirrors LVarSearchCNN.__init__)
# ----------------------------------------------------------------------------
def _randn(key, shape, scale=0.1):
    return scale * jax.random.normal(key, shape, dtype=jnp.float32)


def init_controller_params(key, kw):
    C_in = int(kw["input_channels"])
    C = int(kw["init_channels"])
    n_classes = int(kw["n_classes"])
    n_layers = int(kw["layers"])
    n_nodes = int(kw["n_nodes"])
    stem_multiplier = int(kw["stem_multiplier"])
    n_ops = len(PRIMITIVES)
    keys = iter(jax.random.split(key, 4096))

    params = {"t": float(kw["initial temp"]), "n_nodes": n_nodes}
    C_cur = stem_multiplier * C
    params["stem_w"] = _randn(next(keys), (3, 3, C_in, C_cur))

    C_pp, C_p, C_cur = C_cur, C_cur, C
    cells = []
    reduction_p = False
    for i in range(n_layers):
        if i in [n_layers // 3, 2 * n_layers // 3]:
            C_cur *= 2
            reduction = True
        else:
            reduction = False
        cell = {"reduction": reduction, "reduction_p": reduction_p}
        if reduction_p:
            cell["pre0_w1"] = _randn(next(keys), (1, 1, C_pp, C_cur // 2))
            cell["pre0_w2"] = _randn(next(keys), (1, 1, C_pp, C_cur // 2))
        else:
            cell["pre0_w"] = _randn(next(keys), (1, 1, C_pp, C_cur))
        cell["pre1_w"] = _randn(next(keys), (1, 1, C_p, C_cur))
        dag = []
        for node in range(n_nodes):
            edges = []
            for j in range(2 + node):
                ep = {"conv_w": _randn(next(keys), (3, 3, C_cur, C_cur))}
                if reduction and j < 2:
                    ep["fr_w1"] = _randn(next(keys), (1, 1, C_cur, C_cur // 2))
                    ep["fr_w2"] = _randn(next(keys), (1, 1, C_cur, C_cur // 2))
                edges.append(ep)
            dag.append(edges)
        cell["dag"] = dag
        cells.append(cell)
        reduction_p = reduction
        C_cur_out = C_cur * n_nodes
        C_pp, C_p = C_p, C_cur_out
    params["cells"] = cells

    params["q_gamma_normal"] = [0.001 * jax.random.normal(next(keys), (i + 2, n_ops))
                                for i in range(n_nodes)]
    params["q_gamma_reduce"] = [0.001 * jax.random.normal(next(keys), (i + 2, n_ops))
                                for i in range(n_nodes)]
    # alpha_* exist on the controller but do not participate in forward().
    params["alpha_normal"] = [0.001 * jax.random.normal(next(keys), (i + 2, n_ops))
                              for i in range(n_nodes)]
    params["alpha_reduce"] = [0.001 * jax.random.normal(next(keys), (i + 2, n_ops))
                              for i in range(n_nodes)]
    params["linear_w"] = _randn(next(keys), (C_p, n_classes))
    params["linear_b"] = jnp.zeros((n_classes,), jnp.float32)
    return params


# ----------------------------------------------------------------------------
# Forward pass (LVarSearchCNNController.forward -> LVarSearchCNN.forward)
# ----------------------------------------------------------------------------
def forward(params, x_nchw, key):
    x = jnp.transpose(x_nchw, (0, 2, 3, 1)).astype(jnp.float32)  # NCHW -> NHWC
    B = x.shape[0]
    t = params["t"]

    # stem: LocalVarConv2d(3x3, pad 1, no bias) + BatchNorm2d, fused in one kernel
    stem = conv_bn_nhwc(x, params["stem_w"], stride=1, padding=1)
    s0 = s1 = stem

    for cell in params["cells"]:
        gammas = params["q_gamma_reduce"] if cell["reduction"] else params["q_gamma_normal"]
        # RelaxedOneHotCategorical(t, logits=gamma).rsample([B])
        weights = []
        for gamma in gammas:
            key, sub = jax.random.split(key)
            u = jax.random.uniform(sub, (B,) + gamma.shape, dtype=jnp.float32,
                                   minval=1e-6, maxval=1.0 - 1e-6)
            gumbel = -jnp.log(-jnp.log(u))
            weights.append(jax.nn.softmax((gamma[None] + gumbel) / t, axis=-1))
        s0, s1 = s1, cell_forward(cell, s0, s1, weights)

    N, H, W, Cp = s1.shape
    # AdaptiveAvgPool2d(1) + flatten + LocalVarLinear, fused in one kernel
    logits = pallas_gap_linear(s1.reshape(N, H * W, Cp),
                               params["linear_w"], params["linear_b"])
    return logits


if __name__ == "__main__":
    kwargs = {
        "input_channels": 3, "init_channels": 4, "n_classes": 10, "layers": 2,
        "n_nodes": 2, "stem_multiplier": 3, "dataset size": 100,
        "initial temp": 1.0, "delta": -0.016, "sample num": 2,
        "stochastic_gamma": 1, "stochastic_w": 0,
    }
    root = jax.random.PRNGKey(0)
    pkey, xkey, skey = jax.random.split(root, 3)

    params = init_controller_params(pkey, kwargs)
    x = jax.random.normal(xkey, (2, 3, 16, 16), dtype=jnp.float32)  # NCHW like PyTorch

    apply_fn = jax.jit(lambda xx, kk: forward(params, xx, kk))
    logits = apply_fn(x, skey)
    jax.block_until_ready(logits)
    assert logits.shape == (2, kwargs["n_classes"])
    assert bool(jnp.all(jnp.isfinite(logits)))
    print("KERNEL_OK")
</pallas_src>

<mosaic_0001>
module attributes {stable_mosaic.version = 11 : i64} {
  func.func @_matmul_bn_kernel(%arg0: i32, %arg1: i32, %arg2: memref<512x27xbf16, #tpu.memory_space<vmem>>, %arg3: memref<27x12xbf16, #tpu.memory_space<vmem>>, %arg4: memref<512x12xbf16, #tpu.memory_space<vmem>>, %arg5: memref<512x12xf32, #tpu.memory_space<vmem>>) attributes {dimension_semantics = [#tpu.dimension_semantics<parallel>, #tpu.dimension_semantics<arbitrary>], iteration_bounds = array<i64: 1, 1>, scalar_prefetch = 0 : i64, scratch_operands = 1 : i64, tpu.core_type = #tpu.core_type<tc>, window_params = [{transform_indices = @transform_0, window_bounds = array<i64: 512, 27>}, {transform_indices = @transform_1, window_bounds = array<i64: 27, 12>}, {transform_indices = @transform_2, window_bounds = array<i64: 512, 12>}]} {
    %c0_i32 = arith.constant 0 : i32
    %0 = arith.cmpi eq, %arg1, %c0_i32 : i32
    %1 = arith.extui %0 : i1 to i32
    %c0_i32_0 = arith.constant 0 : i32
    %2 = arith.cmpi ne, %1, %c0_i32_0 : i32
    scf.if %2 {
      %cst_10 = arith.constant 0.000000e+00 : f32
      %12 = vector.broadcast %cst_10 : f32 to vector<512x12xf32>
      %c0_11 = arith.constant 0 : index
      %c0_12 = arith.constant 0 : index
      %13 = vector.load %arg5[%c0_11, %c0_12] : memref<512x12xf32, #tpu.memory_space<vmem>>, vector<512x12xf32>
      tpu.vector_store %arg5[%c0_11, %c0_12], %12 {strides = array<i32>} : memref<512x12xf32, #tpu.memory_space<vmem>>, vector<512x12xf32>,
    } else {
    }
    %c0 = arith.constant 0 : index
    %c0_1 = arith.constant 0 : index
    %3 = vector.load %arg2[%c0, %c0_1] : memref<512x27xbf16, #tpu.memory_space<vmem>>, vector<512x27xbf16>
    %c0_2 = arith.constant 0 : index
    %c0_3 = arith.constant 0 : index
    %4 = vector.load %arg5[%c0_2, %c0_3] : memref<512x12xf32, #tpu.memory_space<vmem>>, vector<512x12xf32>
    %c0_4 = arith.constant 0 : index
    %c0_5 = arith.constant 0 : index
    %5 = vector.load %arg3[%c0_4, %c0_5] : memref<27x12xbf16, #tpu.memory_space<vmem>>, vector<27x12xbf16>
    %cst = arith.constant dense<0.000000e+00> : vector<512x12xf32>
    %6 = tpu.matmul %3, %5, %cst {dimension_numbers = #tpu.dot_dimension_numbers<[1], [0], [0], [1], [0, 0, 1, 1], [], []>} : vector<512x27xbf16>, vector<27x12xbf16>, vector<512x12xf32> -> vector<512x12xf32>
    %7 = arith.addf %4, %6 : vector<512x12xf32>
    %c0_6 = arith.constant 0 : index
    %c0_7 = arith.constant 0 : index
    %8 = vector.load %arg5[%c0_6, %c0_7] : memref<512x12xf32, #tpu.memory_space<vmem>>, vector<512x12xf32>
    tpu.vector_store %arg5[%c0_6, %c0_7], %7 {strides = array<i32>} : memref<512x12xf32, #tpu.memory_space<vmem>>, vector<512x12xf32>,
    %c0_i32_8 = arith.constant 0 : i32
    %9 = arith.cmpi eq, %arg1, %c0_i32_8 : i32
    %10 = arith.extui %9 : i1 to i32
    %c0_i32_9 = arith.constant 0 : i32
    %11 = arith.cmpi ne, %10, %c0_i32_9 : i32
    scf.if %11 {
      %c0_10 = arith.constant 0 : index
      %c0_11 = arith.constant 0 : index
      %12 = vector.load %arg5[%c0_10, %c0_11] : memref<512x12xf32, #tpu.memory_space<vmem>>, vector<512x12xf32>
      %cst_12 = arith.constant dense<0.000000e+00> : vector<12xf32>
      %13 = vector.multi_reduction <add>, %12, %cst_12 [0] : vector<512x12xf32> to vector<12xf32>
      %14 = vector.shape_cast %13 : vector<12xf32> to vector<1x12xf32>
      %cst_13 = arith.constant 0.001953125 : f32
      %15 = vector.broadcast %cst_13 : f32 to vector<1x12xf32>
      %16 = arith.mulf %14, %15 : vector<1x12xf32>
      %17 = vector.broadcast %16 : vector<1x12xf32> to vector<512x12xf32>
      %18 = arith.subf %12, %17 : vector<512x12xf32>
      %19 = arith.mulf %18, %18 : vector<512x12xf32>
      %cst_14 = arith.constant dense<0.000000e+00> : vector<12xf32>
      %20 = vector.multi_reduction <add>, %19, %cst_14 [0] : vector<512x12xf32> to vector<12xf32>
      %21 = vector.shape_cast %20 : vector<12xf32> to vector<1x12xf32>
      %cst_15 = arith.constant 0.001953125 : f32
      %22 = vector.broadcast %cst_15 : f32 to vector<1x12xf32>
      %23 = arith.mulf %21, %22 : vector<1x12xf32>
      %24 = vector.broadcast %16 : vector<1x12xf32> to vector<512x12xf32>
      %25 = arith.subf %12, %24 : vector<512x12xf32>
      %cst_16 = arith.constant 9.99999974E-6 : f32
      %26 = vector.broadcast %cst_16 : f32 to vector<1x12xf32>
      %27 = arith.addf %23, %26 : vector<1x12xf32>
      %28 = math.rsqrt %27 : vector<1x12xf32>
      %29 = vector.broadcast %28 : vector<1x12xf32> to vector<512x12xf32>
      %30 = arith.mulf %25, %29 : vector<512x12xf32>
      %31 = arith.truncf %30 : vector<512x12xf32> to vector<512x12xbf16>
      %c0_17 = arith.constant 0 : index
      %c0_18 = arith.constant 0 : index
      %32 = vector.load %arg4[%c0_17, %c0_18] : memref<512x12xbf16, #tpu.memory_space<vmem>>, vector<512x12xbf16>
      tpu.vector_store %arg4[%c0_17, %c0_18], %31 {strides = array<i32>} : memref<512x12xbf16, #tpu.memory_space<vmem>>, vector<512x12xbf16>,
    } else {
    }
    return
  }
  func.func @transform_0(%arg0: i32, %arg1: i32) -> (i32, i32) {
    %c0_i32 = arith.constant 0 : i32
    %c0_i32_0 = arith.constant 0 : i32
    return %c0_i32, %arg1 : i32, i32
  }
  func.func @transform_1(%arg0: i32, %arg1: i32) -> (i32, i32) {
    %c0_i32 = arith.constant 0 : i32
    return %arg1, %arg0 : i32, i32
  }
  func.func @transform_2(%arg0: i32, %arg1: i32) -> (i32, i32) {
    %c0_i32 = arith.constant 0 : i32
    %c0_i32_0 = arith.constant 0 : i32
    return %c0_i32, %arg0 : i32, i32
  }
}

module attributes {stable_mosaic.version = 11 : i64} {
  func.func @_matmul_bn_kernel(%arg0: i32, %arg1: i32, %arg2: memref<128x12xbf16, #tpu.memory_space<vmem>>, %arg3: memref<12x8xbf16, #tpu.memory_space<vmem>>, %arg4: memref<128x8xbf16, #tpu.memory_space<vmem>>, %arg5: memref<128x8xf32, #tpu.memory_space<vmem>>) attributes {dimension_semantics = [#tpu.dimension_semantics<parallel>, #tpu.dimension_semantics<arbitrary>], iteration_bounds = array<i64: 1, 1>, scalar_prefetch = 0 : i64, scratch_operands = 1 : i64, tpu.core_type = #tpu.core_type<tc>, window_params = [{transform_indices = @transform_0, window_bounds = array<i64: 128, 12>}, {transform_indices = @transform_1, window_bounds = array<i64: 12, 8>}, {transform_indices = @transform_2, window_bounds = array<i64: 128, 8>}]} {
    %c0_i32 = arith.constant 0 : i32
    %0 = arith.cmpi eq, %arg1, %c0_i32 : i32
    %1 = arith.extui %0 : i1 to i32
    %c0_i32_0 = arith.constant 0 : i32
    %2 = arith.cmpi ne, %1, %c0_i32_0 : i32
    scf.if %2 {
      %cst_11 = arith.constant 0.000000e+00 : f32
      %14 = vector.broadcast %cst_11 : f32 to vector<128x8xf32>
      %c0_12 = arith.constant 0 : index
      %c0_13 = arith.constant 0 : index
      %15 = vector.load %arg5[%c0_12, %c0_13] : memref<128x8xf32, #tpu.memory_space<vmem>>, vector<128x8xf32>
      tpu.vector_store %arg5[%c0_12, %c0_13], %14 {strides = array<i32>} : memref<128x8xf32, #tpu.memory_space<vmem>>, vector<128x8xf32>,
    } else {
    }
    %c0 = arith.constant 0 : index
    %c0_1 = arith.constant 0 : index
    %3 = vector.load %arg2[%c0, %c0_1] : memref<128x12xbf16, #tpu.memory_space<vmem>>, vector<128x12xbf16>
    %cst = arith.constant 0.000000e+00 : bf16
    %4 = vector.broadcast %cst : bf16 to vector<128x12xbf16>
    %5 = arith.maximumf %3, %4 : vector<128x12xbf16>
    %c0_2 = arith.constant 0 : index
    %c0_3 = arith.constant 0 : index
    %6 = vector.load %arg5[%c0_2, %c0_3] : memref<128x8xf32, #tpu.memory_space<vmem>>, vector<128x8xf32>
    %c0_4 = arith.constant 0 : index
    %c0_5 = arith.constant 0 : index
    %7 = vector.load %arg3[%c0_4, %c0_5] : memref<12x8xbf16, #tpu.memory_space<vmem>>, vector<12x8xbf16>
    %cst_6 = arith.constant dense<0.000000e+00> : vector<128x8xf32>
    %8 = tpu.matmul %5, %7, %cst_6 {dimension_numbers = #tpu.dot_dimension_numbers<[1], [0], [0], [1], [0, 0, 1, 1], [], []>} : vector<128x12xbf16>, vector<12x8xbf16>, vector<128x8xf32> -> vector<128x8xf32>
    %9 = arith.addf %6, %8 : vector<128x8xf32>
    %c0_7 = arith.constant 0 : index
    %c0_8 = arith.constant 0 : index
    %10 = vector.load %arg5[%c0_7, %c0_8] : memref<128x8xf32, #tpu.memory_space<vmem>>, vector<128x8xf32>
    tpu.vector_store %arg5[%c0_7, %c0_8], %9 {strides = array<i32>} : memref<128x8xf32, #tpu.memory_space<vmem>>, vector<128x8xf32>,
    %c0_i32_9 = arith.constant 0 : i32
    %11 = arith.cmpi eq, %arg1, %c0_i32_9 : i32
    %12 = arith.extui %11 : i1 to i32
    %c0_i32_10 = arith.constant 0 : i32
    %13 = arith.cmpi ne, %12, %c0_i32_10 : i32
    scf.if %13 {
      %c0_11 = arith.constant 0 : index
      %c0_12 = arith.constant 0 : index
      %14 = vector.load %arg5[%c0_11, %c0_12] : memref<128x8xf32, #tpu.memory_space<vmem>>, vector<128x8xf32>
      %cst_13 = arith.constant dense<0.000000e+00> : vector<8xf32>
      %15 = vector.multi_reduction <add>, %14, %cst_13 [0] : vector<128x8xf32> to vector<8xf32>
      %16 = vector.shape_cast %15 : vector<8xf32> to vector<1x8xf32>
      %cst_14 = arith.constant 7.812500e-03 : f32
      %17 = vector.broadcast %cst_14 : f32 to vector<1x8xf32>
      %18 = arith.mulf %16, %17 : vector<1x8xf32>
      %19 = vector.broadcast %18 : vector<1x8xf32> to vector<128x8xf32>
      %20 = arith.subf %14, %19 : vector<128x8xf32>
      %21 = arith.mulf %20, %20 : vector<128x8xf32>
      %cst_15 = arith.constant dense<0.000000e+00> : vector<8xf32>
      %22 = vector.multi_reduction <add>, %21, %cst_15 [0] : vector<128x8xf32> to vector<8xf32>
      %23 = vector.shape_cast %22 : vector<8xf32> to vector<1x8xf32>
      %cst_16 = arith.constant 7.812500e-03 : f32
      %24 = vector.broadcast %cst_16 : f32 to vector<1x8xf32>
      %25 = arith.mulf %23, %24 : vector<1x8xf32>
      %26 = vector.broadcast %18 : vector<1x8xf32> to vector<128x8xf32>
      %27 = arith.subf %14, %26 : vector<128x8xf32>
      %cst_17 = arith.constant 9.99999974E-6 : f32
      %28 = vector.broadcast %cst_17 : f32 to vector<1x8xf32>
      %29 = arith.addf %25, %28 : vector<1x8xf32>
      %30 = math.rsqrt %29 : vector<1x8xf32>
      %31 = vector.broadcast %30 : vector<1x8xf32> to vector<128x8xf32>
      %32 = arith.mulf %27, %31 : vector<128x8xf32>
      %33 = arith.truncf %32 : vector<128x8xf32> to vector<128x8xbf16>
      %c0_18 = arith.constant 0 : index
      %c0_19 = arith.constant 0 : index
      %34 = vector.load %arg4[%c0_18, %c0_19] : memref<128x8xbf16, #tpu.memory_space<vmem>>, vector<128x8xbf16>
      tpu.vector_store %arg4[%c0_18, %c0_19], %33 {strides = array<i32>} : memref<128x8xbf16, #tpu.memory_space<vmem>>, vector<128x8xbf16>,
    } else {
    }
    return
  }
  func.func @transform_0(%arg0: i32, %arg1: i32) -> (i32, i32) {
    %c0_i32 = arith.constant 0 : i32
    %c0_i32_0 = arith.constant 0 : i32
    return %c0_i32, %arg1 : i32, i32
  }
  func.func @transform_1(%arg0: i32, %arg1: i32) -> (i32, i32) {
    %c0_i32 = arith.constant 0 : i32
    return %arg1, %arg0 : i32, i32
  }
  func.func @transform_2(%arg0: i32, %arg1: i32) -> (i32, i32) {
    %c0_i32 = arith.constant 0 : i32
    %c0_i32_0 = arith.constant 0 : i32
    return %c0_i32, %arg0 : i32, i32
  }
}

module attributes {stable_mosaic.version = 11 : i64} {
  func.func @_pool_bn_kernel(%arg0: i32, %arg1: memref<9x32x16xbf16, #tpu.memory_space<vmem>>, %arg2: memref<32x1xf32, #tpu.memory_space<vmem>>, %arg3: memref<32x16xbf16, #tpu.memory_space<vmem>>) attributes {dimension_semantics = [#tpu.dimension_semantics<arbitrary>], iteration_bounds = array<i64: 1>, scalar_prefetch = 0 : i64, scratch_operands = 0 : i64, tpu.core_type = #tpu.core_type<tc>, window_params = [{pipeline_mode = #tpu.pipeline_mode<synchronous>, transform_indices = @transform_0, window_bounds = array<i64: 9, 32, 16>}, {pipeline_mode = #tpu.pipeline_mode<synchronous>, transform_indices = @transform_1, window_bounds = array<i64: 32, 1>}, {pipeline_mode = #tpu.pipeline_mode<synchronous>, transform_indices = @transform_2, window_bounds = array<i64: 32, 16>}]} {
    %c0 = arith.constant 0 : index
    %c0_0 = arith.constant 0 : index
    %c0_1 = arith.constant 0 : index
    %0 = vector.load %arg1[%c0, %c0_0, %c0_1] : memref<9x32x16xbf16, #tpu.memory_space<vmem>>, vector<1x32x16xbf16>
    %1 = vector.shape_cast %0 : vector<1x32x16xbf16> to vector<32x16xbf16>
    %2 = arith.extf %1 : vector<32x16xbf16> to vector<32x16xf32>
    %c1 = arith.constant 1 : index
    %c0_2 = arith.constant 0 : index
    %c0_3 = arith.constant 0 : index
    %3 = vector.load %arg1[%c1, %c0_2, %c0_3] : memref<9x32x16xbf16, #tpu.memory_space<vmem>>, vector<1x32x16xbf16>
    %4 = vector.shape_cast %3 : vector<1x32x16xbf16> to vector<32x16xbf16>
    %5 = arith.extf %4 : vector<32x16xbf16> to vector<32x16xf32>
    %6 = arith.maximumf %2, %5 : vector<32x16xf32>
    %c2 = arith.constant 2 : index
    %c0_4 = arith.constant 0 : index
    %c0_5 = arith.constant 0 : index
    %7 = vector.load %arg1[%c2, %c0_4, %c0_5] : memref<9x32x16xbf16, #tpu.memory_space<vmem>>, vector<1x32x16xbf16>
    %8 = vector.shape_cast %7 : vector<1x32x16xbf16> to vector<32x16xbf16>
    %9 = arith.extf %8 : vector<32x16xbf16> to vector<32x16xf32>
    %10 = arith.maximumf %6, %9 : vector<32x16xf32>
    %c3 = arith.constant 3 : index
    %c0_6 = arith.constant 0 : index
    %c0_7 = arith.constant 0 : index
    %11 = vector.load %arg1[%c3, %c0_6, %c0_7] : memref<9x32x16xbf16, #tpu.memory_space<vmem>>, vector<1x32x16xbf16>
    %12 = vector.shape_cast %11 : vector<1x32x16xbf16> to vector<32x16xbf16>
    %13 = arith.extf %12 : vector<32x16xbf16> to vector<32x16xf32>
    %14 = arith.maximumf %10, %13 : vector<32x16xf32>
    %c4 = arith.constant 4 : index
    %c0_8 = arith.constant 0 : index
    %c0_9 = arith.constant 0 : index
    %15 = vector.load %arg1[%c4, %c0_8, %c0_9] : memref<9x32x16xbf16, #tpu.memory_space<vmem>>, vector<1x32x16xbf16>
    %16 = vector.shape_cast %15 : vector<1x32x16xbf16> to vector<32x16xbf16>
    %17 = arith.extf %16 : vector<32x16xbf16> to vector<32x16xf32>
    %18 = arith.maximumf %14, %17 : vector<32x16xf32>
    %c5 = arith.constant 5 : index
    %c0_10 = arith.constant 0 : index
    %c0_11 = arith.constant 0 : index
    %19 = vector.load %arg1[%c5, %c0_10, %c0_11] : memref<9x32x16xbf16, #tpu.memory_space<vmem>>, vector<1x32x16xbf16>
    %20 = vector.shape_cast %19 : vector<1x32x16xbf16> to vector<32x16xbf16>
    %21 = arith.extf %20 : vector<32x16xbf16> to vector<32x16xf32>
    %22 = arith.maximumf %18, %21 : vector<32x16xf32>
    %c6 = arith.constant 6 : index
    %c0_12 = arith.constant 0 : index
    %c0_13 = arith.constant 0 : index
    %23 = vector.load %arg1[%c6, %c0_12, %c0_13] : memref<9x32x16xbf16, #tpu.memory_space<vmem>>, vector<1x32x16xbf16>
    %24 = vector.shape_cast %23 : vector<1x32x16xbf16> to vector<32x16xbf16>
    %25 = arith.extf %24 : vector<32x16xbf16> to vector<32x16xf32>
    %26 = arith.maximumf %22, %25 : vector<32x16xf32>
    %c7 = arith.constant 7 : index
    %c0_14 = arith.constant 0 : index
    %c0_15 = arith.constant 0 : index
    %27 = vector.load %arg1[%c7, %c0_14, %c0_15] : memref<9x32x16xbf16, #tpu.memory_space<vmem>>, vector<1x32x16xbf16>
    %28 = vector.shape_cast %27 : vector<1x32x16xbf16> to vector<32x16xbf16>
    %29 = arith.extf %28 : vector<32x16xbf16> to vector<32x16xf32>
    %30 = arith.maximumf %26, %29 : vector<32x16xf32>
    %c8 = arith.constant 8 : index
    %c0_16 = arith.constant 0 : index
    %c0_17 = arith.constant 0 : index
    %31 = vector.load %arg1[%c8, %c0_16, %c0_17] : memref<9x32x16xbf16, #tpu.memory_space<vmem>>, vector<1x32x16xbf16>
    %32 = vector.shape_cast %31 : vector<1x32x16xbf16> to vector<32x16xbf16>
    %33 = arith.extf %32 : vector<32x16xbf16> to vector<32x16xf32>
    %34 = arith.maximumf %30, %33 : vector<32x16xf32>
    %cst = arith.constant dense<0.000000e+00> : vector<16xf32>
    %35 = vector.multi_reduction <add>, %34, %cst [0] : vector<32x16xf32> to vector<16xf32>
    %36 = vector.shape_cast %35 : vector<16xf32> to vector<1x16xf32>
    %cst_18 = arith.constant 3.125000e-02 : f32
    %37 = vector.broadcast %cst_18 : f32 to vector<1x16xf32>
    %38 = arith.mulf %36, %37 : vector<1x16xf32>
    %39 = vector.broadcast %38 : vector<1x16xf32> to vector<32x16xf32>
    %40 = arith.subf %34, %39 : vector<32x16xf32>
    %41 = arith.mulf %40, %40 : vector<32x16xf32>
    %cst_19 = arith.constant dense<0.000000e+00> : vector<16xf32>
    %42 = vector.multi_reduction <add>, %41, %cst_19 [0] : vector<32x16xf32> to vector<16xf32>
    %43 = vector.shape_cast %42 : vector<16xf32> to vector<1x16xf32>
    %cst_20 = arith.constant 3.125000e-02 : f32
    %44 = vector.broadcast %cst_20 : f32 to vector<1x16xf32>
    %45 = arith.mulf %43, %44 : vector<1x16xf32>
    %46 = vector.broadcast %38 : vector<1x16xf32> to vector<32x16xf32>
    %47 = arith.subf %34, %46 : vector<32x16xf32>
    %cst_21 = arith.constant 9.99999974E-6 : f32
    %48 = vector.broadcast %cst_21 : f32 to vector<1x16xf32>
    %49 = arith.addf %45, %48 : vector<1x16xf32>
    %50 = math.rsqrt %49 : vector<1x16xf32>
    %51 = vector.broadcast %50 : vector<1x16xf32> to vector<32x16xf32>
    %52 = arith.mulf %47, %51 : vector<32x16xf32>
    %53 = arith.truncf %52 : vector<32x16xf32> to vector<32x16xbf16>
    %c0_22 = arith.constant 0 : index
    %c0_23 = arith.constant 0 : index
    %54 = vector.load %arg3[%c0_22, %c0_23] : memref<32x16xbf16, #tpu.memory_space<vmem>>, vector<32x16xbf16>
    tpu.vector_store %arg3[%c0_22, %c0_23], %53 {strides = array<i32>} : memref<32x16xbf16, #tpu.memory_space<vmem>>, vector<32x16xbf16>,
    return
  }
  func.func @transform_0(%arg0: i32) -> (i32, i32, i32) {
    %c0_i32 = arith.constant 0 : i32
    %c0_i32_0 = arith.constant 0 : i32
    %c0_i32_1 = arith.constant 0 : i32
    %c0_i32_2 = arith.constant 0 : i32
    return %c0_i32, %c0_i32_0, %c0_i32_1 : i32, i32, i32
  }
  func.func @transform_1(%arg0: i32) -> (i32, i32) {
    %c0_i32 = arith.constant 0 : i32
    %c0_i32_0 = arith.constant 0 : i32
    %c0_i32_1 = arith.constant 0 : i32
    return %c0_i32, %c0_i32_0 : i32, i32
  }
  func.func @transform_2(%arg0: i32) -> (i32, i32) {
    %c0_i32 = arith.constant 0 : i32
    %c0_i32_0 = arith.constant 0 : i32
    %c0_i32_1 = arith.constant 0 : i32
    return %c0_i32, %c0_i32_0 : i32, i32
  }
}

module attributes {stable_mosaic.version = 11 : i64} {
  func.func @_pool_bn_kernel(%arg0: i32, %arg1: memref<9x32x16xbf16, #tpu.memory_space<vmem>>, %arg2: memref<32x1xf32, #tpu.memory_space<vmem>>, %arg3: memref<32x16xbf16, #tpu.memory_space<vmem>>) attributes {dimension_semantics = [#tpu.dimension_semantics<arbitrary>], iteration_bounds = array<i64: 1>, scalar_prefetch = 0 : i64, scratch_operands = 0 : i64, tpu.core_type = #tpu.core_type<tc>, window_params = [{pipeline_mode = #tpu.pipeline_mode<synchronous>, transform_indices = @transform_0, window_bounds = array<i64: 9, 32, 16>}, {pipeline_mode = #tpu.pipeline_mode<synchronous>, transform_indices = @transform_1, window_bounds = array<i64: 32, 1>}, {pipeline_mode = #tpu.pipeline_mode<synchronous>, transform_indices = @transform_2, window_bounds = array<i64: 32, 16>}]} {
    %c0 = arith.constant 0 : index
    %c0_0 = arith.constant 0 : index
    %c0_1 = arith.constant 0 : index
    %0 = vector.load %arg1[%c0, %c0_0, %c0_1] : memref<9x32x16xbf16, #tpu.memory_space<vmem>>, vector<1x32x16xbf16>
    %1 = vector.shape_cast %0 : vector<1x32x16xbf16> to vector<32x16xbf16>
    %2 = arith.extf %1 : vector<32x16xbf16> to vector<32x16xf32>
    %c1 = arith.constant 1 : index
    %c0_2 = arith.constant 0 : index
    %c0_3 = arith.constant 0 : index
    %3 = vector.load %arg1[%c1, %c0_2, %c0_3] : memref<9x32x16xbf16, #tpu.memory_space<vmem>>, vector<1x32x16xbf16>
    %4 = vector.shape_cast %3 : vector<1x32x16xbf16> to vector<32x16xbf16>
    %5 = arith.extf %4 : vector<32x16xbf16> to vector<32x16xf32>
    %6 = arith.addf %2, %5 : vector<32x16xf32>
    %c2 = arith.constant 2 : index
    %c0_4 = arith.constant 0 : index
    %c0_5 = arith.constant 0 : index
    %7 = vector.load %arg1[%c2, %c0_4, %c0_5] : memref<9x32x16xbf16, #tpu.memory_space<vmem>>, vector<1x32x16xbf16>
    %8 = vector.shape_cast %7 : vector<1x32x16xbf16> to vector<32x16xbf16>
    %9 = arith.extf %8 : vector<32x16xbf16> to vector<32x16xf32>
    %10 = arith.addf %6, %9 : vector<32x16xf32>
    %c3 = arith.constant 3 : index
    %c0_6 = arith.constant 0 : index
    %c0_7 = arith.constant 0 : index
    %11 = vector.load %arg1[%c3, %c0_6, %c0_7] : memref<9x32x16xbf16, #tpu.memory_space<vmem>>, vector<1x32x16xbf16>
    %12 = vector.shape_cast %11 : vector<1x32x16xbf16> to vector<32x16xbf16>
    %13 = arith.extf %12 : vector<32x16xbf16> to vector<32x16xf32>
    %14 = arith.addf %10, %13 : vector<32x16xf32>
    %c4 = arith.constant 4 : index
    %c0_8 = arith.constant 0 : index
    %c0_9 = arith.constant 0 : index
    %15 = vector.load %arg1[%c4, %c0_8, %c0_9] : memref<9x32x16xbf16, #tpu.memory_space<vmem>>, vector<1x32x16xbf16>
    %16 = vector.shape_cast %15 : vector<1x32x16xbf16> to vector<32x16xbf16>
    %17 = arith.extf %16 : vector<32x16xbf16> to vector<32x16xf32>
    %18 = arith.addf %14, %17 : vector<32x16xf32>
    %c5 = arith.constant 5 : index
    %c0_10 = arith.constant 0 : index
    %c0_11 = arith.constant 0 : index
    %19 = vector.load %arg1[%c5, %c0_10, %c0_11] : memref<9x32x16xbf16, #tpu.memory_space<vmem>>, vector<1x32x16xbf16>
    %20 = vector.shape_cast %19 : vector<1x32x16xbf16> to vector<32x16xbf16>
    %21 = arith.extf %20 : vector<32x16xbf16> to vector<32x16xf32>
    %22 = arith.addf %18, %21 : vector<32x16xf32>
    %c6 = arith.constant 6 : index
    %c0_12 = arith.constant 0 : index
    %c0_13 = arith.constant 0 : index
    %23 = vector.load %arg1[%c6, %c0_12, %c0_13] : memref<9x32x16xbf16, #tpu.memory_space<vmem>>, vector<1x32x16xbf16>
    %24 = vector.shape_cast %23 : vector<1x32x16xbf16> to vector<32x16xbf16>
    %25 = arith.extf %24 : vector<32x16xbf16> to vector<32x16xf32>
    %26 = arith.addf %22, %25 : vector<32x16xf32>
    %c7 = arith.constant 7 : index
    %c0_14 = arith.constant 0 : index
    %c0_15 = arith.constant 0 : index
    %27 = vector.load %arg1[%c7, %c0_14, %c0_15] : memref<9x32x16xbf16, #tpu.memory_space<vmem>>, vector<1x32x16xbf16>
    %28 = vector.shape_cast %27 : vector<1x32x16xbf16> to vector<32x16xbf16>
    %29 = arith.extf %28 : vector<32x16xbf16> to vector<32x16xf32>
    %30 = arith.addf %26, %29 : vector<32x16xf32>
    %c8 = arith.constant 8 : index
    %c0_16 = arith.constant 0 : index
    %c0_17 = arith.constant 0 : index
    %31 = vector.load %arg1[%c8, %c0_16, %c0_17] : memref<9x32x16xbf16, #tpu.memory_space<vmem>>, vector<1x32x16xbf16>
    %32 = vector.shape_cast %31 : vector<1x32x16xbf16> to vector<32x16xbf16>
    %33 = arith.extf %32 : vector<32x16xbf16> to vector<32x16xf32>
    %34 = arith.addf %30, %33 : vector<32x16xf32>
    %c0_18 = arith.constant 0 : index
    %c0_19 = arith.constant 0 : index
    %35 = vector.load %arg2[%c0_18, %c0_19] : memref<32x1xf32, #tpu.memory_space<vmem>>, vector<32x1xf32>
    %36 = vector.broadcast %35 : vector<32x1xf32> to vector<32x16xf32>
    %37 = arith.mulf %34, %36 : vector<32x16xf32>
    %cst = arith.constant dense<0.000000e+00> : vector<16xf32>
    %38 = vector.multi_reduction <add>, %37, %cst [0] : vector<32x16xf32> to vector<16xf32>
    %39 = vector.shape_cast %38 : vector<16xf32> to vector<1x16xf32>
    %cst_20 = arith.constant 3.125000e-02 : f32
    %40 = vector.broadcast %cst_20 : f32 to vector<1x16xf32>
    %41 = arith.mulf %39, %40 : vector<1x16xf32>
    %42 = vector.broadcast %41 : vector<1x16xf32> to vector<32x16xf32>
    %43 = arith.subf %37, %42 : vector<32x16xf32>
    %44 = arith.mulf %43, %43 : vector<32x16xf32>
    %cst_21 = arith.constant dense<0.000000e+00> : vector<16xf32>
    %45 = vector.multi_reduction <add>, %44, %cst_21 [0] : vector<32x16xf32> to vector<16xf32>
    %46 = vector.shape_cast %45 : vector<16xf32> to vector<1x16xf32>
    %cst_22 = arith.constant 3.125000e-02 : f32
    %47 = vector.broadcast %cst_22 : f32 to vector<1x16xf32>
    %48 = arith.mulf %46, %47 : vector<1x16xf32>
    %49 = vector.broadcast %41 : vector<1x16xf32> to vector<32x16xf32>
    %50 = arith.subf %37, %49 : vector<32x16xf32>
    %cst_23 = arith.constant 9.99999974E-6 : f32
    %51 = vector.broadcast %cst_23 : f32 to vector<1x16xf32>
    %52 = arith.addf %48, %51 : vector<1x16xf32>
    %53 = math.rsqrt %52 : vector<1x16xf32>
    %54 = vector.broadcast %53 : vector<1x16xf32> to vector<32x16xf32>
    %55 = arith.mulf %50, %54 : vector<32x16xf32>
    %56 = arith.truncf %55 : vector<32x16xf32> to vector<32x16xbf16>
    %c0_24 = arith.constant 0 : index
    %c0_25 = arith.constant 0 : index
    %57 = vector.load %arg3[%c0_24, %c0_25] : memref<32x16xbf16, #tpu.memory_space<vmem>>, vector<32x16xbf16>
    tpu.vector_store %arg3[%c0_24, %c0_25], %56 {strides = array<i32>} : memref<32x16xbf16, #tpu.memory_space<vmem>>, vector<32x16xbf16>,
    return
  }
  func.func @transform_0(%arg0: i32) -> (i32, i32, i32) {
    %c0_i32 = arith.constant 0 : i32
    %c0_i32_0 = arith.constant 0 : i32
    %c0_i32_1 = arith.constant 0 : i32
    %c0_i32_2 = arith.constant 0 : i32
    return %c0_i32, %c0_i32_0, %c0_i32_1 : i32, i32, i32
  }
  func.func @transform_1(%arg0: i32) -> (i32, i32) {
    %c0_i32 = arith.constant 0 : i32
    %c0_i32_0 = arith.constant 0 : i32
    %c0_i32_1 = arith.constant 0 : i32
    return %c0_i32, %c0_i32_0 : i32, i32
  }
  func.func @transform_2(%arg0: i32) -> (i32, i32) {
    %c0_i32 = arith.constant 0 : i32
    %c0_i32_0 = arith.constant 0 : i32
    %c0_i32_1 = arith.constant 0 : i32
    return %c0_i32, %c0_i32_0 : i32, i32
  }
}

module attributes {stable_mosaic.version = 11 : i64} {
  func.func @_matmul_bn_kernel(%arg0: i32, %arg1: i32, %arg2: memref<32x144xbf16, #tpu.memory_space<vmem>>, %arg3: memref<144x16xbf16, #tpu.memory_space<vmem>>, %arg4: memref<32x16xbf16, #tpu.memory_space<vmem>>, %arg5: memref<32x16xf32, #tpu.memory_space<vmem>>) attributes {dimension_semantics = [#tpu.dimension_semantics<parallel>, #tpu.dimension_semantics<arbitrary>], iteration_bounds = array<i64: 1, 1>, scalar_prefetch = 0 : i64, scratch_operands = 1 : i64, tpu.core_type = #tpu.core_type<tc>, window_params = [{transform_indices = @transform_0, window_bounds = array<i64: 32, 144>}, {transform_indices = @transform_1, window_bounds = array<i64: 144, 16>}, {transform_indices = @transform_2, window_bounds = array<i64: 32, 16>}]} {
    %c0_i32 = arith.constant 0 : i32
    %0 = arith.cmpi eq, %arg1, %c0_i32 : i32
    %1 = arith.extui %0 : i1 to i32
    %c0_i32_0 = arith.constant 0 : i32
    %2 = arith.cmpi ne, %1, %c0_i32_0 : i32
    scf.if %2 {
      %cst_11 = arith.constant 0.000000e+00 : f32
      %14 = vector.broadcast %cst_11 : f32 to vector<32x16xf32>
      %c0_12 = arith.constant 0 : index
      %c0_13 = arith.constant 0 : index
      %15 = vector.load %arg5[%c0_12, %c0_13] : memref<32x16xf32, #tpu.memory_space<vmem>>, vector<32x16xf32>
      tpu.vector_store %arg5[%c0_12, %c0_13], %14 {strides = array<i32>} : memref<32x16xf32, #tpu.memory_space<vmem>>, vector<32x16xf32>,
    } else {
    }
    %c0 = arith.constant 0 : index
    %c0_1 = arith.constant 0 : index
    %3 = vector.load %arg2[%c0, %c0_1] : memref<32x144xbf16, #tpu.memory_space<vmem>>, vector<32x144xbf16>
    %cst = arith.constant 0.000000e+00 : bf16
    %4 = vector.broadcast %cst : bf16 to vector<32x144xbf16>
    %5 = arith.maximumf %3, %4 : vector<32x144xbf16>
    %c0_2 = arith.constant 0 : index
    %c0_3 = arith.constant 0 : index
    %6 = vector.load %arg5[%c0_2, %c0_3] : memref<32x16xf32, #tpu.memory_space<vmem>>, vector<32x16xf32>
    %c0_4 = arith.constant 0 : index
    %c0_5 = arith.constant 0 : index
    %7 = vector.load %arg3[%c0_4, %c0_5] : memref<144x16xbf16, #tpu.memory_space<vmem>>, vector<144x16xbf16>
    %cst_6 = arith.constant dense<0.000000e+00> : vector<32x16xf32>
    %8 = tpu.matmul %5, %7, %cst_6 {dimension_numbers = #tpu.dot_dimension_numbers<[1], [0], [0], [1], [0, 0, 1, 1], [], []>} : vector<32x144xbf16>, vector<144x16xbf16>, vector<32x16xf32> -> vector<32x16xf32>
    %9 = arith.addf %6, %8 : vector<32x16xf32>
    %c0_7 = arith.constant 0 : index
    %c0_8 = arith.constant 0 : index
    %10 = vector.load %arg5[%c0_7, %c0_8] : memref<32x16xf32, #tpu.memory_space<vmem>>, vector<32x16xf32>
    tpu.vector_store %arg5[%c0_7, %c0_8], %9 {strides = array<i32>} : memref<32x16xf32, #tpu.memory_space<vmem>>, vector<32x16xf32>,
    %c0_i32_9 = arith.constant 0 : i32
    %11 = arith.cmpi eq, %arg1, %c0_i32_9 : i32
    %12 = arith.extui %11 : i1 to i32
    %c0_i32_10 = arith.constant 0 : i32
    %13 = arith.cmpi ne, %12, %c0_i32_10 : i32
    scf.if %13 {
      %c0_11 = arith.constant 0 : index
      %c0_12 = arith.constant 0 : index
      %14 = vector.load %arg5[%c0_11, %c0_12] : memref<32x16xf32, #tpu.memory_space<vmem>>, vector<32x16xf32>
      %cst_13 = arith.constant dense<0.000000e+00> : vector<16xf32>
      %15 = vector.multi_reduction <add>, %14, %cst_13 [0] : vector<32x16xf32> to vector<16xf32>
      %16 = vector.shape_cast %15 : vector<16xf32> to vector<1x16xf32>
      %cst_14 = arith.constant 3.125000e-02 : f32
      %17 = vector.broadcast %cst_14 : f32 to vector<1x16xf32>
      %18 = arith.mulf %16, %17 : vector<1x16xf32>
      %19 = vector.broadcast %18 : vector<1x16xf32> to vector<32x16xf32>
      %20 = arith.subf %14, %19 : vector<32x16xf32>
      %21 = arith.mulf %20, %20 : vector<32x16xf32>
      %cst_15 = arith.constant dense<0.000000e+00> : vector<16xf32>
      %22 = vector.multi_reduction <add>, %21, %cst_15 [0] : vector<32x16xf32> to vector<16xf32>
      %23 = vector.shape_cast %22 : vector<16xf32> to vector<1x16xf32>
      %cst_16 = arith.constant 3.125000e-02 : f32
      %24 = vector.broadcast %cst_16 : f32 to vector<1x16xf32>
      %25 = arith.mulf %23, %24 : vector<1x16xf32>
      %26 = vector.broadcast %18 : vector<1x16xf32> to vector<32x16xf32>
      %27 = arith.subf %14, %26 : vector<32x16xf32>
      %cst_17 = arith.constant 9.99999974E-6 : f32
      %28 = vector.broadcast %cst_17 : f32 to vector<1x16xf32>
      %29 = arith.addf %25, %28 : vector<1x16xf32>
      %30 = math.rsqrt %29 : vector<1x16xf32>
      %31 = vector.broadcast %30 : vector<1x16xf32> to vector<32x16xf32>
      %32 = arith.mulf %27, %31 : vector<32x16xf32>
      %33 = arith.truncf %32 : vector<32x16xf32> to vector<32x16xbf16>
      %c0_18 = arith.constant 0 : index
      %c0_19 = arith.constant 0 : index
      %34 = vector.load %arg4[%c0_18, %c0_19] : memref<32x16xbf16, #tpu.memory_space<vmem>>, vector<32x16xbf16>
      tpu.vector_store %arg4[%c0_18, %c0_19], %33 {strides = array<i32>} : memref<32x16xbf16, #tpu.memory_space<vmem>>, vector<32x16xbf16>,
    } else {
    }
    return
  }
  func.func @transform_0(%arg0: i32, %arg1: i32) -> (i32, i32) {
    %c0_i32 = arith.constant 0 : i32
    %c0_i32_0 = arith.constant 0 : i32
    return %c0_i32, %arg1 : i32, i32
  }
  func.func @transform_1(%arg0: i32, %arg1: i32) -> (i32, i32) {
    %c0_i32 = arith.constant 0 : i32
    return %arg1, %arg0 : i32, i32
  }
  func.func @transform_2(%arg0: i32, %arg1: i32) -> (i32, i32) {
    %c0_i32 = arith.constant 0 : i32
    %c0_i32_0 = arith.constant 0 : i32
    return %c0_i32, %arg0 : i32, i32
  }
}

module attributes {stable_mosaic.version = 11 : i64} {
  func.func @_matmul_bn_kernel(%arg0: i32, %arg1: i32, %arg2: memref<32x16xbf16, #tpu.memory_space<vmem>>, %arg3: memref<16x8xbf16, #tpu.memory_space<vmem>>, %arg4: memref<32x8xbf16, #tpu.memory_space<vmem>>, %arg5: memref<32x8xf32, #tpu.memory_space<vmem>>) attributes {dimension_semantics = [#tpu.dimension_semantics<parallel>, #tpu.dimension_semantics<arbitrary>], iteration_bounds = array<i64: 1, 1>, scalar_prefetch = 0 : i64, scratch_operands = 1 : i64, tpu.core_type = #tpu.core_type<tc>, window_params = [{transform_indices = @transform_0, window_bounds = array<i64: 32, 16>}, {transform_indices = @transform_1, window_bounds = array<i64: 16, 8>}, {transform_indices = @transform_2, window_bounds = array<i64: 32, 8>}]} {
    %c0_i32 = arith.constant 0 : i32
    %0 = arith.cmpi eq, %arg1, %c0_i32 : i32
    %1 = arith.extui %0 : i1 to i32
    %c0_i32_0 = arith.constant 0 : i32
    %2 = arith.cmpi ne, %1, %c0_i32_0 : i32
    scf.if %2 {
      %cst_11 = arith.constant 0.000000e+00 : f32
      %14 = vector.broadcast %cst_11 : f32 to vector<32x8xf32>
      %c0_12 = arith.constant 0 : index
      %c0_13 = arith.constant 0 : index
      %15 = vector.load %arg5[%c0_12, %c0_13] : memref<32x8xf32, #tpu.memory_space<vmem>>, vector<32x8xf32>
      tpu.vector_store %arg5[%c0_12, %c0_13], %14 {strides = array<i32>} : memref<32x8xf32, #tpu.memory_space<vmem>>, vector<32x8xf32>,
    } else {
    }
    %c0 = arith.constant 0 : index
    %c0_1 = arith.constant 0 : index
    %3 = vector.load %arg2[%c0, %c0_1] : memref<32x16xbf16, #tpu.memory_space<vmem>>, vector<32x16xbf16>
    %cst = arith.constant 0.000000e+00 : bf16
    %4 = vector.broadcast %cst : bf16 to vector<32x16xbf16>
    %5 = arith.maximumf %3, %4 : vector<32x16xbf16>
    %c0_2 = arith.constant 0 : index
    %c0_3 = arith.constant 0 : index
    %6 = vector.load %arg5[%c0_2, %c0_3] : memref<32x8xf32, #tpu.memory_space<vmem>>, vector<32x8xf32>
    %c0_4 = arith.constant 0 : index
    %c0_5 = arith.constant 0 : index
    %7 = vector.load %arg3[%c0_4, %c0_5] : memref<16x8xbf16, #tpu.memory_space<vmem>>, vector<16x8xbf16>
    %cst_6 = arith.constant dense<0.000000e+00> : vector<32x8xf32>
    %8 = tpu.matmul %5, %7, %cst_6 {dimension_numbers = #tpu.dot_dimension_numbers<[1], [0], [0], [1], [0, 0, 1, 1], [], []>} : vector<32x16xbf16>, vector<16x8xbf16>, vector<32x8xf32> -> vector<32x8xf32>
    %9 = arith.addf %6, %8 : vector<32x8xf32>
    %c0_7 = arith.constant 0 : index
    %c0_8 = arith.constant 0 : index
    %10 = vector.load %arg5[%c0_7, %c0_8] : memref<32x8xf32, #tpu.memory_space<vmem>>, vector<32x8xf32>
    tpu.vector_store %arg5[%c0_7, %c0_8], %9 {strides = array<i32>} : memref<32x8xf32, #tpu.memory_space<vmem>>, vector<32x8xf32>,
    %c0_i32_9 = arith.constant 0 : i32
    %11 = arith.cmpi eq, %arg1, %c0_i32_9 : i32
    %12 = arith.extui %11 : i1 to i32
    %c0_i32_10 = arith.constant 0 : i32
    %13 = arith.cmpi ne, %12, %c0_i32_10 : i32
    scf.if %13 {
      %c0_11 = arith.constant 0 : index
      %c0_12 = arith.constant 0 : index
      %14 = vector.load %arg5[%c0_11, %c0_12] : memref<32x8xf32, #tpu.memory_space<vmem>>, vector<32x8xf32>
      %cst_13 = arith.constant dense<0.000000e+00> : vector<8xf32>
      %15 = vector.multi_reduction <add>, %14, %cst_13 [0] : vector<32x8xf32> to vector<8xf32>
      %16 = vector.shape_cast %15 : vector<8xf32> to vector<1x8xf32>
      %cst_14 = arith.constant 3.125000e-02 : f32
      %17 = vector.broadcast %cst_14 : f32 to vector<1x8xf32>
      %18 = arith.mulf %16, %17 : vector<1x8xf32>
      %19 = vector.broadcast %18 : vector<1x8xf32> to vector<32x8xf32>
      %20 = arith.subf %14, %19 : vector<32x8xf32>
      %21 = arith.mulf %20, %20 : vector<32x8xf32>
      %cst_15 = arith.constant dense<0.000000e+00> : vector<8xf32>
      %22 = vector.multi_reduction <add>, %21, %cst_15 [0] : vector<32x8xf32> to vector<8xf32>
      %23 = vector.shape_cast %22 : vector<8xf32> to vector<1x8xf32>
      %cst_16 = arith.constant 3.125000e-02 : f32
      %24 = vector.broadcast %cst_16 : f32 to vector<1x8xf32>
      %25 = arith.mulf %23, %24 : vector<1x8xf32>
      %26 = vector.broadcast %18 : vector<1x8xf32> to vector<32x8xf32>
      %27 = arith.subf %14, %26 : vector<32x8xf32>
      %cst_17 = arith.constant 9.99999974E-6 : f32
      %28 = vector.broadcast %cst_17 : f32 to vector<1x8xf32>
      %29 = arith.addf %25, %28 : vector<1x8xf32>
      %30 = math.rsqrt %29 : vector<1x8xf32>
      %31 = vector.broadcast %30 : vector<1x8xf32> to vector<32x8xf32>
      %32 = arith.mulf %27, %31 : vector<32x8xf32>
      %33 = arith.truncf %32 : vector<32x8xf32> to vector<32x8xbf16>
      %c0_18 = arith.constant 0 : index
      %c0_19 = arith.constant 0 : index
      %34 = vector.load %arg4[%c0_18, %c0_19] : memref<32x8xbf16, #tpu.memory_space<vmem>>, vector<32x8xbf16>
      tpu.vector_store %arg4[%c0_18, %c0_19], %33 {strides = array<i32>} : memref<32x8xbf16, #tpu.memory_space<vmem>>, vector<32x8xbf16>,
    } else {
    }
    return
  }
  func.func @transform_0(%arg0: i32, %arg1: i32) -> (i32, i32) {
    %c0_i32 = arith.constant 0 : i32
    %c0_i32_0 = arith.constant 0 : i32
    return %c0_i32, %arg1 : i32, i32
  }
  func.func @transform_1(%arg0: i32, %arg1: i32) -> (i32, i32) {
    %c0_i32 = arith.constant 0 : i32
    return %arg1, %arg0 : i32, i32
  }
  func.func @transform_2(%arg0: i32, %arg1: i32) -> (i32, i32) {
    %c0_i32 = arith.constant 0 : i32
    %c0_i32_0 = arith.constant 0 : i32
    return %c0_i32, %arg0 : i32, i32
  }
}

module attributes {stable_mosaic.version = 11 : i64} {
  func.func @_matmul_bn_kernel(%arg0: i32, %arg1: i32, %arg2: memref<512x12xbf16, #tpu.memory_space<vmem>>, %arg3: memref<12x8xbf16, #tpu.memory_space<vmem>>, %arg4: memref<512x8xbf16, #tpu.memory_space<vmem>>, %arg5: memref<512x8xf32, #tpu.memory_space<vmem>>) attributes {dimension_semantics = [#tpu.dimension_semantics<parallel>, #tpu.dimension_semantics<arbitrary>], iteration_bounds = array<i64: 1, 1>, scalar_prefetch = 0 : i64, scratch_operands = 1 : i64, tpu.core_type = #tpu.core_type<tc>, window_params = [{transform_indices = @transform_0, window_bounds = array<i64: 512, 12>}, {transform_indices = @transform_1, window_bounds = array<i64: 12, 8>}, {transform_indices = @transform_2, window_bounds = array<i64: 512, 8>}]} {
    %c0_i32 = arith.constant 0 : i32
    %0 = arith.cmpi eq, %arg1, %c0_i32 : i32
    %1 = arith.extui %0 : i1 to i32
    %c0_i32_0 = arith.constant 0 : i32
    %2 = arith.cmpi ne, %1, %c0_i32_0 : i32
    scf.if %2 {
      %cst_11 = arith.constant 0.000000e+00 : f32
      %14 = vector.broadcast %cst_11 : f32 to vector<512x8xf32>
      %c0_12 = arith.constant 0 : index
      %c0_13 = arith.constant 0 : index
      %15 = vector.load %arg5[%c0_12, %c0_13] : memref<512x8xf32, #tpu.memory_space<vmem>>, vector<512x8xf32>
      tpu.vector_store %arg5[%c0_12, %c0_13], %14 {strides = array<i32>} : memref<512x8xf32, #tpu.memory_space<vmem>>, vector<512x8xf32>,
    } else {
    }
    %c0 = arith.constant 0 : index
    %c0_1 = arith.constant 0 : index
    %3 = vector.load %arg2[%c0, %c0_1] : memref<512x12xbf16, #tpu.memory_space<vmem>>, vector<512x12xbf16>
    %cst = arith.constant 0.000000e+00 : bf16
    %4 = vector.broadcast %cst : bf16 to vector<512x12xbf16>
    %5 = arith.maximumf %3, %4 : vector<512x12xbf16>
    %c0_2 = arith.constant 0 : index
    %c0_3 = arith.constant 0 : index
    %6 = vector.load %arg5[%c0_2, %c0_3] : memref<512x8xf32, #tpu.memory_space<vmem>>, vector<512x8xf32>
    %c0_4 = arith.constant 0 : index
    %c0_5 = arith.constant 0 : index
    %7 = vector.load %arg3[%c0_4, %c0_5] : memref<12x8xbf16, #tpu.memory_space<vmem>>, vector<12x8xbf16>
    %cst_6 = arith.constant dense<0.000000e+00> : vector<512x8xf32>
    %8 = tpu.matmul %5, %7, %cst_6 {dimension_numbers = #tpu.dot_dimension_numbers<[1], [0], [0], [1], [0, 0, 1, 1], [], []>} : vector<512x12xbf16>, vector<12x8xbf16>, vector<512x8xf32> -> vector<512x8xf32>
    %9 = arith.addf %6, %8 : vector<512x8xf32>
    %c0_7 = arith.constant 0 : index
    %c0_8 = arith.constant 0 : index
    %10 = vector.load %arg5[%c0_7, %c0_8] : memref<512x8xf32, #tpu.memory_space<vmem>>, vector<512x8xf32>
    tpu.vector_store %arg5[%c0_7, %c0_8], %9 {strides = array<i32>} : memref<512x8xf32, #tpu.memory_space<vmem>>, vector<512x8xf32>,
    %c0_i32_9 = arith.constant 0 : i32
    %11 = arith.cmpi eq, %arg1, %c0_i32_9 : i32
    %12 = arith.extui %11 : i1 to i32
    %c0_i32_10 = arith.constant 0 : i32
    %13 = arith.cmpi ne, %12, %c0_i32_10 : i32
    scf.if %13 {
      %c0_11 = arith.constant 0 : index
      %c0_12 = arith.constant 0 : index
      %14 = vector.load %arg5[%c0_11, %c0_12] : memref<512x8xf32, #tpu.memory_space<vmem>>, vector<512x8xf32>
      %cst_13 = arith.constant dense<0.000000e+00> : vector<8xf32>
      %15 = vector.multi_reduction <add>, %14, %cst_13 [0] : vector<512x8xf32> to vector<8xf32>
      %16 = vector.shape_cast %15 : vector<8xf32> to vector<1x8xf32>
      %cst_14 = arith.constant 0.001953125 : f32
      %17 = vector.broadcast %cst_14 : f32 to vector<1x8xf32>
      %18 = arith.mulf %16, %17 : vector<1x8xf32>
      %19 = vector.broadcast %18 : vector<1x8xf32> to vector<512x8xf32>
      %20 = arith.subf %14, %19 : vector<512x8xf32>
      %21 = arith.mulf %20, %20 : vector<512x8xf32>
      %cst_15 = arith.constant dense<0.000000e+00> : vector<8xf32>
      %22 = vector.multi_reduction <add>, %21, %cst_15 [0] : vector<512x8xf32> to vector<8xf32>
      %23 = vector.shape_cast %22 : vector<8xf32> to vector<1x8xf32>
      %cst_16 = arith.constant 0.001953125 : f32
      %24 = vector.broadcast %cst_16 : f32 to vector<1x8xf32>
      %25 = arith.mulf %23, %24 : vector<1x8xf32>
      %26 = vector.broadcast %18 : vector<1x8xf32> to vector<512x8xf32>
      %27 = arith.subf %14, %26 : vector<512x8xf32>
      %cst_17 = arith.constant 9.99999974E-6 : f32
      %28 = vector.broadcast %cst_17 : f32 to vector<1x8xf32>
      %29 = arith.addf %25, %28 : vector<1x8xf32>
      %30 = math.rsqrt %29 : vector<1x8xf32>
      %31 = vector.broadcast %30 : vector<1x8xf32> to vector<512x8xf32>
      %32 = arith.mulf %27, %31 : vector<512x8xf32>
      %33 = arith.truncf %32 : vector<512x8xf32> to vector<512x8xbf16>
      %c0_18 = arith.constant 0 : index
      %c0_19 = arith.constant 0 : index
      %34 = vector.load %arg4[%c0_18, %c0_19] : memref<512x8xbf16, #tpu.memory_space<vmem>>, vector<512x8xbf16>
      tpu.vector_store %arg4[%c0_18, %c0_19], %33 {strides = array<i32>} : memref<512x8xbf16, #tpu.memory_space<vmem>>, vector<512x8xbf16>,
    } else {
    }
    return
  }
  func.func @transform_0(%arg0: i32, %arg1: i32) -> (i32, i32) {
    %c0_i32 = arith.constant 0 : i32
    %c0_i32_0 = arith.constant 0 : i32
    return %c0_i32, %arg1 : i32, i32
  }
  func.func @transform_1(%arg0: i32, %arg1: i32) -> (i32, i32) {
    %c0_i32 = arith.constant 0 : i32
    return %arg1, %arg0 : i32, i32
  }
  func.func @transform_2(%arg0: i32, %arg1: i32) -> (i32, i32) {
    %c0_i32 = arith.constant 0 : i32
    %c0_i32_0 = arith.constant 0 : i32
    return %c0_i32, %arg0 : i32, i32
  }
}

module attributes {stable_mosaic.version = 11 : i64} {
  func.func @_combine_kernel(%arg0: i32, %arg1: memref<4x2x256xbf16, #tpu.memory_space<vmem>>, %arg2: memref<2x4xf32, #tpu.memory_space<vmem>>, %arg3: memref<2x256xbf16, #tpu.memory_space<vmem>>) attributes {dimension_semantics = [#tpu.dimension_semantics<arbitrary>], iteration_bounds = array<i64: 1>, scalar_prefetch = 0 : i64, scratch_operands = 0 : i64, tpu.core_type = #tpu.core_type<tc>, window_params = [{pipeline_mode = #tpu.pipeline_mode<synchronous>, transform_indices = @transform_0, window_bounds = array<i64: 4, 2, 256>}, {pipeline_mode = #tpu.pipeline_mode<synchronous>, transform_indices = @transform_1, window_bounds = array<i64: 2, 4>}, {pipeline_mode = #tpu.pipeline_mode<synchronous>, transform_indices = @transform_2, window_bounds = array<i64: 2, 256>}]} {
    %c0 = arith.constant 0 : index
    %c0_0 = arith.constant 0 : index
    %0 = vector.load %arg2[%c0, %c0_0] : memref<2x4xf32, #tpu.memory_space<vmem>>, vector<2x1xf32>
    %c0_1 = arith.constant 0 : index
    %c0_2 = arith.constant 0 : index
    %c0_3 = arith.constant 0 : index
    %1 = vector.load %arg1[%c0_1, %c0_2, %c0_3] : memref<4x2x256xbf16, #tpu.memory_space<vmem>>, vector<1x2x256xbf16>
    %2 = vector.shape_cast %1 : vector<1x2x256xbf16> to vector<2x256xbf16>
    %3 = arith.extf %2 : vector<2x256xbf16> to vector<2x256xf32>
    %4 = vector.broadcast %0 : vector<2x1xf32> to vector<2x256xf32>
    %5 = arith.mulf %4, %3 : vector<2x256xf32>
    %c0_4 = arith.constant 0 : index
    %c1 = arith.constant 1 : index
    %6 = vector.load %arg2[%c0_4, %c1] : memref<2x4xf32, #tpu.memory_space<vmem>>, vector<2x1xf32>
    %c1_5 = arith.constant 1 : index
    %c0_6 = arith.constant 0 : index
    %c0_7 = arith.constant 0 : index
    %7 = vector.load %arg1[%c1_5, %c0_6, %c0_7] : memref<4x2x256xbf16, #tpu.memory_space<vmem>>, vector<1x2x256xbf16>
    %8 = vector.shape_cast %7 : vector<1x2x256xbf16> to vector<2x256xbf16>
    %9 = arith.extf %8 : vector<2x256xbf16> to vector<2x256xf32>
    %10 = vector.broadcast %6 : vector<2x1xf32> to vector<2x256xf32>
    %11 = arith.mulf %10, %9 : vector<2x256xf32>
    %12 = arith.addf %5, %11 : vector<2x256xf32>
    %c0_8 = arith.constant 0 : index
    %c2 = arith.constant 2 : index
    %13 = vector.load %arg2[%c0_8, %c2] : memref<2x4xf32, #tpu.memory_space<vmem>>, vector<2x1xf32>
    %c2_9 = arith.constant 2 : index
    %c0_10 = arith.constant 0 : index
    %c0_11 = arith.constant 0 : index
    %14 = vector.load %arg1[%c2_9, %c0_10, %c0_11] : memref<4x2x256xbf16, #tpu.memory_space<vmem>>, vector<1x2x256xbf16>
    %15 = vector.shape_cast %14 : vector<1x2x256xbf16> to vector<2x256xbf16>
    %16 = arith.extf %15 : vector<2x256xbf16> to vector<2x256xf32>
    %17 = vector.broadcast %13 : vector<2x1xf32> to vector<2x256xf32>
    %18 = arith.mulf %17, %16 : vector<2x256xf32>
    %19 = arith.addf %12, %18 : vector<2x256xf32>
    %c0_12 = arith.constant 0 : index
    %c3 = arith.constant 3 : index
    %20 = vector.load %arg2[%c0_12, %c3] : memref<2x4xf32, #tpu.memory_space<vmem>>, vector<2x1xf32>
    %c3_13 = arith.constant 3 : index
    %c0_14 = arith.constant 0 : index
    %c0_15 = arith.constant 0 : index
    %21 = vector.load %arg1[%c3_13, %c0_14, %c0_15] : memref<4x2x256xbf16, #tpu.memory_space<vmem>>, vector<1x2x256xbf16>
    %22 = vector.shape_cast %21 : vector<1x2x256xbf16> to vector<2x256xbf16>
    %23 = arith.extf %22 : vector<2x256xbf16> to vector<2x256xf32>
    %24 = vector.broadcast %20 : vector<2x1xf32> to vector<2x256xf32>
    %25 = arith.mulf %24, %23 : vector<2x256xf32>
    %26 = arith.addf %19, %25 : vector<2x256xf32>
    %27 = arith.truncf %26 : vector<2x256xf32> to vector<2x256xbf16>
    %c0_16 = arith.constant 0 : index
    %c0_17 = arith.constant 0 : index
    %28 = vector.load %arg3[%c0_16, %c0_17] : memref<2x256xbf16, #tpu.memory_space<vmem>>, vector<2x256xbf16>
    tpu.vector_store %arg3[%c0_16, %c0_17], %27 {strides = array<i32>} : memref<2x256xbf16, #tpu.memory_space<vmem>>, vector<2x256xbf16>,
    return
  }
  func.func @transform_0(%arg0: i32) -> (i32, i32, i32) {
    %c0_i32 = arith.constant 0 : i32
    %c0_i32_0 = arith.constant 0 : i32
    %c0_i32_1 = arith.constant 0 : i32
    %c0_i32_2 = arith.constant 0 : i32
    return %c0_i32, %c0_i32_0, %c0_i32_1 : i32, i32, i32
  }
  func.func @transform_1(%arg0: i32) -> (i32, i32) {
    %c0_i32 = arith.constant 0 : i32
    %c0_i32_0 = arith.constant 0 : i32
    %c0_i32_1 = arith.constant 0 : i32
    return %c0_i32, %c0_i32_0 : i32, i32
  }
  func.func @transform_2(%arg0: i32) -> (i32, i32) {
    %c0_i32 = arith.constant 0 : i32
    %c0_i32_0 = arith.constant 0 : i32
    %c0_i32_1 = arith.constant 0 : i32
    return %c0_i32, %c0_i32_0 : i32, i32
  }
}

module attributes {stable_mosaic.version = 11 : i64} {
  func.func @_pool_bn_kernel(%arg0: i32, %arg1: memref<9x128x8xbf16, #tpu.memory_space<vmem>>, %arg2: memref<128x1xf32, #tpu.memory_space<vmem>>, %arg3: memref<128x8xbf16, #tpu.memory_space<vmem>>) attributes {dimension_semantics = [#tpu.dimension_semantics<arbitrary>], iteration_bounds = array<i64: 1>, scalar_prefetch = 0 : i64, scratch_operands = 0 : i64, tpu.core_type = #tpu.core_type<tc>, window_params = [{pipeline_mode = #tpu.pipeline_mode<synchronous>, transform_indices = @transform_0, window_bounds = array<i64: 9, 128, 8>}, {pipeline_mode = #tpu.pipeline_mode<synchronous>, transform_indices = @transform_1, window_bounds = array<i64: 128, 1>}, {pipeline_mode = #tpu.pipeline_mode<synchronous>, transform_indices = @transform_2, window_bounds = array<i64: 128, 8>}]} {
    %c0 = arith.constant 0 : index
    %c0_0 = arith.constant 0 : index
    %c0_1 = arith.constant 0 : index
    %0 = vector.load %arg1[%c0, %c0_0, %c0_1] : memref<9x128x8xbf16, #tpu.memory_space<vmem>>, vector<1x128x8xbf16>
    %1 = vector.shape_cast %0 : vector<1x128x8xbf16> to vector<128x8xbf16>
    %2 = arith.extf %1 : vector<128x8xbf16> to vector<128x8xf32>
    %c1 = arith.constant 1 : index
    %c0_2 = arith.constant 0 : index
    %c0_3 = arith.constant 0 : index
    %3 = vector.load %arg1[%c1, %c0_2, %c0_3] : memref<9x128x8xbf16, #tpu.memory_space<vmem>>, vector<1x128x8xbf16>
    %4 = vector.shape_cast %3 : vector<1x128x8xbf16> to vector<128x8xbf16>
    %5 = arith.extf %4 : vector<128x8xbf16> to vector<128x8xf32>
    %6 = arith.maximumf %2, %5 : vector<128x8xf32>
    %c2 = arith.constant 2 : index
    %c0_4 = arith.constant 0 : index
    %c0_5 = arith.constant 0 : index
    %7 = vector.load %arg1[%c2, %c0_4, %c0_5] : memref<9x128x8xbf16, #tpu.memory_space<vmem>>, vector<1x128x8xbf16>
    %8 = vector.shape_cast %7 : vector<1x128x8xbf16> to vector<128x8xbf16>
    %9 = arith.extf %8 : vector<128x8xbf16> to vector<128x8xf32>
    %10 = arith.maximumf %6, %9 : vector<128x8xf32>
    %c3 = arith.constant 3 : index
    %c0_6 = arith.constant 0 : index
    %c0_7 = arith.constant 0 : index
    %11 = vector.load %arg1[%c3, %c0_6, %c0_7] : memref<9x128x8xbf16, #tpu.memory_space<vmem>>, vector<1x128x8xbf16>
    %12 = vector.shape_cast %11 : vector<1x128x8xbf16> to vector<128x8xbf16>
    %13 = arith.extf %12 : vector<128x8xbf16> to vector<128x8xf32>
    %14 = arith.maximumf %10, %13 : vector<128x8xf32>
    %c4 = arith.constant 4 : index
    %c0_8 = arith.constant 0 : index
    %c0_9 = arith.constant 0 : index
    %15 = vector.load %arg1[%c4, %c0_8, %c0_9] : memref<9x128x8xbf16, #tpu.memory_space<vmem>>, vector<1x128x8xbf16>
    %16 = vector.shape_cast %15 : vector<1x128x8xbf16> to vector<128x8xbf16>
    %17 = arith.extf %16 : vector<128x8xbf16> to vector<128x8xf32>
    %18 = arith.maximumf %14, %17 : vector<128x8xf32>
    %c5 = arith.constant 5 : index
    %c0_10 = arith.constant 0 : index
    %c0_11 = arith.constant 0 : index
    %19 = vector.load %arg1[%c5, %c0_10, %c0_11] : memref<9x128x8xbf16, #tpu.memory_space<vmem>>, vector<1x128x8xbf16>
    %20 = vector.shape_cast %19 : vector<1x128x8xbf16> to vector<128x8xbf16>
    %21 = arith.extf %20 : vector<128x8xbf16> to vector<128x8xf32>
    %22 = arith.maximumf %18, %21 : vector<128x8xf32>
    %c6 = arith.constant 6 : index
    %c0_12 = arith.constant 0 : index
    %c0_13 = arith.constant 0 : index
    %23 = vector.load %arg1[%c6, %c0_12, %c0_13] : memref<9x128x8xbf16, #tpu.memory_space<vmem>>, vector<1x128x8xbf16>
    %24 = vector.shape_cast %23 : vector<1x128x8xbf16> to vector<128x8xbf16>
    %25 = arith.extf %24 : vector<128x8xbf16> to vector<128x8xf32>
    %26 = arith.maximumf %22, %25 : vector<128x8xf32>
    %c7 = arith.constant 7 : index
    %c0_14 = arith.constant 0 : index
    %c0_15 = arith.constant 0 : index
    %27 = vector.load %arg1[%c7, %c0_14, %c0_15] : memref<9x128x8xbf16, #tpu.memory_space<vmem>>, vector<1x128x8xbf16>
    %28 = vector.shape_cast %27 : vector<1x128x8xbf16> to vector<128x8xbf16>
    %29 = arith.extf %28 : vector<128x8xbf16> to vector<128x8xf32>
    %30 = arith.maximumf %26, %29 : vector<128x8xf32>
    %c8 = arith.constant 8 : index
    %c0_16 = arith.constant 0 : index
    %c0_17 = arith.constant 0 : index
    %31 = vector.load %arg1[%c8, %c0_16, %c0_17] : memref<9x128x8xbf16, #tpu.memory_space<vmem>>, vector<1x128x8xbf16>
    %32 = vector.shape_cast %31 : vector<1x128x8xbf16> to vector<128x8xbf16>
    %33 = arith.extf %32 : vector<128x8xbf16> to vector<128x8xf32>
    %34 = arith.maximumf %30, %33 : vector<128x8xf32>
    %cst = arith.constant dense<0.000000e+00> : vector<8xf32>
    %35 = vector.multi_reduction <add>, %34, %cst [0] : vector<128x8xf32> to vector<8xf32>
    %36 = vector.shape_cast %35 : vector<8xf32> to vector<1x8xf32>
    %cst_18 = arith.constant 7.812500e-03 : f32
    %37 = vector.broadcast %cst_18 : f32 to vector<1x8xf32>
    %38 = arith.mulf %36, %37 : vector<1x8xf32>
    %39 = vector.broadcast %38 : vector<1x8xf32> to vector<128x8xf32>
    %40 = arith.subf %34, %39 : vector<128x8xf32>
    %41 = arith.mulf %40, %40 : vector<128x8xf32>
    %cst_19 = arith.constant dense<0.000000e+00> : vector<8xf32>
    %42 = vector.multi_reduction <add>, %41, %cst_19 [0] : vector<128x8xf32> to vector<8xf32>
    %43 = vector.shape_cast %42 : vector<8xf32> to vector<1x8xf32>
    %cst_20 = arith.constant 7.812500e-03 : f32
    %44 = vector.broadcast %cst_20 : f32 to vector<1x8xf32>
    %45 = arith.mulf %43, %44 : vector<1x8xf32>
    %46 = vector.broadcast %38 : vector<1x8xf32> to vector<128x8xf32>
    %47 = arith.subf %34, %46 : vector<128x8xf32>
    %cst_21 = arith.constant 9.99999974E-6 : f32
    %48 = vector.broadcast %cst_21 : f32 to vector<1x8xf32>
    %49 = arith.addf %45, %48 : vector<1x8xf32>
    %50 = math.rsqrt %49 : vector<1x8xf32>
    %51 = vector.broadcast %50 : vector<1x8xf32> to vector<128x8xf32>
    %52 = arith.mulf %47, %51 : vector<128x8xf32>
    %53 = arith.truncf %52 : vector<128x8xf32> to vector<128x8xbf16>
    %c0_22 = arith.constant 0 : index
    %c0_23 = arith.constant 0 : index
    %54 = vector.load %arg3[%c0_22, %c0_23] : memref<128x8xbf16, #tpu.memory_space<vmem>>, vector<128x8xbf16>
    tpu.vector_store %arg3[%c0_22, %c0_23], %53 {strides = array<i32>} : memref<128x8xbf16, #tpu.memory_space<vmem>>, vector<128x8xbf16>,
    return
  }
  func.func @transform_0(%arg0: i32) -> (i32, i32, i32) {
    %c0_i32 = arith.constant 0 : i32
    %c0_i32_0 = arith.constant 0 : i32
    %c0_i32_1 = arith.constant 0 : i32
    %c0_i32_2 = arith.constant 0 : i32
    return %c0_i32, %c0_i32_0, %c0_i32_1 : i32, i32, i32
  }
  func.func @transform_1(%arg0: i32) -> (i32, i32) {
    %c0_i32 = arith.constant 0 : i32
    %c0_i32_0 = arith.constant 0 : i32
    %c0_i32_1 = arith.constant 0 : i32
    return %c0_i32, %c0_i32_0 : i32, i32
  }
  func.func @transform_2(%arg0: i32) -> (i32, i32) {
    %c0_i32 = arith.constant 0 : i32
    %c0_i32_0 = arith.constant 0 : i32
    %c0_i32_1 = arith.constant 0 : i32
    return %c0_i32, %c0_i32_0 : i32, i32
  }
}

module attributes {stable_mosaic.version = 11 : i64} {
  func.func @_pool_bn_kernel(%arg0: i32, %arg1: memref<9x128x8xbf16, #tpu.memory_space<vmem>>, %arg2: memref<128x1xf32, #tpu.memory_space<vmem>>, %arg3: memref<128x8xbf16, #tpu.memory_space<vmem>>) attributes {dimension_semantics = [#tpu.dimension_semantics<arbitrary>], iteration_bounds = array<i64: 1>, scalar_prefetch = 0 : i64, scratch_operands = 0 : i64, tpu.core_type = #tpu.core_type<tc>, window_params = [{pipeline_mode = #tpu.pipeline_mode<synchronous>, transform_indices = @transform_0, window_bounds = array<i64: 9, 128, 8>}, {pipeline_mode = #tpu.pipeline_mode<synchronous>, transform_indices = @transform_1, window_bounds = array<i64: 128, 1>}, {pipeline_mode = #tpu.pipeline_mode<synchronous>, transform_indices = @transform_2, window_bounds = array<i64: 128, 8>}]} {
    %c0 = arith.constant 0 : index
    %c0_0 = arith.constant 0 : index
    %c0_1 = arith.constant 0 : index
    %0 = vector.load %arg1[%c0, %c0_0, %c0_1] : memref<9x128x8xbf16, #tpu.memory_space<vmem>>, vector<1x128x8xbf16>
    %1 = vector.shape_cast %0 : vector<1x128x8xbf16> to vector<128x8xbf16>
    %2 = arith.extf %1 : vector<128x8xbf16> to vector<128x8xf32>
    %c1 = arith.constant 1 : index
    %c0_2 = arith.constant 0 : index
    %c0_3 = arith.constant 0 : index
    %3 = vector.load %arg1[%c1, %c0_2, %c0_3] : memref<9x128x8xbf16, #tpu.memory_space<vmem>>, vector<1x128x8xbf16>
    %4 = vector.shape_cast %3 : vector<1x128x8xbf16> to vector<128x8xbf16>
    %5 = arith.extf %4 : vector<128x8xbf16> to vector<128x8xf32>
    %6 = arith.addf %2, %5 : vector<128x8xf32>
    %c2 = arith.constant 2 : index
    %c0_4 = arith.constant 0 : index
    %c0_5 = arith.constant 0 : index
    %7 = vector.load %arg1[%c2, %c0_4, %c0_5] : memref<9x128x8xbf16, #tpu.memory_space<vmem>>, vector<1x128x8xbf16>
    %8 = vector.shape_cast %7 : vector<1x128x8xbf16> to vector<128x8xbf16>
    %9 = arith.extf %8 : vector<128x8xbf16> to vector<128x8xf32>
    %10 = arith.addf %6, %9 : vector<128x8xf32>
    %c3 = arith.constant 3 : index
    %c0_6 = arith.constant 0 : index
    %c0_7 = arith.constant 0 : index
    %11 = vector.load %arg1[%c3, %c0_6, %c0_7] : memref<9x128x8xbf16, #tpu.memory_space<vmem>>, vector<1x128x8xbf16>
    %12 = vector.shape_cast %11 : vector<1x128x8xbf16> to vector<128x8xbf16>
    %13 = arith.extf %12 : vector<128x8xbf16> to vector<128x8xf32>
    %14 = arith.addf %10, %13 : vector<128x8xf32>
    %c4 = arith.constant 4 : index
    %c0_8 = arith.constant 0 : index
    %c0_9 = arith.constant 0 : index
    %15 = vector.load %arg1[%c4, %c0_8, %c0_9] : memref<9x128x8xbf16, #tpu.memory_space<vmem>>, vector<1x128x8xbf16>
    %16 = vector.shape_cast %15 : vector<1x128x8xbf16> to vector<128x8xbf16>
    %17 = arith.extf %16 : vector<128x8xbf16> to vector<128x8xf32>
    %18 = arith.addf %14, %17 : vector<128x8xf32>
    %c5 = arith.constant 5 : index
    %c0_10 = arith.constant 0 : index
    %c0_11 = arith.constant 0 : index
    %19 = vector.load %arg1[%c5, %c0_10, %c0_11] : memref<9x128x8xbf16, #tpu.memory_space<vmem>>, vector<1x128x8xbf16>
    %20 = vector.shape_cast %19 : vector<1x128x8xbf16> to vector<128x8xbf16>
    %21 = arith.extf %20 : vector<128x8xbf16> to vector<128x8xf32>
    %22 = arith.addf %18, %21 : vector<128x8xf32>
    %c6 = arith.constant 6 : index
    %c0_12 = arith.constant 0 : index
    %c0_13 = arith.constant 0 : index
    %23 = vector.load %arg1[%c6, %c0_12, %c0_13] : memref<9x128x8xbf16, #tpu.memory_space<vmem>>, vector<1x128x8xbf16>
    %24 = vector.shape_cast %23 : vector<1x128x8xbf16> to vector<128x8xbf16>
    %25 = arith.extf %24 : vector<128x8xbf16> to vector<128x8xf32>
    %26 = arith.addf %22, %25 : vector<128x8xf32>
    %c7 = arith.constant 7 : index
    %c0_14 = arith.constant 0 : index
    %c0_15 = arith.constant 0 : index
    %27 = vector.load %arg1[%c7, %c0_14, %c0_15] : memref<9x128x8xbf16, #tpu.memory_space<vmem>>, vector<1x128x8xbf16>
    %28 = vector.shape_cast %27 : vector<1x128x8xbf16> to vector<128x8xbf16>
    %29 = arith.extf %28 : vector<128x8xbf16> to vector<128x8xf32>
    %30 = arith.addf %26, %29 : vector<128x8xf32>
    %c8 = arith.constant 8 : index
    %c0_16 = arith.constant 0 : index
    %c0_17 = arith.constant 0 : index
    %31 = vector.load %arg1[%c8, %c0_16, %c0_17] : memref<9x128x8xbf16, #tpu.memory_space<vmem>>, vector<1x128x8xbf16>
    %32 = vector.shape_cast %31 : vector<1x128x8xbf16> to vector<128x8xbf16>
    %33 = arith.extf %32 : vector<128x8xbf16> to vector<128x8xf32>
    %34 = arith.addf %30, %33 : vector<128x8xf32>
    %c0_18 = arith.constant 0 : index
    %c0_19 = arith.constant 0 : index
    %35 = vector.load %arg2[%c0_18, %c0_19] : memref<128x1xf32, #tpu.memory_space<vmem>>, vector<128x1xf32>
    %36 = vector.broadcast %35 : vector<128x1xf32> to vector<128x8xf32>
    %37 = arith.mulf %34, %36 : vector<128x8xf32>
    %cst = arith.constant dense<0.000000e+00> : vector<8xf32>
    %38 = vector.multi_reduction <add>, %37, %cst [0] : vector<128x8xf32> to vector<8xf32>
    %39 = vector.shape_cast %38 : vector<8xf32> to vector<1x8xf32>
    %cst_20 = arith.constant 7.812500e-03 : f32
    %40 = vector.broadcast %cst_20 : f32 to vector<1x8xf32>
    %41 = arith.mulf %39, %40 : vector<1x8xf32>
    %42 = vector.broadcast %41 : vector<1x8xf32> to vector<128x8xf32>
    %43 = arith.subf %37, %42 : vector<128x8xf32>
    %44 = arith.mulf %43, %43 : vector<128x8xf32>
    %cst_21 = arith.constant dense<0.000000e+00> : vector<8xf32>
    %45 = vector.multi_reduction <add>, %44, %cst_21 [0] : vector<128x8xf32> to vector<8xf32>
    %46 = vector.shape_cast %45 : vector<8xf32> to vector<1x8xf32>
    %cst_22 = arith.constant 7.812500e-03 : f32
    %47 = vector.broadcast %cst_22 : f32 to vector<1x8xf32>
    %48 = arith.mulf %46, %47 : vector<1x8xf32>
    %49 = vector.broadcast %41 : vector<1x8xf32> to vector<128x8xf32>
    %50 = arith.subf %37, %49 : vector<128x8xf32>
    %cst_23 = arith.constant 9.99999974E-6 : f32
    %51 = vector.broadcast %cst_23 : f32 to vector<1x8xf32>
    %52 = arith.addf %48, %51 : vector<1x8xf32>
    %53 = math.rsqrt %52 : vector<1x8xf32>
    %54 = vector.broadcast %53 : vector<1x8xf32> to vector<128x8xf32>
    %55 = arith.mulf %50, %54 : vector<128x8xf32>
    %56 = arith.truncf %55 : vector<128x8xf32> to vector<128x8xbf16>
    %c0_24 = arith.constant 0 : index
    %c0_25 = arith.constant 0 : index
    %57 = vector.load %arg3[%c0_24, %c0_25] : memref<128x8xbf16, #tpu.memory_space<vmem>>, vector<128x8xbf16>
    tpu.vector_store %arg3[%c0_24, %c0_25], %56 {strides = array<i32>} : memref<128x8xbf16, #tpu.memory_space<vmem>>, vector<128x8xbf16>,
    return
  }
  func.func @transform_0(%arg0: i32) -> (i32, i32, i32) {
    %c0_i32 = arith.constant 0 : i32
    %c0_i32_0 = arith.constant 0 : i32
    %c0_i32_1 = arith.constant 0 : i32
    %c0_i32_2 = arith.constant 0 : i32
    return %c0_i32, %c0_i32_0, %c0_i32_1 : i32, i32, i32
  }
  func.func @transform_1(%arg0: i32) -> (i32, i32) {
    %c0_i32 = arith.constant 0 : i32
    %c0_i32_0 = arith.constant 0 : i32
    %c0_i32_1 = arith.constant 0 : i32
    return %c0_i32, %c0_i32_0 : i32, i32
  }
  func.func @transform_2(%arg0: i32) -> (i32, i32) {
    %c0_i32 = arith.constant 0 : i32
    %c0_i32_0 = arith.constant 0 : i32
    %c0_i32_1 = arith.constant 0 : i32
    return %c0_i32, %c0_i32_0 : i32, i32
  }
}

module attributes {stable_mosaic.version = 11 : i64} {
  func.func @_matmul_bn_kernel(%arg0: i32, %arg1: i32, %arg2: memref<128x72xbf16, #tpu.memory_space<vmem>>, %arg3: memref<72x8xbf16, #tpu.memory_space<vmem>>, %arg4: memref<128x8xbf16, #tpu.memory_space<vmem>>, %arg5: memref<128x8xf32, #tpu.memory_space<vmem>>) attributes {dimension_semantics = [#tpu.dimension_semantics<parallel>, #tpu.dimension_semantics<arbitrary>], iteration_bounds = array<i64: 1, 1>, scalar_prefetch = 0 : i64, scratch_operands = 1 : i64, tpu.core_type = #tpu.core_type<tc>, window_params = [{transform_indices = @transform_0, window_bounds = array<i64: 128, 72>}, {transform_indices = @transform_1, window_bounds = array<i64: 72, 8>}, {transform_indices = @transform_2, window_bounds = array<i64: 128, 8>}]} {
    %c0_i32 = arith.constant 0 : i32
    %0 = arith.cmpi eq, %arg1, %c0_i32 : i32
    %1 = arith.extui %0 : i1 to i32
    %c0_i32_0 = arith.constant 0 : i32
    %2 = arith.cmpi ne, %1, %c0_i32_0 : i32
    scf.if %2 {
      %cst_11 = arith.constant 0.000000e+00 : f32
      %14 = vector.broadcast %cst_11 : f32 to vector<128x8xf32>
      %c0_12 = arith.constant 0 : index
      %c0_13 = arith.constant 0 : index
      %15 = vector.load %arg5[%c0_12, %c0_13] : memref<128x8xf32, #tpu.memory_space<vmem>>, vector<128x8xf32>
      tpu.vector_store %arg5[%c0_12, %c0_13], %14 {strides = array<i32>} : memref<128x8xf32, #tpu.memory_space<vmem>>, vector<128x8xf32>,
    } else {
    }
    %c0 = arith.constant 0 : index
    %c0_1 = arith.constant 0 : index
    %3 = vector.load %arg2[%c0, %c0_1] : memref<128x72xbf16, #tpu.memory_space<vmem>>, vector<128x72xbf16>
    %cst = arith.constant 0.000000e+00 : bf16
    %4 = vector.broadcast %cst : bf16 to vector<128x72xbf16>
    %5 = arith.maximumf %3, %4 : vector<128x72xbf16>
    %c0_2 = arith.constant 0 : index
    %c0_3 = arith.constant 0 : index
    %6 = vector.load %arg5[%c0_2, %c0_3] : memref<128x8xf32, #tpu.memory_space<vmem>>, vector<128x8xf32>
    %c0_4 = arith.constant 0 : index
    %c0_5 = arith.constant 0 : index
    %7 = vector.load %arg3[%c0_4, %c0_5] : memref<72x8xbf16, #tpu.memory_space<vmem>>, vector<72x8xbf16>
    %cst_6 = arith.constant dense<0.000000e+00> : vector<128x8xf32>
    %8 = tpu.matmul %5, %7, %cst_6 {dimension_numbers = #tpu.dot_dimension_numbers<[1], [0], [0], [1], [0, 0, 1, 1], [], []>} : vector<128x72xbf16>, vector<72x8xbf16>, vector<128x8xf32> -> vector<128x8xf32>
    %9 = arith.addf %6, %8 : vector<128x8xf32>
    %c0_7 = arith.constant 0 : index
    %c0_8 = arith.constant 0 : index
    %10 = vector.load %arg5[%c0_7, %c0_8] : memref<128x8xf32, #tpu.memory_space<vmem>>, vector<128x8xf32>
    tpu.vector_store %arg5[%c0_7, %c0_8], %9 {strides = array<i32>} : memref<128x8xf32, #tpu.memory_space<vmem>>, vector<128x8xf32>,
    %c0_i32_9 = arith.constant 0 : i32
    %11 = arith.cmpi eq, %arg1, %c0_i32_9 : i32
    %12 = arith.extui %11 : i1 to i32
    %c0_i32_10 = arith.constant 0 : i32
    %13 = arith.cmpi ne, %12, %c0_i32_10 : i32
    scf.if %13 {
      %c0_11 = arith.constant 0 : index
      %c0_12 = arith.constant 0 : index
      %14 = vector.load %arg5[%c0_11, %c0_12] : memref<128x8xf32, #tpu.memory_space<vmem>>, vector<128x8xf32>
      %cst_13 = arith.constant dense<0.000000e+00> : vector<8xf32>
      %15 = vector.multi_reduction <add>, %14, %cst_13 [0] : vector<128x8xf32> to vector<8xf32>
      %16 = vector.shape_cast %15 : vector<8xf32> to vector<1x8xf32>
      %cst_14 = arith.constant 7.812500e-03 : f32
      %17 = vector.broadcast %cst_14 : f32 to vector<1x8xf32>
      %18 = arith.mulf %16, %17 : vector<1x8xf32>
      %19 = vector.broadcast %18 : vector<1x8xf32> to vector<128x8xf32>
      %20 = arith.subf %14, %19 : vector<128x8xf32>
      %21 = arith.mulf %20, %20 : vector<128x8xf32>
      %cst_15 = arith.constant dense<0.000000e+00> : vector<8xf32>
      %22 = vector.multi_reduction <add>, %21, %cst_15 [0] : vector<128x8xf32> to vector<8xf32>
      %23 = vector.shape_cast %22 : vector<8xf32> to vector<1x8xf32>
      %cst_16 = arith.constant 7.812500e-03 : f32
      %24 = vector.broadcast %cst_16 : f32 to vector<1x8xf32>
      %25 = arith.mulf %23, %24 : vector<1x8xf32>
      %26 = vector.broadcast %18 : vector<1x8xf32> to vector<128x8xf32>
      %27 = arith.subf %14, %26 : vector<128x8xf32>
      %cst_17 = arith.constant 9.99999974E-6 : f32
      %28 = vector.broadcast %cst_17 : f32 to vector<1x8xf32>
      %29 = arith.addf %25, %28 : vector<1x8xf32>
      %30 = math.rsqrt %29 : vector<1x8xf32>
      %31 = vector.broadcast %30 : vector<1x8xf32> to vector<128x8xf32>
      %32 = arith.mulf %27, %31 : vector<128x8xf32>
      %33 = arith.truncf %32 : vector<128x8xf32> to vector<128x8xbf16>
      %c0_18 = arith.constant 0 : index
      %c0_19 = arith.constant 0 : index
      %34 = vector.load %arg4[%c0_18, %c0_19] : memref<128x8xbf16, #tpu.memory_space<vmem>>, vector<128x8xbf16>
      tpu.vector_store %arg4[%c0_18, %c0_19], %33 {strides = array<i32>} : memref<128x8xbf16, #tpu.memory_space<vmem>>, vector<128x8xbf16>,
    } else {
    }
    return
  }
  func.func @transform_0(%arg0: i32, %arg1: i32) -> (i32, i32) {
    %c0_i32 = arith.constant 0 : i32
    %c0_i32_0 = arith.constant 0 : i32
    return %c0_i32, %arg1 : i32, i32
  }
  func.func @transform_1(%arg0: i32, %arg1: i32) -> (i32, i32) {
    %c0_i32 = arith.constant 0 : i32
    return %arg1, %arg0 : i32, i32
  }
  func.func @transform_2(%arg0: i32, %arg1: i32) -> (i32, i32) {
    %c0_i32 = arith.constant 0 : i32
    %c0_i32_0 = arith.constant 0 : i32
    return %c0_i32, %arg0 : i32, i32
  }
}

module attributes {stable_mosaic.version = 11 : i64} {
  func.func @_matmul_bn_kernel(%arg0: i32, %arg1: i32, %arg2: memref<128x8xbf16, #tpu.memory_space<vmem>>, %arg3: memref<8x4xbf16, #tpu.memory_space<vmem>>, %arg4: memref<128x4xbf16, #tpu.memory_space<vmem>>, %arg5: memref<128x4xf32, #tpu.memory_space<vmem>>) attributes {dimension_semantics = [#tpu.dimension_semantics<parallel>, #tpu.dimension_semantics<arbitrary>], iteration_bounds = array<i64: 1, 1>, scalar_prefetch = 0 : i64, scratch_operands = 1 : i64, tpu.core_type = #tpu.core_type<tc>, window_params = [{transform_indices = @transform_0, window_bounds = array<i64: 128, 8>}, {transform_indices = @transform_1, window_bounds = array<i64: 8, 4>}, {transform_indices = @transform_2, window_bounds = array<i64: 128, 4>}]} {
    %c0_i32 = arith.constant 0 : i32
    %0 = arith.cmpi eq, %arg1, %c0_i32 : i32
    %1 = arith.extui %0 : i1 to i32
    %c0_i32_0 = arith.constant 0 : i32
    %2 = arith.cmpi ne, %1, %c0_i32_0 : i32
    scf.if %2 {
      %cst_11 = arith.constant 0.000000e+00 : f32
      %14 = vector.broadcast %cst_11 : f32 to vector<128x4xf32>
      %c0_12 = arith.constant 0 : index
      %c0_13 = arith.constant 0 : index
      %15 = vector.load %arg5[%c0_12, %c0_13] : memref<128x4xf32, #tpu.memory_space<vmem>>, vector<128x4xf32>
      tpu.vector_store %arg5[%c0_12, %c0_13], %14 {strides = array<i32>} : memref<128x4xf32, #tpu.memory_space<vmem>>, vector<128x4xf32>,
    } else {
    }
    %c0 = arith.constant 0 : index
    %c0_1 = arith.constant 0 : index
    %3 = vector.load %arg2[%c0, %c0_1] : memref<128x8xbf16, #tpu.memory_space<vmem>>, vector<128x8xbf16>
    %cst = arith.constant 0.000000e+00 : bf16
    %4 = vector.broadcast %cst : bf16 to vector<128x8xbf16>
    %5 = arith.maximumf %3, %4 : vector<128x8xbf16>
    %c0_2 = arith.constant 0 : index
    %c0_3 = arith.constant 0 : index
    %6 = vector.load %arg5[%c0_2, %c0_3] : memref<128x4xf32, #tpu.memory_space<vmem>>, vector<128x4xf32>
    %c0_4 = arith.constant 0 : index
    %c0_5 = arith.constant 0 : index
    %7 = vector.load %arg3[%c0_4, %c0_5] : memref<8x4xbf16, #tpu.memory_space<vmem>>, vector<8x4xbf16>
    %cst_6 = arith.constant dense<0.000000e+00> : vector<128x4xf32>
    %8 = tpu.matmul %5, %7, %cst_6 {dimension_numbers = #tpu.dot_dimension_numbers<[1], [0], [0], [1], [0, 0, 1, 1], [], []>} : vector<128x8xbf16>, vector<8x4xbf16>, vector<128x4xf32> -> vector<128x4xf32>
    %9 = arith.addf %6, %8 : vector<128x4xf32>
    %c0_7 = arith.constant 0 : index
    %c0_8 = arith.constant 0 : index
    %10 = vector.load %arg5[%c0_7, %c0_8] : memref<128x4xf32, #tpu.memory_space<vmem>>, vector<128x4xf32>
    tpu.vector_store %arg5[%c0_7, %c0_8], %9 {strides = array<i32>} : memref<128x4xf32, #tpu.memory_space<vmem>>, vector<128x4xf32>,
    %c0_i32_9 = arith.constant 0 : i32
    %11 = arith.cmpi eq, %arg1, %c0_i32_9 : i32
    %12 = arith.extui %11 : i1 to i32
    %c0_i32_10 = arith.constant 0 : i32
    %13 = arith.cmpi ne, %12, %c0_i32_10 : i32
    scf.if %13 {
      %c0_11 = arith.constant 0 : index
      %c0_12 = arith.constant 0 : index
      %14 = vector.load %arg5[%c0_11, %c0_12] : memref<128x4xf32, #tpu.memory_space<vmem>>, vector<128x4xf32>
      %cst_13 = arith.constant dense<0.000000e+00> : vector<4xf32>
      %15 = vector.multi_reduction <add>, %14, %cst_13 [0] : vector<128x4xf32> to vector<4xf32>
      %16 = vector.shape_cast %15 : vector<4xf32> to vector<1x4xf32>
      %cst_14 = arith.constant 7.812500e-03 : f32
      %17 = vector.broadcast %cst_14 : f32 to vector<1x4xf32>
      %18 = arith.mulf %16, %17 : vector<1x4xf32>
      %19 = vector.broadcast %18 : vector<1x4xf32> to vector<128x4xf32>
      %20 = arith.subf %14, %19 : vector<128x4xf32>
      %21 = arith.mulf %20, %20 : vector<128x4xf32>
      %cst_15 = arith.constant dense<0.000000e+00> : vector<4xf32>
      %22 = vector.multi_reduction <add>, %21, %cst_15 [0] : vector<128x4xf32> to vector<4xf32>
      %23 = vector.shape_cast %22 : vector<4xf32> to vector<1x4xf32>
      %cst_16 = arith.constant 7.812500e-03 : f32
      %24 = vector.broadcast %cst_16 : f32 to vector<1x4xf32>
      %25 = arith.mulf %23, %24 : vector<1x4xf32>
      %26 = vector.broadcast %18 : vector<1x4xf32> to vector<128x4xf32>
      %27 = arith.subf %14, %26 : vector<128x4xf32>
      %cst_17 = arith.constant 9.99999974E-6 : f32
      %28 = vector.broadcast %cst_17 : f32 to vector<1x4xf32>
      %29 = arith.addf %25, %28 : vector<1x4xf32>
      %30 = math.rsqrt %29 : vector<1x4xf32>
      %31 = vector.broadcast %30 : vector<1x4xf32> to vector<128x4xf32>
      %32 = arith.mulf %27, %31 : vector<128x4xf32>
      %33 = arith.truncf %32 : vector<128x4xf32> to vector<128x4xbf16>
      %c0_18 = arith.constant 0 : index
      %c0_19 = arith.constant 0 : index
      %34 = vector.load %arg4[%c0_18, %c0_19] : memref<128x4xbf16, #tpu.memory_space<vmem>>, vector<128x4xbf16>
      tpu.vector_store %arg4[%c0_18, %c0_19], %33 {strides = array<i32>} : memref<128x4xbf16, #tpu.memory_space<vmem>>, vector<128x4xbf16>,
    } else {
    }
    return
  }
  func.func @transform_0(%arg0: i32, %arg1: i32) -> (i32, i32) {
    %c0_i32 = arith.constant 0 : i32
    %c0_i32_0 = arith.constant 0 : i32
    return %c0_i32, %arg1 : i32, i32
  }
  func.func @transform_1(%arg0: i32, %arg1: i32) -> (i32, i32) {
    %c0_i32 = arith.constant 0 : i32
    return %arg1, %arg0 : i32, i32
  }
  func.func @transform_2(%arg0: i32, %arg1: i32) -> (i32, i32) {
    %c0_i32 = arith.constant 0 : i32
    %c0_i32_0 = arith.constant 0 : i32
    return %c0_i32, %arg0 : i32, i32
  }
}

module attributes {stable_mosaic.version = 11 : i64} {
  func.func @_combine_kernel(%arg0: i32, %arg1: memref<4x2x512xbf16, #tpu.memory_space<vmem>>, %arg2: memref<2x4xf32, #tpu.memory_space<vmem>>, %arg3: memref<2x512xbf16, #tpu.memory_space<vmem>>) attributes {dimension_semantics = [#tpu.dimension_semantics<arbitrary>], iteration_bounds = array<i64: 1>, scalar_prefetch = 0 : i64, scratch_operands = 0 : i64, tpu.core_type = #tpu.core_type<tc>, window_params = [{pipeline_mode = #tpu.pipeline_mode<synchronous>, transform_indices = @transform_0, window_bounds = array<i64: 4, 2, 512>}, {pipeline_mode = #tpu.pipeline_mode<synchronous>, transform_indices = @transform_1, window_bounds = array<i64: 2, 4>}, {pipeline_mode = #tpu.pipeline_mode<synchronous>, transform_indices = @transform_2, window_bounds = array<i64: 2, 512>}]} {
    %c0 = arith.constant 0 : index
    %c0_0 = arith.constant 0 : index
    %0 = vector.load %arg2[%c0, %c0_0] : memref<2x4xf32, #tpu.memory_space<vmem>>, vector<2x1xf32>
    %c0_1 = arith.constant 0 : index
    %c0_2 = arith.constant 0 : index
    %c0_3 = arith.constant 0 : index
    %1 = vector.load %arg1[%c0_1, %c0_2, %c0_3] : memref<4x2x512xbf16, #tpu.memory_space<vmem>>, vector<1x2x512xbf16>
    %2 = vector.shape_cast %1 : vector<1x2x512xbf16> to vector<2x512xbf16>
    %3 = arith.extf %2 : vector<2x512xbf16> to vector<2x512xf32>
    %4 = vector.broadcast %0 : vector<2x1xf32> to vector<2x512xf32>
    %5 = arith.mulf %4, %3 : vector<2x512xf32>
    %c0_4 = arith.constant 0 : index
    %c1 = arith.constant 1 : index
    %6 = vector.load %arg2[%c0_4, %c1] : memref<2x4xf32, #tpu.memory_space<vmem>>, vector<2x1xf32>
    %c1_5 = arith.constant 1 : index
    %c0_6 = arith.constant 0 : index
    %c0_7 = arith.constant 0 : index
    %7 = vector.load %arg1[%c1_5, %c0_6, %c0_7] : memref<4x2x512xbf16, #tpu.memory_space<vmem>>, vector<1x2x512xbf16>
    %8 = vector.shape_cast %7 : vector<1x2x512xbf16> to vector<2x512xbf16>
    %9 = arith.extf %8 : vector<2x512xbf16> to vector<2x512xf32>
    %10 = vector.broadcast %6 : vector<2x1xf32> to vector<2x512xf32>
    %11 = arith.mulf %10, %9 : vector<2x512xf32>
    %12 = arith.addf %5, %11 : vector<2x512xf32>
    %c0_8 = arith.constant 0 : index
    %c2 = arith.constant 2 : index
    %13 = vector.load %arg2[%c0_8, %c2] : memref<2x4xf32, #tpu.memory_space<vmem>>, vector<2x1xf32>
    %c2_9 = arith.constant 2 : index
    %c0_10 = arith.constant 0 : index
    %c0_11 = arith.constant 0 : index
    %14 = vector.load %arg1[%c2_9, %c0_10, %c0_11] : memref<4x2x512xbf16, #tpu.memory_space<vmem>>, vector<1x2x512xbf16>
    %15 = vector.shape_cast %14 : vector<1x2x512xbf16> to vector<2x512xbf16>
    %16 = arith.extf %15 : vector<2x512xbf16> to vector<2x512xf32>
    %17 = vector.broadcast %13 : vector<2x1xf32> to vector<2x512xf32>
    %18 = arith.mulf %17, %16 : vector<2x512xf32>
    %19 = arith.addf %12, %18 : vector<2x512xf32>
    %c0_12 = arith.constant 0 : index
    %c3 = arith.constant 3 : index
    %20 = vector.load %arg2[%c0_12, %c3] : memref<2x4xf32, #tpu.memory_space<vmem>>, vector<2x1xf32>
    %c3_13 = arith.constant 3 : index
    %c0_14 = arith.constant 0 : index
    %c0_15 = arith.constant 0 : index
    %21 = vector.load %arg1[%c3_13, %c0_14, %c0_15] : memref<4x2x512xbf16, #tpu.memory_space<vmem>>, vector<1x2x512xbf16>
    %22 = vector.shape_cast %21 : vector<1x2x512xbf16> to vector<2x512xbf16>
    %23 = arith.extf %22 : vector<2x512xbf16> to vector<2x512xf32>
    %24 = vector.broadcast %20 : vector<2x1xf32> to vector<2x512xf32>
    %25 = arith.mulf %24, %23 : vector<2x512xf32>
    %26 = arith.addf %19, %25 : vector<2x512xf32>
    %27 = arith.truncf %26 : vector<2x512xf32> to vector<2x512xbf16>
    %c0_16 = arith.constant 0 : index
    %c0_17 = arith.constant 0 : index
    %28 = vector.load %arg3[%c0_16, %c0_17] : memref<2x512xbf16, #tpu.memory_space<vmem>>, vector<2x512xbf16>
    tpu.vector_store %arg3[%c0_16, %c0_17], %27 {strides = array<i32>} : memref<2x512xbf16, #tpu.memory_space<vmem>>, vector<2x512xbf16>,
    return
  }
  func.func @transform_0(%arg0: i32) -> (i32, i32, i32) {
    %c0_i32 = arith.constant 0 : i32
    %c0_i32_0 = arith.constant 0 : i32
    %c0_i32_1 = arith.constant 0 : i32
    %c0_i32_2 = arith.constant 0 : i32
    return %c0_i32, %c0_i32_0, %c0_i32_1 : i32, i32, i32
  }
  func.func @transform_1(%arg0: i32) -> (i32, i32) {
    %c0_i32 = arith.constant 0 : i32
    %c0_i32_0 = arith.constant 0 : i32
    %c0_i32_1 = arith.constant 0 : i32
    return %c0_i32, %c0_i32_0 : i32, i32
  }
  func.func @transform_2(%arg0: i32) -> (i32, i32) {
    %c0_i32 = arith.constant 0 : i32
    %c0_i32_0 = arith.constant 0 : i32
    %c0_i32_1 = arith.constant 0 : i32
    return %c0_i32, %c0_i32_0 : i32, i32
  }
}

module attributes {stable_mosaic.version = 11 : i64} {
  func.func @_matmul_bn_kernel(%arg0: i32, %arg1: i32, %arg2: memref<128x16xbf16, #tpu.memory_space<vmem>>, %arg3: memref<16x16xbf16, #tpu.memory_space<vmem>>, %arg4: memref<128x16xbf16, #tpu.memory_space<vmem>>, %arg5: memref<128x16xf32, #tpu.memory_space<vmem>>) attributes {dimension_semantics = [#tpu.dimension_semantics<parallel>, #tpu.dimension_semantics<arbitrary>], iteration_bounds = array<i64: 1, 1>, scalar_prefetch = 0 : i64, scratch_operands = 1 : i64, tpu.core_type = #tpu.core_type<tc>, window_params = [{transform_indices = @transform_0, window_bounds = array<i64: 128, 16>}, {transform_indices = @transform_1, window_bounds = array<i64: 16, 16>}, {transform_indices = @transform_2, window_bounds = array<i64: 128, 16>}]} {
    %c0_i32 = arith.constant 0 : i32
    %0 = arith.cmpi eq, %arg1, %c0_i32 : i32
    %1 = arith.extui %0 : i1 to i32
    %c0_i32_0 = arith.constant 0 : i32
    %2 = arith.cmpi ne, %1, %c0_i32_0 : i32
    scf.if %2 {
      %cst_11 = arith.constant 0.000000e+00 : f32
      %14 = vector.broadcast %cst_11 : f32 to vector<128x16xf32>
      %c0_12 = arith.constant 0 : index
      %c0_13 = arith.constant 0 : index
      %15 = vector.load %arg5[%c0_12, %c0_13] : memref<128x16xf32, #tpu.memory_space<vmem>>, vector<128x16xf32>
      tpu.vector_store %arg5[%c0_12, %c0_13], %14 {strides = array<i32>} : memref<128x16xf32, #tpu.memory_space<vmem>>, vector<128x16xf32>,
    } else {
    }
    %c0 = arith.constant 0 : index
    %c0_1 = arith.constant 0 : index
    %3 = vector.load %arg2[%c0, %c0_1] : memref<128x16xbf16, #tpu.memory_space<vmem>>, vector<128x16xbf16>
    %cst = arith.constant 0.000000e+00 : bf16
    %4 = vector.broadcast %cst : bf16 to vector<128x16xbf16>
    %5 = arith.maximumf %3, %4 : vector<128x16xbf16>
    %c0_2 = arith.constant 0 : index
    %c0_3 = arith.constant 0 : index
    %6 = vector.load %arg5[%c0_2, %c0_3] : memref<128x16xf32, #tpu.memory_space<vmem>>, vector<128x16xf32>
    %c0_4 = arith.constant 0 : index
    %c0_5 = arith.constant 0 : index
    %7 = vector.load %arg3[%c0_4, %c0_5] : memref<16x16xbf16, #tpu.memory_space<vmem>>, vector<16x16xbf16>
    %cst_6 = arith.constant dense<0.000000e+00> : vector<128x16xf32>
    %8 = tpu.matmul %5, %7, %cst_6 {dimension_numbers = #tpu.dot_dimension_numbers<[1], [0], [0], [1], [0, 0, 1, 1], [], []>} : vector<128x16xbf16>, vector<16x16xbf16>, vector<128x16xf32> -> vector<128x16xf32>
    %9 = arith.addf %6, %8 : vector<128x16xf32>
    %c0_7 = arith.constant 0 : index
    %c0_8 = arith.constant 0 : index
    %10 = vector.load %arg5[%c0_7, %c0_8] : memref<128x16xf32, #tpu.memory_space<vmem>>, vector<128x16xf32>
    tpu.vector_store %arg5[%c0_7, %c0_8], %9 {strides = array<i32>} : memref<128x16xf32, #tpu.memory_space<vmem>>, vector<128x16xf32>,
    %c0_i32_9 = arith.constant 0 : i32
    %11 = arith.cmpi eq, %arg1, %c0_i32_9 : i32
    %12 = arith.extui %11 : i1 to i32
    %c0_i32_10 = arith.constant 0 : i32
    %13 = arith.cmpi ne, %12, %c0_i32_10 : i32
    scf.if %13 {
      %c0_11 = arith.constant 0 : index
      %c0_12 = arith.constant 0 : index
      %14 = vector.load %arg5[%c0_11, %c0_12] : memref<128x16xf32, #tpu.memory_space<vmem>>, vector<128x16xf32>
      %cst_13 = arith.constant dense<0.000000e+00> : vector<16xf32>
      %15 = vector.multi_reduction <add>, %14, %cst_13 [0] : vector<128x16xf32> to vector<16xf32>
      %16 = vector.shape_cast %15 : vector<16xf32> to vector<1x16xf32>
      %cst_14 = arith.constant 7.812500e-03 : f32
      %17 = vector.broadcast %cst_14 : f32 to vector<1x16xf32>
      %18 = arith.mulf %16, %17 : vector<1x16xf32>
      %19 = vector.broadcast %18 : vector<1x16xf32> to vector<128x16xf32>
      %20 = arith.subf %14, %19 : vector<128x16xf32>
      %21 = arith.mulf %20, %20 : vector<128x16xf32>
      %cst_15 = arith.constant dense<0.000000e+00> : vector<16xf32>
      %22 = vector.multi_reduction <add>, %21, %cst_15 [0] : vector<128x16xf32> to vector<16xf32>
      %23 = vector.shape_cast %22 : vector<16xf32> to vector<1x16xf32>
      %cst_16 = arith.constant 7.812500e-03 : f32
      %24 = vector.broadcast %cst_16 : f32 to vector<1x16xf32>
      %25 = arith.mulf %23, %24 : vector<1x16xf32>
      %26 = vector.broadcast %18 : vector<1x16xf32> to vector<128x16xf32>
      %27 = arith.subf %14, %26 : vector<128x16xf32>
      %cst_17 = arith.constant 9.99999974E-6 : f32
      %28 = vector.broadcast %cst_17 : f32 to vector<1x16xf32>
      %29 = arith.addf %25, %28 : vector<1x16xf32>
      %30 = math.rsqrt %29 : vector<1x16xf32>
      %31 = vector.broadcast %30 : vector<1x16xf32> to vector<128x16xf32>
      %32 = arith.mulf %27, %31 : vector<128x16xf32>
      %33 = arith.truncf %32 : vector<128x16xf32> to vector<128x16xbf16>
      %c0_18 = arith.constant 0 : index
      %c0_19 = arith.constant 0 : index
      %34 = vector.load %arg4[%c0_18, %c0_19] : memref<128x16xbf16, #tpu.memory_space<vmem>>, vector<128x16xbf16>
      tpu.vector_store %arg4[%c0_18, %c0_19], %33 {strides = array<i32>} : memref<128x16xbf16, #tpu.memory_space<vmem>>, vector<128x16xbf16>,
    } else {
    }
    return
  }
  func.func @transform_0(%arg0: i32, %arg1: i32) -> (i32, i32) {
    %c0_i32 = arith.constant 0 : i32
    %c0_i32_0 = arith.constant 0 : i32
    return %c0_i32, %arg1 : i32, i32
  }
  func.func @transform_1(%arg0: i32, %arg1: i32) -> (i32, i32) {
    %c0_i32 = arith.constant 0 : i32
    return %arg1, %arg0 : i32, i32
  }
  func.func @transform_2(%arg0: i32, %arg1: i32) -> (i32, i32) {
    %c0_i32 = arith.constant 0 : i32
    %c0_i32_0 = arith.constant 0 : i32
    return %c0_i32, %arg0 : i32, i32
  }
}

module attributes {stable_mosaic.version = 11 : i64} {
  func.func @_gap_linear_kernel(%arg0: i32, %arg1: memref<2x16x32xbf16, #tpu.memory_space<vmem>>, %arg2: memref<32x10xf32, #tpu.memory_space<vmem>>, %arg3: memref<1x10xf32, #tpu.memory_space<vmem>>, %arg4: memref<2x10xf32, #tpu.memory_space<vmem>>) attributes {dimension_semantics = [#tpu.dimension_semantics<arbitrary>], iteration_bounds = array<i64: 1>, scalar_prefetch = 0 : i64, scratch_operands = 0 : i64, tpu.core_type = #tpu.core_type<tc>, window_params = [{pipeline_mode = #tpu.pipeline_mode<synchronous>, transform_indices = @transform_0, window_bounds = array<i64: 2, 16, 32>}, {pipeline_mode = #tpu.pipeline_mode<synchronous>, transform_indices = @transform_1, window_bounds = array<i64: 32, 10>}, {pipeline_mode = #tpu.pipeline_mode<synchronous>, transform_indices = @transform_2, window_bounds = array<i64: 1, 10>}, {pipeline_mode = #tpu.pipeline_mode<synchronous>, transform_indices = @transform_3, window_bounds = array<i64: 2, 10>}]} {
    %c0 = arith.constant 0 : index
    %c0_0 = arith.constant 0 : index
    %c0_1 = arith.constant 0 : index
    %0 = vector.load %arg1[%c0, %c0_0, %c0_1] : memref<2x16x32xbf16, #tpu.memory_space<vmem>>, vector<2x16x32xbf16>
    %1 = arith.extf %0 : vector<2x16x32xbf16> to vector<2x16x32xf32>
    %cst = arith.constant dense<0.000000e+00> : vector<2x32xf32>
    %2 = vector.multi_reduction <add>, %1, %cst [1] : vector<2x16x32xf32> to vector<2x32xf32>
    %cst_2 = arith.constant 6.250000e-02 : f32
    %3 = vector.broadcast %cst_2 : f32 to vector<2x32xf32>
    %4 = arith.mulf %2, %3 : vector<2x32xf32>
    %c0_3 = arith.constant 0 : index
    %c0_4 = arith.constant 0 : index
    %5 = vector.load %arg2[%c0_3, %c0_4] : memref<32x10xf32, #tpu.memory_space<vmem>>, vector<32x10xf32>
    %cst_5 = arith.constant dense<0.000000e+00> : vector<2x10xf32>
    %6 = tpu.matmul %4, %5, %cst_5 {dimension_numbers = #tpu.dot_dimension_numbers<[1], [0], [0], [1], [0, 0, 1, 1], [], []>} : vector<2x32xf32>, vector<32x10xf32>, vector<2x10xf32> -> vector<2x10xf32>
    %c0_6 = arith.constant 0 : index
    %c0_7 = arith.constant 0 : index
    %7 = vector.load %arg3[%c0_6, %c0_7] : memref<1x10xf32, #tpu.memory_space<vmem>>, vector<1x10xf32>
    %8 = vector.broadcast %7 : vector<1x10xf32> to vector<2x10xf32>
    %9 = arith.addf %6, %8 : vector<2x10xf32>
    %c0_8 = arith.constant 0 : index
    %c0_9 = arith.constant 0 : index
    %10 = vector.load %arg4[%c0_8, %c0_9] : memref<2x10xf32, #tpu.memory_space<vmem>>, vector<2x10xf32>
    tpu.vector_store %arg4[%c0_8, %c0_9], %9 {strides = array<i32>} : memref<2x10xf32, #tpu.memory_space<vmem>>, vector<2x10xf32>,
    return
  }
  func.func @transform_0(%arg0: i32) -> (i32, i32, i32) {
    %c0_i32 = arith.constant 0 : i32
    %c0_i32_0 = arith.constant 0 : i32
    %c0_i32_1 = arith.constant 0 : i32
    %c0_i32_2 = arith.constant 0 : i32
    return %c0_i32, %c0_i32_0, %c0_i32_1 : i32, i32, i32
  }
  func.func @transform_1(%arg0: i32) -> (i32, i32) {
    %c0_i32 = arith.constant 0 : i32
    %c0_i32_0 = arith.constant 0 : i32
    %c0_i32_1 = arith.constant 0 : i32
    return %c0_i32, %c0_i32_0 : i32, i32
  }
  func.func @transform_2(%arg0: i32) -> (i32, i32) {
    %c0_i32 = arith.constant 0 : i32
    %c0_i32_0 = arith.constant 0 : i32
    %c0_i32_1 = arith.constant 0 : i32
    return %c0_i32, %c0_i32_0 : i32, i32
  }
  func.func @transform_3(%arg0: i32) -> (i32, i32) {
    %c0_i32 = arith.constant 0 : i32
    %c0_i32_0 = arith.constant 0 : i32
    %c0_i32_1 = arith.constant 0 : i32
    return %c0_i32, %c0_i32_0 : i32, i32
  }
}

</mosaic_0001>

<llo_original>
// kernel: _lambda_.65
$region0: #{_lambda_.65}
  #allocation0 [shape = 'u32[]', space=smem, size = 0x4, offset = 0x4, fixed_abs, tag = 'smem constant byte address 0x4 - core index']
  #allocation1 [shape = 'u32[72,128]{1,0:T(1,128)}', space=vmem, size = 0x9000, scoped, tag = 'internal scratch']
  #allocation2 [shape = 'f32[128,8]{1,0:T(8,128)}', space=vmem, size = 0x10000, scoped, tag = 'scratch operand']
  %s0 = inlined_call_operand.vmem [shape: bf16[128,12], index: 0, kind: input, shape index: {}]
  %s1 = inlined_call_operand.vmem [shape: bf16[12,8], index: 1, kind: input, shape index: {}]
  %s2 = inlined_call_operand.vmem [shape: bf16[128,8], index: 2, kind: output, shape index: {}]
  %s3 = sld [smem:[#allocation0]]
  $region26: #{_lambda_.65} parent=0
    _
  %s5 = ssub.s32 1, %s3
  %s6 = scalar_select 0, %s5, %s3
  // Predicated region
  $region2: #{_lambda_.65} parent=0 // pred_check
    _
  $region3: #{_lambda_.65} parent=0 // pred_check_branch
    %8 = sbr.rel (0) target = $region5
  $region4: #{_lambda_.65} parent=0 // pred_region
    _
  $region5: #{_lambda_.65} parent=0 // pred_fallthru
    _
  // Predicated region
  $region6: #{_lambda_.65} parent=0 // pred_check
    _
  $region7: #{_lambda_.65} parent=0 // pred_check_branch
    %10 = sbr.rel (0) target = $region9
  $region8: #{_lambda_.65} parent=0 // pred_region
    _
  $region9: #{_lambda_.65} parent=0 // pred_fallthru
    _
  %p12 = scmp.eq.s32.totalorder 0, 0
  // Predicated region
  $region10: #{_lambda_.65} parent=0 // pred_check
    %p13 = pneg %p12
  $region11: #{_lambda_.65} parent=0 // pred_check_branch
    %15 = sbr.rel (%p13) target = $region13
  $region12: #{_lambda_.65} parent=0 // pred_region
    %vm16 = vcmask 64512
    %17 = vst.msk [vmem:[#allocation2] sm:$0xff] %vm16, 0.0
    %18 = vst.msk [vmem:[#allocation2 + $0x8] sm:$0xff] %vm16, 0.0
    %19 = vst.msk [vmem:[#allocation2 + $0x10] sm:$0xff] %vm16, 0.0
    %20 = vst.msk [vmem:[#allocation2 + $0x18] sm:$0xff] %vm16, 0.0
    %21 = vst.msk [vmem:[#allocation2 + $0x20] sm:$0xff] %vm16, 0.0
    %22 = vst.msk [vmem:[#allocation2 + $0x28] sm:$0xff] %vm16, 0.0
    %23 = vst.msk [vmem:[#allocation2 + $0x30] sm:$0xff] %vm16, 0.0
    %24 = vst.msk [vmem:[#allocation2 + $0x38] sm:$0xff] %vm16, 0.0
    %25 = vst.msk [vmem:[#allocation2 + $0x40] sm:$0xff] %vm16, 0.0
    %26 = vst.msk [vmem:[#allocation2 + $0x48] sm:$0xff] %vm16, 0.0
    %27 = vst.msk [vmem:[#allocation2 + $0x50] sm:$0xff] %vm16, 0.0
    %28 = vst.msk [vmem:[#allocation2 + $0x58] sm:$0xff] %vm16, 0.0
    %29 = vst.msk [vmem:[#allocation2 + $0x60] sm:$0xff] %vm16, 0.0
    %30 = vst.msk [vmem:[#allocation2 + $0x68] sm:$0xff] %vm16, 0.0
    %31 = vst.msk [vmem:[#allocation2 + $0x70] sm:$0xff] %vm16, 0.0
    %32 = vst.msk [vmem:[#allocation2 + $0x78] sm:$0xff] %vm16, 0.0
  $region13: #{_lambda_.65} parent=0 // pred_fallthru
    _
  %v33 = vld [vmem:[%s0] sm:$0xf]
  %v34 = vld [vmem:[%s0 + $0x4] sm:$0xf]
  %v35 = vld [vmem:[%s0 + $0x8] sm:$0xf]
  %v36 = vld [vmem:[%s0 + $0xc] sm:$0xf]
  %v37 = vld [vmem:[%s0 + $0x10] sm:$0xf]
  %v38 = vld [vmem:[%s0 + $0x14] sm:$0xf]
  %v39 = vld [vmem:[%s0 + $0x18] sm:$0xf]
  %v40 = vld [vmem:[%s0 + $0x1c] sm:$0xf]
  %v41 = vld [vmem:[%s0 + $0x20] sm:$0xf]
  %v42 = vld [vmem:[%s0 + $0x24] sm:$0xf]
  %v43 = vld [vmem:[%s0 + $0x28] sm:$0xf]
  %v44 = vld [vmem:[%s0 + $0x2c] sm:$0xf]
  %v45 = vld [vmem:[%s0 + $0x30] sm:$0xf]
  %v46 = vld [vmem:[%s0 + $0x34] sm:$0xf]
  %v47 = vld [vmem:[%s0 + $0x38] sm:$0xf]
  %v48 = vld [vmem:[%s0 + $0x3c] sm:$0xf]
  %v49 = vunpack.c.l.bf16 %v33
  %v50 = vunpack.c.l.bf16 %v34
  %v51 = vunpack.c.l.bf16 %v35
  %v52 = vunpack.c.l.bf16 %v36
  %v53 = vunpack.c.l.bf16 %v37
  %v54 = vunpack.c.l.bf16 %v38
  %v55 = vunpack.c.l.bf16 %v39
  %v56 = vunpack.c.l.bf16 %v40
  %v57 = vunpack.c.l.bf16 %v41
  %v58 = vunpack.c.l.bf16 %v42
  %v59 = vunpack.c.l.bf16 %v43
  %v60 = vunpack.c.l.bf16 %v44
  %v61 = vunpack.c.l.bf16 %v45
  %v62 = vunpack.c.l.bf16 %v46
  %v63 = vunpack.c.l.bf16 %v47
  %v64 = vunpack.c.l.bf16 %v48
  %v65 = vmax.f32 %v49, 0.0
  %v66 = vmax.f32 %v50, 0.0
  %v67 = vmax.f32 %v51, 0.0
  %v68 = vmax.f32 %v52, 0.0
  %v69 = vmax.f32 %v53, 0.0
  %v70 = vmax.f32 %v54, 0.0
  %v71 = vmax.f32 %v55, 0.0
  %v72 = vmax.f32 %v56, 0.0
  %v73 = vmax.f32 %v57, 0.0
  %v74 = vmax.f32 %v58, 0.0
  %v75 = vmax.f32 %v59, 0.0
  %v76 = vmax.f32 %v60, 0.0
  %v77 = vmax.f32 %v61, 0.0
  %v78 = vmax.f32 %v62, 0.0
  %v79 = vmax.f32 %v63, 0.0
  %v80 = vmax.f32 %v64, 0.0
  %v81 = vpack.c.bf16 %v66, %v65
  %v82 = vpack.c.bf16 %v68, %v67
  %v83 = vpack.c.bf16 %v70, %v69
  %v84 = vpack.c.bf16 %v72, %v71
  %v85 = vpack.c.bf16 %v74, %v73
  %v86 = vpack.c.bf16 %v76, %v75
  %v87 = vpack.c.bf16 %v78, %v77
  %v88 = vpack.c.bf16 %v80, %v79
  %v89 = vld [vmem:[#allocation2] sm:$0xff]
  %v90 = vld [vmem:[#allocation2 + $0x8] sm:$0xff]
  %v91 = vld [vmem:[#allocation2 + $0x10] sm:$0xff]
  %v92 = vld [vmem:[#allocation2 + $0x18] sm:$0xff]
  %v93 = vld [vmem:[#allocation2 + $0x20] sm:$0xff]
  %v94 = vld [vmem:[#allocation2 + $0x28] sm:$0xff]
  %v95 = vld [vmem:[#allocation2 + $0x30] sm:$0xff]
  %v96 = vld [vmem:[#allocation2 + $0x38] sm:$0xff]
  %v97 = vld [vmem:[#allocation2 + $0x40] sm:$0xff]
  %v98 = vld [vmem:[#allocation2 + $0x48] sm:$0xff]
  %v99 = vld [vmem:[#allocation2 + $0x50] sm:$0xff]
  %v100 = vld [vmem:[#allocation2 + $0x58] sm:$0xff]
  %v101 = vld [vmem:[#allocation2 + $0x60] sm:$0xff]
  %v102 = vld [vmem:[#allocation2 + $0x68] sm:$0xff]
  %v103 = vld [vmem:[#allocation2 + $0x70] sm:$0xff]
  %v104 = vld [vmem:[#allocation2 + $0x78] sm:$0xff]
  %v105 = vld [vmem:[%s1] sm:$0xf]
  %v106 = vld [vmem:[%s1 + $0x4] sm:$0x3]
  %v109 = vunpack.c.l.b16 %v105
  %v110 = vunpack.c.l.b16 %v106
  %v111 = vpack.c.b16 %v110, %v109
  %vm112 = vcmask 97280
  %v114 = vsel %vm112, %v81, 0
  %v117 = vsel %vm112, %v82, 0
  %v120 = vsel %vm112, %v83, 0
  %v123 = vsel %vm112, %v84, 0
  %v126 = vsel %vm112, %v85, 0
  %v129 = vsel %vm112, %v86, 0
  %v132 = vsel %vm112, %v87, 0
  %v135 = vsel %vm112, %v88, 0
  %vm137 = vcmask 1045504
  %v139 = vsel %vm137, %v111, 0
  %141 = vmatpush.bf16.msra.mxu0 0
  %142 = vmatpush.bf16.msra.mxu0 0
  %143 = vmatpush.bf16.msra.mxu0 0
  %144 = vmatpush.bf16.msra.mxu0 0
  %145 = vmatpush.bf16.msra.mxu0 0
  %146 = vmatpush.bf16.msra.mxu0 0
  %147 = vmatpush.bf16.msra.mxu0 0
  %148 = vmatpush.bf16.msra.mxu0 %v139
  %149 = vmatmul.bf16.gmra.mxu0 %v114
  %v150 = vpop.f32.mrf.mxu0
  %v151 = vadd.f32 0.0, %v150
  %v152 = vpop.f32.mrf.mxu0
  %v153 = vadd.f32 0.0, %v152
  %154 = vmatmul.bf16.gmra.mxu0 %v117
  %v155 = vpop.f32.mrf.mxu0
  %v156 = vadd.f32 0.0, %v155
  %v157 = vpop.f32.mrf.mxu0
  %v158 = vadd.f32 0.0, %v157
  %159 = vmatmul.bf16.gmra.mxu0 %v120
  %v160 = vpop.f32.mrf.mxu0
  %v161 = vadd.f32 0.0, %v160
  %v162 = vpop.f32.mrf.mxu0
  %v163 = vadd.f32 0.0, %v162
  %164 = vmatmul.bf16.gmra.mxu0 %v123
  %v165 = vpop.f32.mrf.mxu0
  %v166 = vadd.f32 0.0, %v165
  %v167 = vpop.f32.mrf.mxu0
  %v168 = vadd.f32 0.0, %v167
  %169 = vmatmul.bf16.gmra.mxu0 %v126
  %v170 = vpop.f32.mrf.mxu0
  %v171 = vadd.f32 0.0, %v170
  %v172 = vpop.f32.mrf.mxu0
  %v173 = vadd.f32 0.0, %v172
  %174 = vmatmul.bf16.gmra.mxu0 %v129
  %v175 = vpop.f32.mrf.mxu0
  %v176 = vadd.f32 0.0, %v175
  %v177 = vpop.f32.mrf.mxu0
  %v178 = vadd.f32 0.0, %v177
  %179 = vmatmul.bf16.gmra.mxu0 %v132
  %v180 = vpop.f32.mrf.mxu0
  %v181 = vadd.f32 0.0, %v180
  %v182 = vpop.f32.mrf.mxu0
  %v183 = vadd.f32 0.0, %v182
  %184 = vmatmul.bf16.gmra.mxu0 %v135
  %v185 = vpop.f32.mrf.mxu0
  %v186 = vadd.f32 0.0, %v185
  %v187 = vpop.f32.mrf.mxu0
  %v188 = vadd.f32 0.0, %v187
  %189 = vdwg.mxu0
  %v190 = vadd.f32 %v89, %v151
  %v191 = vadd.f32 %v90, %v153
  %v192 = vadd.f32 %v91, %v156
  %v193 = vadd.f32 %v92, %v158
  %v194 = vadd.f32 %v93, %v161
  %v195 = vadd.f32 %v94, %v163
  %v196 = vadd.f32 %v95, %v166
  %v197 = vadd.f32 %v96, %v168
  %v198 = vadd.f32 %v97, %v171
  %v199 = vadd.f32 %v98, %v173
  %v200 = vadd.f32 %v99, %v176
  %v201 = vadd.f32 %v100, %v178
  %v202 = vadd.f32 %v101, %v181
  %v203 = vadd.f32 %v102, %v183
  %v204 = vadd.f32 %v103, %v186
  %v205 = vadd.f32 %v104, %v188
  %vm206 = vcmask 64512
  %207 = vst.msk [vmem:[#allocation2] sm:$0xff] %vm206, %v190
  %208 = vst.msk [vmem:[#allocation2 + $0x8] sm:$0xff] %vm206, %v191
  %209 = vst.msk [vmem:[#allocation2 + $0x10] sm:$0xff] %vm206, %v192
  %210 = vst.msk [vmem:[#allocation2 + $0x18] sm:$0xff] %vm206, %v193
  %211 = vst.msk [vmem:[#allocation2 + $0x20] sm:$0xff] %vm206, %v194
  %212 = vst.msk [vmem:[#allocation2 + $0x28] sm:$0xff] %vm206, %v195
  %213 = vst.msk [vmem:[#allocation2 + $0x30] sm:$0xff] %vm206, %v196
  %214 = vst.msk [vmem:[#allocation2 + $0x38] sm:$0xff] %vm206, %v197
  %215 = vst.msk [vmem:[#allocation2 + $0x40] sm:$0xff] %vm206, %v198
  %216 = vst.msk [vmem:[#allocation2 + $0x48] sm:$0xff] %vm206, %v199
  %217 = vst.msk [vmem:[#allocation2 + $0x50] sm:$0xff] %vm206, %v200
  %218 = vst.msk [vmem:[#allocation2 + $0x58] sm:$0xff] %vm206, %v201
  %219 = vst.msk [vmem:[#allocation2 + $0x60] sm:$0xff] %vm206, %v202
  %220 = vst.msk [vmem:[#allocation2 + $0x68] sm:$0xff] %vm206, %v203
  %221 = vst.msk [vmem:[#allocation2 + $0x70] sm:$0xff] %vm206, %v204
  %222 = vst.msk [vmem:[#allocation2 + $0x78] sm:$0xff] %vm206, %v205
  // Predicated region
  $region14: #{_lambda_.65} parent=0 // pred_check
    %p223 = pneg %p12
  $region15: #{_lambda_.65} parent=0 // pred_check_branch
    %225 = sbr.rel (%p223) target = $region17
  $region16: #{_lambda_.65} parent=0 // pred_region
    %v226 = vld [vmem:[#allocation2] sm:$0xff]
    %v227 = vld [vmem:[#allocation2 + $0x8] sm:$0xff]
    %v228 = vld [vmem:[#allocation2 + $0x10] sm:$0xff]
    %v229 = vld [vmem:[#allocation2 + $0x18] sm:$0xff]
    %v230 = vld [vmem:[#allocation2 + $0x20] sm:$0xff]
    %v231 = vld [vmem:[#allocation2 + $0x28] sm:$0xff]
    %v232 = vld [vmem:[#allocation2 + $0x30] sm:$0xff]
    %v233 = vld [vmem:[#allocation2 + $0x38] sm:$0xff]
    %v234 = vld [vmem:[#allocation2 + $0x40] sm:$0xff]
    %v235 = vld [vmem:[#allocation2 + $0x48] sm:$0xff]
    %v236 = vld [vmem:[#allocation2 + $0x50] sm:$0xff]
    %v237 = vld [vmem:[#allocation2 + $0x58] sm:$0xff]
    %v238 = vld [vmem:[#allocation2 + $0x60] sm:$0xff]
    %v239 = vld [vmem:[#allocation2 + $0x68] sm:$0xff]
    %v240 = vld [vmem:[#allocation2 + $0x70] sm:$0xff]
    %v241 = vld [vmem:[#allocation2 + $0x78] sm:$0xff]
    %v242 = vsel %vm206, %v226, 0.0
    %v243 = vsel %vm206, %v227, 0.0
    %v244 = vadd.f32 %v242, %v243
    %v245 = vsel %vm206, %v228, 0.0
    %v246 = vadd.f32 %v244, %v245
    %v247 = vsel %vm206, %v229, 0.0
    %v248 = vadd.f32 %v246, %v247
    %v249 = vsel %vm206, %v230, 0.0
    %v250 = vadd.f32 %v248, %v249
    %v251 = vsel %vm206, %v231, 0.0
    %v252 = vadd.f32 %v250, %v251
    %v253 = vsel %vm206, %v232, 0.0
    %v254 = vadd.f32 %v252, %v253
    %v255 = vsel %vm206, %v233, 0.0
    %v256 = vadd.f32 %v254, %v255
    %v257 = vsel %vm206, %v234, 0.0
    %v258 = vadd.f32 %v256, %v257
    %v259 = vsel %vm206, %v235, 0.0
    %v260 = vadd.f32 %v258, %v259
    %v261 = vsel %vm206, %v236, 0.0
    %v262 = vadd.f32 %v260, %v261
    %v263 = vsel %vm206, %v237, 0.0
    %v264 = vadd.f32 %v262, %v263
    %v265 = vsel %vm206, %v238, 0.0
    %v266 = vadd.f32 %v264, %v265
    %v267 = vsel %vm206, %v239, 0.0
    %v268 = vadd.f32 %v266, %v267
    %v269 = vsel %vm206, %v240, 0.0
    %v270 = vadd.f32 %v268, %v269
    %v271 = vsel %vm206, %v241, 0.0
    %v272 = vadd.f32 %v270, %v271
    %v273 = vrot.slane %v272, 4
    %v274 = vadd.f32 %v272, %v273
    %v275 = vrot.slane %v274, 2
    %v276 = vadd.f32 %v274, %v275
    %v277 = vrot.slane %v276, 1
    %v278 = vadd.f32 %v276, %v277
    %v279 = vmul.f32 %v278, 0.0078125
    %v280 = vsub.f32 %v226, %v279
    %v281 = vsub.f32 %v227, %v279
    %v282 = vsub.f32 %v228, %v279
    %v283 = vsub.f32 %v229, %v279
    %v284 = vsub.f32 %v230, %v279
    %v285 = vsub.f32 %v231, %v279
    %v286 = vsub.f32 %v232, %v279
    %v287 = vsub.f32 %v233, %v279
    %v288 = vsub.f32 %v234, %v279
    %v289 = vsub.f32 %v235, %v279
    %v290 = vsub.f32 %v236, %v279
    %v291 = vsub.f32 %v237, %v279
    %v292 = vsub.f32 %v238, %v279
    %v293 = vsub.f32 %v239, %v279
    %v294 = vsub.f32 %v240, %v279
    %v295 = vsub.f32 %v241, %v279
    %v296 = vmul.f32 %v280, %v280
    %v297 = vmul.f32 %v281, %v281
    %v298 = vmul.f32 %v282, %v282
    %v299 = vmul.f32 %v283, %v283
    %v300 = vmul.f32 %v284, %v284
    %v301 = vmul.f32 %v285, %v285
    %v302 = vmul.f32 %v286, %v286
    %v303 = vmul.f32 %v287, %v287
    %v304 = vmul.f32 %v288, %v288
    %v305 = vmul.f32 %v289, %v289
    %v306 = vmul.f32 %v290, %v290
    %v307 = vmul.f32 %v291, %v291
    %v308 = vmul.f32 %v292, %v292
    %v309 = vmul.f32 %v293, %v293
    %v310 = vmul.f32 %v294, %v294
    %v311 = vmul.f32 %v295, %v295
    %v312 = vsel %vm206, %v296, 0.0
    %v313 = vsel %vm206, %v297, 0.0
    %v314 = vadd.f32 %v312, %v313
    %v315 = vsel %vm206, %v298, 0.0
    %v316 = vadd.f32 %v314, %v315
    %v317 = vsel %vm206, %v299, 0.0
    %v318 = vadd.f32 %v316, %v317
    %v319 = vsel %vm206, %v300, 0.0
    %v320 = vadd.f32 %v318, %v319
    %v321 = vsel %vm206, %v301, 0.0
    %v322 = vadd.f32 %v320, %v321
    %v323 = vsel %vm206, %v302, 0.0
    %v324 = vadd.f32 %v322, %v323
    %v325 = vsel %vm206, %v303, 0.0
    %v326 = vadd.f32 %v324, %v325
    %v327 = vsel %vm206, %v304, 0.0
    %v328 = vadd.f32 %v326, %v327
    %v329 = vsel %vm206, %v305, 0.0
    %v330 = vadd.f32 %v328, %v329
    %v331 = vsel %vm206, %v306, 0.0
    %v332 = vadd.f32 %v330, %v331
    %v333 = vsel %vm206, %v307, 0.0
    %v334 = vadd.f32 %v332, %v333
    %v335 = vsel %vm206, %v308, 0.0
    %v336 = vadd.f32 %v334, %v335
    %v337 = vsel %vm206, %v309, 0.0
    %v338 = vadd.f32 %v336, %v337
    %v339 = vsel %vm206, %v310, 0.0
    %v340 = vadd.f32 %v338, %v339
    %v341 = vsel %vm206, %v311, 0.0
    %v342 = vadd.f32 %v340, %v341
    %v343 = vrot.slane %v342, 4
    %v344 = vadd.f32 %v342, %v343
    %v345 = vrot.slane %v344, 2
    %v346 = vadd.f32 %v344, %v345
    %v347 = vrot.slane %v346, 1
    %v348 = vadd.f32 %v346, %v347
    %v349 = vmul.f32 %v348, 0.0078125
    %v350 = vadd.f32 %v349, 1e-05
    %v351 = vrsqrt.pop %v350
    %v352 = vmul.f32 %v351, %v350
    %v353 = vmul.f32 %v352, %v351
    %v354 = vmul.f32 0.5, %v353
    %v355 = vsub.f32 1.5, %v354
    %v356 = vmul.f32 %v351, %v355
    %vm357 = vweird.f32 %v350
    %vm358 = vweird.f32 %v351
    %vm359 = vmor %vm357, %vm358
    %v360 = vsel %vm359, %v351, %v356
    %v361 = vmul.f32 %v280, %v360
    %v362 = vmul.f32 %v281, %v360
    %v363 = vmul.f32 %v282, %v360
    %v364 = vmul.f32 %v283, %v360
    %v365 = vmul.f32 %v284, %v360
    %v366 = vmul.f32 %v285, %v360
    %v367 = vmul.f32 %v286, %v360
    %v368 = vmul.f32 %v287, %v360
    %v369 = vmul.f32 %v288, %v360
    %v370 = vmul.f32 %v289, %v360
    %v371 = vmul.f32 %v290, %v360
    %v372 = vmul.f32 %v291, %v360
    %v373 = vmul.f32 %v292, %v360
    %v374 = vmul.f32 %v293, %v360
    %v375 = vmul.f32 %v294, %v360
    %v376 = vmul.f32 %v295, %v360
    %v377 = vpack.c.bf16 %v361, %v361
    %v378 = vpack.c.bf16 %v362, %v362
    %v379 = vpack.c.bf16 %v363, %v363
    %v380 = vpack.c.bf16 %v364, %v364
    %v381 = vpack.c.bf16 %v365, %v365
    %v382 = vpack.c.bf16 %v366, %v366
    %v383 = vpack.c.bf16 %v367, %v367
    %v384 = vpack.c.bf16 %v368, %v368
    %v385 = vpack.c.bf16 %v369, %v369
    %v386 = vpack.c.bf16 %v370, %v370
    %v387 = vpack.c.bf16 %v371, %v371
    %v388 = vpack.c.bf16 %v372, %v372
    %v389 = vpack.c.bf16 %v373, %v373
    %v390 = vpack.c.bf16 %v374, %v374
    %v391 = vpack.c.bf16 %v375, %v375
    %v392 = vpack.c.bf16 %v376, %v376
    %vm393 = vcmask 60416
    %394 = vst.msk [vmem:[%s2] sm:$0xf] %vm393, %v377
    %395 = vst.msk [vmem:[%s2 + $0x4] sm:$0xf] %vm393, %v378
    %396 = vst.msk [vmem:[%s2 + $0x8] sm:$0xf] %vm393, %v379
    %397 = vst.msk [vmem:[%s2 + $0xc] sm:$0xf] %vm393, %v380
    %398 = vst.msk [vmem:[%s2 + $0x10] sm:$0xf] %vm393, %v381
    %399 = vst.msk [vmem:[%s2 + $0x14] sm:$0xf] %vm393, %v382
    %400 = vst.msk [vmem:[%s2 + $0x18] sm:$0xf] %vm393, %v383
    %401 = vst.msk [vmem:[%s2 + $0x1c] sm:$0xf] %vm393, %v384
    %402 = vst.msk [vmem:[%s2 + $0x20] sm:$0xf] %vm393, %v385
    %403 = vst.msk [vmem:[%s2 + $0x24] sm:$0xf] %vm393, %v386
    %404 = vst.msk [vmem:[%s2 + $0x28] sm:$0xf] %vm393, %v387
    %405 = vst.msk [vmem:[%s2 + $0x2c] sm:$0xf] %vm393, %v388
    %406 = vst.msk [vmem:[%s2 + $0x30] sm:$0xf] %vm393, %v389
    %407 = vst.msk [vmem:[%s2 + $0x34] sm:$0xf] %vm393, %v390
    %408 = vst.msk [vmem:[%s2 + $0x38] sm:$0xf] %vm393, %v391
    %409 = vst.msk [vmem:[%s2 + $0x3c] sm:$0xf] %vm393, %v392
  $region17: #{_lambda_.65} parent=0 // pred_fallthru
    _
  // Predicated region
  $region18: #{_lambda_.65} parent=0 // pred_check
    _
  $region19: #{_lambda_.65} parent=0 // pred_check_branch
    %411 = sbr.rel (0) target = $region21
  $region20: #{_lambda_.65} parent=0 // pred_region
    _
  $region21: #{_lambda_.65} parent=0 // pred_fallthru
    _
  // Predicated region
  $region22: #{_lambda_.65} parent=0 // pred_check
    _
  $region23: #{_lambda_.65} parent=0 // pred_check_branch
    %413 = sbr.rel (0) target = $region25
  $region24: #{_lambda_.65} parent=0 // pred_region
    _
  $region25: #{_lambda_.65} parent=0 // pred_fallthru
    _

// kernel: _lambda_.63
$region0: #{_lambda_.63}
  #allocation0 [shape = 'u32[]', space=smem, size = 0x4, offset = 0x4, fixed_abs, tag = 'smem constant byte address 0x4 - core index']
  #allocation1 [shape = 'u32[72,128]{1,0:T(1,128)}', space=vmem, size = 0x9000, scoped, tag = 'internal scratch']
  #allocation2 [shape = 'f32[512,12]{1,0:T(8,128)}', space=vmem, size = 0x40000, scoped, tag = 'scratch operand']
  %s0 = inlined_call_operand.vmem [shape: bf16[512,27], index: 0, kind: input, shape index: {}]
  %s1 = inlined_call_operand.vmem [shape: bf16[27,12], index: 1, kind: input, shape index: {}]
  %s2 = inlined_call_operand.vmem [shape: bf16[512,12], index: 2, kind: output, shape index: {}]
  %s3 = sld [smem:[#allocation0]]
  $region26: #{_lambda_.63} parent=0
    _
  %s5 = ssub.s32 1, %s3
  %s6 = scalar_select 0, %s5, %s3
  // Predicated region
  $region2: #{_lambda_.63} parent=0 // pred_check
    _
  $region3: #{_lambda_.63} parent=0 // pred_check_branch
    %8 = sbr.rel (0) target = $region5
  $region4: #{_lambda_.63} parent=0 // pred_region
    _
  $region5: #{_lambda_.63} parent=0 // pred_fallthru
    _
  // Predicated region
  $region6: #{_lambda_.63} parent=0 // pred_check
    _
  $region7: #{_lambda_.63} parent=0 // pred_check_branch
    %10 = sbr.rel (0) target = $region9
  $region8: #{_lambda_.63} parent=0 // pred_region
    _
  $region9: #{_lambda_.63} parent=0 // pred_fallthru
    _
  %p12 = scmp.eq.s32.totalorder 0, 0
  // Predicated region
  $region10: #{_lambda_.63} parent=0 // pred_check
    %p13 = pneg %p12
  $region11: #{_lambda_.63} parent=0 // pred_check_branch
    %15 = sbr.rel (%p13) target = $region13
  $region12: #{_lambda_.63} parent=0 // pred_region
    %vm16 = vcmask 97280
    %17 = vst.msk [vmem:[#allocation2] sm:$0xff] %vm16, 0.0
    %18 = vst.msk [vmem:[#allocation2 + $0x8] sm:$0xff] %vm16, 0.0
    %19 = vst.msk [vmem:[#allocation2 + $0x10] sm:$0xff] %vm16, 0.0
    %20 = vst.msk [vmem:[#allocation2 + $0x18] sm:$0xff] %vm16, 0.0
    %21 = vst.msk [vmem:[#allocation2 + $0x20] sm:$0xff] %vm16, 0.0
    %22 = vst.msk [vmem:[#allocation2 + $0x28] sm:$0xff] %vm16, 0.0
    %23 = vst.msk [vmem:[#allocation2 + $0x30] sm:$0xff] %vm16, 0.0
    %24 = vst.msk [vmem:[#allocation2 + $0x38] sm:$0xff] %vm16, 0.0
    %25 = vst.msk [vmem:[#allocation2 + $0x40] sm:$0xff] %vm16, 0.0
    %26 = vst.msk [vmem:[#allocation2 + $0x48] sm:$0xff] %vm16, 0.0
    %27 = vst.msk [vmem:[#allocation2 + $0x50] sm:$0xff] %vm16, 0.0
    %28 = vst.msk [vmem:[#allocation2 + $0x58] sm:$0xff] %vm16, 0.0
    %29 = vst.msk [vmem:[#allocation2 + $0x60] sm:$0xff] %vm16, 0.0
    %30 = vst.msk [vmem:[#allocation2 + $0x68] sm:$0xff] %vm16, 0.0
    %31 = vst.msk [vmem:[#allocation2 + $0x70] sm:$0xff] %vm16, 0.0
    %32 = vst.msk [vmem:[#allocation2 + $0x78] sm:$0xff] %vm16, 0.0
    %33 = vst.msk [vmem:[#allocation2 + $0x80] sm:$0xff] %vm16, 0.0
    %34 = vst.msk [vmem:[#allocation2 + $0x88] sm:$0xff] %vm16, 0.0
    %35 = vst.msk [vmem:[#allocation2 + $0x90] sm:$0xff] %vm16, 0.0
    %36 = vst.msk [vmem:[#allocation2 + $0x98] sm:$0xff] %vm16, 0.0
    %37 = vst.msk [vmem:[#allocation2 + $0xa0] sm:$0xff] %vm16, 0.0
    %38 = vst.msk [vmem:[#allocation2 + $0xa8] sm:$0xff] %vm16, 0.0
    %39 = vst.msk [vmem:[#allocation2 + $0xb0] sm:$0xff] %vm16, 0.0
    %40 = vst.msk [vmem:[#allocation2 + $0xb8] sm:$0xff] %vm16, 0.0
    %41 = vst.msk [vmem:[#allocation2 + $0xc0] sm:$0xff] %vm16, 0.0
    %42 = vst.msk [vmem:[#allocation2 + $0xc8] sm:$0xff] %vm16, 0.0
    %43 = vst.msk [vmem:[#allocation2 + $0xd0] sm:$0xff] %vm16, 0.0
    %44 = vst.msk [vmem:[#allocation2 + $0xd8] sm:$0xff] %vm16, 0.0
    %45 = vst.msk [vmem:[#allocation2 + $0xe0] sm:$0xff] %vm16, 0.0
    %46 = vst.msk [vmem:[#allocation2 + $0xe8] sm:$0xff] %vm16, 0.0
    %47 = vst.msk [vmem:[#allocation2 + $0xf0] sm:$0xff] %vm16, 0.0
    %48 = vst.msk [vmem:[#allocation2 + $0xf8] sm:$0xff] %vm16, 0.0
    %49 = vst.msk [vmem:[#allocation2 + $0x100] sm:$0xff] %vm16, 0.0
    %50 = vst.msk [vmem:[#allocation2 + $0x108] sm:$0xff] %vm16, 0.0
    %51 = vst.msk [vmem:[#allocation2 + $0x110] sm:$0xff] %vm16, 0.0
    %52 = vst.msk [vmem:[#allocation2 + $0x118] sm:$0xff] %vm16, 0.0
    %53 = vst.msk [vmem:[#allocation2 + $0x120] sm:$0xff] %vm16, 0.0
    %54 = vst.msk [vmem:[#allocation2 + $0x128] sm:$0xff] %vm16, 0.0
    %55 = vst.msk [vmem:[#allocation2 + $0x130] sm:$0xff] %vm16, 0.0
    %56 = vst.msk [vmem:[#allocation2 + $0x138] sm:$0xff] %vm16, 0.0
    %57 = vst.msk [vmem:[#allocation2 + $0x140] sm:$0xff] %vm16, 0.0
    %58 = vst.msk [vmem:[#allocation2 + $0x148] sm:$0xff] %vm16, 0.0
    %59 = vst.msk [vmem:[#allocation2 + $0x150] sm:$0xff] %vm16, 0.0
    %60 = vst.msk [vmem:[#allocation2 + $0x158] sm:$0xff] %vm16, 0.0
    %61 = vst.msk [vmem:[#allocation2 + $0x160] sm:$0xff] %vm16, 0.0
    %62 = vst.msk [vmem:[#allocation2 + $0x168] sm:$0xff] %vm16, 0.0
    %63 = vst.msk [vmem:[#allocation2 + $0x170] sm:$0xff] %vm16, 0.0
    %64 = vst.msk [vmem:[#allocation2 + $0x178] sm:$0xff] %vm16, 0.0
    %65 = vst.msk [vmem:[#allocation2 + $0x180] sm:$0xff] %vm16, 0.0
    %66 = vst.msk [vmem:[#allocation2 + $0x188] sm:$0xff] %vm16, 0.0
    %67 = vst.msk [vmem:[#allocation2 + $0x190] sm:$0xff] %vm16, 0.0
    %68 = vst.msk [vmem:[#allocation2 + $0x198] sm:$0xff] %vm16, 0.0
    %69 = vst.msk [vmem:[#allocation2 + $0x1a0] sm:$0xff] %vm16, 0.0
    %70 = vst.msk [vmem:[#allocation2 + $0x1a8] sm:$0xff] %vm16, 0.0
    %71 = vst.msk [vmem:[#allocation2 + $0x1b0] sm:$0xff] %vm16, 0.0
    %72 = vst.msk [vmem:[#allocation2 + $0x1b8] sm:$0xff] %vm16, 0.0
    %73 = vst.msk [vmem:[#allocation2 + $0x1c0] sm:$0xff] %vm16, 0.0
    %74 = vst.msk [vmem:[#allocation2 + $0x1c8] sm:$0xff] %vm16, 0.0
    %75 = vst.msk [vmem:[#allocation2 + $0x1d0] sm:$0xff] %vm16, 0.0
    %76 = vst.msk [vmem:[#allocation2 + $0x1d8] sm:$0xff] %vm16, 0.0
    %77 = vst.msk [vmem:[#allocation2 + $0x1e0] sm:$0xff] %vm16, 0.0
    %78 = vst.msk [vmem:[#allocation2 + $0x1e8] sm:$0xff] %vm16, 0.0
    %79 = vst.msk [vmem:[#allocation2 + $0x1f0] sm:$0xff] %vm16, 0.0
    %80 = vst.msk [vmem:[#allocation2 + $0x1f8] sm:$0xff] %vm16, 0.0
  $region13: #{_lambda_.63} parent=0 // pred_fallthru
    _
  %v81 = vld [vmem:[%s0] sm:$0xf]
  %v82 = vld [vmem:[%s0 + $0x4] sm:$0xf]
  %v83 = vld [vmem:[%s0 + $0x8] sm:$0xf]
  %v84 = vld [vmem:[%s0 + $0xc] sm:$0xf]
  %v85 = vld [vmem:[%s0 + $0x10] sm:$0xf]
  %v86 = vld [vmem:[%s0 + $0x14] sm:$0xf]
  %v87 = vld [vmem:[%s0 + $0x18] sm:$0xf]
  %v88 = vld [vmem:[%s0 + $0x1c] sm:$0xf]
  %v89 = vld [vmem:[%s0 + $0x20] sm:$0xf]
  %v90 = vld [vmem:[%s0 + $0x24] sm:$0xf]
  %v91 = vld [vmem:[%s0 + $0x28] sm:$0xf]
  %v92 = vld [vmem:[%s0 + $0x2c] sm:$0xf]
  %v93 = vld [vmem:[%s0 + $0x30] sm:$0xf]
  %v94 = vld [vmem:[%s0 + $0x34] sm:$0xf]
  %v95 = vld [vmem:[%s0 + $0x38] sm:$0xf]
  %v96 = vld [vmem:[%s0 + $0x3c] sm:$0xf]
  %v97 = vld [vmem:[%s0 + $0x40] sm:$0xf]
  %v98 = vld [vmem:[%s0 + $0x44] sm:$0xf]
  %v99 = vld [vmem:[%s0 + $0x48] sm:$0xf]
  %v100 = vld [vmem:[%s0 + $0x4c] sm:$0xf]
  %v101 = vld [vmem:[%s0 + $0x50] sm:$0xf]
  %v102 = vld [vmem:[%s0 + $0x54] sm:$0xf]
  %v103 = vld [vmem:[%s0 + $0x58] sm:$0xf]
  %v104 = vld [vmem:[%s0 + $0x5c] sm:$0xf]
  %v105 = vld [vmem:[%s0 + $0x60] sm:$0xf]
  %v106 = vld [vmem:[%s0 + $0x64] sm:$0xf]
  %v107 = vld [vmem:[%s0 + $0x68] sm:$0xf]
  %v108 = vld [vmem:[%s0 + $0x6c] sm:$0xf]
  %v109 = vld [vmem:[%s0 + $0x70] sm:$0xf]
  %v110 = vld [vmem:[%s0 + $0x74] sm:$0xf]
  %v111 = vld [vmem:[%s0 + $0x78] sm:$0xf]
  %v112 = vld [vmem:[%s0 + $0x7c] sm:$0xf]
  %v113 = vld [vmem:[%s0 + $0x80] sm:$0xf]
  %v114 = vld [vmem:[%s0 + $0x84] sm:$0xf]
  %v115 = vld [vmem:[%s0 + $0x88] sm:$0xf]
  %v116 = vld [vmem:[%s0 + $0x8c] sm:$0xf]
  %v117 = vld [vmem:[%s0 + $0x90] sm:$0xf]
  %v118 = vld [vmem:[%s0 + $0x94] sm:$0xf]
  %v119 = vld [vmem:[%s0 + $0x98] sm:$0xf]
  %v120 = vld [vmem:[%s0 + $0x9c] sm:$0xf]
  %v121 = vld [vmem:[%s0 + $0xa0] sm:$0xf]
  %v122 = vld [vmem:[%s0 + $0xa4] sm:$0xf]
  %v123 = vld [vmem:[%s0 + $0xa8] sm:$0xf]
  %v124 = vld [vmem:[%s0 + $0xac] sm:$0xf]
  %v125 = vld [vmem:[%s0 + $0xb0] sm:$0xf]
  %v126 = vld [vmem:[%s0 + $0xb4] sm:$0xf]
  %v127 = vld [vmem:[%s0 + $0xb8] sm:$0xf]
  %v128 = vld [vmem:[%s0 + $0xbc] sm:$0xf]
  %v129 = vld [vmem:[%s0 + $0xc0] sm:$0xf]
  %v130 = vld [vmem:[%s0 + $0xc4] sm:$0xf]
  %v131 = vld [vmem:[%s0 + $0xc8] sm:$0xf]
  %v132 = vld [vmem:[%s0 + $0xcc] sm:$0xf]
  %v133 = vld [vmem:[%s0 + $0xd0] sm:$0xf]
  %v134 = vld [vmem:[%s0 + $0xd4] sm:$0xf]
  %v135 = vld [vmem:[%s0 + $0xd8] sm:$0xf]
  %v136 = vld [vmem:[%s0 + $0xdc] sm:$0xf]
  %v137 = vld [vmem:[%s0 + $0xe0] sm:$0xf]
  %v138 = vld [vmem:[%s0 + $0xe4] sm:$0xf]
  %v139 = vld [vmem:[%s0 + $0xe8] sm:$0xf]
  %v140 = vld [vmem:[%s0 + $0xec] sm:$0xf]
  %v141 = vld [vmem:[%s0 + $0xf0] sm:$0xf]
  %v142 = vld [vmem:[%s0 + $0xf4] sm:$0xf]
  %v143 = vld [vmem:[%s0 + $0xf8] sm:$0xf]
  %v144 = vld [vmem:[%s0 + $0xfc] sm:$0xf]
  %v145 = vld [vmem:[#allocation2] sm:$0xff]
  %v146 = vld [vmem:[#allocation2 + $0x8] sm:$0xff]
  %v147 = vld [vmem:[#allocation2 + $0x10] sm:$0xff]
  %v148 = vld [vmem:[#allocation2 + $0x18] sm:$0xff]
  %v149 = vld [vmem:[#allocation2 + $0x20] sm:$0xff]
  %v150 = vld [vmem:[#allocation2 + $0x28] sm:$0xff]
  %v151 = vld [vmem:[#allocation2 + $0x30] sm:$0xff]
  %v152 = vld [vmem:[#allocation2 + $0x38] sm:$0xff]
  %v153 = vld [vmem:[#allocation2 + $0x40] sm:$0xff]
  %v154 = vld [vmem:[#allocation2 + $0x48] sm:$0xff]
  %v155 = vld [vmem:[#allocation2 + $0x50] sm:$0xff]
  %v156 = vld [vmem:[#allocation2 + $0x58] sm:$0xff]
  %v157 = vld [vmem:[#allocation2 + $0x60] sm:$0xff]
  %v158 = vld [vmem:[#allocation2 + $0x68] sm:$0xff]
  %v159 = vld [vmem:[#allocation2 + $0x70] sm:$0xff]
  %v160 = vld [vmem:[#allocation2 + $0x78] sm:$0xff]
  %v161 = vld [vmem:[#allocation2 + $0x80] sm:$0xff]
  %v162 = vld [vmem:[#allocation2 + $0x88] sm:$0xff]
  %v163 = vld [vmem:[#allocation2 + $0x90] sm:$0xff]
  %v164 = vld [vmem:[#allocation2 + $0x98] sm:$0xff]
  %v165 = vld [vmem:[#allocation2 + $0xa0] sm:$0xff]
  %v166 = vld [vmem:[#allocation2 + $0xa8] sm:$0xff]
  %v167 = vld [vmem:[#allocation2 + $0xb0] sm:$0xff]
  %v168 = vld [vmem:[#allocation2 + $0xb8] sm:$0xff]
  %v169 = vld [vmem:[#allocation2 + $0xc0] sm:$0xff]
  %v170 = vld [vmem:[#allocation2 + $0xc8] sm:$0xff]
  %v171 = vld [vmem:[#allocation2 + $0xd0] sm:$0xff]
  %v172 = vld [vmem:[#allocation2 + $0xd8] sm:$0xff]
  %v173 = vld [vmem:[#allocation2 + $0xe0] sm:$0xff]
  %v174 = vld [vmem:[#allocation2 + $0xe8] sm:$0xff]
  %v175 = vld [vmem:[#allocation2 + $0xf0] sm:$0xff]
  %v176 = vld [vmem:[#allocation2 + $0xf8] sm:$0xff]
  %v177 = vld [vmem:[#allocation2 + $0x100] sm:$0xff]
  %v178 = vld [vmem:[#allocation2 + $0x108] sm:$0xff]
  %v179 = vld [vmem:[#allocation2 + $0x110] sm:$0xff]
  %v180 = vld [vmem:[#allocation2 + $0x118] sm:$0xff]
  %v181 = vld [vmem:[#allocation2 + $0x120] sm:$0xff]
  %v182 = vld [vmem:[#allocation2 + $0x128] sm:$0xff]
  %v183 = vld [vmem:[#allocation2 + $0x130] sm:$0xff]
  %v184 = vld [vmem:[#allocation2 + $0x138] sm:$0xff]
  %v185 = vld [vmem:[#allocation2 + $0x140] sm:$0xff]
  %v186 = vld [vmem:[#allocation2 + $0x148] sm:$0xff]
  %v187 = vld [vmem:[#allocation2 + $0x150] sm:$0xff]
  %v188 = vld [vmem:[#allocation2 + $0x158] sm:$0xff]
  %v189 = vld [vmem:[#allocation2 + $0x160] sm:$0xff]
  %v190 = vld [vmem:[#allocation2 + $0x168] sm:$0xff]
  %v191 = vld [vmem:[#allocation2 + $0x170] sm:$0xff]
  %v192 = vld [vmem:[#allocation2 + $0x178] sm:$0xff]
  %v193 = vld [vmem:[#allocation2 + $0x180] sm:$0xff]
  %v194 = vld [vmem:[#allocation2 + $0x188] sm:$0xff]
  %v195 = vld [vmem:[#allocation2 + $0x190] sm:$0xff]
  %v196 = vld [vmem:[#allocation2 + $0x198] sm:$0xff]
  %v197 = vld [vmem:[#allocation2 + $0x1a0] sm:$0xff]
  %v198 = vld [vmem:[#allocation2 + $0x1a8] sm:$0xff]
  %v199 = vld [vmem:[#allocation2 + $0x1b0] sm:$0xff]
  %v200 = vld [vmem:[#allocation2 + $0x1b8] sm:$0xff]
  %v201 = vld [vmem:[#allocation2 + $0x1c0] sm:$0xff]
  %v202 = vld [vmem:[#allocation2 + $0x1c8] sm:$0xff]
  %v203 = vld [vmem:[#allocation2 + $0x1d0] sm:$0xff]
  %v204 = vld [vmem:[#allocation2 + $0x1d8] sm:$0xff]
  %v205 = vld [vmem:[#allocation2 + $0x1e0] sm:$0xff]
  %v206 = vld [vmem:[#allocation2 + $0x1e8] sm:$0xff]
  %v207 = vld [vmem:[#allocation2 + $0x1f0] sm:$0xff]
  %v208 = vld [vmem:[#allocation2 + $0x1f8] sm:$0xff]
  %v209 = vld [vmem:[%s1] sm:$0xf]
  %v210 = vld [vmem:[%s1 + $0x4] sm:$0xf]
  %v211 = vld [vmem:[%s1 + $0x8] sm:$0xf]
  %v212 = vld [vmem:[%s1 + $0xc] sm:$0x3]
  %v277 = vunpack.c.l.b16 %v81
  %v278 = vunpack.c.l.b16 %v82
  %v279 = vunpack.c.l.b16 %v83
  %v280 = vunpack.c.l.b16 %v84
  %v281 = vunpack.c.l.b16 %v85
  %v282 = vunpack.c.l.b16 %v86
  %v283 = vunpack.c.l.b16 %v87
  %v284 = vunpack.c.l.b16 %v88
  %v285 = vunpack.c.l.b16 %v89
  %v286 = vunpack.c.l.b16 %v90
  %v287 = vunpack.c.l.b16 %v91
  %v288 = vunpack.c.l.b16 %v92
  %v289 = vunpack.c.l.b16 %v93
  %v290 = vunpack.c.l.b16 %v94
  %v291 = vunpack.c.l.b16 %v95
  %v292 = vunpack.c.l.b16 %v96
  %v293 = vunpack.c.l.b16 %v97
  %v294 = vunpack.c.l.b16 %v98
  %v295 = vunpack.c.l.b16 %v99
  %v296 = vunpack.c.l.b16 %v100
  %v297 = vunpack.c.l.b16 %v101
  %v298 = vunpack.c.l.b16 %v102
  %v299 = vunpack.c.l.b16 %v103
  %v300 = vunpack.c.l.b16 %v104
  %v301 = vunpack.c.l.b16 %v105
  %v302 = vunpack.c.l.b16 %v106
  %v303 = vunpack.c.l.b16 %v107
  %v304 = vunpack.c.l.b16 %v108
  %v305 = vunpack.c.l.b16 %v109
  %v306 = vunpack.c.l.b16 %v110
  %v307 = vunpack.c.l.b16 %v111
  %v308 = vunpack.c.l.b16 %v112
  %v309 = vunpack.c.l.b16 %v113
  %v310 = vunpack.c.l.b16 %v114
  %v311 = vunpack.c.l.b16 %v115
  %v312 = vunpack.c.l.b16 %v116
  %v313 = vunpack.c.l.b16 %v117
  %v314 = vunpack.c.l.b16 %v118
  %v315 = vunpack.c.l.b16 %v119
  %v316 = vunpack.c.l.b16 %v120
  %v317 = vunpack.c.l.b16 %v121
  %v318 = vunpack.c.l.b16 %v122
  %v319 = vunpack.c.l.b16 %v123
  %v320 = vunpack.c.l.b16 %v124
  %v321 = vunpack.c.l.b16 %v125
  %v322 = vunpack.c.l.b16 %v126
  %v323 = vunpack.c.l.b16 %v127
  %v324 = vunpack.c.l.b16 %v128
  %v325 = vunpack.c.l.b16 %v129
  %v326 = vunpack.c.l.b16 %v130
  %v327 = vunpack.c.l.b16 %v131
  %v328 = vunpack.c.l.b16 %v132
  %v329 = vunpack.c.l.b16 %v133
  %v330 = vunpack.c.l.b16 %v134
  %v331 = vunpack.c.l.b16 %v135
  %v332 = vunpack.c.l.b16 %v136
  %v333 = vunpack.c.l.b16 %v137
  %v334 = vunpack.c.l.b16 %v138
  %v335 = vunpack.c.l.b16 %v139
  %v336 = vunpack.c.l.b16 %v140
  %v337 = vunpack.c.l.b16 %v141
  %v338 = vunpack.c.l.b16 %v142
  %v339 = vunpack.c.l.b16 %v143
  %v340 = vunpack.c.l.b16 %v144
  %v341 = vpack.c.b16 %v278, %v277
  %v342 = vpack.c.b16 %v280, %v279
  %v343 = vpack.c.b16 %v282, %v281
  %v344 = vpack.c.b16 %v284, %v283
  %v345 = vpack.c.b16 %v286, %v285
  %v346 = vpack.c.b16 %v288, %v287
  %v347 = vpack.c.b16 %v290, %v289
  %v348 = vpack.c.b16 %v292, %v291
  %v349 = vpack.c.b16 %v294, %v293
  %v350 = vpack.c.b16 %v296, %v295
  %v351 = vpack.c.b16 %v298, %v297
  %v352 = vpack.c.b16 %v300, %v299
  %v353 = vpack.c.b16 %v302, %v301
  %v354 = vpack.c.b16 %v304, %v303
  %v355 = vpack.c.b16 %v306, %v305
  %v356 = vpack.c.b16 %v308, %v307
  %v357 = vpack.c.b16 %v310, %v309
  %v358 = vpack.c.b16 %v312, %v311
  %v359 = vpack.c.b16 %v314, %v313
  %v360 = vpack.c.b16 %v316, %v315
  %v361 = vpack.c.b16 %v318, %v317
  %v362 = vpack.c.b16 %v320, %v319
  %v363 = vpack.c.b16 %v322, %v321
  %v364 = vpack.c.b16 %v324, %v323
  %v365 = vpack.c.b16 %v326, %v325
  %v366 = vpack.c.b16 %v328, %v327
  %v367 = vpack.c.b16 %v330, %v329
  %v368 = vpack.c.b16 %v332, %v331
  %v369 = vpack.c.b16 %v334, %v333
  %v370 = vpack.c.b16 %v336, %v335
  %v371 = vpack.c.b16 %v338, %v337
  %v372 = vpack.c.b16 %v340, %v339
  %v377 = vunpack.c.l.b16 %v209
  %v378 = vunpack.c.l.b16 %v210
  %v379 = vunpack.c.l.b16 %v211
  %v380 = vunpack.c.l.b16 %v212
  %v381 = vpack.c.b16 %v378, %v377
  %v382 = vpack.c.b16 %v380, %v379
  %vm384 = vcmask 220160
  %v386 = vsel %vm384, %v341, 0
  %v389 = vsel %vm384, %v342, 0
  %v392 = vsel %vm384, %v343, 0
  %v395 = vsel %vm384, %v344, 0
  %v398 = vsel %vm384, %v345, 0
  %v401 = vsel %vm384, %v346, 0
  %v404 = vsel %vm384, %v347, 0
  %v407 = vsel %vm384, %v348, 0
  %v410 = vsel %vm384, %v349, 0
  %v413 = vsel %vm384, %v350, 0
  %v416 = vsel %vm384, %v351, 0
  %v419 = vsel %vm384, %v352, 0
  %v422 = vsel %vm384, %v353, 0
  %v425 = vsel %vm384, %v354, 0
  %v428 = vsel %vm384, %v355, 0
  %v431 = vsel %vm384, %v356, 0
  %v434 = vsel %vm384, %v357, 0
  %v437 = vsel %vm384, %v358, 0
  %v440 = vsel %vm384, %v359, 0
  %v443 = vsel %vm384, %v360, 0
  %v446 = vsel %vm384, %v361, 0
  %v449 = vsel %vm384, %v362, 0
  %v452 = vsel %vm384, %v363, 0
  %v455 = vsel %vm384, %v364, 0
  %v458 = vsel %vm384, %v365, 0
  %v461 = vsel %vm384, %v366, 0
  %v464 = vsel %vm384, %v367, 0
  %v467 = vsel %vm384, %v368, 0
  %v470 = vsel %vm384, %v369, 0
  %v473 = vsel %vm384, %v370, 0
  %v476 = vsel %vm384, %v371, 0
  %v479 = vsel %vm384, %v372, 0
  %vm481 = vcmask 1044480
  %vm482 = vcmask 1045504
  %v483 = vsel %vm481, 4294967295, 65535
  %v484 = vsel %vm482, %v483, 0
  %v486 = vand.u32 %v382, %v484
  %488 = vmatpush.bf16.msra.mxu0 0
  %489 = vmatpush.bf16.msra.mxu0 0
  %490 = vmatpush.bf16.msra.mxu0 0
  %491 = vmatpush.bf16.msra.mxu0 0
  %492 = vmatpush.bf16.msra.mxu0 0
  %493 = vmatpush.bf16.msra.mxu0 0
  %494 = vmatpush.bf16.msra.mxu0 %v486
  %495 = vmatpush.bf16.msra.mxu0 %v381
  %496 = vmatmul.bf16.gmra.mxu0 %v386
  %v497 = vpop.f32.mrf.mxu0
  %v498 = vadd.f32 0.0, %v497
  %v499 = vpop.f32.mrf.mxu0
  %v500 = vadd.f32 0.0, %v499
  %501 = vmatmul.bf16.gmra.mxu0 %v389
  %v502 = vpop.f32.mrf.mxu0
  %v503 = vadd.f32 0.0, %v502
  %v504 = vpop.f32.mrf.mxu0
  %v505 = vadd.f32 0.0, %v504
  %506 = vmatmul.bf16.gmra.mxu0 %v392
  %v507 = vpop.f32.mrf.mxu0
  %v508 = vadd.f32 0.0, %v507
  %v509 = vpop.f32.mrf.mxu0
  %v510 = vadd.f32 0.0, %v509
  %511 = vmatmul.bf16.gmra.mxu0 %v395
  %v512 = vpop.f32.mrf.mxu0
  %v513 = vadd.f32 0.0, %v512
  %v514 = vpop.f32.mrf.mxu0
  %v515 = vadd.f32 0.0, %v514
  %516 = vmatmul.bf16.gmra.mxu0 %v398
  %v517 = vpop.f32.mrf.mxu0
  %v518 = vadd.f32 0.0, %v517
  %v519 = vpop.f32.mrf.mxu0
  %v520 = vadd.f32 0.0, %v519
  %521 = vmatmul.bf16.gmra.mxu0 %v401
  %v522 = vpop.f32.mrf.mxu0
  %v523 = vadd.f32 0.0, %v522
  %v524 = vpop.f32.mrf.mxu0
  %v525 = vadd.f32 0.0, %v524
  %526 = vmatmul.bf16.gmra.mxu0 %v404
  %v527 = vpop.f32.mrf.mxu0
  %v528 = vadd.f32 0.0, %v527
  %v529 = vpop.f32.mrf.mxu0
  %v530 = vadd.f32 0.0, %v529
  %531 = vmatmul.bf16.gmra.mxu0 %v407
  %v532 = vpop.f32.mrf.mxu0
  %v533 = vadd.f32 0.0, %v532
  %v534 = vpop.f32.mrf.mxu0
  %v535 = vadd.f32 0.0, %v534
  %536 = vmatmul.bf16.gmra.mxu0 %v410
  %v537 = vpop.f32.mrf.mxu0
  %v538 = vadd.f32 0.0, %v537
  %v539 = vpop.f32.mrf.mxu0
  %v540 = vadd.f32 0.0, %v539
  %541 = vmatmul.bf16.gmra.mxu0 %v413
  %v542 = vpop.f32.mrf.mxu0
  %v543 = vadd.f32 0.0, %v542
  %v544 = vpop.f32.mrf.mxu0
  %v545 = vadd.f32 0.0, %v544
  %546 = vmatmul.bf16.gmra.mxu0 %v416
  %v547 = vpop.f32.mrf.mxu0
  %v548 = vadd.f32 0.0, %v547
  %v549 = vpop.f32.mrf.mxu0
  %v550 = vadd.f32 0.0, %v549
  %551 = vmatmul.bf16.gmra.mxu0 %v419
  %v552 = vpop.f32.mrf.mxu0
  %v553 = vadd.f32 0.0, %v552
  %v554 = vpop.f32.mrf.mxu0
  %v555 = vadd.f32 0.0, %v554
  %556 = vmatmul.bf16.gmra.mxu0 %v422
  %v557 = vpop.f32.mrf.mxu0
  %v558 = vadd.f32 0.0, %v557
  %v559 = vpop.f32.mrf.mxu0
  %v560 = vadd.f32 0.0, %v559
  %561 = vmatmul.bf16.gmra.mxu0 %v425
  %v562 = vpop.f32.mrf.mxu0
  %v563 = vadd.f32 0.0, %v562
  %v564 = vpop.f32.mrf.mxu0
  %v565 = vadd.f32 0.0, %v564
  %566 = vmatmul.bf16.gmra.mxu0 %v428
  %v567 = vpop.f32.mrf.mxu0
  %v568 = vadd.f32 0.0, %v567
  %v569 = vpop.f32.mrf.mxu0
  %v570 = vadd.f32 0.0, %v569
  %571 = vmatmul.bf16.gmra.mxu0 %v431
  %v572 = vpop.f32.mrf.mxu0
  %v573 = vadd.f32 0.0, %v572
  %v574 = vpop.f32.mrf.mxu0
  %v575 = vadd.f32 0.0, %v574
  %576 = vmatmul.bf16.gmra.mxu0 %v434
  %v577 = vpop.f32.mrf.mxu0
  %v578 = vadd.f32 0.0, %v577
  %v579 = vpop.f32.mrf.mxu0
  %v580 = vadd.f32 0.0, %v579
  %581 = vmatmul.bf16.gmra.mxu0 %v437
  %v582 = vpop.f32.mrf.mxu0
  %v583 = vadd.f32 0.0, %v582
  %v584 = vpop.f32.mrf.mxu0
  %v585 = vadd.f32 0.0, %v584
  %586 = vmatmul.bf16.gmra.mxu0 %v440
  %v587 = vpop.f32.mrf.mxu0
  %v588 = vadd.f32 0.0, %v587
  %v589 = vpop.f32.mrf.mxu0
  %v590 = vadd.f32 0.0, %v589
  %591 = vmatmul.bf16.gmra.mxu0 %v443
  %v592 = vpop.f32.mrf.mxu0
  %v593 = vadd.f32 0.0, %v592
  %v594 = vpop.f32.mrf.mxu0
  %v595 = vadd.f32 0.0, %v594
  %596 = vmatmul.bf16.gmra.mxu0 %v446
  %v597 = vpop.f32.mrf.mxu0
  %v598 = vadd.f32 0.0, %v597
  %v599 = vpop.f32.mrf.mxu0
  %v600 = vadd.f32 0.0, %v599
  %601 = vmatmul.bf16.gmra.mxu0 %v449
  %v602 = vpop.f32.mrf.mxu0
  %v603 = vadd.f32 0.0, %v602
  %v604 = vpop.f32.mrf.mxu0
  %v605 = vadd.f32 0.0, %v604
  %606 = vmatmul.bf16.gmra.mxu0 %v452
  %v607 = vpop.f32.mrf.mxu0
  %v608 = vadd.f32 0.0, %v607
  %v609 = vpop.f32.mrf.mxu0
  %v610 = vadd.f32 0.0, %v609
  %611 = vmatmul.bf16.gmra.mxu0 %v455
  %v612 = vpop.f32.mrf.mxu0
  %v613 = vadd.f32 0.0, %v612
  %v614 = vpop.f32.mrf.mxu0
  %v615 = vadd.f32 0.0, %v614
  %616 = vmatmul.bf16.gmra.mxu0 %v458
  %v617 = vpop.f32.mrf.mxu0
  %v618 = vadd.f32 0.0, %v617
  %v619 = vpop.f32.mrf.mxu0
  %v620 = vadd.f32 0.0, %v619
  %621 = vmatmul.bf16.gmra.mxu0 %v461
  %v622 = vpop.f32.mrf.mxu0
  %v623 = vadd.f32 0.0, %v622
  %v624 = vpop.f32.mrf.mxu0
  %v625 = vadd.f32 0.0, %v624
  %626 = vmatmul.bf16.gmra.mxu0 %v464
  %v627 = vpop.f32.mrf.mxu0
  %v628 = vadd.f32 0.0, %v627
  %v629 = vpop.f32.mrf.mxu0
  %v630 = vadd.f32 0.0, %v629
  %631 = vmatmul.bf16.gmra.mxu0 %v467
  %v632 = vpop.f32.mrf.mxu0
  %v633 = vadd.f32 0.0, %v632
  %v634 = vpop.f32.mrf.mxu0
  %v635 = vadd.f32 0.0, %v634
  %636 = vmatmul.bf16.gmra.mxu0 %v470
  %v637 = vpop.f32.mrf.mxu0
  %v638 = vadd.f32 0.0, %v637
  %v639 = vpop.f32.mrf.mxu0
  %v640 = vadd.f32 0.0, %v639
  %641 = vmatmul.bf16.gmra.mxu0 %v473
  %v642 = vpop.f32.mrf.mxu0
  %v643 = vadd.f32 0.0, %v642
  %v644 = vpop.f32.mrf.mxu0
  %v645 = vadd.f32 0.0, %v644
  %646 = vmatmul.bf16.gmra.mxu0 %v476
  %v647 = vpop.f32.mrf.mxu0
  %v648 = vadd.f32 0.0, %v647
  %v649 = vpop.f32.mrf.mxu0
  %v650 = vadd.f32 0.0, %v649
  %651 = vmatmul.bf16.gmra.mxu0 %v479
  %v652 = vpop.f32.mrf.mxu0
  %v653 = vadd.f32 0.0, %v652
  %v654 = vpop.f32.mrf.mxu0
  %v655 = vadd.f32 0.0, %v654
  %656 = vdwg.mxu0
  %v657 = vadd.f32 %v145, %v498
  %v658 = vadd.f32 %v146, %v500
  %v659 = vadd.f32 %v147, %v503
  %v660 = vadd.f32 %v148, %v505
  %v661 = vadd.f32 %v149, %v508
  %v662 = vadd.f32 %v150, %v510
  %v663 = vadd.f32 %v151, %v513
  %v664 = vadd.f32 %v152, %v515
  %v665 = vadd.f32 %v153, %v518
  %v666 = vadd.f32 %v154, %v520
  %v667 = vadd.f32 %v155, %v523
  %v668 = vadd.f32 %v156, %v525
  %v669 = vadd.f32 %v157, %v528
  %v670 = vadd.f32 %v158, %v530
  %v671 = vadd.f32 %v159, %v533
  %v672 = vadd.f32 %v160, %v535
  %v673 = vadd.f32 %v161, %v538
  %v674 = vadd.f32 %v162, %v540
  %v675 = vadd.f32 %v163, %v543
  %v676 = vadd.f32 %v164, %v545
  %v677 = vadd.f32 %v165, %v548
  %v678 = vadd.f32 %v166, %v550
  %v679 = vadd.f32 %v167, %v553
  %v680 = vadd.f32 %v168, %v555
  %v681 = vadd.f32 %v169, %v558
  %v682 = vadd.f32 %v170, %v560
  %v683 = vadd.f32 %v171, %v563
  %v684 = vadd.f32 %v172, %v565
  %v685 = vadd.f32 %v173, %v568
  %v686 = vadd.f32 %v174, %v570
  %v687 = vadd.f32 %v175, %v573
  %v688 = vadd.f32 %v176, %v575
  %v689 = vadd.f32 %v177, %v578
  %v690 = vadd.f32 %v178, %v580
  %v691 = vadd.f32 %v179, %v583
  %v692 = vadd.f32 %v180, %v585
  %v693 = vadd.f32 %v181, %v588
  %v694 = vadd.f32 %v182, %v590
  %v695 = vadd.f32 %v183, %v593
  %v696 = vadd.f32 %v184, %v595
  %v697 = vadd.f32 %v185, %v598
  %v698 = vadd.f32 %v186, %v600
  %v699 = vadd.f32 %v187, %v603
  %v700 = vadd.f32 %v188, %v605
  %v701 = vadd.f32 %v189, %v608
  %v702 = vadd.f32 %v190, %v610
  %v703 = vadd.f32 %v191, %v613
  %v704 = vadd.f32 %v192, %v615
  %v705 = vadd.f32 %v193, %v618
  %v706 = vadd.f32 %v194, %v620
  %v707 = vadd.f32 %v195, %v623
  %v708 = vadd.f32 %v196, %v625
  %v709 = vadd.f32 %v197, %v628
  %v710 = vadd.f32 %v198, %v630
  %v711 = vadd.f32 %v199, %v633
  %v712 = vadd.f32 %v200, %v635
  %v713 = vadd.f32 %v201, %v638
  %v714 = vadd.f32 %v202, %v640
  %v715 = vadd.f32 %v203, %v643
  %v716 = vadd.f32 %v204, %v645
  %v717 = vadd.f32 %v205, %v648
  %v718 = vadd.f32 %v206, %v650
  %v719 = vadd.f32 %v207, %v653
  %v720 = vadd.f32 %v208, %v655
  %vm721 = vcmask 97280
  %722 = vst.msk [vmem:[#allocation2] sm:$0xff] %vm721, %v657
  %723 = vst.msk [vmem:[#allocation2 + $0x8] sm:$0xff] %vm721, %v658
  %724 = vst.msk [vmem:[#allocation2 + $0x10] sm:$0xff] %vm721, %v659
  %725 = vst.msk [vmem:[#allocation2 + $0x18] sm:$0xff] %vm721, %v660
  %726 = vst.msk [vmem:[#allocation2 + $0x20] sm:$0xff] %vm721, %v661
  %727 = vst.msk [vmem:[#allocation2 + $0x28] sm:$0xff] %vm721, %v662
  %728 = vst.msk [vmem:[#allocation2 + $0x30] sm:$0xff] %vm721, %v663
  %729 = vst.msk [vmem:[#allocation2 + $0x38] sm:$0xff] %vm721, %v664
  %730 = vst.msk [vmem:[#allocation2 + $0x40] sm:$0xff] %vm721, %v665
  %731 = vst.msk [vmem:[#allocation2 + $0x48] sm:$0xff] %vm721, %v666
  %732 = vst.msk [vmem:[#allocation2 + $0x50] sm:$0xff] %vm721, %v667
  %733 = vst.msk [vmem:[#allocation2 + $0x58] sm:$0xff] %vm721, %v668
  %734 = vst.msk [vmem:[#allocation2 + $0x60] sm:$0xff] %vm721, %v669
  %735 = vst.msk [vmem:[#allocation2 + $0x68] sm:$0xff] %vm721, %v670
  %736 = vst.msk [vmem:[#allocation2 + $0x70] sm:$0xff] %vm721, %v671
  %737 = vst.msk [vmem:[#allocation2 + $0x78] sm:$0xff] %vm721, %v672
  %738 = vst.msk [vmem:[#allocation2 + $0x80] sm:$0xff] %vm721, %v673
  %739 = vst.msk [vmem:[#allocation2 + $0x88] sm:$0xff] %vm721, %v674
  %740 = vst.msk [vmem:[#allocation2 + $0x90] sm:$0xff] %vm721, %v675
  %741 = vst.msk [vmem:[#allocation2 + $0x98] sm:$0xff] %vm721, %v676
  %742 = vst.msk [vmem:[#allocation2 + $0xa0] sm:$0xff] %vm721, %v677
  %743 = vst.msk [vmem:[#allocation2 + $0xa8] sm:$0xff] %vm721, %v678
  %744 = vst.msk [vmem:[#allocation2 + $0xb0] sm:$0xff] %vm721, %v679
  %745 = vst.msk [vmem:[#allocation2 + $0xb8] sm:$0xff] %vm721, %v680
  %746 = vst.msk [vmem:[#allocation2 + $0xc0] sm:$0xff] %vm721, %v681
  %747 = vst.msk [vmem:[#allocation2 + $0xc8] sm:$0xff] %vm721, %v682
  %748 = vst.msk [vmem:[#allocation2 + $0xd0] sm:$0xff] %vm721, %v683
  %749 = vst.msk [vmem:[#allocation2 + $0xd8] sm:$0xff] %vm721, %v684
  %750 = vst.msk [vmem:[#allocation2 + $0xe0] sm:$0xff] %vm721, %v685
  %751 = vst.msk [vmem:[#allocation2 + $0xe8] sm:$0xff] %vm721, %v686
  %752 = vst.msk [vmem:[#allocation2 + $0xf0] sm:$0xff] %vm721, %v687
  %753 = vst.msk [vmem:[#allocation2 + $0xf8] sm:$0xff] %vm721, %v688
  %754 = vst.msk [vmem:[#allocation2 + $0x100] sm:$0xff] %vm721, %v689
  %755 = vst.msk [vmem:[#allocation2 + $0x108] sm:$0xff] %vm721, %v690
  %756 = vst.msk [vmem:[#allocation2 + $0x110] sm:$0xff] %vm721, %v691
  %757 = vst.msk [vmem:[#allocation2 + $0x118] sm:$0xff] %vm721, %v692
  %758 = vst.msk [vmem:[#allocation2 + $0x120] sm:$0xff] %vm721, %v693
  %759 = vst.msk [vmem:[#allocation2 + $0x128] sm:$0xff] %vm721, %v694
  %760 = vst.msk [vmem:[#allocation2 + $0x130] sm:$0xff] %vm721, %v695
  %761 = vst.msk [vmem:[#allocation2 + $0x138] sm:$0xff] %vm721, %v696
  %762 = vst.msk [vmem:[#allocation2 + $0x140] sm:$0xff] %vm721, %v697
  %763 = vst.msk [vmem:[#allocation2 + $0x148] sm:$0xff] %vm721, %v698
  %764 = vst.msk [vmem:[#allocation2 + $0x150] sm:$0xff] %vm721, %v699
  %765 = vst.msk [vmem:[#allocation2 + $0x158] sm:$0xff] %vm721, %v700
  %766 = vst.msk [vmem:[#allocation2 + $0x160] sm:$0xff] %vm721, %v701
  %767 = vst.msk [vmem:[#allocation2 + $0x168] sm:$0xff] %vm721, %v702
  %768 = vst.msk [vmem:[#allocation2 + $0x170] sm:$0xff] %vm721, %v703
  %769 = vst.msk [vmem:[#allocation2 + $0x178] sm:$0xff] %vm721, %v704
  %770 = vst.msk [vmem:[#allocation2 + $0x180] sm:$0xff] %vm721, %v705
  %771 = vst.msk [vmem:[#allocation2 + $0x188] sm:$0xff] %vm721, %v706
  %772 = vst.msk [vmem:[#allocation2 + $0x190] sm:$0xff] %vm721, %v707
  %773 = vst.msk [vmem:[#allocation2 + $0x198] sm:$0xff] %vm721, %v708
  %774 = vst.msk [vmem:[#allocation2 + $0x1a0] sm:$0xff] %vm721, %v709
  %775 = vst.msk [vmem:[#allocation2 + $0x1a8] sm:$0xff] %vm721, %v710
  %776 = vst.msk [vmem:[#allocation2 + $0x1b0] sm:$0xff] %vm721, %v711
  %777 = vst.msk [vmem:[#allocation2 + $0x1b8] sm:$0xff] %vm721, %v712
  %778 = vst.msk [vmem:[#allocation2 + $0x1c0] sm:$0xff] %vm721, %v713
  %779 = vst.msk [vmem:[#allocation2 + $0x1c8] sm:$0xff] %vm721, %v714
  %780 = vst.msk [vmem:[#allocation2 + $0x1d0] sm:$0xff] %vm721, %v715
  %781 = vst.msk [vmem:[#allocation2 + $0x1d8] sm:$0xff] %vm721, %v716
  %782 = vst.msk [vmem:[#allocation2 + $0x1e0] sm:$0xff] %vm721, %v717
  %783 = vst.msk [vmem:[#allocation2 + $0x1e8] sm:$0xff] %vm721, %v718
  %784 = vst.msk [vmem:[#allocation2 + $0x1f0] sm:$0xff] %vm721, %v719
  %785 = vst.msk [vmem:[#allocation2 + $0x1f8] sm:$0xff] %vm721, %v720
  // Predicated region
  $region14: #{_lambda_.63} parent=0 // pred_check
    %p786 = pneg %p12
  $region15: #{_lambda_.63} parent=0 // pred_check_branch
    %788 = sbr.rel (%p786) target = $region17
  $region16: #{_lambda_.63} parent=0 // pred_region
    %v789 = vld [vmem:[#allocation2] sm:$0xff]
    %v790 = vld [vmem:[#allocation2 + $0x8] sm:$0xff]
    %v791 = vld [vmem:[#allocation2 + $0x10] sm:$0xff]
    %v792 = vld [vmem:[#allocation2 + $0x18] sm:$0xff]
    %v793 = vld [vmem:[#allocation2 + $0x20] sm:$0xff]
    %v794 = vld [vmem:[#allocation2 + $0x28] sm:$0xff]
    %v795 = vld [vmem:[#allocation2 + $0x30] sm:$0xff]
    %v796 = vld [vmem:[#allocation2 + $0x38] sm:$0xff]
    %v797 = vld [vmem:[#allocation2 + $0x40] sm:$0xff]
    %v798 = vld [vmem:[#allocation2 + $0x48] sm:$0xff]
    %v799 = vld [vmem:[#allocation2 + $0x50] sm:$0xff]
    %v800 = vld [vmem:[#allocation2 + $0x58] sm:$0xff]
    %v801 = vld [vmem:[#allocation2 + $0x60] sm:$0xff]
    %v802 = vld [vmem:[#allocation2 + $0x68] sm:$0xff]
    %v803 = vld [vmem:[#allocation2 + $0x70] sm:$0xff]
    %v804 = vld [vmem:[#allocation2 + $0x78] sm:$0xff]
    %v805 = vld [vmem:[#allocation2 + $0x80] sm:$0xff]
    %v806 = vld [vmem:[#allocation2 + $0x88] sm:$0xff]
    %v807 = vld [vmem:[#allocation2 + $0x90] sm:$0xff]
    %v808 = vld [vmem:[#allocation2 + $0x98] sm:$0xff]
    %v809 = vld [vmem:[#allocation2 + $0xa0] sm:$0xff]
    %v810 = vld [vmem:[#allocation2 + $0xa8] sm:$0xff]
    %v811 = vld [vmem:[#allocation2 + $0xb0] sm:$0xff]
    %v812 = vld [vmem:[#allocation2 + $0xb8] sm:$0xff]
    %v813 = vld [vmem:[#allocation2 + $0xc0] sm:$0xff]
    %v814 = vld [vmem:[#allocation2 + $0xc8] sm:$0xff]
    %v815 = vld [vmem:[#allocation2 + $0xd0] sm:$0xff]
    %v816 = vld [vmem:[#allocation2 + $0xd8] sm:$0xff]
    %v817 = vld [vmem:[#allocation2 + $0xe0] sm:$0xff]
    %v818 = vld [vmem:[#allocation2 + $0xe8] sm:$0xff]
    %v819 = vld [vmem:[#allocation2 + $0xf0] sm:$0xff]
    %v820 = vld [vmem:[#allocation2 + $0xf8] sm:$0xff]
    %v821 = vld [vmem:[#allocation2 + $0x100] sm:$0xff]
    %v822 = vld [vmem:[#allocation2 + $0x108] sm:$0xff]
    %v823 = vld [vmem:[#allocation2 + $0x110] sm:$0xff]
    %v824 = vld [vmem:[#allocation2 + $0x118] sm:$0xff]
    %v825 = vld [vmem:[#allocation2 + $0x120] sm:$0xff]
    %v826 = vld [vmem:[#allocation2 + $0x128] sm:$0xff]
    %v827 = vld [vmem:[#allocation2 + $0x130] sm:$0xff]
    %v828 = vld [vmem:[#allocation2 + $0x138] sm:$0xff]
    %v829 = vld [vmem:[#allocation2 + $0x140] sm:$0xff]
    %v830 = vld [vmem:[#allocation2 + $0x148] sm:$0xff]
    %v831 = vld [vmem:[#allocation2 + $0x150] sm:$0xff]
    %v832 = vld [vmem:[#allocation2 + $0x158] sm:$0xff]
    %v833 = vld [vmem:[#allocation2 + $0x160] sm:$0xff]
    %v834 = vld [vmem:[#allocation2 + $0x168] sm:$0xff]
    %v835 = vld [vmem:[#allocation2 + $0x170] sm:$0xff]
    %v836 = vld [vmem:[#allocation2 + $0x178] sm:$0xff]
    %v837 = vld [vmem:[#allocation2 + $0x180] sm:$0xff]
    %v838 = vld [vmem:[#allocation2 + $0x188] sm:$0xff]
    %v839 = vld [vmem:[#allocation2 + $0x190] sm:$0xff]
    %v840 = vld [vmem:[#allocation2 + $0x198] sm:$0xff]
    %v841 = vld [vmem:[#allocation2 + $0x1a0] sm:$0xff]
    %v842 = vld [vmem:[#allocation2 + $0x1a8] sm:$0xff]
    %v843 = vld [vmem:[#allocation2 + $0x1b0] sm:$0xff]
    %v844 = vld [vmem:[#allocation2 + $0x1b8] sm:$0xff]
    %v845 = vld [vmem:[#allocation2 + $0x1c0] sm:$0xff]
    %v846 = vld [vmem:[#allocation2 + $0x1c8] sm:$0xff]
    %v847 = vld [vmem:[#allocation2 + $0x1d0] sm:$0xff]
    %v848 = vld [vmem:[#allocation2 + $0x1d8] sm:$0xff]
    %v849 = vld [vmem:[#allocation2 + $0x1e0] sm:$0xff]
    %v850 = vld [vmem:[#allocation2 + $0x1e8] sm:$0xff]
    %v851 = vld [vmem:[#allocation2 + $0x1f0] sm:$0xff]
    %v852 = vld [vmem:[#allocation2 + $0x1f8] sm:$0xff]
    %v853 = vsel %vm721, %v789, 0.0
    %v854 = vsel %vm721, %v790, 0.0
    %v855 = vadd.f32 %v853, %v854
    %v856 = vsel %vm721, %v791, 0.0
    %v857 = vadd.f32 %v855, %v856
    %v858 = vsel %vm721, %v792, 0.0
    %v859 = vadd.f32 %v857, %v858
    %v860 = vsel %vm721, %v793, 0.0
    %v861 = vadd.f32 %v859, %v860
    %v862 = vsel %vm721, %v794, 0.0
    %v863 = vadd.f32 %v861, %v862
    %v864 = vsel %vm721, %v795, 0.0
    %v865 = vadd.f32 %v863, %v864
    %v866 = vsel %vm721, %v796, 0.0
    %v867 = vadd.f32 %v865, %v866
    %v868 = vsel %vm721, %v797, 0.0
    %v869 = vadd.f32 %v867, %v868
    %v870 = vsel %vm721, %v798, 0.0
    %v871 = vadd.f32 %v869, %v870
    %v872 = vsel %vm721, %v799, 0.0
    %v873 = vadd.f32 %v871, %v872
    %v874 = vsel %vm721, %v800, 0.0
    %v875 = vadd.f32 %v873, %v874
    %v876 = vsel %vm721, %v801, 0.0
    %v877 = vadd.f32 %v875, %v876
    %v878 = vsel %vm721, %v802, 0.0
    %v879 = vadd.f32 %v877, %v878
    %v880 = vsel %vm721, %v803, 0.0
    %v881 = vadd.f32 %v879, %v880
    %v882 = vsel %vm721, %v804, 0.0
    %v883 = vadd.f32 %v881, %v882
    %v884 = vsel %vm721, %v805, 0.0
    %v885 = vadd.f32 %v883, %v884
    %v886 = vsel %vm721, %v806, 0.0
    %v887 = vadd.f32 %v885, %v886
    %v888 = vsel %vm721, %v807, 0.0
    %v889 = vadd.f32 %v887, %v888
    %v890 = vsel %vm721, %v808, 0.0
    %v891 = vadd.f32 %v889, %v890
    %v892 = vsel %vm721, %v809, 0.0
    %v893 = vadd.f32 %v891, %v892
    %v894 = vsel %vm721, %v810, 0.0
    %v895 = vadd.f32 %v893, %v894
    %v896 = vsel %vm721, %v811, 0.0
    %v897 = vadd.f32 %v895, %v896
    %v898 = vsel %vm721, %v812, 0.0
    %v899 = vadd.f32 %v897, %v898
    %v900 = vsel %vm721, %v813, 0.0
    %v901 = vadd.f32 %v899, %v900
    %v902 = vsel %vm721, %v814, 0.0
    %v903 = vadd.f32 %v901, %v902
    %v904 = vsel %vm721, %v815, 0.0
    %v905 = vadd.f32 %v903, %v904
    %v906 = vsel %vm721, %v816, 0.0
    %v907 = vadd.f32 %v905, %v906
    %v908 = vsel %vm721, %v817, 0.0
    %v909 = vadd.f32 %v907, %v908
    %v910 = vsel %vm721, %v818, 0.0
    %v911 = vadd.f32 %v909, %v910
    %v912 = vsel %vm721, %v819, 0.0
    %v913 = vadd.f32 %v911, %v912
    %v914 = vsel %vm721, %v820, 0.0
    %v915 = vadd.f32 %v913, %v914
    %v916 = vsel %vm721, %v821, 0.0
    %v917 = vadd.f32 %v915, %v916
    %v918 = vsel %vm721, %v822, 0.0
    %v919 = vadd.f32 %v917, %v918
    %v920 = vsel %vm721, %v823, 0.0
    %v921 = vadd.f32 %v919, %v920
    %v922 = vsel %vm721, %v824, 0.0
    %v923 = vadd.f32 %v921, %v922
    %v924 = vsel %vm721, %v825, 0.0
    %v925 = vadd.f32 %v923, %v924
    %v926 = vsel %vm721, %v826, 0.0
    %v927 = vadd.f32 %v925, %v926
    %v928 = vsel %vm721, %v827, 0.0
    %v929 = vadd.f32 %v927, %v928
    %v930 = vsel %vm721, %v828, 0.0
    %v931 = vadd.f32 %v929, %v930
    %v932 = vsel %vm721, %v829, 0.0
    %v933 = vadd.f32 %v931, %v932
    %v934 = vsel %vm721, %v830, 0.0
    %v935 = vadd.f32 %v933, %v934
    %v936 = vsel %vm721, %v831, 0.0
    %v937 = vadd.f32 %v935, %v936
    %v938 = vsel %vm721, %v832, 0.0
    %v939 = vadd.f32 %v937, %v938
    %v940 = vsel %vm721, %v833, 0.0
    %v941 = vadd.f32 %v939, %v940
    %v942 = vsel %vm721, %v834, 0.0
    %v943 = vadd.f32 %v941, %v942
    %v944 = vsel %vm721, %v835, 0.0
    %v945 = vadd.f32 %v943, %v944
    %v946 = vsel %vm721, %v836, 0.0
    %v947 = vadd.f32 %v945, %v946
    %v948 = vsel %vm721, %v837, 0.0
    %v949 = vadd.f32 %v947, %v948
    %v950 = vsel %vm721, %v838, 0.0
    %v951 = vadd.f32 %v949, %v950
    %v952 = vsel %vm721, %v839, 0.0
    %v953 = vadd.f32 %v951, %v952
    %v954 = vsel %vm721, %v840, 0.0
    %v955 = vadd.f32 %v953, %v954
    %v956 = vsel %vm721, %v841, 0.0
    %v957 = vadd.f32 %v955, %v956
    %v958 = vsel %vm721, %v842, 0.0
    %v959 = vadd.f32 %v957, %v958
    %v960 = vsel %vm721, %v843, 0.0
    %v961 = vadd.f32 %v959, %v960
    %v962 = vsel %vm721, %v844, 0.0
    %v963 = vadd.f32 %v961, %v962
    %v964 = vsel %vm721, %v845, 0.0
    %v965 = vadd.f32 %v963, %v964
    %v966 = vsel %vm721, %v846, 0.0
    %v967 = vadd.f32 %v965, %v966
    %v968 = vsel %vm721, %v847, 0.0
    %v969 = vadd.f32 %v967, %v968
    %v970 = vsel %vm721, %v848, 0.0
    %v971 = vadd.f32 %v969, %v970
    %v972 = vsel %vm721, %v849, 0.0
    %v973 = vadd.f32 %v971, %v972
    %v974 = vsel %vm721, %v850, 0.0
    %v975 = vadd.f32 %v973, %v974
    %v976 = vsel %vm721, %v851, 0.0
    %v977 = vadd.f32 %v975, %v976
    %v978 = vsel %vm721, %v852, 0.0
    %v979 = vadd.f32 %v977, %v978
    %v980 = vrot.slane %v979, 4
    %v981 = vadd.f32 %v979, %v980
    %v982 = vrot.slane %v981, 2
    %v983 = vadd.f32 %v981, %v982
    %v984 = vrot.slane %v983, 1
    %v985 = vadd.f32 %v983, %v984
    %v986 = vmul.f32 %v985, 0.001953125
    %v987 = vsub.f32 %v789, %v986
    %v988 = vsub.f32 %v790, %v986
    %v989 = vsub.f32 %v791, %v986
    %v990 = vsub.f32 %v792, %v986
    %v991 = vsub.f32 %v793, %v986
    %v992 = vsub.f32 %v794, %v986
    %v993 = vsub.f32 %v795, %v986
    %v994 = vsub.f32 %v796, %v986
    %v995 = vsub.f32 %v797, %v986
    %v996 = vsub.f32 %v798, %v986
    %v997 = vsub.f32 %v799, %v986
    %v998 = vsub.f32 %v800, %v986
    %v999 = vsub.f32 %v801, %v986
    %v1000 = vsub.f32 %v802, %v986
    %v1001 = vsub.f32 %v803, %v986
    %v1002 = vsub.f32 %v804, %v986
    %v1003 = vsub.f32 %v805, %v986
    %v1004 = vsub.f32 %v806, %v986
    %v1005 = vsub.f32 %v807, %v986
    %v1006 = vsub.f32 %v808, %v986
    %v1007 = vsub.f32 %v809, %v986
    %v1008 = vsub.f32 %v810, %v986
    %v1009 = vsub.f32 %v811, %v986
    %v1010 = vsub.f32 %v812, %v986
    %v1011 = vsub.f32 %v813, %v986
    %v1012 = vsub.f32 %v814, %v986
    %v1013 = vsub.f32 %v815, %v986
    %v1014 = vsub.f32 %v816, %v986
    %v1015 = vsub.f32 %v817, %v986
    %v1016 = vsub.f32 %v818, %v986
    %v1017 = vsub.f32 %v819, %v986
    %v1018 = vsub.f32 %v820, %v986
    %v1019 = vsub.f32 %v821, %v986
    %v1020 = vsub.f32 %v822, %v986
    %v1021 = vsub.f32 %v823, %v986
    %v1022 = vsub.f32 %v824, %v986
    %v1023 = vsub.f32 %v825, %v986
    %v1024 = vsub.f32 %v826, %v986
    %v1025 = vsub.f32 %v827, %v986
    %v1026 = vsub.f32 %v828, %v986
    %v1027 = vsub.f32 %v829, %v986
    %v1028 = vsub.f32 %v830, %v986
    %v1029 = vsub.f32 %v831, %v986
    %v1030 = vsub.f32 %v832, %v986
    %v1031 = vsub.f32 %v833, %v986
    %v1032 = vsub.f32 %v834, %v986
    %v1033 = vsub.f32 %v835, %v986
    %v1034 = vsub.f32 %v836, %v986
    %v1035 = vsub.f32 %v837, %v986
    %v1036 = vsub.f32 %v838, %v986
    %v1037 = vsub.f32 %v839, %v986
    %v1038 = vsub.f32 %v840, %v986
    %v1039 = vsub.f32 %v841, %v986
    %v1040 = vsub.f32 %v842, %v986
    %v1041 = vsub.f32 %v843, %v986
    %v1042 = vsub.f32 %v844, %v986
    %v1043 = vsub.f32 %v845, %v986
    %v1044 = vsub.f32 %v846, %v986
    %v1045 = vsub.f32 %v847, %v986
    %v1046 = vsub.f32 %v848, %v986
    %v1047 = vsub.f32 %v849, %v986
    %v1048 = vsub.f32 %v850, %v986
    %v1049 = vsub.f32 %v851, %v986
    %v1050 = vsub.f32 %v852, %v986
    %v1051 = vmul.f32 %v987, %v987
    %v1052 = vmul.f32 %v988, %v988
    %v1053 = vmul.f32 %v989, %v989
    %v1054 = vmul.f32 %v990, %v990
    %v1055 = vmul.f32 %v991, %v991
    %v1056 = vmul.f32 %v992, %v992
    %v1057 = vmul.f32 %v993, %v993
    %v1058 = vmul.f32 %v994, %v994
    %v1059 = vmul.f32 %v995, %v995
    %v1060 = vmul.f32 %v996, %v996
    %v1061 = vmul.f32 %v997, %v997
    %v1062 = vmul.f32 %v998, %v998
    %v1063 = vmul.f32 %v999, %v999
    %v1064 = vmul.f32 %v1000, %v1000
    %v1065 = vmul.f32 %v1001, %v1001
    %v1066 = vmul.f32 %v1002, %v1002
    %v1067 = vmul.f32 %v1003, %v1003
    %v1068 = vmul.f32 %v1004, %v1004
    %v1069 = vmul.f32 %v1005, %v1005
    %v1070 = vmul.f32 %v1006, %v1006
    %v1071 = vmul.f32 %v1007, %v1007
    %v1072 = vmul.f32 %v1008, %v1008
    %v1073 = vmul.f32 %v1009, %v1009
    %v1074 = vmul.f32 %v1010, %v1010
    %v1075 = vmul.f32 %v1011, %v1011
    %v1076 = vmul.f32 %v1012, %v1012
    %v1077 = vmul.f32 %v1013, %v1013
    %v1078 = vmul.f32 %v1014, %v1014
    %v1079 = vmul.f32 %v1015, %v1015
    %v1080 = vmul.f32 %v1016, %v1016
    %v1081 = vmul.f32 %v1017, %v1017
    %v1082 = vmul.f32 %v1018, %v1018
    %v1083 = vmul.f32 %v1019, %v1019
    %v1084 = vmul.f32 %v1020, %v1020
    %v1085 = vmul.f32 %v1021, %v1021
    %v1086 = vmul.f32 %v1022, %v1022
    %v1087 = vmul.f32 %v1023, %v1023
    %v1088 = vmul.f32 %v1024, %v1024
    %v1089 = vmul.f32 %v1025, %v1025
    %v1090 = vmul.f32 %v1026, %v1026
    %v1091 = vmul.f32 %v1027, %v1027
    %v1092 = vmul.f32 %v1028, %v1028
    %v1093 = vmul.f32 %v1029, %v1029
    %v1094 = vmul.f32 %v1030, %v1030
    %v1095 = vmul.f32 %v1031, %v1031
    %v1096 = vmul.f32 %v1032, %v1032
    %v1097 = vmul.f32 %v1033, %v1033
    %v1098 = vmul.f32 %v1034, %v1034
    %v1099 = vmul.f32 %v1035, %v1035
    %v1100 = vmul.f32 %v1036, %v1036
    %v1101 = vmul.f32 %v1037, %v1037
    %v1102 = vmul.f32 %v1038, %v1038
    %v1103 = vmul.f32 %v1039, %v1039
    %v1104 = vmul.f32 %v1040, %v1040
    %v1105 = vmul.f32 %v1041, %v1041
    %v1106 = vmul.f32 %v1042, %v1042
    %v1107 = vmul.f32 %v1043, %v1043
    %v1108 = vmul.f32 %v1044, %v1044
    %v1109 = vmul.f32 %v1045, %v1045
    %v1110 = vmul.f32 %v1046, %v1046
    %v1111 = vmul.f32 %v1047, %v1047
    %v1112 = vmul.f32 %v1048, %v1048
    %v1113 = vmul.f32 %v1049, %v1049
    %v1114 = vmul.f32 %v1050, %v1050
    %v1115 = vsel %vm721, %v1051, 0.0
    %v1116 = vsel %vm721, %v1052, 0.0
    %v1117 = vadd.f32 %v1115, %v1116
    %v1118 = vsel %vm721, %v1053, 0.0
    %v1119 = vadd.f32 %v1117, %v1118
    %v1120 = vsel %vm721, %v1054, 0.0
    %v1121 = vadd.f32 %v1119, %v1120
    %v1122 = vsel %vm721, %v1055, 0.0
    %v1123 = vadd.f32 %v1121, %v1122
    %v1124 = vsel %vm721, %v1056, 0.0
    %v1125 = vadd.f32 %v1123, %v1124
    %v1126 = vsel %vm721, %v1057, 0.0
    %v1127 = vadd.f32 %v1125, %v1126
    %v1128 = vsel %vm721, %v1058, 0.0
    %v1129 = vadd.f32 %v1127, %v1128
    %v1130 = vsel %vm721, %v1059, 0.0
    %v1131 = vadd.f32 %v1129, %v1130
    %v1132 = vsel %vm721, %v1060, 0.0
    %v1133 = vadd.f32 %v1131, %v1132
    %v1134 = vsel %vm721, %v1061, 0.0
    %v1135 = vadd.f32 %v1133, %v1134
    %v1136 = vsel %vm721, %v1062, 0.0
    %v1137 = vadd.f32 %v1135, %v1136
    %v1138 = vsel %vm721, %v1063, 0.0
    %v1139 = vadd.f32 %v1137, %v1138
    %v1140 = vsel %vm721, %v1064, 0.0
    %v1141 = vadd.f32 %v1139, %v1140
    %v1142 = vsel %vm721, %v1065, 0.0
    %v1143 = vadd.f32 %v1141, %v1142
    %v1144 = vsel %vm721, %v1066, 0.0
    %v1145 = vadd.f32 %v1143, %v1144
    %v1146 = vsel %vm721, %v1067, 0.0
    %v1147 = vadd.f32 %v1145, %v1146
    %v1148 = vsel %vm721, %v1068, 0.0
    %v1149 = vadd.f32 %v1147, %v1148
    %v1150 = vsel %vm721, %v1069, 0.0
    %v1151 = vadd.f32 %v1149, %v1150
    %v1152 = vsel %vm721, %v1070, 0.0
    %v1153 = vadd.f32 %v1151, %v1152
    %v1154 = vsel %vm721, %v1071, 0.0
    %v1155 = vadd.f32 %v1153, %v1154
    %v1156 = vsel %vm721, %v1072, 0.0
    %v1157 = vadd.f32 %v1155, %v1156
    %v1158 = vsel %vm721, %v1073, 0.0
    %v1159 = vadd.f32 %v1157, %v1158
    %v1160 = vsel %vm721, %v1074, 0.0
    %v1161 = vadd.f32 %v1159, %v1160
    %v1162 = vsel %vm721, %v1075, 0.0
    %v1163 = vadd.f32 %v1161, %v1162
    %v1164 = vsel %vm721, %v1076, 0.0
    %v1165 = vadd.f32 %v1163, %v1164
    %v1166 = vsel %vm721, %v1077, 0.0
    %v1167 = vadd.f32 %v1165, %v1166
    %v1168 = vsel %vm721, %v1078, 0.0
    %v1169 = vadd.f32 %v1167, %v1168
    %v1170 = vsel %vm721, %v1079, 0.0
    %v1171 = vadd.f32 %v1169, %v1170
    %v1172 = vsel %vm721, %v1080, 0.0
    %v1173 = vadd.f32 %v1171, %v1172
    %v1174 = vsel %vm721, %v1081, 0.0
    %v1175 = vadd.f32 %v1173, %v1174
    %v1176 = vsel %vm721, %v1082, 0.0
    %v1177 = vadd.f32 %v1175, %v1176
    %v1178 = vsel %vm721, %v1083, 0.0
    %v1179 = vadd.f32 %v1177, %v1178
    %v1180 = vsel %vm721, %v1084, 0.0
    %v1181 = vadd.f32 %v1179, %v1180
    %v1182 = vsel %vm721, %v1085, 0.0
    %v1183 = vadd.f32 %v1181, %v1182
    %v1184 = vsel %vm721, %v1086, 0.0
    %v1185 = vadd.f32 %v1183, %v1184
    %v1186 = vsel %vm721, %v1087, 0.0
    %v1187 = vadd.f32 %v1185, %v1186
    %v1188 = vsel %vm721, %v1088, 0.0
    %v1189 = vadd.f32 %v1187, %v1188
    %v1190 = vsel %vm721, %v1089, 0.0
    %v1191 = vadd.f32 %v1189, %v1190
    %v1192 = vsel %vm721, %v1090, 0.0
    %v1193 = vadd.f32 %v1191, %v1192
    %v1194 = vsel %vm721, %v1091, 0.0
    %v1195 = vadd.f32 %v1193, %v1194
    %v1196 = vsel %vm721, %v1092, 0.0
    %v1197 = vadd.f32 %v1195, %v1196
    %v1198 = vsel %vm721, %v1093, 0.0
    %v1199 = vadd.f32 %v1197, %v1198
    %v1200 = vsel %vm721, %v1094, 0.0
    %v1201 = vadd.f32 %v1199, %v1200
    %v1202 = vsel %vm721, %v1095, 0.0
    %v1203 = vadd.f32 %v1201, %v1202
    %v1204 = vsel %vm721, %v1096, 0.0
    %v1205 = vadd.f32 %v1203, %v1204
    %v1206 = vsel %vm721, %v1097, 0.0
    %v1207 = vadd.f32 %v1205, %v1206
    %v1208 = vsel %vm721, %v1098, 0.0
    %v1209 = vadd.f32 %v1207, %v1208
    %v1210 = vsel %vm721, %v1099, 0.0
    %v1211 = vadd.f32 %v1209, %v1210
    %v1212 = vsel %vm721, %v1100, 0.0
    %v1213 = vadd.f32 %v1211, %v1212
    %v1214 = vsel %vm721, %v1101, 0.0
    %v1215 = vadd.f32 %v1213, %v1214
    %v1216 = vsel %vm721, %v1102, 0.0
    %v1217 = vadd.f32 %v1215, %v1216
    %v1218 = vsel %vm721, %v1103, 0.0
    %v1219 = vadd.f32 %v1217, %v1218
    %v1220 = vsel %vm721, %v1104, 0.0
    %v1221 = vadd.f32 %v1219, %v1220
    %v1222 = vsel %vm721, %v1105, 0.0
    %v1223 = vadd.f32 %v1221, %v1222
    %v1224 = vsel %vm721, %v1106, 0.0
    %v1225 = vadd.f32 %v1223, %v1224
    %v1226 = vsel %vm721, %v1107, 0.0
    %v1227 = vadd.f32 %v1225, %v1226
    %v1228 = vsel %vm721, %v1108, 0.0
    %v1229 = vadd.f32 %v1227, %v1228
    %v1230 = vsel %vm721, %v1109, 0.0
    %v1231 = vadd.f32 %v1229, %v1230
    %v1232 = vsel %vm721, %v1110, 0.0
    %v1233 = vadd.f32 %v1231, %v1232
    %v1234 = vsel %vm721, %v1111, 0.0
    %v1235 = vadd.f32 %v1233, %v1234
    %v1236 = vsel %vm721, %v1112, 0.0
    %v1237 = vadd.f32 %v1235, %v1236
    %v1238 = vsel %vm721, %v1113, 0.0
    %v1239 = vadd.f32 %v1237, %v1238
    %v1240 = vsel %vm721, %v1114, 0.0
    %v1241 = vadd.f32 %v1239, %v1240
    %v1242 = vrot.slane %v1241, 4
    %v1243 = vadd.f32 %v1241, %v1242
    %v1244 = vrot.slane %v1243, 2
    %v1245 = vadd.f32 %v1243, %v1244
    %v1246 = vrot.slane %v1245, 1
    %v1247 = vadd.f32 %v1245, %v1246
    %v1248 = vmul.f32 %v1247, 0.001953125
    %v1249 = vadd.f32 %v1248, 1e-05
    %v1250 = vrsqrt.pop %v1249
    %v1251 = vmul.f32 %v1250, %v1249
    %v1252 = vmul.f32 %v1251, %v1250
    %v1253 = vmul.f32 0.5, %v1252
    %v1254 = vsub.f32 1.5, %v1253
    %v1255 = vmul.f32 %v1250, %v1254
    %vm1256 = vweird.f32 %v1249
    %vm1257 = vweird.f32 %v1250
    %vm1258 = vmor %vm1256, %vm1257
    %v1259 = vsel %vm1258, %v1250, %v1255
    %v1260 = vmul.f32 %v987, %v1259
    %v1261 = vmul.f32 %v988, %v1259
    %v1262 = vmul.f32 %v989, %v1259
    %v1263 = vmul.f32 %v990, %v1259
    %v1264 = vmul.f32 %v991, %v1259
    %v1265 = vmul.f32 %v992, %v1259
    %v1266 = vmul.f32 %v993, %v1259
    %v1267 = vmul.f32 %v994, %v1259
    %v1268 = vmul.f32 %v995, %v1259
    %v1269 = vmul.f32 %v996, %v1259
    %v1270 = vmul.f32 %v997, %v1259
    %v1271 = vmul.f32 %v998, %v1259
    %v1272 = vmul.f32 %v999, %v1259
    %v1273 = vmul.f32 %v1000, %v1259
    %v1274 = vmul.f32 %v1001, %v1259
    %v1275 = vmul.f32 %v1002, %v1259
    %v1276 = vmul.f32 %v1003, %v1259
    %v1277 = vmul.f32 %v1004, %v1259
    %v1278 = vmul.f32 %v1005, %v1259
    %v1279 = vmul.f32 %v1006, %v1259
    %v1280 = vmul.f32 %v1007, %v1259
    %v1281 = vmul.f32 %v1008, %v1259
    %v1282 = vmul.f32 %v1009, %v1259
    %v1283 = vmul.f32 %v1010, %v1259
    %v1284 = vmul.f32 %v1011, %v1259
    %v1285 = vmul.f32 %v1012, %v1259
    %v1286 = vmul.f32 %v1013, %v1259
    %v1287 = vmul.f32 %v1014, %v1259
    %v1288 = vmul.f32 %v1015, %v1259
    %v1289 = vmul.f32 %v1016, %v1259
    %v1290 = vmul.f32 %v1017, %v1259
    %v1291 = vmul.f32 %v1018, %v1259
    %v1292 = vmul.f32 %v1019, %v1259
    %v1293 = vmul.f32 %v1020, %v1259
    %v1294 = vmul.f32 %v1021, %v1259
    %v1295 = vmul.f32 %v1022, %v1259
    %v1296 = vmul.f32 %v1023, %v1259
    %v1297 = vmul.f32 %v1024, %v1259
    %v1298 = vmul.f32 %v1025, %v1259
    %v1299 = vmul.f32 %v1026, %v1259
    %v1300 = vmul.f32 %v1027, %v1259
    %v1301 = vmul.f32 %v1028, %v1259
    %v1302 = vmul.f32 %v1029, %v1259
    %v1303 = vmul.f32 %v1030, %v1259
    %v1304 = vmul.f32 %v1031, %v1259
    %v1305 = vmul.f32 %v1032, %v1259
    %v1306 = vmul.f32 %v1033, %v1259
    %v1307 = vmul.f32 %v1034, %v1259
    %v1308 = vmul.f32 %v1035, %v1259
    %v1309 = vmul.f32 %v1036, %v1259
    %v1310 = vmul.f32 %v1037, %v1259
    %v1311 = vmul.f32 %v1038, %v1259
    %v1312 = vmul.f32 %v1039, %v1259
    %v1313 = vmul.f32 %v1040, %v1259
    %v1314 = vmul.f32 %v1041, %v1259
    %v1315 = vmul.f32 %v1042, %v1259
    %v1316 = vmul.f32 %v1043, %v1259
    %v1317 = vmul.f32 %v1044, %v1259
    %v1318 = vmul.f32 %v1045, %v1259
    %v1319 = vmul.f32 %v1046, %v1259
    %v1320 = vmul.f32 %v1047, %v1259
    %v1321 = vmul.f32 %v1048, %v1259
    %v1322 = vmul.f32 %v1049, %v1259
    %v1323 = vmul.f32 %v1050, %v1259
    %v1324 = vpack.c.bf16 %v1260, %v1260
    %v1325 = vpack.c.bf16 %v1261, %v1261
    %v1326 = vpack.c.bf16 %v1262, %v1262
    %v1327 = vpack.c.bf16 %v1263, %v1263
    %v1328 = vpack.c.bf16 %v1264, %v1264
    %v1329 = vpack.c.bf16 %v1265, %v1265
    %v1330 = vpack.c.bf16 %v1266, %v1266
    %v1331 = vpack.c.bf16 %v1267, %v1267
    %v1332 = vpack.c.bf16 %v1268, %v1268
    %v1333 = vpack.c.bf16 %v1269, %v1269
    %v1334 = vpack.c.bf16 %v1270, %v1270
    %v1335 = vpack.c.bf16 %v1271, %v1271
    %v1336 = vpack.c.bf16 %v1272, %v1272
    %v1337 = vpack.c.bf16 %v1273, %v1273
    %v1338 = vpack.c.bf16 %v1274, %v1274
    %v1339 = vpack.c.bf16 %v1275, %v1275
    %v1340 = vpack.c.bf16 %v1276, %v1276
    %v1341 = vpack.c.bf16 %v1277, %v1277
    %v1342 = vpack.c.bf16 %v1278, %v1278
    %v1343 = vpack.c.bf16 %v1279, %v1279
    %v1344 = vpack.c.bf16 %v1280, %v1280
    %v1345 = vpack.c.bf16 %v1281, %v1281
    %v1346 = vpack.c.bf16 %v1282, %v1282
    %v1347 = vpack.c.bf16 %v1283, %v1283
    %v1348 = vpack.c.bf16 %v1284, %v1284
    %v1349 = vpack.c.bf16 %v1285, %v1285
    %v1350 = vpack.c.bf16 %v1286, %v1286
    %v1351 = vpack.c.bf16 %v1287, %v1287
    %v1352 = vpack.c.bf16 %v1288, %v1288
    %v1353 = vpack.c.bf16 %v1289, %v1289
    %v1354 = vpack.c.bf16 %v1290, %v1290
    %v1355 = vpack.c.bf16 %v1291, %v1291
    %v1356 = vpack.c.bf16 %v1292, %v1292
    %v1357 = vpack.c.bf16 %v1293, %v1293
    %v1358 = vpack.c.bf16 %v1294, %v1294
    %v1359 = vpack.c.bf16 %v1295, %v1295
    %v1360 = vpack.c.bf16 %v1296, %v1296
    %v1361 = vpack.c.bf16 %v1297, %v1297
    %v1362 = vpack.c.bf16 %v1298, %v1298
    %v1363 = vpack.c.bf16 %v1299, %v1299
    %v1364 = vpack.c.bf16 %v1300, %v1300
    %v1365 = vpack.c.bf16 %v1301, %v1301
    %v1366 = vpack.c.bf16 %v1302, %v1302
    %v1367 = vpack.c.bf16 %v1303, %v1303
    %v1368 = vpack.c.bf16 %v1304, %v1304
    %v1369 = vpack.c.bf16 %v1305, %v1305
    %v1370 = vpack.c.bf16 %v1306, %v1306
    %v1371 = vpack.c.bf16 %v1307, %v1307
    %v1372 = vpack.c.bf16 %v1308, %v1308
    %v1373 = vpack.c.bf16 %v1309, %v1309
    %v1374 = vpack.c.bf16 %v1310, %v1310
    %v1375 = vpack.c.bf16 %v1311, %v1311
    %v1376 = vpack.c.bf16 %v1312, %v1312
    %v1377 = vpack.c.bf16 %v1313, %v1313
    %v1378 = vpack.c.bf16 %v1314, %v1314
    %v1379 = vpack.c.bf16 %v1315, %v1315
    %v1380 = vpack.c.bf16 %v1316, %v1316
    %v1381 = vpack.c.bf16 %v1317, %v1317
    %v1382 = vpack.c.bf16 %v1318, %v1318
    %v1383 = vpack.c.bf16 %v1319, %v1319
    %v1384 = vpack.c.bf16 %v1320, %v1320
    %v1385 = vpack.c.bf16 %v1321, %v1321
    %v1386 = vpack.c.bf16 %v1322, %v1322
    %v1387 = vpack.c.bf16 %v1323, %v1323
    %vm1388 = vcmask 93184
    %1389 = vst.msk [vmem:[%s2] sm:$0xf] %vm1388, %v1324
    %1390 = vst.msk [vmem:[%s2 + $0x4] sm:$0xf] %vm1388, %v1325
    %1391 = vst.msk [vmem:[%s2 + $0x8] sm:$0xf] %vm1388, %v1326
    %1392 = vst.msk [vmem:[%s2 + $0xc] sm:$0xf] %vm1388, %v1327
    %1393 = vst.msk [vmem:[%s2 + $0x10] sm:$0xf] %vm1388, %v1328
    %1394 = vst.msk [vmem:[%s2 + $0x14] sm:$0xf] %vm1388, %v1329
    %1395 = vst.msk [vmem:[%s2 + $0x18] sm:$0xf] %vm1388, %v1330
    %1396 = vst.msk [vmem:[%s2 + $0x1c] sm:$0xf] %vm1388, %v1331
    %1397 = vst.msk [vmem:[%s2 + $0x20] sm:$0xf] %vm1388, %v1332
    %1398 = vst.msk [vmem:[%s2 + $0x24] sm:$0xf] %vm1388, %v1333
    %1399 = vst.msk [vmem:[%s2 + $0x28] sm:$0xf] %vm1388, %v1334
    %1400 = vst.msk [vmem:[%s2 + $0x2c] sm:$0xf] %vm1388, %v1335
    %1401 = vst.msk [vmem:[%s2 + $0x30] sm:$0xf] %vm1388, %v1336
    %1402 = vst.msk [vmem:[%s2 + $0x34] sm:$0xf] %vm1388, %v1337
    %1403 = vst.msk [vmem:[%s2 + $0x38] sm:$0xf] %vm1388, %v1338
    %1404 = vst.msk [vmem:[%s2 + $0x3c] sm:$0xf] %vm1388, %v1339
    %1405 = vst.msk [vmem:[%s2 + $0x40] sm:$0xf] %vm1388, %v1340
    %1406 = vst.msk [vmem:[%s2 + $0x44] sm:$0xf] %vm1388, %v1341
    %1407 = vst.msk [vmem:[%s2 + $0x48] sm:$0xf] %vm1388, %v1342
    %1408 = vst.msk [vmem:[%s2 + $0x4c] sm:$0xf] %vm1388, %v1343
    %1409 = vst.msk [vmem:[%s2 + $0x50] sm:$0xf] %vm1388, %v1344
    %1410 = vst.msk [vmem:[%s2 + $0x54] sm:$0xf] %vm1388, %v1345
    %1411 = vst.msk [vmem:[%s2 + $0x58] sm:$0xf] %vm1388, %v1346
    %1412 = vst.msk [vmem:[%s2 + $0x5c] sm:$0xf] %vm1388, %v1347
    %1413 = vst.msk [vmem:[%s2 + $0x60] sm:$0xf] %vm1388, %v1348
    %1414 = vst.msk [vmem:[%s2 + $0x64] sm:$0xf] %vm1388, %v1349
    %1415 = vst.msk [vmem:[%s2 + $0x68] sm:$0xf] %vm1388, %v1350
    %1416 = vst.msk [vmem:[%s2 + $0x6c] sm:$0xf] %vm1388, %v1351
    %1417 = vst.msk [vmem:[%s2 + $0x70] sm:$0xf] %vm1388, %v1352
    %1418 = vst.msk [vmem:[%s2 + $0x74] sm:$0xf] %vm1388, %v1353
    %1419 = vst.msk [vmem:[%s2 + $0x78] sm:$0xf] %vm1388, %v1354
    %1420 = vst.msk [vmem:[%s2 + $0x7c] sm:$0xf] %vm1388, %v1355
    %1421 = vst.msk [vmem:[%s2 + $0x80] sm:$0xf] %vm1388, %v1356
    %1422 = vst.msk [vmem:[%s2 + $0x84] sm:$0xf] %vm1388, %v1357
    %1423 = vst.msk [vmem:[%s2 + $0x88] sm:$0xf] %vm1388, %v1358
    %1424 = vst.msk [vmem:[%s2 + $0x8c] sm:$0xf] %vm1388, %v1359
    %1425 = vst.msk [vmem:[%s2 + $0x90] sm:$0xf] %vm1388, %v1360
    %1426 = vst.msk [vmem:[%s2 + $0x94] sm:$0xf] %vm1388, %v1361
    %1427 = vst.msk [vmem:[%s2 + $0x98] sm:$0xf] %vm1388, %v1362
    %1428 = vst.msk [vmem:[%s2 + $0x9c] sm:$0xf] %vm1388, %v1363
    %1429 = vst.msk [vmem:[%s2 + $0xa0] sm:$0xf] %vm1388, %v1364
    %1430 = vst.msk [vmem:[%s2 + $0xa4] sm:$0xf] %vm1388, %v1365
    %1431 = vst.msk [vmem:[%s2 + $0xa8] sm:$0xf] %vm1388, %v1366
    %1432 = vst.msk [vmem:[%s2 + $0xac] sm:$0xf] %vm1388, %v1367
    %1433 = vst.msk [vmem:[%s2 + $0xb0] sm:$0xf] %vm1388, %v1368
    %1434 = vst.msk [vmem:[%s2 + $0xb4] sm:$0xf] %vm1388, %v1369
    %1435 = vst.msk [vmem:[%s2 + $0xb8] sm:$0xf] %vm1388, %v1370
    %1436 = vst.msk [vmem:[%s2 + $0xbc] sm:$0xf] %vm1388, %v1371
    %1437 = vst.msk [vmem:[%s2 + $0xc0] sm:$0xf] %vm1388, %v1372
    %1438 = vst.msk [vmem:[%s2 + $0xc4] sm:$0xf] %vm1388, %v1373
    %1439 = vst.msk [vmem:[%s2 + $0xc8] sm:$0xf] %vm1388, %v1374
    %1440 = vst.msk [vmem:[%s2 + $0xcc] sm:$0xf] %vm1388, %v1375
    %1441 = vst.msk [vmem:[%s2 + $0xd0] sm:$0xf] %vm1388, %v1376
    %1442 = vst.msk [vmem:[%s2 + $0xd4] sm:$0xf] %vm1388, %v1377
    %1443 = vst.msk [vmem:[%s2 + $0xd8] sm:$0xf] %vm1388, %v1378
    %1444 = vst.msk [vmem:[%s2 + $0xdc] sm:$0xf] %vm1388, %v1379
    %1445 = vst.msk [vmem:[%s2 + $0xe0] sm:$0xf] %vm1388, %v1380
    %1446 = vst.msk [vmem:[%s2 + $0xe4] sm:$0xf] %vm1388, %v1381
    %1447 = vst.msk [vmem:[%s2 + $0xe8] sm:$0xf] %vm1388, %v1382
    %1448 = vst.msk [vmem:[%s2 + $0xec] sm:$0xf] %vm1388, %v1383
    %1449 = vst.msk [vmem:[%s2 + $0xf0] sm:$0xf] %vm1388, %v1384
    %1450 = vst.msk [vmem:[%s2 + $0xf4] sm:$0xf] %vm1388, %v1385
    %1451 = vst.msk [vmem:[%s2 + $0xf8] sm:$0xf] %vm1388, %v1386
    %1452 = vst.msk [vmem:[%s2 + $0xfc] sm:$0xf] %vm1388, %v1387
  $region17: #{_lambda_.63} parent=0 // pred_fallthru
    _
  // Predicated region
  $region18: #{_lambda_.63} parent=0 // pred_check
    _
  $region19: #{_lambda_.63} parent=0 // pred_check_branch
    %1454 = sbr.rel (0) target = $region21
  $region20: #{_lambda_.63} parent=0 // pred_region
    _
  $region21: #{_lambda_.63} parent=0 // pred_fallthru
    _
  // Predicated region
  $region22: #{_lambda_.63} parent=0 // pred_check
    _
  $region23: #{_lambda_.63} parent=0 // pred_check_branch
    %1456 = sbr.rel (0) target = $region25
  $region24: #{_lambda_.63} parent=0 // pred_region
    _
  $region25: #{_lambda_.63} parent=0 // pred_fallthru
    _

// kernel: _lambda_.69
$region0: #{_lambda_.69}
  #allocation0 [shape = 'u32[]', space=smem, size = 0x4, offset = 0x4, fixed_abs, tag = 'smem constant byte address 0x4 - core index']
  #allocation1 [shape = 'u32[72,128]{1,0:T(1,128)}', space=vmem, size = 0x9000, scoped, tag = 'internal scratch']
  %s0 = inlined_call_operand.vmem [shape: bf16[9,32,16], index: 0, kind: input, shape index: {}]
  %s1 = inlined_call_operand.vmem [shape: f32[32,1], index: 1, kind: input, shape index: {}]
  %s2 = inlined_call_operand.vmem [shape: bf16[32,16], index: 2, kind: output, shape index: {}]
  %s3 = sld [smem:[#allocation0]]
  $region18: #{_lambda_.69} parent=0
    _
  %s5 = ssub.s32 1, %s3
  %s6 = scalar_select 0, %s5, %s3
  // Predicated region
  $region2: #{_lambda_.69} parent=0 // pred_check
    _
  $region3: #{_lambda_.69} parent=0 // pred_check_branch
    %8 = sbr.rel (0) target = $region5
  $region4: #{_lambda_.69} parent=0 // pred_region
    _
  $region5: #{_lambda_.69} parent=0 // pred_fallthru
    _
  // Predicated region
  $region6: #{_lambda_.69} parent=0 // pred_check
    _
  $region7: #{_lambda_.69} parent=0 // pred_check_branch
    %10 = sbr.rel (0) target = $region9
  $region8: #{_lambda_.69} parent=0 // pred_region
    _
  $region9: #{_lambda_.69} parent=0 // pred_fallthru
    _
  %v11 = vld [vmem:[%s0] sm:$0xf]
  %v12 = vld [vmem:[%s0 + $0x4] sm:$0xf]
  %v13 = vld [vmem:[%s0 + $0x8] sm:$0xf]
  %v14 = vld [vmem:[%s0 + $0xc] sm:$0xf]
  %v15 = vunpack.c.l.bf16 %v11
  %v16 = vunpack.c.l.bf16 %v12
  %v17 = vunpack.c.l.bf16 %v13
  %v18 = vunpack.c.l.bf16 %v14
  %s19 = scalar_lea.vmem %s0, 16
  %v20 = vld [vmem:[%s19] sm:$0xf]
  %v21 = vld [vmem:[%s19 + $0x4] sm:$0xf]
  %v22 = vld [vmem:[%s19 + $0x8] sm:$0xf]
  %v23 = vld [vmem:[%s19 + $0xc] sm:$0xf]
  %v24 = vunpack.c.l.bf16 %v20
  %v25 = vunpack.c.l.bf16 %v21
  %v26 = vunpack.c.l.bf16 %v22
  %v27 = vunpack.c.l.bf16 %v23
  %v28 = vmax.f32 %v15, %v24
  %v29 = vmax.f32 %v16, %v25
  %v30 = vmax.f32 %v17, %v26
  %v31 = vmax.f32 %v18, %v27
  %s32 = scalar_lea.vmem %s0, 32
  %v33 = vld [vmem:[%s32] sm:$0xf]
  %v34 = vld [vmem:[%s32 + $0x4] sm:$0xf]
  %v35 = vld [vmem:[%s32 + $0x8] sm:$0xf]
  %v36 = vld [vmem:[%s32 + $0xc] sm:$0xf]
  %v37 = vunpack.c.l.bf16 %v33
  %v38 = vunpack.c.l.bf16 %v34
  %v39 = vunpack.c.l.bf16 %v35
  %v40 = vunpack.c.l.bf16 %v36
  %v41 = vmax.f32 %v28, %v37
  %v42 = vmax.f32 %v29, %v38
  %v43 = vmax.f32 %v30, %v39
  %v44 = vmax.f32 %v31, %v40
  %s45 = scalar_lea.vmem %s0, 48
  %v46 = vld [vmem:[%s45] sm:$0xf]
  %v47 = vld [vmem:[%s45 + $0x4] sm:$0xf]
  %v48 = vld [vmem:[%s45 + $0x8] sm:$0xf]
  %v49 = vld [vmem:[%s45 + $0xc] sm:$0xf]
  %v50 = vunpack.c.l.bf16 %v46
  %v51 = vunpack.c.l.bf16 %v47
  %v52 = vunpack.c.l.bf16 %v48
  %v53 = vunpack.c.l.bf16 %v49
  %v54 = vmax.f32 %v41, %v50
  %v55 = vmax.f32 %v42, %v51
  %v56 = vmax.f32 %v43, %v52
  %v57 = vmax.f32 %v44, %v53
  %s58 = scalar_lea.vmem %s0, 64
  %v59 = vld [vmem:[%s58] sm:$0xf]
  %v60 = vld [vmem:[%s58 + $0x4] sm:$0xf]
  %v61 = vld [vmem:[%s58 + $0x8] sm:$0xf]
  %v62 = vld [vmem:[%s58 + $0xc] sm:$0xf]
  %v63 = vunpack.c.l.bf16 %v59
  %v64 = vunpack.c.l.bf16 %v60
  %v65 = vunpack.c.l.bf16 %v61
  %v66 = vunpack.c.l.bf16 %v62
  %v67 = vmax.f32 %v54, %v63
  %v68 = vmax.f32 %v55, %v64
  %v69 = vmax.f32 %v56, %v65
  %v70 = vmax.f32 %v57, %v66
  %s71 = scalar_lea.vmem %s0, 80
  %v72 = vld [vmem:[%s71] sm:$0xf]
  %v73 = vld [vmem:[%s71 + $0x4] sm:$0xf]
  %v74 = vld [vmem:[%s71 + $0x8] sm:$0xf]
  %v75 = vld [vmem:[%s71 + $0xc] sm:$0xf]
  %v76 = vunpack.c.l.bf16 %v72
  %v77 = vunpack.c.l.bf16 %v73
  %v78 = vunpack.c.l.bf16 %v74
  %v79 = vunpack.c.l.bf16 %v75
  %v80 = vmax.f32 %v67, %v76
  %v81 = vmax.f32 %v68, %v77
  %v82 = vmax.f32 %v69, %v78
  %v83 = vmax.f32 %v70, %v79
  %s84 = scalar_lea.vmem %s0, 96
  %v85 = vld [vmem:[%s84] sm:$0xf]
  %v86 = vld [vmem:[%s84 + $0x4] sm:$0xf]
  %v87 = vld [vmem:[%s84 + $0x8] sm:$0xf]
  %v88 = vld [vmem:[%s84 + $0xc] sm:$0xf]
  %v89 = vunpack.c.l.bf16 %v85
  %v90 = vunpack.c.l.bf16 %v86
  %v91 = vunpack.c.l.bf16 %v87
  %v92 = vunpack.c.l.bf16 %v88
  %v93 = vmax.f32 %v80, %v89
  %v94 = vmax.f32 %v81, %v90
  %v95 = vmax.f32 %v82, %v91
  %v96 = vmax.f32 %v83, %v92
  %s97 = scalar_lea.vmem %s0, 112
  %v98 = vld [vmem:[%s97] sm:$0xf]
  %v99 = vld [vmem:[%s97 + $0x4] sm:$0xf]
  %v100 = vld [vmem:[%s97 + $0x8] sm:$0xf]
  %v101 = vld [vmem:[%s97 + $0xc] sm:$0xf]
  %v102 = vunpack.c.l.bf16 %v98
  %v103 = vunpack.c.l.bf16 %v99
  %v104 = vunpack.c.l.bf16 %v100
  %v105 = vunpack.c.l.bf16 %v101
  %v106 = vmax.f32 %v93, %v102
  %v107 = vmax.f32 %v94, %v103
  %v108 = vmax.f32 %v95, %v104
  %v109 = vmax.f32 %v96, %v105
  %s110 = scalar_lea.vmem %s0, 128
  %v111 = vld [vmem:[%s110] sm:$0xf]
  %v112 = vld [vmem:[%s110 + $0x4] sm:$0xf]
  %v113 = vld [vmem:[%s110 + $0x8] sm:$0xf]
  %v114 = vld [vmem:[%s110 + $0xc] sm:$0xf]
  %v115 = vunpack.c.l.bf16 %v111
  %v116 = vunpack.c.l.bf16 %v112
  %v117 = vunpack.c.l.bf16 %v113
  %v118 = vunpack.c.l.bf16 %v114
  %v119 = vmax.f32 %v106, %v115
  %v120 = vmax.f32 %v107, %v116
  %v121 = vmax.f32 %v108, %v117
  %v122 = vmax.f32 %v109, %v118
  %vm123 = vcmask 130048
  %v124 = vsel %vm123, %v119, 0.0
  %v125 = vsel %vm123, %v120, 0.0
  %v126 = vadd.f32 %v124, %v125
  %v127 = vsel %vm123, %v121, 0.0
  %v128 = vadd.f32 %v126, %v127
  %v129 = vsel %vm123, %v122, 0.0
  %v130 = vadd.f32 %v128, %v129
  %v131 = vrot.slane %v130, 4
  %v132 = vadd.f32 %v130, %v131
  %v133 = vrot.slane %v132, 2
  %v134 = vadd.f32 %v132, %v133
  %v135 = vrot.slane %v134, 1
  %v136 = vadd.f32 %v134, %v135
  %v137 = vmul.f32 %v136, 0.03125
  %v138 = vsub.f32 %v119, %v137
  %v139 = vsub.f32 %v120, %v137
  %v140 = vsub.f32 %v121, %v137
  %v141 = vsub.f32 %v122, %v137
  %v142 = vmul.f32 %v138, %v138
  %v143 = vmul.f32 %v139, %v139
  %v144 = vmul.f32 %v140, %v140
  %v145 = vmul.f32 %v141, %v141
  %v146 = vsel %vm123, %v142, 0.0
  %v147 = vsel %vm123, %v143, 0.0
  %v148 = vadd.f32 %v146, %v147
  %v149 = vsel %vm123, %v144, 0.0
  %v150 = vadd.f32 %v148, %v149
  %v151 = vsel %vm123, %v145, 0.0
  %v152 = vadd.f32 %v150, %v151
  %v153 = vrot.slane %v152, 4
  %v154 = vadd.f32 %v152, %v153
  %v155 = vrot.slane %v154, 2
  %v156 = vadd.f32 %v154, %v155
  %v157 = vrot.slane %v156, 1
  %v158 = vadd.f32 %v156, %v157
  %v159 = vmul.f32 %v158, 0.03125
  %v160 = vadd.f32 %v159, 1e-05
  %v161 = vrsqrt.pop %v160
  %v162 = vmul.f32 %v161, %v160
  %v163 = vmul.f32 %v162, %v161
  %v164 = vmul.f32 0.5, %v163
  %v165 = vsub.f32 1.5, %v164
  %v166 = vmul.f32 %v161, %v165
  %vm167 = vweird.f32 %v160
  %vm168 = vweird.f32 %v161
  %vm169 = vmor %vm167, %vm168
  %v170 = vsel %vm169, %v161, %v166
  %v171 = vmul.f32 %v138, %v170
  %v172 = vmul.f32 %v139, %v170
  %v173 = vmul.f32 %v140, %v170
  %v174 = vmul.f32 %v141, %v170
  %v175 = vpack.c.bf16 %v171, %v171
  %v176 = vpack.c.bf16 %v172, %v172
  %v177 = vpack.c.bf16 %v173, %v173
  %v178 = vpack.c.bf16 %v174, %v174
  %vm179 = vcmask 125952
  %180 = vst.msk [vmem:[%s2] sm:$0xf] %vm179, %v175
  %181 = vst.msk [vmem:[%s2 + $0x4] sm:$0xf] %vm179, %v176
  %182 = vst.msk [vmem:[%s2 + $0x8] sm:$0xf] %vm179, %v177
  %183 = vst.msk [vmem:[%s2 + $0xc] sm:$0xf] %vm179, %v178
  // Predicated region
  $region10: #{_lambda_.69} parent=0 // pred_check
    _
  $region11: #{_lambda_.69} parent=0 // pred_check_branch
    %185 = sbr.rel (0) target = $region13
  $region12: #{_lambda_.69} parent=0 // pred_region
    _
  $region13: #{_lambda_.69} parent=0 // pred_fallthru
    _
  // Predicated region
  $region14: #{_lambda_.69} parent=0 // pred_check
    _
  $region15: #{_lambda_.69} parent=0 // pred_check_branch
    %187 = sbr.rel (0) target = $region17
  $region16: #{_lambda_.69} parent=0 // pred_region
    _
  $region17: #{_lambda_.69} parent=0 // pred_fallthru
    _

// kernel: _lambda_.68
$region0: #{_lambda_.68}
  #allocation0 [shape = 'u32[]', space=smem, size = 0x4, offset = 0x4, fixed_abs, tag = 'smem constant byte address 0x4 - core index']
  #allocation1 [shape = 'u32[72,128]{1,0:T(1,128)}', space=vmem, size = 0x9000, scoped, tag = 'internal scratch']
  %s0 = inlined_call_operand.vmem [shape: bf16[9,32,16], index: 0, kind: input, shape index: {}]
  %s1 = inlined_call_operand.vmem [shape: f32[32,1], index: 1, kind: input, shape index: {}]
  %s2 = inlined_call_operand.vmem [shape: bf16[32,16], index: 2, kind: output, shape index: {}]
  %s3 = sld [smem:[#allocation0]]
  $region18: #{_lambda_.68} parent=0
    _
  %s5 = ssub.s32 1, %s3
  %s6 = scalar_select 0, %s5, %s3
  // Predicated region
  $region2: #{_lambda_.68} parent=0 // pred_check
    _
  $region3: #{_lambda_.68} parent=0 // pred_check_branch
    %8 = sbr.rel (0) target = $region5
  $region4: #{_lambda_.68} parent=0 // pred_region
    _
  $region5: #{_lambda_.68} parent=0 // pred_fallthru
    _
  // Predicated region
  $region6: #{_lambda_.68} parent=0 // pred_check
    _
  $region7: #{_lambda_.68} parent=0 // pred_check_branch
    %10 = sbr.rel (0) target = $region9
  $region8: #{_lambda_.68} parent=0 // pred_region
    _
  $region9: #{_lambda_.68} parent=0 // pred_fallthru
    _
  %v11 = vld [vmem:[%s0] sm:$0xf]
  %v12 = vld [vmem:[%s0 + $0x4] sm:$0xf]
  %v13 = vld [vmem:[%s0 + $0x8] sm:$0xf]
  %v14 = vld [vmem:[%s0 + $0xc] sm:$0xf]
  %v15 = vunpack.c.l.bf16 %v11
  %v16 = vunpack.c.l.bf16 %v12
  %v17 = vunpack.c.l.bf16 %v13
  %v18 = vunpack.c.l.bf16 %v14
  %s19 = scalar_lea.vmem %s0, 16
  %v20 = vld [vmem:[%s19] sm:$0xf]
  %v21 = vld [vmem:[%s19 + $0x4] sm:$0xf]
  %v22 = vld [vmem:[%s19 + $0x8] sm:$0xf]
  %v23 = vld [vmem:[%s19 + $0xc] sm:$0xf]
  %v24 = vunpack.c.l.bf16 %v20
  %v25 = vunpack.c.l.bf16 %v21
  %v26 = vunpack.c.l.bf16 %v22
  %v27 = vunpack.c.l.bf16 %v23
  %v28 = vadd.f32 %v15, %v24
  %v29 = vadd.f32 %v16, %v25
  %v30 = vadd.f32 %v17, %v26
  %v31 = vadd.f32 %v18, %v27
  %s32 = scalar_lea.vmem %s0, 32
  %v33 = vld [vmem:[%s32] sm:$0xf]
  %v34 = vld [vmem:[%s32 + $0x4] sm:$0xf]
  %v35 = vld [vmem:[%s32 + $0x8] sm:$0xf]
  %v36 = vld [vmem:[%s32 + $0xc] sm:$0xf]
  %v37 = vunpack.c.l.bf16 %v33
  %v38 = vunpack.c.l.bf16 %v34
  %v39 = vunpack.c.l.bf16 %v35
  %v40 = vunpack.c.l.bf16 %v36
  %v41 = vadd.f32 %v28, %v37
  %v42 = vadd.f32 %v29, %v38
  %v43 = vadd.f32 %v30, %v39
  %v44 = vadd.f32 %v31, %v40
  %s45 = scalar_lea.vmem %s0, 48
  %v46 = vld [vmem:[%s45] sm:$0xf]
  %v47 = vld [vmem:[%s45 + $0x4] sm:$0xf]
  %v48 = vld [vmem:[%s45 + $0x8] sm:$0xf]
  %v49 = vld [vmem:[%s45 + $0xc] sm:$0xf]
  %v50 = vunpack.c.l.bf16 %v46
  %v51 = vunpack.c.l.bf16 %v47
  %v52 = vunpack.c.l.bf16 %v48
  %v53 = vunpack.c.l.bf16 %v49
  %v54 = vadd.f32 %v41, %v50
  %v55 = vadd.f32 %v42, %v51
  %v56 = vadd.f32 %v43, %v52
  %v57 = vadd.f32 %v44, %v53
  %s58 = scalar_lea.vmem %s0, 64
  %v59 = vld [vmem:[%s58] sm:$0xf]
  %v60 = vld [vmem:[%s58 + $0x4] sm:$0xf]
  %v61 = vld [vmem:[%s58 + $0x8] sm:$0xf]
  %v62 = vld [vmem:[%s58 + $0xc] sm:$0xf]
  %v63 = vunpack.c.l.bf16 %v59
  %v64 = vunpack.c.l.bf16 %v60
  %v65 = vunpack.c.l.bf16 %v61
  %v66 = vunpack.c.l.bf16 %v62
  %v67 = vadd.f32 %v54, %v63
  %v68 = vadd.f32 %v55, %v64
  %v69 = vadd.f32 %v56, %v65
  %v70 = vadd.f32 %v57, %v66
  %s71 = scalar_lea.vmem %s0, 80
  %v72 = vld [vmem:[%s71] sm:$0xf]
  %v73 = vld [vmem:[%s71 + $0x4] sm:$0xf]
  %v74 = vld [vmem:[%s71 + $0x8] sm:$0xf]
  %v75 = vld [vmem:[%s71 + $0xc] sm:$0xf]
  %v76 = vunpack.c.l.bf16 %v72
  %v77 = vunpack.c.l.bf16 %v73
  %v78 = vunpack.c.l.bf16 %v74
  %v79 = vunpack.c.l.bf16 %v75
  %v80 = vadd.f32 %v67, %v76
  %v81 = vadd.f32 %v68, %v77
  %v82 = vadd.f32 %v69, %v78
  %v83 = vadd.f32 %v70, %v79
  %s84 = scalar_lea.vmem %s0, 96
  %v85 = vld [vmem:[%s84] sm:$0xf]
  %v86 = vld [vmem:[%s84 + $0x4] sm:$0xf]
  %v87 = vld [vmem:[%s84 + $0x8] sm:$0xf]
  %v88 = vld [vmem:[%s84 + $0xc] sm:$0xf]
  %v89 = vunpack.c.l.bf16 %v85
  %v90 = vunpack.c.l.bf16 %v86
  %v91 = vunpack.c.l.bf16 %v87
  %v92 = vunpack.c.l.bf16 %v88
  %v93 = vadd.f32 %v80, %v89
  %v94 = vadd.f32 %v81, %v90
  %v95 = vadd.f32 %v82, %v91
  %v96 = vadd.f32 %v83, %v92
  %s97 = scalar_lea.vmem %s0, 112
  %v98 = vld [vmem:[%s97] sm:$0xf]
  %v99 = vld [vmem:[%s97 + $0x4] sm:$0xf]
  %v100 = vld [vmem:[%s97 + $0x8] sm:$0xf]
  %v101 = vld [vmem:[%s97 + $0xc] sm:$0xf]
  %v102 = vunpack.c.l.bf16 %v98
  %v103 = vunpack.c.l.bf16 %v99
  %v104 = vunpack.c.l.bf16 %v100
  %v105 = vunpack.c.l.bf16 %v101
  %v106 = vadd.f32 %v93, %v102
  %v107 = vadd.f32 %v94, %v103
  %v108 = vadd.f32 %v95, %v104
  %v109 = vadd.f32 %v96, %v105
  %s110 = scalar_lea.vmem %s0, 128
  %v111 = vld [vmem:[%s110] sm:$0xf]
  %v112 = vld [vmem:[%s110 + $0x4] sm:$0xf]
  %v113 = vld [vmem:[%s110 + $0x8] sm:$0xf]
  %v114 = vld [vmem:[%s110 + $0xc] sm:$0xf]
  %v115 = vunpack.c.l.bf16 %v111
  %v116 = vunpack.c.l.bf16 %v112
  %v117 = vunpack.c.l.bf16 %v113
  %v118 = vunpack.c.l.bf16 %v114
  %v119 = vadd.f32 %v106, %v115
  %v120 = vadd.f32 %v107, %v116
  %v121 = vadd.f32 %v108, %v117
  %v122 = vadd.f32 %v109, %v118
  %v123 = vld [vmem:[%s1] sm:$0xff]
  %v124 = vld [vmem:[%s1 + $0x8] sm:$0xff]
  %v125 = vld [vmem:[%s1 + $0x10] sm:$0xff]
  %v126 = vld [vmem:[%s1 + $0x18] sm:$0xff]
  %128 = vset.pattern.permute.xlu0 0
  %129 = vperm.xlu0 %128, %v123
  %v130 = vpop.permute.xlu0 %129
  %133 = vset.pattern.permute.xlu0 0
  %134 = vperm.xlu0 %133, %v124
  %v135 = vpop.permute.xlu0 %134
  %138 = vset.pattern.permute.xlu0 0
  %139 = vperm.xlu0 %138, %v125
  %v140 = vpop.permute.xlu0 %139
  %143 = vset.pattern.permute.xlu0 0
  %144 = vperm.xlu0 %143, %v126
  %v145 = vpop.permute.xlu0 %144
  %v147 = vmul.f32 %v119, %v130
  %v148 = vmul.f32 %v120, %v135
  %v149 = vmul.f32 %v121, %v140
  %v150 = vmul.f32 %v122, %v145
  %vm151 = vcmask 130048
  %v152 = vsel %vm151, %v147, 0.0
  %v153 = vsel %vm151, %v148, 0.0
  %v154 = vadd.f32 %v152, %v153
  %v155 = vsel %vm151, %v149, 0.0
  %v156 = vadd.f32 %v154, %v155
  %v157 = vsel %vm151, %v150, 0.0
  %v158 = vadd.f32 %v156, %v157
  %v159 = vrot.slane %v158, 4
  %v160 = vadd.f32 %v158, %v159
  %v161 = vrot.slane %v160, 2
  %v162 = vadd.f32 %v160, %v161
  %v163 = vrot.slane %v162, 1
  %v164 = vadd.f32 %v162, %v163
  %v165 = vmul.f32 %v164, 0.03125
  %v166 = vsub.f32 %v147, %v165
  %v167 = vsub.f32 %v148, %v165
  %v168 = vsub.f32 %v149, %v165
  %v169 = vsub.f32 %v150, %v165
  %v170 = vmul.f32 %v166, %v166
  %v171 = vmul.f32 %v167, %v167
  %v172 = vmul.f32 %v168, %v168
  %v173 = vmul.f32 %v169, %v169
  %v174 = vsel %vm151, %v170, 0.0
  %v175 = vsel %vm151, %v171, 0.0
  %v176 = vadd.f32 %v174, %v175
  %v177 = vsel %vm151, %v172, 0.0
  %v178 = vadd.f32 %v176, %v177
  %v179 = vsel %vm151, %v173, 0.0
  %v180 = vadd.f32 %v178, %v179
  %v181 = vrot.slane %v180, 4
  %v182 = vadd.f32 %v180, %v181
  %v183 = vrot.slane %v182, 2
  %v184 = vadd.f32 %v182, %v183
  %v185 = vrot.slane %v184, 1
  %v186 = vadd.f32 %v184, %v185
  %v187 = vmul.f32 %v186, 0.03125
  %v188 = vadd.f32 %v187, 1e-05
  %v189 = vrsqrt.pop %v188
  %v190 = vmul.f32 %v189, %v188
  %v191 = vmul.f32 %v190, %v189
  %v192 = vmul.f32 0.5, %v191
  %v193 = vsub.f32 1.5, %v192
  %v194 = vmul.f32 %v189, %v193
  %vm195 = vweird.f32 %v188
  %vm196 = vweird.f32 %v189
  %vm197 = vmor %vm195, %vm196
  %v198 = vsel %vm197, %v189, %v194
  %v199 = vmul.f32 %v166, %v198
  %v200 = vmul.f32 %v167, %v198
  %v201 = vmul.f32 %v168, %v198
  %v202 = vmul.f32 %v169, %v198
  %v203 = vpack.c.bf16 %v199, %v199
  %v204 = vpack.c.bf16 %v200, %v200
  %v205 = vpack.c.bf16 %v201, %v201
  %v206 = vpack.c.bf16 %v202, %v202
  %vm207 = vcmask 125952
  %208 = vst.msk [vmem:[%s2] sm:$0xf] %vm207, %v203
  %209 = vst.msk [vmem:[%s2 + $0x4] sm:$0xf] %vm207, %v204
  %210 = vst.msk [vmem:[%s2 + $0x8] sm:$0xf] %vm207, %v205
  %211 = vst.msk [vmem:[%s2 + $0xc] sm:$0xf] %vm207, %v206
  // Predicated region
  $region10: #{_lambda_.68} parent=0 // pred_check
    _
  $region11: #{_lambda_.68} parent=0 // pred_check_branch
    %213 = sbr.rel (0) target = $region13
  $region12: #{_lambda_.68} parent=0 // pred_region
    _
  $region13: #{_lambda_.68} parent=0 // pred_fallthru
    _
  // Predicated region
  $region14: #{_lambda_.68} parent=0 // pred_check
    _
  $region15: #{_lambda_.68} parent=0 // pred_check_branch
    %215 = sbr.rel (0) target = $region17
  $region16: #{_lambda_.68} parent=0 // pred_region
    _
  $region17: #{_lambda_.68} parent=0 // pred_fallthru
    _

// kernel: _lambda_.107
$region0: #{_lambda_.107}
  #allocation0 [shape = 'u32[]', space=smem, size = 0x4, offset = 0x4, fixed_abs, tag = 'smem constant byte address 0x4 - core index']
  #allocation1 [shape = 'u32[72,128]{1,0:T(1,128)}', space=vmem, size = 0x9000, scoped, tag = 'internal scratch']
  #allocation2 [shape = 'f32[32,16]{1,0:T(8,128)}', space=vmem, size = 0x4000, scoped, tag = 'scratch operand']
  %s0 = inlined_call_operand.vmem [shape: bf16[32,144], index: 0, kind: input, shape index: {}]
  %s1 = inlined_call_operand.vmem [shape: bf16[144,16], index: 1, kind: input, shape index: {}]
  %s2 = inlined_call_operand.vmem [shape: bf16[32,16], index: 2, kind: output, shape index: {}]
  %s3 = sld [smem:[#allocation0]]
  $region26: #{_lambda_.107} parent=0
    _
  %s5 = ssub.s32 1, %s3
  %s6 = scalar_select 0, %s5, %s3
  // Predicated region
  $region2: #{_lambda_.107} parent=0 // pred_check
    _
  $region3: #{_lambda_.107} parent=0 // pred_check_branch
    %8 = sbr.rel (0) target = $region5
  $region4: #{_lambda_.107} parent=0 // pred_region
    _
  $region5: #{_lambda_.107} parent=0 // pred_fallthru
    _
  // Predicated region
  $region6: #{_lambda_.107} parent=0 // pred_check
    _
  $region7: #{_lambda_.107} parent=0 // pred_check_branch
    %10 = sbr.rel (0) target = $region9
  $region8: #{_lambda_.107} parent=0 // pred_region
    _
  $region9: #{_lambda_.107} parent=0 // pred_fallthru
    _
  %p12 = scmp.eq.s32.totalorder 0, 0
  // Predicated region
  $region10: #{_lambda_.107} parent=0 // pred_check
    %p13 = pneg %p12
  $region11: #{_lambda_.107} parent=0 // pred_check_branch
    %15 = sbr.rel (%p13) target = $region13
  $region12: #{_lambda_.107} parent=0 // pred_region
    %vm16 = vcmask 130048
    %17 = vst.msk [vmem:[#allocation2] sm:$0xff] %vm16, 0.0
    %18 = vst.msk [vmem:[#allocation2 + $0x8] sm:$0xff] %vm16, 0.0
    %19 = vst.msk [vmem:[#allocation2 + $0x10] sm:$0xff] %vm16, 0.0
    %20 = vst.msk [vmem:[#allocation2 + $0x18] sm:$0xff] %vm16, 0.0
  $region13: #{_lambda_.107} parent=0 // pred_fallthru
    _
  %v21 = vld [vmem:[%s0] sm:$0xff]
  %v22 = vld [vmem:[%s0 + $0x8] sm:$0xff]
  %v23 = vld [vmem:[%s0 + $0x10] sm:$0xff]
  %v24 = vld [vmem:[%s0 + $0x18] sm:$0xff]
  %v25 = vunpack.c.l.bf16 %v21
  %v26 = vunpack.c.h.bf16 %v21
  %v27 = vunpack.c.l.bf16 %v22
  %v28 = vunpack.c.h.bf16 %v22
  %v29 = vunpack.c.l.bf16 %v23
  %v30 = vunpack.c.h.bf16 %v23
  %v31 = vunpack.c.l.bf16 %v24
  %v32 = vunpack.c.h.bf16 %v24
  %v33 = vmax.f32 %v25, 0.0
  %v34 = vmax.f32 %v26, 0.0
  %v35 = vmax.f32 %v27, 0.0
  %v36 = vmax.f32 %v28, 0.0
  %v37 = vmax.f32 %v29, 0.0
  %v38 = vmax.f32 %v30, 0.0
  %v39 = vmax.f32 %v31, 0.0
  %v40 = vmax.f32 %v32, 0.0
  %v41 = vpack.c.bf16 %v35, %v33
  %v42 = vpack.c.bf16 %v36, %v34
  %v43 = vpack.c.bf16 %v39, %v37
  %v44 = vpack.c.bf16 %v40, %v38
  %v45 = vld [vmem:[#allocation2] sm:$0xff]
  %v46 = vld [vmem:[#allocation2 + $0x8] sm:$0xff]
  %v47 = vld [vmem:[#allocation2 + $0x10] sm:$0xff]
  %v48 = vld [vmem:[#allocation2 + $0x18] sm:$0xff]
  %v49 = vld [vmem:[%s1] sm:$0xf]
  %v50 = vld [vmem:[%s1 + $0x4] sm:$0xf]
  %v51 = vld [vmem:[%s1 + $0x8] sm:$0xf]
  %v52 = vld [vmem:[%s1 + $0xc] sm:$0xf]
  %v53 = vld [vmem:[%s1 + $0x10] sm:$0xf]
  %v54 = vld [vmem:[%s1 + $0x14] sm:$0xf]
  %v55 = vld [vmem:[%s1 + $0x18] sm:$0xf]
  %v56 = vld [vmem:[%s1 + $0x1c] sm:$0xf]
  %v57 = vld [vmem:[%s1 + $0x20] sm:$0xf]
  %v58 = vld [vmem:[%s1 + $0x24] sm:$0xf]
  %v59 = vld [vmem:[%s1 + $0x28] sm:$0xf]
  %v60 = vld [vmem:[%s1 + $0x2c] sm:$0xf]
  %v61 = vld [vmem:[%s1 + $0x30] sm:$0xf]
  %v62 = vld [vmem:[%s1 + $0x34] sm:$0xf]
  %v63 = vld [vmem:[%s1 + $0x38] sm:$0xf]
  %v64 = vld [vmem:[%s1 + $0x3c] sm:$0xf]
  %v65 = vld [vmem:[%s1 + $0x40] sm:$0xf]
  %v66 = vld [vmem:[%s1 + $0x44] sm:$0xf]
  %v85 = vunpack.c.l.b16 %v49
  %v86 = vunpack.c.l.b16 %v50
  %v87 = vunpack.c.l.b16 %v51
  %v88 = vunpack.c.l.b16 %v52
  %v89 = vunpack.c.l.b16 %v53
  %v90 = vunpack.c.l.b16 %v54
  %v91 = vunpack.c.l.b16 %v55
  %v92 = vunpack.c.l.b16 %v56
  %v93 = vunpack.c.l.b16 %v57
  %v94 = vunpack.c.l.b16 %v58
  %v95 = vunpack.c.l.b16 %v59
  %v96 = vunpack.c.l.b16 %v60
  %v97 = vunpack.c.l.b16 %v61
  %v98 = vunpack.c.l.b16 %v62
  %v99 = vunpack.c.l.b16 %v63
  %v100 = vunpack.c.l.b16 %v64
  %v101 = vunpack.c.l.b16 %v65
  %v102 = vunpack.c.l.b16 %v66
  %v103 = vpack.c.b16 %v86, %v85
  %v104 = vpack.c.b16 %v88, %v87
  %v105 = vpack.c.b16 %v90, %v89
  %v106 = vpack.c.b16 %v92, %v91
  %v107 = vpack.c.b16 %v94, %v93
  %v108 = vpack.c.b16 %v96, %v95
  %v109 = vpack.c.b16 %v98, %v97
  %v110 = vpack.c.b16 %v100, %v99
  %v111 = vpack.c.b16 %v102, %v101
  %vm121 = vcmask 130048
  %v123 = vsel %vm121, %v42, 0
  %v126 = vsel %vm121, %v44, 0
  %128 = vmatpush.bf16.msra.mxu0 %v110
  %129 = vmatpush.bf16.msra.mxu0 %v109
  %130 = vmatpush.bf16.msra.mxu0 %v108
  %131 = vmatpush.bf16.msra.mxu0 %v107
  %132 = vmatpush.bf16.msra.mxu0 %v106
  %133 = vmatpush.bf16.msra.mxu0 %v105
  %134 = vmatpush.bf16.msra.mxu0 %v104
  %135 = vmatpush.bf16.msra.mxu0 %v103
  %136 = vmatmul.bf16.gmra.mxu0 %v41
  %v137 = vpop.f32.mrf.mxu0
  %v138 = vadd.f32 0.0, %v137
  %v139 = vpop.f32.mrf.mxu0
  %v140 = vadd.f32 0.0, %v139
  %141 = vmatmul.bf16.gmra.mxu0 %v43
  %v142 = vpop.f32.mrf.mxu0
  %v143 = vadd.f32 0.0, %v142
  %v144 = vpop.f32.mrf.mxu0
  %v145 = vadd.f32 0.0, %v144
  %146 = vdwg.mxu0
  %147 = vmatpush.bf16.msra.mxu0 0
  %148 = vmatpush.bf16.msra.mxu0 0
  %149 = vmatpush.bf16.msra.mxu0 0
  %150 = vmatpush.bf16.msra.mxu0 0
  %151 = vmatpush.bf16.msra.mxu0 0
  %152 = vmatpush.bf16.msra.mxu0 0
  %153 = vmatpush.bf16.msra.mxu0 0
  %154 = vmatpush.bf16.msra.mxu0 %v111
  %155 = vmatmul.bf16.gmra.mxu0 %v123
  %v156 = vpop.f32.mrf.mxu0
  %v157 = vadd.f32 %v138, %v156
  %v158 = vpop.f32.mrf.mxu0
  %v159 = vadd.f32 %v140, %v158
  %160 = vmatmul.bf16.gmra.mxu0 %v126
  %v161 = vpop.f32.mrf.mxu0
  %v162 = vadd.f32 %v143, %v161
  %v163 = vpop.f32.mrf.mxu0
  %v164 = vadd.f32 %v145, %v163
  %165 = vdwg.mxu0
  %v166 = vadd.f32 %v45, %v157
  %v167 = vadd.f32 %v46, %v159
  %v168 = vadd.f32 %v47, %v162
  %v169 = vadd.f32 %v48, %v164
  %170 = vst.msk [vmem:[#allocation2] sm:$0xff] %vm121, %v166
  %171 = vst.msk [vmem:[#allocation2 + $0x8] sm:$0xff] %vm121, %v167
  %172 = vst.msk [vmem:[#allocation2 + $0x10] sm:$0xff] %vm121, %v168
  %173 = vst.msk [vmem:[#allocation2 + $0x18] sm:$0xff] %vm121, %v169
  // Predicated region
  $region14: #{_lambda_.107} parent=0 // pred_check
    %p174 = pneg %p12
  $region15: #{_lambda_.107} parent=0 // pred_check_branch
    %176 = sbr.rel (%p174) target = $region17
  $region16: #{_lambda_.107} parent=0 // pred_region
    %v177 = vld [vmem:[#allocation2] sm:$0xff]
    %v178 = vld [vmem:[#allocation2 + $0x8] sm:$0xff]
    %v179 = vld [vmem:[#allocation2 + $0x10] sm:$0xff]
    %v180 = vld [vmem:[#allocation2 + $0x18] sm:$0xff]
    %v181 = vsel %vm121, %v177, 0.0
    %v182 = vsel %vm121, %v178, 0.0
    %v183 = vadd.f32 %v181, %v182
    %v184 = vsel %vm121, %v179, 0.0
    %v185 = vadd.f32 %v183, %v184
    %v186 = vsel %vm121, %v180, 0.0
    %v187 = vadd.f32 %v185, %v186
    %v188 = vrot.slane %v187, 4
    %v189 = vadd.f32 %v187, %v188
    %v190 = vrot.slane %v189, 2
    %v191 = vadd.f32 %v189, %v190
    %v192 = vrot.slane %v191, 1
    %v193 = vadd.f32 %v191, %v192
    %v194 = vmul.f32 %v193, 0.03125
    %v195 = vsub.f32 %v177, %v194
    %v196 = vsub.f32 %v178, %v194
    %v197 = vsub.f32 %v179, %v194
    %v198 = vsub.f32 %v180, %v194
    %v199 = vmul.f32 %v195, %v195
    %v200 = vmul.f32 %v196, %v196
    %v201 = vmul.f32 %v197, %v197
    %v202 = vmul.f32 %v198, %v198
    %v203 = vsel %vm121, %v199, 0.0
    %v204 = vsel %vm121, %v200, 0.0
    %v205 = vadd.f32 %v203, %v204
    %v206 = vsel %vm121, %v201, 0.0
    %v207 = vadd.f32 %v205, %v206
    %v208 = vsel %vm121, %v202, 0.0
    %v209 = vadd.f32 %v207, %v208
    %v210 = vrot.slane %v209, 4
    %v211 = vadd.f32 %v209, %v210
    %v212 = vrot.slane %v211, 2
    %v213 = vadd.f32 %v211, %v212
    %v214 = vrot.slane %v213, 1
    %v215 = vadd.f32 %v213, %v214
    %v216 = vmul.f32 %v215, 0.03125
    %v217 = vadd.f32 %v216, 1e-05
    %v218 = vrsqrt.pop %v217
    %v219 = vmul.f32 %v218, %v217
    %v220 = vmul.f32 %v219, %v218
    %v221 = vmul.f32 0.5, %v220
    %v222 = vsub.f32 1.5, %v221
    %v223 = vmul.f32 %v218, %v222
    %vm224 = vweird.f32 %v217
    %vm225 = vweird.f32 %v218
    %vm226 = vmor %vm224, %vm225
    %v227 = vsel %vm226, %v218, %v223
    %v228 = vmul.f32 %v195, %v227
    %v229 = vmul.f32 %v196, %v227
    %v230 = vmul.f32 %v197, %v227
    %v231 = vmul.f32 %v198, %v227
    %v232 = vpack.c.bf16 %v228, %v228
    %v233 = vpack.c.bf16 %v229, %v229
    %v234 = vpack.c.bf16 %v230, %v230
    %v235 = vpack.c.bf16 %v231, %v231
    %vm236 = vcmask 125952
    %237 = vst.msk [vmem:[%s2] sm:$0xf] %vm236, %v232
    %238 = vst.msk [vmem:[%s2 + $0x4] sm:$0xf] %vm236, %v233
    %239 = vst.msk [vmem:[%s2 + $0x8] sm:$0xf] %vm236, %v234
    %240 = vst.msk [vmem:[%s2 + $0xc] sm:$0xf] %vm236, %v235
  $region17: #{_lambda_.107} parent=0 // pred_fallthru
    _
  // Predicated region
  $region18: #{_lambda_.107} parent=0 // pred_check
    _
  $region19: #{_lambda_.107} parent=0 // pred_check_branch
    %242 = sbr.rel (0) target = $region21
  $region20: #{_lambda_.107} parent=0 // pred_region
    _
  $region21: #{_lambda_.107} parent=0 // pred_fallthru
    _
  // Predicated region
  $region22: #{_lambda_.107} parent=0 // pred_check
    _
  $region23: #{_lambda_.107} parent=0 // pred_check_branch
    %244 = sbr.rel (0) target = $region25
  $region24: #{_lambda_.107} parent=0 // pred_region
    _
  $region25: #{_lambda_.107} parent=0 // pred_fallthru
    _

// kernel: _lambda_.106
$region0: #{_lambda_.106}
  #allocation0 [shape = 'u32[]', space=smem, size = 0x4, offset = 0x4, fixed_abs, tag = 'smem constant byte address 0x4 - core index']
  #allocation1 [shape = 'u32[72,128]{1,0:T(1,128)}', space=vmem, size = 0x9000, scoped, tag = 'internal scratch']
  #allocation2 [shape = 'f32[32,8]{1,0:T(8,128)}', space=vmem, size = 0x4000, scoped, tag = 'scratch operand']
  %s0 = inlined_call_operand.vmem [shape: bf16[32,16], index: 0, kind: input, shape index: {}]
  %s1 = inlined_call_operand.vmem [shape: bf16[16,8], index: 1, kind: input, shape index: {}]
  %s2 = inlined_call_operand.vmem [shape: bf16[32,8], index: 2, kind: output, shape index: {}]
  %s3 = sld [smem:[#allocation0]]
  $region26: #{_lambda_.106} parent=0
    _
  %s5 = ssub.s32 1, %s3
  %s6 = scalar_select 0, %s5, %s3
  // Predicated region
  $region2: #{_lambda_.106} parent=0 // pred_check
    _
  $region3: #{_lambda_.106} parent=0 // pred_check_branch
    %8 = sbr.rel (0) target = $region5
  $region4: #{_lambda_.106} parent=0 // pred_region
    _
  $region5: #{_lambda_.106} parent=0 // pred_fallthru
    _
  // Predicated region
  $region6: #{_lambda_.106} parent=0 // pred_check
    _
  $region7: #{_lambda_.106} parent=0 // pred_check_branch
    %10 = sbr.rel (0) target = $region9
  $region8: #{_lambda_.106} parent=0 // pred_region
    _
  $region9: #{_lambda_.106} parent=0 // pred_fallthru
    _
  %p12 = scmp.eq.s32.totalorder 0, 0
  // Predicated region
  $region10: #{_lambda_.106} parent=0 // pred_check
    %p13 = pneg %p12
  $region11: #{_lambda_.106} parent=0 // pred_check_branch
    %15 = sbr.rel (%p13) target = $region13
  $region12: #{_lambda_.106} parent=0 // pred_region
    %vm16 = vcmask 64512
    %17 = vst.msk [vmem:[#allocation2] sm:$0xff] %vm16, 0.0
    %18 = vst.msk [vmem:[#allocation2 + $0x8] sm:$0xff] %vm16, 0.0
    %19 = vst.msk [vmem:[#allocation2 + $0x10] sm:$0xff] %vm16, 0.0
    %20 = vst.msk [vmem:[#allocation2 + $0x18] sm:$0xff] %vm16, 0.0
  $region13: #{_lambda_.106} parent=0 // pred_fallthru
    _
  %v21 = vld [vmem:[%s0] sm:$0xf]
  %v22 = vld [vmem:[%s0 + $0x4] sm:$0xf]
  %v23 = vld [vmem:[%s0 + $0x8] sm:$0xf]
  %v24 = vld [vmem:[%s0 + $0xc] sm:$0xf]
  %v25 = vunpack.c.l.bf16 %v21
  %v26 = vunpack.c.l.bf16 %v22
  %v27 = vunpack.c.l.bf16 %v23
  %v28 = vunpack.c.l.bf16 %v24
  %v29 = vmax.f32 %v25, 0.0
  %v30 = vmax.f32 %v26, 0.0
  %v31 = vmax.f32 %v27, 0.0
  %v32 = vmax.f32 %v28, 0.0
  %v33 = vpack.c.bf16 %v30, %v29
  %v34 = vpack.c.bf16 %v32, %v31
  %v35 = vld [vmem:[#allocation2] sm:$0xff]
  %v36 = vld [vmem:[#allocation2 + $0x8] sm:$0xff]
  %v37 = vld [vmem:[#allocation2 + $0x10] sm:$0xff]
  %v38 = vld [vmem:[#allocation2 + $0x18] sm:$0xff]
  %v39 = vld [vmem:[%s1] sm:$0xf]
  %v40 = vld [vmem:[%s1 + $0x4] sm:$0xf]
  %v43 = vunpack.c.l.b16 %v39
  %v44 = vunpack.c.l.b16 %v40
  %v45 = vpack.c.b16 %v44, %v43
  %vm47 = vcmask 130048
  %v49 = vsel %vm47, %v33, 0
  %v52 = vsel %vm47, %v34, 0
  %54 = vmatpush.bf16.msra.mxu0 0
  %55 = vmatpush.bf16.msra.mxu0 0
  %56 = vmatpush.bf16.msra.mxu0 0
  %57 = vmatpush.bf16.msra.mxu0 0
  %58 = vmatpush.bf16.msra.mxu0 0
  %59 = vmatpush.bf16.msra.mxu0 0
  %60 = vmatpush.bf16.msra.mxu0 0
  %61 = vmatpush.bf16.msra.mxu0 %v45
  %62 = vmatmul.bf16.gmra.mxu0 %v49
  %v63 = vpop.f32.mrf.mxu0
  %v64 = vadd.f32 0.0, %v63
  %v65 = vpop.f32.mrf.mxu0
  %v66 = vadd.f32 0.0, %v65
  %67 = vmatmul.bf16.gmra.mxu0 %v52
  %v68 = vpop.f32.mrf.mxu0
  %v69 = vadd.f32 0.0, %v68
  %v70 = vpop.f32.mrf.mxu0
  %v71 = vadd.f32 0.0, %v70
  %72 = vdwg.mxu0
  %v73 = vadd.f32 %v35, %v64
  %v74 = vadd.f32 %v36, %v66
  %v75 = vadd.f32 %v37, %v69
  %v76 = vadd.f32 %v38, %v71
  %vm77 = vcmask 64512
  %78 = vst.msk [vmem:[#allocation2] sm:$0xff] %vm77, %v73
  %79 = vst.msk [vmem:[#allocation2 + $0x8] sm:$0xff] %vm77, %v74
  %80 = vst.msk [vmem:[#allocation2 + $0x10] sm:$0xff] %vm77, %v75
  %81 = vst.msk [vmem:[#allocation2 + $0x18] sm:$0xff] %vm77, %v76
  // Predicated region
  $region14: #{_lambda_.106} parent=0 // pred_check
    %p82 = pneg %p12
  $region15: #{_lambda_.106} parent=0 // pred_check_branch
    %84 = sbr.rel (%p82) target = $region17
  $region16: #{_lambda_.106} parent=0 // pred_region
    %v85 = vld [vmem:[#allocation2] sm:$0xff]
    %v86 = vld [vmem:[#allocation2 + $0x8] sm:$0xff]
    %v87 = vld [vmem:[#allocation2 + $0x10] sm:$0xff]
    %v88 = vld [vmem:[#allocation2 + $0x18] sm:$0xff]
    %v89 = vsel %vm77, %v85, 0.0
    %v90 = vsel %vm77, %v86, 0.0
    %v91 = vadd.f32 %v89, %v90
    %v92 = vsel %vm77, %v87, 0.0
    %v93 = vadd.f32 %v91, %v92
    %v94 = vsel %vm77, %v88, 0.0
    %v95 = vadd.f32 %v93, %v94
    %v96 = vrot.slane %v95, 4
    %v97 = vadd.f32 %v95, %v96
    %v98 = vrot.slane %v97, 2
    %v99 = vadd.f32 %v97, %v98
    %v100 = vrot.slane %v99, 1
    %v101 = vadd.f32 %v99, %v100
    %v102 = vmul.f32 %v101, 0.03125
    %v103 = vsub.f32 %v85, %v102
    %v104 = vsub.f32 %v86, %v102
    %v105 = vsub.f32 %v87, %v102
    %v106 = vsub.f32 %v88, %v102
    %v107 = vmul.f32 %v103, %v103
    %v108 = vmul.f32 %v104, %v104
    %v109 = vmul.f32 %v105, %v105
    %v110 = vmul.f32 %v106, %v106
    %v111 = vsel %vm77, %v107, 0.0
    %v112 = vsel %vm77, %v108, 0.0
    %v113 = vadd.f32 %v111, %v112
    %v114 = vsel %vm77, %v109, 0.0
    %v115 = vadd.f32 %v113, %v114
    %v116 = vsel %vm77, %v110, 0.0
    %v117 = vadd.f32 %v115, %v116
    %v118 = vrot.slane %v117, 4
    %v119 = vadd.f32 %v117, %v118
    %v120 = vrot.slane %v119, 2
    %v121 = vadd.f32 %v119, %v120
    %v122 = vrot.slane %v121, 1
    %v123 = vadd.f32 %v121, %v122
    %v124 = vmul.f32 %v123, 0.03125
    %v125 = vadd.f32 %v124, 1e-05
    %v126 = vrsqrt.pop %v125
    %v127 = vmul.f32 %v126, %v125
    %v128 = vmul.f32 %v127, %v126
    %v129 = vmul.f32 0.5, %v128
    %v130 = vsub.f32 1.5, %v129
    %v131 = vmul.f32 %v126, %v130
    %vm132 = vweird.f32 %v125
    %vm133 = vweird.f32 %v126
    %vm134 = vmor %vm132, %vm133
    %v135 = vsel %vm134, %v126, %v131
    %v136 = vmul.f32 %v103, %v135
    %v137 = vmul.f32 %v104, %v135
    %v138 = vmul.f32 %v105, %v135
    %v139 = vmul.f32 %v106, %v135
    %v140 = vpack.c.bf16 %v136, %v136
    %v141 = vpack.c.bf16 %v137, %v137
    %v142 = vpack.c.bf16 %v138, %v138
    %v143 = vpack.c.bf16 %v139, %v139
    %vm144 = vcmask 60416
    %145 = vst.msk [vmem:[%s2] sm:$0xf] %vm144, %v140
    %146 = vst.msk [vmem:[%s2 + $0x4] sm:$0xf] %vm144, %v141
    %147 = vst.msk [vmem:[%s2 + $0x8] sm:$0xf] %vm144, %v142
    %148 = vst.msk [vmem:[%s2 + $0xc] sm:$0xf] %vm144, %v143
  $region17: #{_lambda_.106} parent=0 // pred_fallthru
    _
  // Predicated region
  $region18: #{_lambda_.106} parent=0 // pred_check
    _
  $region19: #{_lambda_.106} parent=0 // pred_check_branch
    %150 = sbr.rel (0) target = $region21
  $region20: #{_lambda_.106} parent=0 // pred_region
    _
  $region21: #{_lambda_.106} parent=0 // pred_fallthru
    _
  // Predicated region
  $region22: #{_lambda_.106} parent=0 // pred_check
    _
  $region23: #{_lambda_.106} parent=0 // pred_check_branch
    %152 = sbr.rel (0) target = $region25
  $region24: #{_lambda_.106} parent=0 // pred_region
    _
  $region25: #{_lambda_.106} parent=0 // pred_fallthru
    _

// kernel: _lambda_.71
$region0: #{_lambda_.71}
  #allocation0 [shape = 'u32[]', space=smem, size = 0x4, offset = 0x4, fixed_abs, tag = 'smem constant byte address 0x4 - core index']
  #allocation1 [shape = 'u32[72,128]{1,0:T(1,128)}', space=vmem, size = 0x9000, scoped, tag = 'internal scratch']
  %s0 = inlined_call_operand.vmem [shape: bf16[4,2,256], index: 0, kind: input, shape index: {}]
  %s1 = inlined_call_operand.vmem [shape: f32[2,4], index: 1, kind: input, shape index: {}]
  %s2 = inlined_call_operand.vmem [shape: bf16[2,256], index: 2, kind: output, shape index: {}]
  %s3 = sld [smem:[#allocation0]]
  $region18: #{_lambda_.71} parent=0
    _
  %s5 = ssub.s32 1, %s3
  %s6 = scalar_select 0, %s5, %s3
  // Predicated region
  $region2: #{_lambda_.71} parent=0 // pred_check
    _
  $region3: #{_lambda_.71} parent=0 // pred_check_branch
    %8 = sbr.rel (0) target = $region5
  $region4: #{_lambda_.71} parent=0 // pred_region
    _
  $region5: #{_lambda_.71} parent=0 // pred_fallthru
    _
  // Predicated region
  $region6: #{_lambda_.71} parent=0 // pred_check
    _
  $region7: #{_lambda_.71} parent=0 // pred_check_branch
    %10 = sbr.rel (0) target = $region9
  $region8: #{_lambda_.71} parent=0 // pred_region
    _
  $region9: #{_lambda_.71} parent=0 // pred_fallthru
    _
  %v11 = vld [vmem:[%s1] sm:$0x3]
  %v12 = vld [vmem:[%s0] sm:$0x3]
  %v13 = vunpack.c.l.bf16 %v12
  %15 = vset.pattern.permute.xlu0 0
  %16 = vperm.xlu0 %15, %v11
  %v17 = vpop.permute.xlu0 %16
  %20 = vst [vmem:[#allocation1] ss:$4 sm:$0xff] %v13
  %v21 = vld.sshfl [vmem:[#allocation1] sm:$0xff pattern:$0x73625140]
  %v22 = vld.sshfl [vmem:[#allocation1 + $0x8] sm:$0xff pattern:$0x73625140]
  %v25 = vmul.f32 %v17, %v21
  %v26 = vmul.f32 %v17, %v22
  %v27 = vld [vmem:[%s1] sm:$0x3]
  %s28 = scalar_lea.vmem %s0, 2
  %v29 = vld [vmem:[%s28] sm:$0x3]
  %v30 = vunpack.c.l.bf16 %v29
  %32 = vset.pattern.permute.xlu0 1
  %33 = vperm.xlu0 %32, %v27
  %v34 = vpop.permute.xlu0 %33
  %37 = vst [vmem:[#allocation1] ss:$4 sm:$0xff] %v30
  %v38 = vld.sshfl [vmem:[#allocation1] sm:$0xff pattern:$0x73625140]
  %v39 = vld.sshfl [vmem:[#allocation1 + $0x8] sm:$0xff pattern:$0x73625140]
  %v42 = vmul.f32 %v34, %v38
  %v43 = vmul.f32 %v34, %v39
  %v44 = vadd.f32 %v25, %v42
  %v45 = vadd.f32 %v26, %v43
  %v46 = vld [vmem:[%s1] sm:$0x3]
  %s47 = scalar_lea.vmem %s0, 4
  %v48 = vld [vmem:[%s47] sm:$0x3]
  %v49 = vunpack.c.l.bf16 %v48
  %51 = vset.pattern.permute.xlu0 2
  %52 = vperm.xlu0 %51, %v46
  %v53 = vpop.permute.xlu0 %52
  %56 = vst [vmem:[#allocation1] ss:$4 sm:$0xff] %v49
  %v57 = vld.sshfl [vmem:[#allocation1] sm:$0xff pattern:$0x73625140]
  %v58 = vld.sshfl [vmem:[#allocation1 + $0x8] sm:$0xff pattern:$0x73625140]
  %v61 = vmul.f32 %v53, %v57
  %v62 = vmul.f32 %v53, %v58
  %v63 = vadd.f32 %v44, %v61
  %v64 = vadd.f32 %v45, %v62
  %v65 = vld [vmem:[%s1] sm:$0x3]
  %s66 = scalar_lea.vmem %s0, 6
  %v67 = vld [vmem:[%s66] sm:$0x3]
  %v68 = vunpack.c.l.bf16 %v67
  %70 = vset.pattern.permute.xlu0 3
  %71 = vperm.xlu0 %70, %v65
  %v72 = vpop.permute.xlu0 %71
  %75 = vst [vmem:[#allocation1] ss:$4 sm:$0xff] %v68
  %v76 = vld.sshfl [vmem:[#allocation1] sm:$0xff pattern:$0x73625140]
  %v77 = vld.sshfl [vmem:[#allocation1 + $0x8] sm:$0xff pattern:$0x73625140]
  %v80 = vmul.f32 %v72, %v76
  %v81 = vmul.f32 %v72, %v77
  %v82 = vadd.f32 %v63, %v80
  %v83 = vadd.f32 %v64, %v81
  %v84 = vpack.c.bf16 %v83, %v82
  %v86 = vrot.slane %v84, 3
  %vm87 = vcmask 1040384
  %v90 = vsel %vm87, %v84, %v86
  %92 = vst [vmem:[%s2] sm:$0x3] %v90
  // Predicated region
  $region10: #{_lambda_.71} parent=0 // pred_check
    _
  $region11: #{_lambda_.71} parent=0 // pred_check_branch
    %94 = sbr.rel (0) target = $region13
  $region12: #{_lambda_.71} parent=0 // pred_region
    _
  $region13: #{_lambda_.71} parent=0 // pred_fallthru
    _
  // Predicated region
  $region14: #{_lambda_.71} parent=0 // pred_check
    _
  $region15: #{_lambda_.71} parent=0 // pred_check_branch
    %96 = sbr.rel (0) target = $region17
  $region16: #{_lambda_.71} parent=0 // pred_region
    _
  $region17: #{_lambda_.71} parent=0 // pred_fallthru
    _

// kernel: _lambda_.72
$region0: #{_lambda_.72}
  #allocation0 [shape = 'u32[]', space=smem, size = 0x4, offset = 0x4, fixed_abs, tag = 'smem constant byte address 0x4 - core index']
  #allocation1 [shape = 'u32[72,128]{1,0:T(1,128)}', space=vmem, size = 0x9000, scoped, tag = 'internal scratch']
  #allocation2 [shape = 'f32[512,8]{1,0:T(8,128)}', space=vmem, size = 0x40000, scoped, tag = 'scratch operand']
  %s0 = inlined_call_operand.vmem [shape: bf16[512,12], index: 0, kind: input, shape index: {}]
  %s1 = inlined_call_operand.vmem [shape: bf16[12,8], index: 1, kind: input, shape index: {}]
  %s2 = inlined_call_operand.vmem [shape: bf16[512,8], index: 2, kind: output, shape index: {}]
  %s3 = sld [smem:[#allocation0]]
  $region26: #{_lambda_.72} parent=0
    _
  %s5 = ssub.s32 1, %s3
  %s6 = scalar_select 0, %s5, %s3
  // Predicated region
  $region2: #{_lambda_.72} parent=0 // pred_check
    _
  $region3: #{_lambda_.72} parent=0 // pred_check_branch
    %8 = sbr.rel (0) target = $region5
  $region4: #{_lambda_.72} parent=0 // pred_region
    _
  $region5: #{_lambda_.72} parent=0 // pred_fallthru
    _
  // Predicated region
  $region6: #{_lambda_.72} parent=0 // pred_check
    _
  $region7: #{_lambda_.72} parent=0 // pred_check_branch
    %10 = sbr.rel (0) target = $region9
  $region8: #{_lambda_.72} parent=0 // pred_region
    _
  $region9: #{_lambda_.72} parent=0 // pred_fallthru
    _
  %p12 = scmp.eq.s32.totalorder 0, 0
  // Predicated region
  $region10: #{_lambda_.72} parent=0 // pred_check
    %p13 = pneg %p12
  $region11: #{_lambda_.72} parent=0 // pred_check_branch
    %15 = sbr.rel (%p13) target = $region13
  $region12: #{_lambda_.72} parent=0 // pred_region
    %vm16 = vcmask 64512
    %17 = vst.msk [vmem:[#allocation2] sm:$0xff] %vm16, 0.0
    %18 = vst.msk [vmem:[#allocation2 + $0x8] sm:$0xff] %vm16, 0.0
    %19 = vst.msk [vmem:[#allocation2 + $0x10] sm:$0xff] %vm16, 0.0
    %20 = vst.msk [vmem:[#allocation2 + $0x18] sm:$0xff] %vm16, 0.0
    %21 = vst.msk [vmem:[#allocation2 + $0x20] sm:$0xff] %vm16, 0.0
    %22 = vst.msk [vmem:[#allocation2 + $0x28] sm:$0xff] %vm16, 0.0
    %23 = vst.msk [vmem:[#allocation2 + $0x30] sm:$0xff] %vm16, 0.0
    %24 = vst.msk [vmem:[#allocation2 + $0x38] sm:$0xff] %vm16, 0.0
    %25 = vst.msk [vmem:[#allocation2 + $0x40] sm:$0xff] %vm16, 0.0
    %26 = vst.msk [vmem:[#allocation2 + $0x48] sm:$0xff] %vm16, 0.0
    %27 = vst.msk [vmem:[#allocation2 + $0x50] sm:$0xff] %vm16, 0.0
    %28 = vst.msk [vmem:[#allocation2 + $0x58] sm:$0xff] %vm16, 0.0
    %29 = vst.msk [vmem:[#allocation2 + $0x60] sm:$0xff] %vm16, 0.0
    %30 = vst.msk [vmem:[#allocation2 + $0x68] sm:$0xff] %vm16, 0.0
    %31 = vst.msk [vmem:[#allocation2 + $0x70] sm:$0xff] %vm16, 0.0
    %32 = vst.msk [vmem:[#allocation2 + $0x78] sm:$0xff] %vm16, 0.0
    %33 = vst.msk [vmem:[#allocation2 + $0x80] sm:$0xff] %vm16, 0.0
    %34 = vst.msk [vmem:[#allocation2 + $0x88] sm:$0xff] %vm16, 0.0
    %35 = vst.msk [vmem:[#allocation2 + $0x90] sm:$0xff] %vm16, 0.0
    %36 = vst.msk [vmem:[#allocation2 + $0x98] sm:$0xff] %vm16, 0.0
    %37 = vst.msk [vmem:[#allocation2 + $0xa0] sm:$0xff] %vm16, 0.0
    %38 = vst.msk [vmem:[#allocation2 + $0xa8] sm:$0xff] %vm16, 0.0
    %39 = vst.msk [vmem:[#allocation2 + $0xb0] sm:$0xff] %vm16, 0.0
    %40 = vst.msk [vmem:[#allocation2 + $0xb8] sm:$0xff] %vm16, 0.0
    %41 = vst.msk [vmem:[#allocation2 + $0xc0] sm:$0xff] %vm16, 0.0
    %42 = vst.msk [vmem:[#allocation2 + $0xc8] sm:$0xff] %vm16, 0.0
    %43 = vst.msk [vmem:[#allocation2 + $0xd0] sm:$0xff] %vm16, 0.0
    %44 = vst.msk [vmem:[#allocation2 + $0xd8] sm:$0xff] %vm16, 0.0
    %45 = vst.msk [vmem:[#allocation2 + $0xe0] sm:$0xff] %vm16, 0.0
    %46 = vst.msk [vmem:[#allocation2 + $0xe8] sm:$0xff] %vm16, 0.0
    %47 = vst.msk [vmem:[#allocation2 + $0xf0] sm:$0xff] %vm16, 0.0
    %48 = vst.msk [vmem:[#allocation2 + $0xf8] sm:$0xff] %vm16, 0.0
    %49 = vst.msk [vmem:[#allocation2 + $0x100] sm:$0xff] %vm16, 0.0
    %50 = vst.msk [vmem:[#allocation2 + $0x108] sm:$0xff] %vm16, 0.0
    %51 = vst.msk [vmem:[#allocation2 + $0x110] sm:$0xff] %vm16, 0.0
    %52 = vst.msk [vmem:[#allocation2 + $0x118] sm:$0xff] %vm16, 0.0
    %53 = vst.msk [vmem:[#allocation2 + $0x120] sm:$0xff] %vm16, 0.0
    %54 = vst.msk [vmem:[#allocation2 + $0x128] sm:$0xff] %vm16, 0.0
    %55 = vst.msk [vmem:[#allocation2 + $0x130] sm:$0xff] %vm16, 0.0
    %56 = vst.msk [vmem:[#allocation2 + $0x138] sm:$0xff] %vm16, 0.0
    %57 = vst.msk [vmem:[#allocation2 + $0x140] sm:$0xff] %vm16, 0.0
    %58 = vst.msk [vmem:[#allocation2 + $0x148] sm:$0xff] %vm16, 0.0
    %59 = vst.msk [vmem:[#allocation2 + $0x150] sm:$0xff] %vm16, 0.0
    %60 = vst.msk [vmem:[#allocation2 + $0x158] sm:$0xff] %vm16, 0.0
    %61 = vst.msk [vmem:[#allocation2 + $0x160] sm:$0xff] %vm16, 0.0
    %62 = vst.msk [vmem:[#allocation2 + $0x168] sm:$0xff] %vm16, 0.0
    %63 = vst.msk [vmem:[#allocation2 + $0x170] sm:$0xff] %vm16, 0.0
    %64 = vst.msk [vmem:[#allocation2 + $0x178] sm:$0xff] %vm16, 0.0
    %65 = vst.msk [vmem:[#allocation2 + $0x180] sm:$0xff] %vm16, 0.0
    %66 = vst.msk [vmem:[#allocation2 + $0x188] sm:$0xff] %vm16, 0.0
    %67 = vst.msk [vmem:[#allocation2 + $0x190] sm:$0xff] %vm16, 0.0
    %68 = vst.msk [vmem:[#allocation2 + $0x198] sm:$0xff] %vm16, 0.0
    %69 = vst.msk [vmem:[#allocation2 + $0x1a0] sm:$0xff] %vm16, 0.0
    %70 = vst.msk [vmem:[#allocation2 + $0x1a8] sm:$0xff] %vm16, 0.0
    %71 = vst.msk [vmem:[#allocation2 + $0x1b0] sm:$0xff] %vm16, 0.0
    %72 = vst.msk [vmem:[#allocation2 + $0x1b8] sm:$0xff] %vm16, 0.0
    %73 = vst.msk [vmem:[#allocation2 + $0x1c0] sm:$0xff] %vm16, 0.0
    %74 = vst.msk [vmem:[#allocation2 + $0x1c8] sm:$0xff] %vm16, 0.0
    %75 = vst.msk [vmem:[#allocation2 + $0x1d0] sm:$0xff] %vm16, 0.0
    %76 = vst.msk [vmem:[#allocation2 + $0x1d8] sm:$0xff] %vm16, 0.0
    %77 = vst.msk [vmem:[#allocation2 + $0x1e0] sm:$0xff] %vm16, 0.0
    %78 = vst.msk [vmem:[#allocation2 + $0x1e8] sm:$0xff] %vm16, 0.0
    %79 = vst.msk [vmem:[#allocation2 + $0x1f0] sm:$0xff] %vm16, 0.0
    %80 = vst.msk [vmem:[#allocation2 + $0x1f8] sm:$0xff] %vm16, 0.0
  $region13: #{_lambda_.72} parent=0 // pred_fallthru
    _
  %v81 = vld [vmem:[%s0] sm:$0xf]
  %v82 = vld [vmem:[%s0 + $0x4] sm:$0xf]
  %v83 = vld [vmem:[%s0 + $0x8] sm:$0xf]
  %v84 = vld [vmem:[%s0 + $0xc] sm:$0xf]
  %v85 = vld [vmem:[%s0 + $0x10] sm:$0xf]
  %v86 = vld [vmem:[%s0 + $0x14] sm:$0xf]
  %v87 = vld [vmem:[%s0 + $0x18] sm:$0xf]
  %v88 = vld [vmem:[%s0 + $0x1c] sm:$0xf]
  %v89 = vld [vmem:[%s0 + $0x20] sm:$0xf]
  %v90 = vld [vmem:[%s0 + $0x24] sm:$0xf]
  %v91 = vld [vmem:[%s0 + $0x28] sm:$0xf]
  %v92 = vld [vmem:[%s0 + $0x2c] sm:$0xf]
  %v93 = vld [vmem:[%s0 + $0x30] sm:$0xf]
  %v94 = vld [vmem:[%s0 + $0x34] sm:$0xf]
  %v95 = vld [vmem:[%s0 + $0x38] sm:$0xf]
  %v96 = vld [vmem:[%s0 + $0x3c] sm:$0xf]
  %v97 = vld [vmem:[%s0 + $0x40] sm:$0xf]
  %v98 = vld [vmem:[%s0 + $0x44] sm:$0xf]
  %v99 = vld [vmem:[%s0 + $0x48] sm:$0xf]
  %v100 = vld [vmem:[%s0 + $0x4c] sm:$0xf]
  %v101 = vld [vmem:[%s0 + $0x50] sm:$0xf]
  %v102 = vld [vmem:[%s0 + $0x54] sm:$0xf]
  %v103 = vld [vmem:[%s0 + $0x58] sm:$0xf]
  %v104 = vld [vmem:[%s0 + $0x5c] sm:$0xf]
  %v105 = vld [vmem:[%s0 + $0x60] sm:$0xf]
  %v106 = vld [vmem:[%s0 + $0x64] sm:$0xf]
  %v107 = vld [vmem:[%s0 + $0x68] sm:$0xf]
  %v108 = vld [vmem:[%s0 + $0x6c] sm:$0xf]
  %v109 = vld [vmem:[%s0 + $0x70] sm:$0xf]
  %v110 = vld [vmem:[%s0 + $0x74] sm:$0xf]
  %v111 = vld [vmem:[%s0 + $0x78] sm:$0xf]
  %v112 = vld [vmem:[%s0 + $0x7c] sm:$0xf]
  %v113 = vld [vmem:[%s0 + $0x80] sm:$0xf]
  %v114 = vld [vmem:[%s0 + $0x84] sm:$0xf]
  %v115 = vld [vmem:[%s0 + $0x88] sm:$0xf]
  %v116 = vld [vmem:[%s0 + $0x8c] sm:$0xf]
  %v117 = vld [vmem:[%s0 + $0x90] sm:$0xf]
  %v118 = vld [vmem:[%s0 + $0x94] sm:$0xf]
  %v119 = vld [vmem:[%s0 + $0x98] sm:$0xf]
  %v120 = vld [vmem:[%s0 + $0x9c] sm:$0xf]
  %v121 = vld [vmem:[%s0 + $0xa0] sm:$0xf]
  %v122 = vld [vmem:[%s0 + $0xa4] sm:$0xf]
  %v123 = vld [vmem:[%s0 + $0xa8] sm:$0xf]
  %v124 = vld [vmem:[%s0 + $0xac] sm:$0xf]
  %v125 = vld [vmem:[%s0 + $0xb0] sm:$0xf]
  %v126 = vld [vmem:[%s0 + $0xb4] sm:$0xf]
  %v127 = vld [vmem:[%s0 + $0xb8] sm:$0xf]
  %v128 = vld [vmem:[%s0 + $0xbc] sm:$0xf]
  %v129 = vld [vmem:[%s0 + $0xc0] sm:$0xf]
  %v130 = vld [vmem:[%s0 + $0xc4] sm:$0xf]
  %v131 = vld [vmem:[%s0 + $0xc8] sm:$0xf]
  %v132 = vld [vmem:[%s0 + $0xcc] sm:$0xf]
  %v133 = vld [vmem:[%s0 + $0xd0] sm:$0xf]
  %v134 = vld [vmem:[%s0 + $0xd4] sm:$0xf]
  %v135 = vld [vmem:[%s0 + $0xd8] sm:$0xf]
  %v136 = vld [vmem:[%s0 + $0xdc] sm:$0xf]
  %v137 = vld [vmem:[%s0 + $0xe0] sm:$0xf]
  %v138 = vld [vmem:[%s0 + $0xe4] sm:$0xf]
  %v139 = vld [vmem:[%s0 + $0xe8] sm:$0xf]
  %v140 = vld [vmem:[%s0 + $0xec] sm:$0xf]
  %v141 = vld [vmem:[%s0 + $0xf0] sm:$0xf]
  %v142 = vld [vmem:[%s0 + $0xf4] sm:$0xf]
  %v143 = vld [vmem:[%s0 + $0xf8] sm:$0xf]
  %v144 = vld [vmem:[%s0 + $0xfc] sm:$0xf]
  %v145 = vunpack.c.l.bf16 %v81
  %v146 = vunpack.c.l.bf16 %v82
  %v147 = vunpack.c.l.bf16 %v83
  %v148 = vunpack.c.l.bf16 %v84
  %v149 = vunpack.c.l.bf16 %v85
  %v150 = vunpack.c.l.bf16 %v86
  %v151 = vunpack.c.l.bf16 %v87
  %v152 = vunpack.c.l.bf16 %v88
  %v153 = vunpack.c.l.bf16 %v89
  %v154 = vunpack.c.l.bf16 %v90
  %v155 = vunpack.c.l.bf16 %v91
  %v156 = vunpack.c.l.bf16 %v92
  %v157 = vunpack.c.l.bf16 %v93
  %v158 = vunpack.c.l.bf16 %v94
  %v159 = vunpack.c.l.bf16 %v95
  %v160 = vunpack.c.l.bf16 %v96
  %v161 = vunpack.c.l.bf16 %v97
  %v162 = vunpack.c.l.bf16 %v98
  %v163 = vunpack.c.l.bf16 %v99
  %v164 = vunpack.c.l.bf16 %v100
  %v165 = vunpack.c.l.bf16 %v101
  %v166 = vunpack.c.l.bf16 %v102
  %v167 = vunpack.c.l.bf16 %v103
  %v168 = vunpack.c.l.bf16 %v104
  %v169 = vunpack.c.l.bf16 %v105
  %v170 = vunpack.c.l.bf16 %v106
  %v171 = vunpack.c.l.bf16 %v107
  %v172 = vunpack.c.l.bf16 %v108
  %v173 = vunpack.c.l.bf16 %v109
  %v174 = vunpack.c.l.bf16 %v110
  %v175 = vunpack.c.l.bf16 %v111
  %v176 = vunpack.c.l.bf16 %v112
  %v177 = vunpack.c.l.bf16 %v113
  %v178 = vunpack.c.l.bf16 %v114
  %v179 = vunpack.c.l.bf16 %v115
  %v180 = vunpack.c.l.bf16 %v116
  %v181 = vunpack.c.l.bf16 %v117
  %v182 = vunpack.c.l.bf16 %v118
  %v183 = vunpack.c.l.bf16 %v119
  %v184 = vunpack.c.l.bf16 %v120
  %v185 = vunpack.c.l.bf16 %v121
  %v186 = vunpack.c.l.bf16 %v122
  %v187 = vunpack.c.l.bf16 %v123
  %v188 = vunpack.c.l.bf16 %v124
  %v189 = vunpack.c.l.bf16 %v125
  %v190 = vunpack.c.l.bf16 %v126
  %v191 = vunpack.c.l.bf16 %v127
  %v192 = vunpack.c.l.bf16 %v128
  %v193 = vunpack.c.l.bf16 %v129
  %v194 = vunpack.c.l.bf16 %v130
  %v195 = vunpack.c.l.bf16 %v131
  %v196 = vunpack.c.l.bf16 %v132
  %v197 = vunpack.c.l.bf16 %v133
  %v198 = vunpack.c.l.bf16 %v134
  %v199 = vunpack.c.l.bf16 %v135
  %v200 = vunpack.c.l.bf16 %v136
  %v201 = vunpack.c.l.bf16 %v137
  %v202 = vunpack.c.l.bf16 %v138
  %v203 = vunpack.c.l.bf16 %v139
  %v204 = vunpack.c.l.bf16 %v140
  %v205 = vunpack.c.l.bf16 %v141
  %v206 = vunpack.c.l.bf16 %v142
  %v207 = vunpack.c.l.bf16 %v143
  %v208 = vunpack.c.l.bf16 %v144
  %v209 = vmax.f32 %v145, 0.0
  %v210 = vmax.f32 %v146, 0.0
  %v211 = vmax.f32 %v147, 0.0
  %v212 = vmax.f32 %v148, 0.0
  %v213 = vmax.f32 %v149, 0.0
  %v214 = vmax.f32 %v150, 0.0
  %v215 = vmax.f32 %v151, 0.0
  %v216 = vmax.f32 %v152, 0.0
  %v217 = vmax.f32 %v153, 0.0
  %v218 = vmax.f32 %v154, 0.0
  %v219 = vmax.f32 %v155, 0.0
  %v220 = vmax.f32 %v156, 0.0
  %v221 = vmax.f32 %v157, 0.0
  %v222 = vmax.f32 %v158, 0.0
  %v223 = vmax.f32 %v159, 0.0
  %v224 = vmax.f32 %v160, 0.0
  %v225 = vmax.f32 %v161, 0.0
  %v226 = vmax.f32 %v162, 0.0
  %v227 = vmax.f32 %v163, 0.0
  %v228 = vmax.f32 %v164, 0.0
  %v229 = vmax.f32 %v165, 0.0
  %v230 = vmax.f32 %v166, 0.0
  %v231 = vmax.f32 %v167, 0.0
  %v232 = vmax.f32 %v168, 0.0
  %v233 = vmax.f32 %v169, 0.0
  %v234 = vmax.f32 %v170, 0.0
  %v235 = vmax.f32 %v171, 0.0
  %v236 = vmax.f32 %v172, 0.0
  %v237 = vmax.f32 %v173, 0.0
  %v238 = vmax.f32 %v174, 0.0
  %v239 = vmax.f32 %v175, 0.0
  %v240 = vmax.f32 %v176, 0.0
  %v241 = vmax.f32 %v177, 0.0
  %v242 = vmax.f32 %v178, 0.0
  %v243 = vmax.f32 %v179, 0.0
  %v244 = vmax.f32 %v180, 0.0
  %v245 = vmax.f32 %v181, 0.0
  %v246 = vmax.f32 %v182, 0.0
  %v247 = vmax.f32 %v183, 0.0
  %v248 = vmax.f32 %v184, 0.0
  %v249 = vmax.f32 %v185, 0.0
  %v250 = vmax.f32 %v186, 0.0
  %v251 = vmax.f32 %v187, 0.0
  %v252 = vmax.f32 %v188, 0.0
  %v253 = vmax.f32 %v189, 0.0
  %v254 = vmax.f32 %v190, 0.0
  %v255 = vmax.f32 %v191, 0.0
  %v256 = vmax.f32 %v192, 0.0
  %v257 = vmax.f32 %v193, 0.0
  %v258 = vmax.f32 %v194, 0.0
  %v259 = vmax.f32 %v195, 0.0
  %v260 = vmax.f32 %v196, 0.0
  %v261 = vmax.f32 %v197, 0.0
  %v262 = vmax.f32 %v198, 0.0
  %v263 = vmax.f32 %v199, 0.0
  %v264 = vmax.f32 %v200, 0.0
  %v265 = vmax.f32 %v201, 0.0
  %v266 = vmax.f32 %v202, 0.0
  %v267 = vmax.f32 %v203, 0.0
  %v268 = vmax.f32 %v204, 0.0
  %v269 = vmax.f32 %v205, 0.0
  %v270 = vmax.f32 %v206, 0.0
  %v271 = vmax.f32 %v207, 0.0
  %v272 = vmax.f32 %v208, 0.0
  %v273 = vpack.c.bf16 %v210, %v209
  %v274 = vpack.c.bf16 %v212, %v211
  %v275 = vpack.c.bf16 %v214, %v213
  %v276 = vpack.c.bf16 %v216, %v215
  %v277 = vpack.c.bf16 %v218, %v217
  %v278 = vpack.c.bf16 %v220, %v219
  %v279 = vpack.c.bf16 %v222, %v221
  %v280 = vpack.c.bf16 %v224, %v223
  %v281 = vpack.c.bf16 %v226, %v225
  %v282 = vpack.c.bf16 %v228, %v227
  %v283 = vpack.c.bf16 %v230, %v229
  %v284 = vpack.c.bf16 %v232, %v231
  %v285 = vpack.c.bf16 %v234, %v233
  %v286 = vpack.c.bf16 %v236, %v235
  %v287 = vpack.c.bf16 %v238, %v237
  %v288 = vpack.c.bf16 %v240, %v239
  %v289 = vpack.c.bf16 %v242, %v241
  %v290 = vpack.c.bf16 %v244, %v243
  %v291 = vpack.c.bf16 %v246, %v245
  %v292 = vpack.c.bf16 %v248, %v247
  %v293 = vpack.c.bf16 %v250, %v249
  %v294 = vpack.c.bf16 %v252, %v251
  %v295 = vpack.c.bf16 %v254, %v253
  %v296 = vpack.c.bf16 %v256, %v255
  %v297 = vpack.c.bf16 %v258, %v257
  %v298 = vpack.c.bf16 %v260, %v259
  %v299 = vpack.c.bf16 %v262, %v261
  %v300 = vpack.c.bf16 %v264, %v263
  %v301 = vpack.c.bf16 %v266, %v265
  %v302 = vpack.c.bf16 %v268, %v267
  %v303 = vpack.c.bf16 %v270, %v269
  %v304 = vpack.c.bf16 %v272, %v271
  %v305 = vld [vmem:[#allocation2] sm:$0xff]
  %v306 = vld [vmem:[#allocation2 + $0x8] sm:$0xff]
  %v307 = vld [vmem:[#allocation2 + $0x10] sm:$0xff]
  %v308 = vld [vmem:[#allocation2 + $0x18] sm:$0xff]
  %v309 = vld [vmem:[#allocation2 + $0x20] sm:$0xff]
  %v310 = vld [vmem:[#allocation2 + $0x28] sm:$0xff]
  %v311 = vld [vmem:[#allocation2 + $0x30] sm:$0xff]
  %v312 = vld [vmem:[#allocation2 + $0x38] sm:$0xff]
  %v313 = vld [vmem:[#allocation2 + $0x40] sm:$0xff]
  %v314 = vld [vmem:[#allocation2 + $0x48] sm:$0xff]
  %v315 = vld [vmem:[#allocation2 + $0x50] sm:$0xff]
  %v316 = vld [vmem:[#allocation2 + $0x58] sm:$0xff]
  %v317 = vld [vmem:[#allocation2 + $0x60] sm:$0xff]
  %v318 = vld [vmem:[#allocation2 + $0x68] sm:$0xff]
  %v319 = vld [vmem:[#allocation2 + $0x70] sm:$0xff]
  %v320 = vld [vmem:[#allocation2 + $0x78] sm:$0xff]
  %v321 = vld [vmem:[#allocation2 + $0x80] sm:$0xff]
  %v322 = vld [vmem:[#allocation2 + $0x88] sm:$0xff]
  %v323 = vld [vmem:[#allocation2 + $0x90] sm:$0xff]
  %v324 = vld [vmem:[#allocation2 + $0x98] sm:$0xff]
  %v325 = vld [vmem:[#allocation2 + $0xa0] sm:$0xff]
  %v326 = vld [vmem:[#allocation2 + $0xa8] sm:$0xff]
  %v327 = vld [vmem:[#allocation2 + $0xb0] sm:$0xff]
  %v328 = vld [vmem:[#allocation2 + $0xb8] sm:$0xff]
  %v329 = vld [vmem:[#allocation2 + $0xc0] sm:$0xff]
  %v330 = vld [vmem:[#allocation2 + $0xc8] sm:$0xff]
  %v331 = vld [vmem:[#allocation2 + $0xd0] sm:$0xff]
  %v332 = vld [vmem:[#allocation2 + $0xd8] sm:$0xff]
  %v333 = vld [vmem:[#allocation2 + $0xe0] sm:$0xff]
  %v334 = vld [vmem:[#allocation2 + $0xe8] sm:$0xff]
  %v335 = vld [vmem:[#allocation2 + $0xf0] sm:$0xff]
  %v336 = vld [vmem:[#allocation2 + $0xf8] sm:$0xff]
  %v337 = vld [vmem:[#allocation2 + $0x100] sm:$0xff]
  %v338 = vld [vmem:[#allocation2 + $0x108] sm:$0xff]
  %v339 = vld [vmem:[#allocation2 + $0x110] sm:$0xff]
  %v340 = vld [vmem:[#allocation2 + $0x118] sm:$0xff]
  %v341 = vld [vmem:[#allocation2 + $0x120] sm:$0xff]
  %v342 = vld [vmem:[#allocation2 + $0x128] sm:$0xff]
  %v343 = vld [vmem:[#allocation2 + $0x130] sm:$0xff]
  %v344 = vld [vmem:[#allocation2 + $0x138] sm:$0xff]
  %v345 = vld [vmem:[#allocation2 + $0x140] sm:$0xff]
  %v346 = vld [vmem:[#allocation2 + $0x148] sm:$0xff]
  %v347 = vld [vmem:[#allocation2 + $0x150] sm:$0xff]
  %v348 = vld [vmem:[#allocation2 + $0x158] sm:$0xff]
  %v349 = vld [vmem:[#allocation2 + $0x160] sm:$0xff]
  %v350 = vld [vmem:[#allocation2 + $0x168] sm:$0xff]
  %v351 = vld [vmem:[#allocation2 + $0x170] sm:$0xff]
  %v352 = vld [vmem:[#allocation2 + $0x178] sm:$0xff]
  %v353 = vld [vmem:[#allocation2 + $0x180] sm:$0xff]
  %v354 = vld [vmem:[#allocation2 + $0x188] sm:$0xff]
  %v355 = vld [vmem:[#allocation2 + $0x190] sm:$0xff]
  %v356 = vld [vmem:[#allocation2 + $0x198] sm:$0xff]
  %v357 = vld [vmem:[#allocation2 + $0x1a0] sm:$0xff]
  %v358 = vld [vmem:[#allocation2 + $0x1a8] sm:$0xff]
  %v359 = vld [vmem:[#allocation2 + $0x1b0] sm:$0xff]
  %v360 = vld [vmem:[#allocation2 + $0x1b8] sm:$0xff]
  %v361 = vld [vmem:[#allocation2 + $0x1c0] sm:$0xff]
  %v362 = vld [vmem:[#allocation2 + $0x1c8] sm:$0xff]
  %v363 = vld [vmem:[#allocation2 + $0x1d0] sm:$0xff]
  %v364 = vld [vmem:[#allocation2 + $0x1d8] sm:$0xff]
  %v365 = vld [vmem:[#allocation2 + $0x1e0] sm:$0xff]
  %v366 = vld [vmem:[#allocation2 + $0x1e8] sm:$0xff]
  %v367 = vld [vmem:[#allocation2 + $0x1f0] sm:$0xff]
  %v368 = vld [vmem:[#allocation2 + $0x1f8] sm:$0xff]
  %v369 = vld [vmem:[%s1] sm:$0xf]
  %v370 = vld [vmem:[%s1 + $0x4] sm:$0x3]
  %v373 = vunpack.c.l.b16 %v369
  %v374 = vunpack.c.l.b16 %v370
  %v375 = vpack.c.b16 %v374, %v373
  %vm376 = vcmask 97280
  %v378 = vsel %vm376, %v273, 0
  %v381 = vsel %vm376, %v274, 0
  %v384 = vsel %vm376, %v275, 0
  %v387 = vsel %vm376, %v276, 0
  %v390 = vsel %vm376, %v277, 0
  %v393 = vsel %vm376, %v278, 0
  %v396 = vsel %vm376, %v279, 0
  %v399 = vsel %vm376, %v280, 0
  %v402 = vsel %vm376, %v281, 0
  %v405 = vsel %vm376, %v282, 0
  %v408 = vsel %vm376, %v283, 0
  %v411 = vsel %vm376, %v284, 0
  %v414 = vsel %vm376, %v285, 0
  %v417 = vsel %vm376, %v286, 0
  %v420 = vsel %vm376, %v287, 0
  %v423 = vsel %vm376, %v288, 0
  %v426 = vsel %vm376, %v289, 0
  %v429 = vsel %vm376, %v290, 0
  %v432 = vsel %vm376, %v291, 0
  %v435 = vsel %vm376, %v292, 0
  %v438 = vsel %vm376, %v293, 0
  %v441 = vsel %vm376, %v294, 0
  %v444 = vsel %vm376, %v295, 0
  %v447 = vsel %vm376, %v296, 0
  %v450 = vsel %vm376, %v297, 0
  %v453 = vsel %vm376, %v298, 0
  %v456 = vsel %vm376, %v299, 0
  %v459 = vsel %vm376, %v300, 0
  %v462 = vsel %vm376, %v301, 0
  %v465 = vsel %vm376, %v302, 0
  %v468 = vsel %vm376, %v303, 0
  %v471 = vsel %vm376, %v304, 0
  %vm473 = vcmask 1045504
  %v475 = vsel %vm473, %v375, 0
  %477 = vmatpush.bf16.msra.mxu0 0
  %478 = vmatpush.bf16.msra.mxu0 0
  %479 = vmatpush.bf16.msra.mxu0 0
  %480 = vmatpush.bf16.msra.mxu0 0
  %481 = vmatpush.bf16.msra.mxu0 0
  %482 = vmatpush.bf16.msra.mxu0 0
  %483 = vmatpush.bf16.msra.mxu0 0
  %484 = vmatpush.bf16.msra.mxu0 %v475
  %485 = vmatmul.bf16.gmra.mxu0 %v378
  %v486 = vpop.f32.mrf.mxu0
  %v487 = vadd.f32 0.0, %v486
  %v488 = vpop.f32.mrf.mxu0
  %v489 = vadd.f32 0.0, %v488
  %490 = vmatmul.bf16.gmra.mxu0 %v381
  %v491 = vpop.f32.mrf.mxu0
  %v492 = vadd.f32 0.0, %v491
  %v493 = vpop.f32.mrf.mxu0
  %v494 = vadd.f32 0.0, %v493
  %495 = vmatmul.bf16.gmra.mxu0 %v384
  %v496 = vpop.f32.mrf.mxu0
  %v497 = vadd.f32 0.0, %v496
  %v498 = vpop.f32.mrf.mxu0
  %v499 = vadd.f32 0.0, %v498
  %500 = vmatmul.bf16.gmra.mxu0 %v387
  %v501 = vpop.f32.mrf.mxu0
  %v502 = vadd.f32 0.0, %v501
  %v503 = vpop.f32.mrf.mxu0
  %v504 = vadd.f32 0.0, %v503
  %505 = vmatmul.bf16.gmra.mxu0 %v390
  %v506 = vpop.f32.mrf.mxu0
  %v507 = vadd.f32 0.0, %v506
  %v508 = vpop.f32.mrf.mxu0
  %v509 = vadd.f32 0.0, %v508
  %510 = vmatmul.bf16.gmra.mxu0 %v393
  %v511 = vpop.f32.mrf.mxu0
  %v512 = vadd.f32 0.0, %v511
  %v513 = vpop.f32.mrf.mxu0
  %v514 = vadd.f32 0.0, %v513
  %515 = vmatmul.bf16.gmra.mxu0 %v396
  %v516 = vpop.f32.mrf.mxu0
  %v517 = vadd.f32 0.0, %v516
  %v518 = vpop.f32.mrf.mxu0
  %v519 = vadd.f32 0.0, %v518
  %520 = vmatmul.bf16.gmra.mxu0 %v399
  %v521 = vpop.f32.mrf.mxu0
  %v522 = vadd.f32 0.0, %v521
  %v523 = vpop.f32.mrf.mxu0
  %v524 = vadd.f32 0.0, %v523
  %525 = vmatmul.bf16.gmra.mxu0 %v402
  %v526 = vpop.f32.mrf.mxu0
  %v527 = vadd.f32 0.0, %v526
  %v528 = vpop.f32.mrf.mxu0
  %v529 = vadd.f32 0.0, %v528
  %530 = vmatmul.bf16.gmra.mxu0 %v405
  %v531 = vpop.f32.mrf.mxu0
  %v532 = vadd.f32 0.0, %v531
  %v533 = vpop.f32.mrf.mxu0
  %v534 = vadd.f32 0.0, %v533
  %535 = vmatmul.bf16.gmra.mxu0 %v408
  %v536 = vpop.f32.mrf.mxu0
  %v537 = vadd.f32 0.0, %v536
  %v538 = vpop.f32.mrf.mxu0
  %v539 = vadd.f32 0.0, %v538
  %540 = vmatmul.bf16.gmra.mxu0 %v411
  %v541 = vpop.f32.mrf.mxu0
  %v542 = vadd.f32 0.0, %v541
  %v543 = vpop.f32.mrf.mxu0
  %v544 = vadd.f32 0.0, %v543
  %545 = vmatmul.bf16.gmra.mxu0 %v414
  %v546 = vpop.f32.mrf.mxu0
  %v547 = vadd.f32 0.0, %v546
  %v548 = vpop.f32.mrf.mxu0
  %v549 = vadd.f32 0.0, %v548
  %550 = vmatmul.bf16.gmra.mxu0 %v417
  %v551 = vpop.f32.mrf.mxu0
  %v552 = vadd.f32 0.0, %v551
  %v553 = vpop.f32.mrf.mxu0
  %v554 = vadd.f32 0.0, %v553
  %555 = vmatmul.bf16.gmra.mxu0 %v420
  %v556 = vpop.f32.mrf.mxu0
  %v557 = vadd.f32 0.0, %v556
  %v558 = vpop.f32.mrf.mxu0
  %v559 = vadd.f32 0.0, %v558
  %560 = vmatmul.bf16.gmra.mxu0 %v423
  %v561 = vpop.f32.mrf.mxu0
  %v562 = vadd.f32 0.0, %v561
  %v563 = vpop.f32.mrf.mxu0
  %v564 = vadd.f32 0.0, %v563
  %565 = vmatmul.bf16.gmra.mxu0 %v426
  %v566 = vpop.f32.mrf.mxu0
  %v567 = vadd.f32 0.0, %v566
  %v568 = vpop.f32.mrf.mxu0
  %v569 = vadd.f32 0.0, %v568
  %570 = vmatmul.bf16.gmra.mxu0 %v429
  %v571 = vpop.f32.mrf.mxu0
  %v572 = vadd.f32 0.0, %v571
  %v573 = vpop.f32.mrf.mxu0
  %v574 = vadd.f32 0.0, %v573
  %575 = vmatmul.bf16.gmra.mxu0 %v432
  %v576 = vpop.f32.mrf.mxu0
  %v577 = vadd.f32 0.0, %v576
  %v578 = vpop.f32.mrf.mxu0
  %v579 = vadd.f32 0.0, %v578
  %580 = vmatmul.bf16.gmra.mxu0 %v435
  %v581 = vpop.f32.mrf.mxu0
  %v582 = vadd.f32 0.0, %v581
  %v583 = vpop.f32.mrf.mxu0
  %v584 = vadd.f32 0.0, %v583
  %585 = vmatmul.bf16.gmra.mxu0 %v438
  %v586 = vpop.f32.mrf.mxu0
  %v587 = vadd.f32 0.0, %v586
  %v588 = vpop.f32.mrf.mxu0
  %v589 = vadd.f32 0.0, %v588
  %590 = vmatmul.bf16.gmra.mxu0 %v441
  %v591 = vpop.f32.mrf.mxu0
  %v592 = vadd.f32 0.0, %v591
  %v593 = vpop.f32.mrf.mxu0
  %v594 = vadd.f32 0.0, %v593
  %595 = vmatmul.bf16.gmra.mxu0 %v444
  %v596 = vpop.f32.mrf.mxu0
  %v597 = vadd.f32 0.0, %v596
  %v598 = vpop.f32.mrf.mxu0
  %v599 = vadd.f32 0.0, %v598
  %600 = vmatmul.bf16.gmra.mxu0 %v447
  %v601 = vpop.f32.mrf.mxu0
  %v602 = vadd.f32 0.0, %v601
  %v603 = vpop.f32.mrf.mxu0
  %v604 = vadd.f32 0.0, %v603
  %605 = vmatmul.bf16.gmra.mxu0 %v450
  %v606 = vpop.f32.mrf.mxu0
  %v607 = vadd.f32 0.0, %v606
  %v608 = vpop.f32.mrf.mxu0
  %v609 = vadd.f32 0.0, %v608
  %610 = vmatmul.bf16.gmra.mxu0 %v453
  %v611 = vpop.f32.mrf.mxu0
  %v612 = vadd.f32 0.0, %v611
  %v613 = vpop.f32.mrf.mxu0
  %v614 = vadd.f32 0.0, %v613
  %615 = vmatmul.bf16.gmra.mxu0 %v456
  %v616 = vpop.f32.mrf.mxu0
  %v617 = vadd.f32 0.0, %v616
  %v618 = vpop.f32.mrf.mxu0
  %v619 = vadd.f32 0.0, %v618
  %620 = vmatmul.bf16.gmra.mxu0 %v459
  %v621 = vpop.f32.mrf.mxu0
  %v622 = vadd.f32 0.0, %v621
  %v623 = vpop.f32.mrf.mxu0
  %v624 = vadd.f32 0.0, %v623
  %625 = vmatmul.bf16.gmra.mxu0 %v462
  %v626 = vpop.f32.mrf.mxu0
  %v627 = vadd.f32 0.0, %v626
  %v628 = vpop.f32.mrf.mxu0
  %v629 = vadd.f32 0.0, %v628
  %630 = vmatmul.bf16.gmra.mxu0 %v465
  %v631 = vpop.f32.mrf.mxu0
  %v632 = vadd.f32 0.0, %v631
  %v633 = vpop.f32.mrf.mxu0
  %v634 = vadd.f32 0.0, %v633
  %635 = vmatmul.bf16.gmra.mxu0 %v468
  %v636 = vpop.f32.mrf.mxu0
  %v637 = vadd.f32 0.0, %v636
  %v638 = vpop.f32.mrf.mxu0
  %v639 = vadd.f32 0.0, %v638
  %640 = vmatmul.bf16.gmra.mxu0 %v471
  %v641 = vpop.f32.mrf.mxu0
  %v642 = vadd.f32 0.0, %v641
  %v643 = vpop.f32.mrf.mxu0
  %v644 = vadd.f32 0.0, %v643
  %645 = vdwg.mxu0
  %v646 = vadd.f32 %v305, %v487
  %v647 = vadd.f32 %v306, %v489
  %v648 = vadd.f32 %v307, %v492
  %v649 = vadd.f32 %v308, %v494
  %v650 = vadd.f32 %v309, %v497
  %v651 = vadd.f32 %v310, %v499
  %v652 = vadd.f32 %v311, %v502
  %v653 = vadd.f32 %v312, %v504
  %v654 = vadd.f32 %v313, %v507
  %v655 = vadd.f32 %v314, %v509
  %v656 = vadd.f32 %v315, %v512
  %v657 = vadd.f32 %v316, %v514
  %v658 = vadd.f32 %v317, %v517
  %v659 = vadd.f32 %v318, %v519
  %v660 = vadd.f32 %v319, %v522
  %v661 = vadd.f32 %v320, %v524
  %v662 = vadd.f32 %v321, %v527
  %v663 = vadd.f32 %v322, %v529
  %v664 = vadd.f32 %v323, %v532
  %v665 = vadd.f32 %v324, %v534
  %v666 = vadd.f32 %v325, %v537
  %v667 = vadd.f32 %v326, %v539
  %v668 = vadd.f32 %v327, %v542
  %v669 = vadd.f32 %v328, %v544
  %v670 = vadd.f32 %v329, %v547
  %v671 = vadd.f32 %v330, %v549
  %v672 = vadd.f32 %v331, %v552
  %v673 = vadd.f32 %v332, %v554
  %v674 = vadd.f32 %v333, %v557
  %v675 = vadd.f32 %v334, %v559
  %v676 = vadd.f32 %v335, %v562
  %v677 = vadd.f32 %v336, %v564
  %v678 = vadd.f32 %v337, %v567
  %v679 = vadd.f32 %v338, %v569
  %v680 = vadd.f32 %v339, %v572
  %v681 = vadd.f32 %v340, %v574
  %v682 = vadd.f32 %v341, %v577
  %v683 = vadd.f32 %v342, %v579
  %v684 = vadd.f32 %v343, %v582
  %v685 = vadd.f32 %v344, %v584
  %v686 = vadd.f32 %v345, %v587
  %v687 = vadd.f32 %v346, %v589
  %v688 = vadd.f32 %v347, %v592
  %v689 = vadd.f32 %v348, %v594
  %v690 = vadd.f32 %v349, %v597
  %v691 = vadd.f32 %v350, %v599
  %v692 = vadd.f32 %v351, %v602
  %v693 = vadd.f32 %v352, %v604
  %v694 = vadd.f32 %v353, %v607
  %v695 = vadd.f32 %v354, %v609
  %v696 = vadd.f32 %v355, %v612
  %v697 = vadd.f32 %v356, %v614
  %v698 = vadd.f32 %v357, %v617
  %v699 = vadd.f32 %v358, %v619
  %v700 = vadd.f32 %v359, %v622
  %v701 = vadd.f32 %v360, %v624
  %v702 = vadd.f32 %v361, %v627
  %v703 = vadd.f32 %v362, %v629
  %v704 = vadd.f32 %v363, %v632
  %v705 = vadd.f32 %v364, %v634
  %v706 = vadd.f32 %v365, %v637
  %v707 = vadd.f32 %v366, %v639
  %v708 = vadd.f32 %v367, %v642
  %v709 = vadd.f32 %v368, %v644
  %vm710 = vcmask 64512
  %711 = vst.msk [vmem:[#allocation2] sm:$0xff] %vm710, %v646
  %712 = vst.msk [vmem:[#allocation2 + $0x8] sm:$0xff] %vm710, %v647
  %713 = vst.msk [vmem:[#allocation2 + $0x10] sm:$0xff] %vm710, %v648
  %714 = vst.msk [vmem:[#allocation2 + $0x18] sm:$0xff] %vm710, %v649
  %715 = vst.msk [vmem:[#allocation2 + $0x20] sm:$0xff] %vm710, %v650
  %716 = vst.msk [vmem:[#allocation2 + $0x28] sm:$0xff] %vm710, %v651
  %717 = vst.msk [vmem:[#allocation2 + $0x30] sm:$0xff] %vm710, %v652
  %718 = vst.msk [vmem:[#allocation2 + $0x38] sm:$0xff] %vm710, %v653
  %719 = vst.msk [vmem:[#allocation2 + $0x40] sm:$0xff] %vm710, %v654
  %720 = vst.msk [vmem:[#allocation2 + $0x48] sm:$0xff] %vm710, %v655
  %721 = vst.msk [vmem:[#allocation2 + $0x50] sm:$0xff] %vm710, %v656
  %722 = vst.msk [vmem:[#allocation2 + $0x58] sm:$0xff] %vm710, %v657
  %723 = vst.msk [vmem:[#allocation2 + $0x60] sm:$0xff] %vm710, %v658
  %724 = vst.msk [vmem:[#allocation2 + $0x68] sm:$0xff] %vm710, %v659
  %725 = vst.msk [vmem:[#allocation2 + $0x70] sm:$0xff] %vm710, %v660
  %726 = vst.msk [vmem:[#allocation2 + $0x78] sm:$0xff] %vm710, %v661
  %727 = vst.msk [vmem:[#allocation2 + $0x80] sm:$0xff] %vm710, %v662
  %728 = vst.msk [vmem:[#allocation2 + $0x88] sm:$0xff] %vm710, %v663
  %729 = vst.msk [vmem:[#allocation2 + $0x90] sm:$0xff] %vm710, %v664
  %730 = vst.msk [vmem:[#allocation2 + $0x98] sm:$0xff] %vm710, %v665
  %731 = vst.msk [vmem:[#allocation2 + $0xa0] sm:$0xff] %vm710, %v666
  %732 = vst.msk [vmem:[#allocation2 + $0xa8] sm:$0xff] %vm710, %v667
  %733 = vst.msk [vmem:[#allocation2 + $0xb0] sm:$0xff] %vm710, %v668
  %734 = vst.msk [vmem:[#allocation2 + $0xb8] sm:$0xff] %vm710, %v669
  %735 = vst.msk [vmem:[#allocation2 + $0xc0] sm:$0xff] %vm710, %v670
  %736 = vst.msk [vmem:[#allocation2 + $0xc8] sm:$0xff] %vm710, %v671
  %737 = vst.msk [vmem:[#allocation2 + $0xd0] sm:$0xff] %vm710, %v672
  %738 = vst.msk [vmem:[#allocation2 + $0xd8] sm:$0xff] %vm710, %v673
  %739 = vst.msk [vmem:[#allocation2 + $0xe0] sm:$0xff] %vm710, %v674
  %740 = vst.msk [vmem:[#allocation2 + $0xe8] sm:$0xff] %vm710, %v675
  %741 = vst.msk [vmem:[#allocation2 + $0xf0] sm:$0xff] %vm710, %v676
  %742 = vst.msk [vmem:[#allocation2 + $0xf8] sm:$0xff] %vm710, %v677
  %743 = vst.msk [vmem:[#allocation2 + $0x100] sm:$0xff] %vm710, %v678
  %744 = vst.msk [vmem:[#allocation2 + $0x108] sm:$0xff] %vm710, %v679
  %745 = vst.msk [vmem:[#allocation2 + $0x110] sm:$0xff] %vm710, %v680
  %746 = vst.msk [vmem:[#allocation2 + $0x118] sm:$0xff] %vm710, %v681
  %747 = vst.msk [vmem:[#allocation2 + $0x120] sm:$0xff] %vm710, %v682
  %748 = vst.msk [vmem:[#allocation2 + $0x128] sm:$0xff] %vm710, %v683
  %749 = vst.msk [vmem:[#allocation2 + $0x130] sm:$0xff] %vm710, %v684
  %750 = vst.msk [vmem:[#allocation2 + $0x138] sm:$0xff] %vm710, %v685
  %751 = vst.msk [vmem:[#allocation2 + $0x140] sm:$0xff] %vm710, %v686
  %752 = vst.msk [vmem:[#allocation2 + $0x148] sm:$0xff] %vm710, %v687
  %753 = vst.msk [vmem:[#allocation2 + $0x150] sm:$0xff] %vm710, %v688
  %754 = vst.msk [vmem:[#allocation2 + $0x158] sm:$0xff] %vm710, %v689
  %755 = vst.msk [vmem:[#allocation2 + $0x160] sm:$0xff] %vm710, %v690
  %756 = vst.msk [vmem:[#allocation2 + $0x168] sm:$0xff] %vm710, %v691
  %757 = vst.msk [vmem:[#allocation2 + $0x170] sm:$0xff] %vm710, %v692
  %758 = vst.msk [vmem:[#allocation2 + $0x178] sm:$0xff] %vm710, %v693
  %759 = vst.msk [vmem:[#allocation2 + $0x180] sm:$0xff] %vm710, %v694
  %760 = vst.msk [vmem:[#allocation2 + $0x188] sm:$0xff] %vm710, %v695
  %761 = vst.msk [vmem:[#allocation2 + $0x190] sm:$0xff] %vm710, %v696
  %762 = vst.msk [vmem:[#allocation2 + $0x198] sm:$0xff] %vm710, %v697
  %763 = vst.msk [vmem:[#allocation2 + $0x1a0] sm:$0xff] %vm710, %v698
  %764 = vst.msk [vmem:[#allocation2 + $0x1a8] sm:$0xff] %vm710, %v699
  %765 = vst.msk [vmem:[#allocation2 + $0x1b0] sm:$0xff] %vm710, %v700
  %766 = vst.msk [vmem:[#allocation2 + $0x1b8] sm:$0xff] %vm710, %v701
  %767 = vst.msk [vmem:[#allocation2 + $0x1c0] sm:$0xff] %vm710, %v702
  %768 = vst.msk [vmem:[#allocation2 + $0x1c8] sm:$0xff] %vm710, %v703
  %769 = vst.msk [vmem:[#allocation2 + $0x1d0] sm:$0xff] %vm710, %v704
  %770 = vst.msk [vmem:[#allocation2 + $0x1d8] sm:$0xff] %vm710, %v705
  %771 = vst.msk [vmem:[#allocation2 + $0x1e0] sm:$0xff] %vm710, %v706
  %772 = vst.msk [vmem:[#allocation2 + $0x1e8] sm:$0xff] %vm710, %v707
  %773 = vst.msk [vmem:[#allocation2 + $0x1f0] sm:$0xff] %vm710, %v708
  %774 = vst.msk [vmem:[#allocation2 + $0x1f8] sm:$0xff] %vm710, %v709
  // Predicated region
  $region14: #{_lambda_.72} parent=0 // pred_check
    %p775 = pneg %p12
  $region15: #{_lambda_.72} parent=0 // pred_check_branch
    %777 = sbr.rel (%p775) target = $region17
  $region16: #{_lambda_.72} parent=0 // pred_region
    %v778 = vld [vmem:[#allocation2] sm:$0xff]
    %v779 = vld [vmem:[#allocation2 + $0x8] sm:$0xff]
    %v780 = vld [vmem:[#allocation2 + $0x10] sm:$0xff]
    %v781 = vld [vmem:[#allocation2 + $0x18] sm:$0xff]
    %v782 = vld [vmem:[#allocation2 + $0x20] sm:$0xff]
    %v783 = vld [vmem:[#allocation2 + $0x28] sm:$0xff]
    %v784 = vld [vmem:[#allocation2 + $0x30] sm:$0xff]
    %v785 = vld [vmem:[#allocation2 + $0x38] sm:$0xff]
    %v786 = vld [vmem:[#allocation2 + $0x40] sm:$0xff]
    %v787 = vld [vmem:[#allocation2 + $0x48] sm:$0xff]
    %v788 = vld [vmem:[#allocation2 + $0x50] sm:$0xff]
    %v789 = vld [vmem:[#allocation2 + $0x58] sm:$0xff]
    %v790 = vld [vmem:[#allocation2 + $0x60] sm:$0xff]
    %v791 = vld [vmem:[#allocation2 + $0x68] sm:$0xff]
    %v792 = vld [vmem:[#allocation2 + $0x70] sm:$0xff]
    %v793 = vld [vmem:[#allocation2 + $0x78] sm:$0xff]
    %v794 = vld [vmem:[#allocation2 + $0x80] sm:$0xff]
    %v795 = vld [vmem:[#allocation2 + $0x88] sm:$0xff]
    %v796 = vld [vmem:[#allocation2 + $0x90] sm:$0xff]
    %v797 = vld [vmem:[#allocation2 + $0x98] sm:$0xff]
    %v798 = vld [vmem:[#allocation2 + $0xa0] sm:$0xff]
    %v799 = vld [vmem:[#allocation2 + $0xa8] sm:$0xff]
    %v800 = vld [vmem:[#allocation2 + $0xb0] sm:$0xff]
    %v801 = vld [vmem:[#allocation2 + $0xb8] sm:$0xff]
    %v802 = vld [vmem:[#allocation2 + $0xc0] sm:$0xff]
    %v803 = vld [vmem:[#allocation2 + $0xc8] sm:$0xff]
    %v804 = vld [vmem:[#allocation2 + $0xd0] sm:$0xff]
    %v805 = vld [vmem:[#allocation2 + $0xd8] sm:$0xff]
    %v806 = vld [vmem:[#allocation2 + $0xe0] sm:$0xff]
    %v807 = vld [vmem:[#allocation2 + $0xe8] sm:$0xff]
    %v808 = vld [vmem:[#allocation2 + $0xf0] sm:$0xff]
    %v809 = vld [vmem:[#allocation2 + $0xf8] sm:$0xff]
    %v810 = vld [vmem:[#allocation2 + $0x100] sm:$0xff]
    %v811 = vld [vmem:[#allocation2 + $0x108] sm:$0xff]
    %v812 = vld [vmem:[#allocation2 + $0x110] sm:$0xff]
    %v813 = vld [vmem:[#allocation2 + $0x118] sm:$0xff]
    %v814 = vld [vmem:[#allocation2 + $0x120] sm:$0xff]
    %v815 = vld [vmem:[#allocation2 + $0x128] sm:$0xff]
    %v816 = vld [vmem:[#allocation2 + $0x130] sm:$0xff]
    %v817 = vld [vmem:[#allocation2 + $0x138] sm:$0xff]
    %v818 = vld [vmem:[#allocation2 + $0x140] sm:$0xff]
    %v819 = vld [vmem:[#allocation2 + $0x148] sm:$0xff]
    %v820 = vld [vmem:[#allocation2 + $0x150] sm:$0xff]
    %v821 = vld [vmem:[#allocation2 + $0x158] sm:$0xff]
    %v822 = vld [vmem:[#allocation2 + $0x160] sm:$0xff]
    %v823 = vld [vmem:[#allocation2 + $0x168] sm:$0xff]
    %v824 = vld [vmem:[#allocation2 + $0x170] sm:$0xff]
    %v825 = vld [vmem:[#allocation2 + $0x178] sm:$0xff]
    %v826 = vld [vmem:[#allocation2 + $0x180] sm:$0xff]
    %v827 = vld [vmem:[#allocation2 + $0x188] sm:$0xff]
    %v828 = vld [vmem:[#allocation2 + $0x190] sm:$0xff]
    %v829 = vld [vmem:[#allocation2 + $0x198] sm:$0xff]
    %v830 = vld [vmem:[#allocation2 + $0x1a0] sm:$0xff]
    %v831 = vld [vmem:[#allocation2 + $0x1a8] sm:$0xff]
    %v832 = vld [vmem:[#allocation2 + $0x1b0] sm:$0xff]
    %v833 = vld [vmem:[#allocation2 + $0x1b8] sm:$0xff]
    %v834 = vld [vmem:[#allocation2 + $0x1c0] sm:$0xff]
    %v835 = vld [vmem:[#allocation2 + $0x1c8] sm:$0xff]
    %v836 = vld [vmem:[#allocation2 + $0x1d0] sm:$0xff]
    %v837 = vld [vmem:[#allocation2 + $0x1d8] sm:$0xff]
    %v838 = vld [vmem:[#allocation2 + $0x1e0] sm:$0xff]
    %v839 = vld [vmem:[#allocation2 + $0x1e8] sm:$0xff]
    %v840 = vld [vmem:[#allocation2 + $0x1f0] sm:$0xff]
    %v841 = vld [vmem:[#allocation2 + $0x1f8] sm:$0xff]
    %v842 = vsel %vm710, %v778, 0.0
    %v843 = vsel %vm710, %v779, 0.0
    %v844 = vadd.f32 %v842, %v843
    %v845 = vsel %vm710, %v780, 0.0
    %v846 = vadd.f32 %v844, %v845
    %v847 = vsel %vm710, %v781, 0.0
    %v848 = vadd.f32 %v846, %v847
    %v849 = vsel %vm710, %v782, 0.0
    %v850 = vadd.f32 %v848, %v849
    %v851 = vsel %vm710, %v783, 0.0
    %v852 = vadd.f32 %v850, %v851
    %v853 = vsel %vm710, %v784, 0.0
    %v854 = vadd.f32 %v852, %v853
    %v855 = vsel %vm710, %v785, 0.0
    %v856 = vadd.f32 %v854, %v855
    %v857 = vsel %vm710, %v786, 0.0
    %v858 = vadd.f32 %v856, %v857
    %v859 = vsel %vm710, %v787, 0.0
    %v860 = vadd.f32 %v858, %v859
    %v861 = vsel %vm710, %v788, 0.0
    %v862 = vadd.f32 %v860, %v861
    %v863 = vsel %vm710, %v789, 0.0
    %v864 = vadd.f32 %v862, %v863
    %v865 = vsel %vm710, %v790, 0.0
    %v866 = vadd.f32 %v864, %v865
    %v867 = vsel %vm710, %v791, 0.0
    %v868 = vadd.f32 %v866, %v867
    %v869 = vsel %vm710, %v792, 0.0
    %v870 = vadd.f32 %v868, %v869
    %v871 = vsel %vm710, %v793, 0.0
    %v872 = vadd.f32 %v870, %v871
    %v873 = vsel %vm710, %v794, 0.0
    %v874 = vadd.f32 %v872, %v873
    %v875 = vsel %vm710, %v795, 0.0
    %v876 = vadd.f32 %v874, %v875
    %v877 = vsel %vm710, %v796, 0.0
    %v878 = vadd.f32 %v876, %v877
    %v879 = vsel %vm710, %v797, 0.0
    %v880 = vadd.f32 %v878, %v879
    %v881 = vsel %vm710, %v798, 0.0
    %v882 = vadd.f32 %v880, %v881
    %v883 = vsel %vm710, %v799, 0.0
    %v884 = vadd.f32 %v882, %v883
    %v885 = vsel %vm710, %v800, 0.0
    %v886 = vadd.f32 %v884, %v885
    %v887 = vsel %vm710, %v801, 0.0
    %v888 = vadd.f32 %v886, %v887
    %v889 = vsel %vm710, %v802, 0.0
    %v890 = vadd.f32 %v888, %v889
    %v891 = vsel %vm710, %v803, 0.0
    %v892 = vadd.f32 %v890, %v891
    %v893 = vsel %vm710, %v804, 0.0
    %v894 = vadd.f32 %v892, %v893
    %v895 = vsel %vm710, %v805, 0.0
    %v896 = vadd.f32 %v894, %v895
    %v897 = vsel %vm710, %v806, 0.0
    %v898 = vadd.f32 %v896, %v897
    %v899 = vsel %vm710, %v807, 0.0
    %v900 = vadd.f32 %v898, %v899
    %v901 = vsel %vm710, %v808, 0.0
    %v902 = vadd.f32 %v900, %v901
    %v903 = vsel %vm710, %v809, 0.0
    %v904 = vadd.f32 %v902, %v903
    %v905 = vsel %vm710, %v810, 0.0
    %v906 = vadd.f32 %v904, %v905
    %v907 = vsel %vm710, %v811, 0.0
    %v908 = vadd.f32 %v906, %v907
    %v909 = vsel %vm710, %v812, 0.0
    %v910 = vadd.f32 %v908, %v909
    %v911 = vsel %vm710, %v813, 0.0
    %v912 = vadd.f32 %v910, %v911
    %v913 = vsel %vm710, %v814, 0.0
    %v914 = vadd.f32 %v912, %v913
    %v915 = vsel %vm710, %v815, 0.0
    %v916 = vadd.f32 %v914, %v915
    %v917 = vsel %vm710, %v816, 0.0
    %v918 = vadd.f32 %v916, %v917
    %v919 = vsel %vm710, %v817, 0.0
    %v920 = vadd.f32 %v918, %v919
    %v921 = vsel %vm710, %v818, 0.0
    %v922 = vadd.f32 %v920, %v921
    %v923 = vsel %vm710, %v819, 0.0
    %v924 = vadd.f32 %v922, %v923
    %v925 = vsel %vm710, %v820, 0.0
    %v926 = vadd.f32 %v924, %v925
    %v927 = vsel %vm710, %v821, 0.0
    %v928 = vadd.f32 %v926, %v927
    %v929 = vsel %vm710, %v822, 0.0
    %v930 = vadd.f32 %v928, %v929
    %v931 = vsel %vm710, %v823, 0.0
    %v932 = vadd.f32 %v930, %v931
    %v933 = vsel %vm710, %v824, 0.0
    %v934 = vadd.f32 %v932, %v933
    %v935 = vsel %vm710, %v825, 0.0
    %v936 = vadd.f32 %v934, %v935
    %v937 = vsel %vm710, %v826, 0.0
    %v938 = vadd.f32 %v936, %v937
    %v939 = vsel %vm710, %v827, 0.0
    %v940 = vadd.f32 %v938, %v939
    %v941 = vsel %vm710, %v828, 0.0
    %v942 = vadd.f32 %v940, %v941
    %v943 = vsel %vm710, %v829, 0.0
    %v944 = vadd.f32 %v942, %v943
    %v945 = vsel %vm710, %v830, 0.0
    %v946 = vadd.f32 %v944, %v945
    %v947 = vsel %vm710, %v831, 0.0
    %v948 = vadd.f32 %v946, %v947
    %v949 = vsel %vm710, %v832, 0.0
    %v950 = vadd.f32 %v948, %v949
    %v951 = vsel %vm710, %v833, 0.0
    %v952 = vadd.f32 %v950, %v951
    %v953 = vsel %vm710, %v834, 0.0
    %v954 = vadd.f32 %v952, %v953
    %v955 = vsel %vm710, %v835, 0.0
    %v956 = vadd.f32 %v954, %v955
    %v957 = vsel %vm710, %v836, 0.0
    %v958 = vadd.f32 %v956, %v957
    %v959 = vsel %vm710, %v837, 0.0
    %v960 = vadd.f32 %v958, %v959
    %v961 = vsel %vm710, %v838, 0.0
    %v962 = vadd.f32 %v960, %v961
    %v963 = vsel %vm710, %v839, 0.0
    %v964 = vadd.f32 %v962, %v963
    %v965 = vsel %vm710, %v840, 0.0
    %v966 = vadd.f32 %v964, %v965
    %v967 = vsel %vm710, %v841, 0.0
    %v968 = vadd.f32 %v966, %v967
    %v969 = vrot.slane %v968, 4
    %v970 = vadd.f32 %v968, %v969
    %v971 = vrot.slane %v970, 2
    %v972 = vadd.f32 %v970, %v971
    %v973 = vrot.slane %v972, 1
    %v974 = vadd.f32 %v972, %v973
    %v975 = vmul.f32 %v974, 0.001953125
    %v976 = vsub.f32 %v778, %v975
    %v977 = vsub.f32 %v779, %v975
    %v978 = vsub.f32 %v780, %v975
    %v979 = vsub.f32 %v781, %v975
    %v980 = vsub.f32 %v782, %v975
    %v981 = vsub.f32 %v783, %v975
    %v982 = vsub.f32 %v784, %v975
    %v983 = vsub.f32 %v785, %v975
    %v984 = vsub.f32 %v786, %v975
    %v985 = vsub.f32 %v787, %v975
    %v986 = vsub.f32 %v788, %v975
    %v987 = vsub.f32 %v789, %v975
    %v988 = vsub.f32 %v790, %v975
    %v989 = vsub.f32 %v791, %v975
    %v990 = vsub.f32 %v792, %v975
    %v991 = vsub.f32 %v793, %v975
    %v992 = vsub.f32 %v794, %v975
    %v993 = vsub.f32 %v795, %v975
    %v994 = vsub.f32 %v796, %v975
    %v995 = vsub.f32 %v797, %v975
    %v996 = vsub.f32 %v798, %v975
    %v997 = vsub.f32 %v799, %v975
    %v998 = vsub.f32 %v800, %v975
    %v999 = vsub.f32 %v801, %v975
    %v1000 = vsub.f32 %v802, %v975
    %v1001 = vsub.f32 %v803, %v975
    %v1002 = vsub.f32 %v804, %v975
    %v1003 = vsub.f32 %v805, %v975
    %v1004 = vsub.f32 %v806, %v975
    %v1005 = vsub.f32 %v807, %v975
    %v1006 = vsub.f32 %v808, %v975
    %v1007 = vsub.f32 %v809, %v975
    %v1008 = vsub.f32 %v810, %v975
    %v1009 = vsub.f32 %v811, %v975
    %v1010 = vsub.f32 %v812, %v975
    %v1011 = vsub.f32 %v813, %v975
    %v1012 = vsub.f32 %v814, %v975
    %v1013 = vsub.f32 %v815, %v975
    %v1014 = vsub.f32 %v816, %v975
    %v1015 = vsub.f32 %v817, %v975
    %v1016 = vsub.f32 %v818, %v975
    %v1017 = vsub.f32 %v819, %v975
    %v1018 = vsub.f32 %v820, %v975
    %v1019 = vsub.f32 %v821, %v975
    %v1020 = vsub.f32 %v822, %v975
    %v1021 = vsub.f32 %v823, %v975
    %v1022 = vsub.f32 %v824, %v975
    %v1023 = vsub.f32 %v825, %v975
    %v1024 = vsub.f32 %v826, %v975
    %v1025 = vsub.f32 %v827, %v975
    %v1026 = vsub.f32 %v828, %v975
    %v1027 = vsub.f32 %v829, %v975
    %v1028 = vsub.f32 %v830, %v975
    %v1029 = vsub.f32 %v831, %v975
    %v1030 = vsub.f32 %v832, %v975
    %v1031 = vsub.f32 %v833, %v975
    %v1032 = vsub.f32 %v834, %v975
    %v1033 = vsub.f32 %v835, %v975
    %v1034 = vsub.f32 %v836, %v975
    %v1035 = vsub.f32 %v837, %v975
    %v1036 = vsub.f32 %v838, %v975
    %v1037 = vsub.f32 %v839, %v975
    %v1038 = vsub.f32 %v840, %v975
    %v1039 = vsub.f32 %v841, %v975
    %v1040 = vmul.f32 %v976, %v976
    %v1041 = vmul.f32 %v977, %v977
    %v1042 = vmul.f32 %v978, %v978
    %v1043 = vmul.f32 %v979, %v979
    %v1044 = vmul.f32 %v980, %v980
    %v1045 = vmul.f32 %v981, %v981
    %v1046 = vmul.f32 %v982, %v982
    %v1047 = vmul.f32 %v983, %v983
    %v1048 = vmul.f32 %v984, %v984
    %v1049 = vmul.f32 %v985, %v985
    %v1050 = vmul.f32 %v986, %v986
    %v1051 = vmul.f32 %v987, %v987
    %v1052 = vmul.f32 %v988, %v988
    %v1053 = vmul.f32 %v989, %v989
    %v1054 = vmul.f32 %v990, %v990
    %v1055 = vmul.f32 %v991, %v991
    %v1056 = vmul.f32 %v992, %v992
    %v1057 = vmul.f32 %v993, %v993
    %v1058 = vmul.f32 %v994, %v994
    %v1059 = vmul.f32 %v995, %v995
    %v1060 = vmul.f32 %v996, %v996
    %v1061 = vmul.f32 %v997, %v997
    %v1062 = vmul.f32 %v998, %v998
    %v1063 = vmul.f32 %v999, %v999
    %v1064 = vmul.f32 %v1000, %v1000
    %v1065 = vmul.f32 %v1001, %v1001
    %v1066 = vmul.f32 %v1002, %v1002
    %v1067 = vmul.f32 %v1003, %v1003
    %v1068 = vmul.f32 %v1004, %v1004
    %v1069 = vmul.f32 %v1005, %v1005
    %v1070 = vmul.f32 %v1006, %v1006
    %v1071 = vmul.f32 %v1007, %v1007
    %v1072 = vmul.f32 %v1008, %v1008
    %v1073 = vmul.f32 %v1009, %v1009
    %v1074 = vmul.f32 %v1010, %v1010
    %v1075 = vmul.f32 %v1011, %v1011
    %v1076 = vmul.f32 %v1012, %v1012
    %v1077 = vmul.f32 %v1013, %v1013
    %v1078 = vmul.f32 %v1014, %v1014
    %v1079 = vmul.f32 %v1015, %v1015
    %v1080 = vmul.f32 %v1016, %v1016
    %v1081 = vmul.f32 %v1017, %v1017
    %v1082 = vmul.f32 %v1018, %v1018
    %v1083 = vmul.f32 %v1019, %v1019
    %v1084 = vmul.f32 %v1020, %v1020
    %v1085 = vmul.f32 %v1021, %v1021
    %v1086 = vmul.f32 %v1022, %v1022
    %v1087 = vmul.f32 %v1023, %v1023
    %v1088 = vmul.f32 %v1024, %v1024
    %v1089 = vmul.f32 %v1025, %v1025
    %v1090 = vmul.f32 %v1026, %v1026
    %v1091 = vmul.f32 %v1027, %v1027
    %v1092 = vmul.f32 %v1028, %v1028
    %v1093 = vmul.f32 %v1029, %v1029
    %v1094 = vmul.f32 %v1030, %v1030
    %v1095 = vmul.f32 %v1031, %v1031
    %v1096 = vmul.f32 %v1032, %v1032
    %v1097 = vmul.f32 %v1033, %v1033
    %v1098 = vmul.f32 %v1034, %v1034
    %v1099 = vmul.f32 %v1035, %v1035
    %v1100 = vmul.f32 %v1036, %v1036
    %v1101 = vmul.f32 %v1037, %v1037
    %v1102 = vmul.f32 %v1038, %v1038
    %v1103 = vmul.f32 %v1039, %v1039
    %v1104 = vsel %vm710, %v1040, 0.0
    %v1105 = vsel %vm710, %v1041, 0.0
    %v1106 = vadd.f32 %v1104, %v1105
    %v1107 = vsel %vm710, %v1042, 0.0
    %v1108 = vadd.f32 %v1106, %v1107
    %v1109 = vsel %vm710, %v1043, 0.0
    %v1110 = vadd.f32 %v1108, %v1109
    %v1111 = vsel %vm710, %v1044, 0.0
    %v1112 = vadd.f32 %v1110, %v1111
    %v1113 = vsel %vm710, %v1045, 0.0
    %v1114 = vadd.f32 %v1112, %v1113
    %v1115 = vsel %vm710, %v1046, 0.0
    %v1116 = vadd.f32 %v1114, %v1115
    %v1117 = vsel %vm710, %v1047, 0.0
    %v1118 = vadd.f32 %v1116, %v1117
    %v1119 = vsel %vm710, %v1048, 0.0
    %v1120 = vadd.f32 %v1118, %v1119
    %v1121 = vsel %vm710, %v1049, 0.0
    %v1122 = vadd.f32 %v1120, %v1121
    %v1123 = vsel %vm710, %v1050, 0.0
    %v1124 = vadd.f32 %v1122, %v1123
    %v1125 = vsel %vm710, %v1051, 0.0
    %v1126 = vadd.f32 %v1124, %v1125
    %v1127 = vsel %vm710, %v1052, 0.0
    %v1128 = vadd.f32 %v1126, %v1127
    %v1129 = vsel %vm710, %v1053, 0.0
    %v1130 = vadd.f32 %v1128, %v1129
    %v1131 = vsel %vm710, %v1054, 0.0
    %v1132 = vadd.f32 %v1130, %v1131
    %v1133 = vsel %vm710, %v1055, 0.0
    %v1134 = vadd.f32 %v1132, %v1133
    %v1135 = vsel %vm710, %v1056, 0.0
    %v1136 = vadd.f32 %v1134, %v1135
    %v1137 = vsel %vm710, %v1057, 0.0
    %v1138 = vadd.f32 %v1136, %v1137
    %v1139 = vsel %vm710, %v1058, 0.0
    %v1140 = vadd.f32 %v1138, %v1139
    %v1141 = vsel %vm710, %v1059, 0.0
    %v1142 = vadd.f32 %v1140, %v1141
    %v1143 = vsel %vm710, %v1060, 0.0
    %v1144 = vadd.f32 %v1142, %v1143
    %v1145 = vsel %vm710, %v1061, 0.0
    %v1146 = vadd.f32 %v1144, %v1145
    %v1147 = vsel %vm710, %v1062, 0.0
    %v1148 = vadd.f32 %v1146, %v1147
    %v1149 = vsel %vm710, %v1063, 0.0
    %v1150 = vadd.f32 %v1148, %v1149
    %v1151 = vsel %vm710, %v1064, 0.0
    %v1152 = vadd.f32 %v1150, %v1151
    %v1153 = vsel %vm710, %v1065, 0.0
    %v1154 = vadd.f32 %v1152, %v1153
    %v1155 = vsel %vm710, %v1066, 0.0
    %v1156 = vadd.f32 %v1154, %v1155
    %v1157 = vsel %vm710, %v1067, 0.0
    %v1158 = vadd.f32 %v1156, %v1157
    %v1159 = vsel %vm710, %v1068, 0.0
    %v1160 = vadd.f32 %v1158, %v1159
    %v1161 = vsel %vm710, %v1069, 0.0
    %v1162 = vadd.f32 %v1160, %v1161
    %v1163 = vsel %vm710, %v1070, 0.0
    %v1164 = vadd.f32 %v1162, %v1163
    %v1165 = vsel %vm710, %v1071, 0.0
    %v1166 = vadd.f32 %v1164, %v1165
    %v1167 = vsel %vm710, %v1072, 0.0
    %v1168 = vadd.f32 %v1166, %v1167
    %v1169 = vsel %vm710, %v1073, 0.0
    %v1170 = vadd.f32 %v1168, %v1169
    %v1171 = vsel %vm710, %v1074, 0.0
    %v1172 = vadd.f32 %v1170, %v1171
    %v1173 = vsel %vm710, %v1075, 0.0
    %v1174 = vadd.f32 %v1172, %v1173
    %v1175 = vsel %vm710, %v1076, 0.0
    %v1176 = vadd.f32 %v1174, %v1175
    %v1177 = vsel %vm710, %v1077, 0.0
    %v1178 = vadd.f32 %v1176, %v1177
    %v1179 = vsel %vm710, %v1078, 0.0
    %v1180 = vadd.f32 %v1178, %v1179
    %v1181 = vsel %vm710, %v1079, 0.0
    %v1182 = vadd.f32 %v1180, %v1181
    %v1183 = vsel %vm710, %v1080, 0.0
    %v1184 = vadd.f32 %v1182, %v1183
    %v1185 = vsel %vm710, %v1081, 0.0
    %v1186 = vadd.f32 %v1184, %v1185
    %v1187 = vsel %vm710, %v1082, 0.0
    %v1188 = vadd.f32 %v1186, %v1187
    %v1189 = vsel %vm710, %v1083, 0.0
    %v1190 = vadd.f32 %v1188, %v1189
    %v1191 = vsel %vm710, %v1084, 0.0
    %v1192 = vadd.f32 %v1190, %v1191
    %v1193 = vsel %vm710, %v1085, 0.0
    %v1194 = vadd.f32 %v1192, %v1193
    %v1195 = vsel %vm710, %v1086, 0.0
    %v1196 = vadd.f32 %v1194, %v1195
    %v1197 = vsel %vm710, %v1087, 0.0
    %v1198 = vadd.f32 %v1196, %v1197
    %v1199 = vsel %vm710, %v1088, 0.0
    %v1200 = vadd.f32 %v1198, %v1199
    %v1201 = vsel %vm710, %v1089, 0.0
    %v1202 = vadd.f32 %v1200, %v1201
    %v1203 = vsel %vm710, %v1090, 0.0
    %v1204 = vadd.f32 %v1202, %v1203
    %v1205 = vsel %vm710, %v1091, 0.0
    %v1206 = vadd.f32 %v1204, %v1205
    %v1207 = vsel %vm710, %v1092, 0.0
    %v1208 = vadd.f32 %v1206, %v1207
    %v1209 = vsel %vm710, %v1093, 0.0
    %v1210 = vadd.f32 %v1208, %v1209
    %v1211 = vsel %vm710, %v1094, 0.0
    %v1212 = vadd.f32 %v1210, %v1211
    %v1213 = vsel %vm710, %v1095, 0.0
    %v1214 = vadd.f32 %v1212, %v1213
    %v1215 = vsel %vm710, %v1096, 0.0
    %v1216 = vadd.f32 %v1214, %v1215
    %v1217 = vsel %vm710, %v1097, 0.0
    %v1218 = vadd.f32 %v1216, %v1217
    %v1219 = vsel %vm710, %v1098, 0.0
    %v1220 = vadd.f32 %v1218, %v1219
    %v1221 = vsel %vm710, %v1099, 0.0
    %v1222 = vadd.f32 %v1220, %v1221
    %v1223 = vsel %vm710, %v1100, 0.0
    %v1224 = vadd.f32 %v1222, %v1223
    %v1225 = vsel %vm710, %v1101, 0.0
    %v1226 = vadd.f32 %v1224, %v1225
    %v1227 = vsel %vm710, %v1102, 0.0
    %v1228 = vadd.f32 %v1226, %v1227
    %v1229 = vsel %vm710, %v1103, 0.0
    %v1230 = vadd.f32 %v1228, %v1229
    %v1231 = vrot.slane %v1230, 4
    %v1232 = vadd.f32 %v1230, %v1231
    %v1233 = vrot.slane %v1232, 2
    %v1234 = vadd.f32 %v1232, %v1233
    %v1235 = vrot.slane %v1234, 1
    %v1236 = vadd.f32 %v1234, %v1235
    %v1237 = vmul.f32 %v1236, 0.001953125
    %v1238 = vadd.f32 %v1237, 1e-05
    %v1239 = vrsqrt.pop %v1238
    %v1240 = vmul.f32 %v1239, %v1238
    %v1241 = vmul.f32 %v1240, %v1239
    %v1242 = vmul.f32 0.5, %v1241
    %v1243 = vsub.f32 1.5, %v1242
    %v1244 = vmul.f32 %v1239, %v1243
    %vm1245 = vweird.f32 %v1238
    %vm1246 = vweird.f32 %v1239
    %vm1247 = vmor %vm1245, %vm1246
    %v1248 = vsel %vm1247, %v1239, %v1244
    %v1249 = vmul.f32 %v976, %v1248
    %v1250 = vmul.f32 %v977, %v1248
    %v1251 = vmul.f32 %v978, %v1248
    %v1252 = vmul.f32 %v979, %v1248
    %v1253 = vmul.f32 %v980, %v1248
    %v1254 = vmul.f32 %v981, %v1248
    %v1255 = vmul.f32 %v982, %v1248
    %v1256 = vmul.f32 %v983, %v1248
    %v1257 = vmul.f32 %v984, %v1248
    %v1258 = vmul.f32 %v985, %v1248
    %v1259 = vmul.f32 %v986, %v1248
    %v1260 = vmul.f32 %v987, %v1248
    %v1261 = vmul.f32 %v988, %v1248
    %v1262 = vmul.f32 %v989, %v1248
    %v1263 = vmul.f32 %v990, %v1248
    %v1264 = vmul.f32 %v991, %v1248
    %v1265 = vmul.f32 %v992, %v1248
    %v1266 = vmul.f32 %v993, %v1248
    %v1267 = vmul.f32 %v994, %v1248
    %v1268 = vmul.f32 %v995, %v1248
    %v1269 = vmul.f32 %v996, %v1248
    %v1270 = vmul.f32 %v997, %v1248
    %v1271 = vmul.f32 %v998, %v1248
    %v1272 = vmul.f32 %v999, %v1248
    %v1273 = vmul.f32 %v1000, %v1248
    %v1274 = vmul.f32 %v1001, %v1248
    %v1275 = vmul.f32 %v1002, %v1248
    %v1276 = vmul.f32 %v1003, %v1248
    %v1277 = vmul.f32 %v1004, %v1248
    %v1278 = vmul.f32 %v1005, %v1248
    %v1279 = vmul.f32 %v1006, %v1248
    %v1280 = vmul.f32 %v1007, %v1248
    %v1281 = vmul.f32 %v1008, %v1248
    %v1282 = vmul.f32 %v1009, %v1248
    %v1283 = vmul.f32 %v1010, %v1248
    %v1284 = vmul.f32 %v1011, %v1248
    %v1285 = vmul.f32 %v1012, %v1248
    %v1286 = vmul.f32 %v1013, %v1248
    %v1287 = vmul.f32 %v1014, %v1248
    %v1288 = vmul.f32 %v1015, %v1248
    %v1289 = vmul.f32 %v1016, %v1248
    %v1290 = vmul.f32 %v1017, %v1248
    %v1291 = vmul.f32 %v1018, %v1248
    %v1292 = vmul.f32 %v1019, %v1248
    %v1293 = vmul.f32 %v1020, %v1248
    %v1294 = vmul.f32 %v1021, %v1248
    %v1295 = vmul.f32 %v1022, %v1248
    %v1296 = vmul.f32 %v1023, %v1248
    %v1297 = vmul.f32 %v1024, %v1248
    %v1298 = vmul.f32 %v1025, %v1248
    %v1299 = vmul.f32 %v1026, %v1248
    %v1300 = vmul.f32 %v1027, %v1248
    %v1301 = vmul.f32 %v1028, %v1248
    %v1302 = vmul.f32 %v1029, %v1248
    %v1303 = vmul.f32 %v1030, %v1248
    %v1304 = vmul.f32 %v1031, %v1248
    %v1305 = vmul.f32 %v1032, %v1248
    %v1306 = vmul.f32 %v1033, %v1248
    %v1307 = vmul.f32 %v1034, %v1248
    %v1308 = vmul.f32 %v1035, %v1248
    %v1309 = vmul.f32 %v1036, %v1248
    %v1310 = vmul.f32 %v1037, %v1248
    %v1311 = vmul.f32 %v1038, %v1248
    %v1312 = vmul.f32 %v1039, %v1248
    %v1313 = vpack.c.bf16 %v1249, %v1249
    %v1314 = vpack.c.bf16 %v1250, %v1250
    %v1315 = vpack.c.bf16 %v1251, %v1251
    %v1316 = vpack.c.bf16 %v1252, %v1252
    %v1317 = vpack.c.bf16 %v1253, %v1253
    %v1318 = vpack.c.bf16 %v1254, %v1254
    %v1319 = vpack.c.bf16 %v1255, %v1255
    %v1320 = vpack.c.bf16 %v1256, %v1256
    %v1321 = vpack.c.bf16 %v1257, %v1257
    %v1322 = vpack.c.bf16 %v1258, %v1258
    %v1323 = vpack.c.bf16 %v1259, %v1259
    %v1324 = vpack.c.bf16 %v1260, %v1260
    %v1325 = vpack.c.bf16 %v1261, %v1261
    %v1326 = vpack.c.bf16 %v1262, %v1262
    %v1327 = vpack.c.bf16 %v1263, %v1263
    %v1328 = vpack.c.bf16 %v1264, %v1264
    %v1329 = vpack.c.bf16 %v1265, %v1265
    %v1330 = vpack.c.bf16 %v1266, %v1266
    %v1331 = vpack.c.bf16 %v1267, %v1267
    %v1332 = vpack.c.bf16 %v1268, %v1268
    %v1333 = vpack.c.bf16 %v1269, %v1269
    %v1334 = vpack.c.bf16 %v1270, %v1270
    %v1335 = vpack.c.bf16 %v1271, %v1271
    %v1336 = vpack.c.bf16 %v1272, %v1272
    %v1337 = vpack.c.bf16 %v1273, %v1273
    %v1338 = vpack.c.bf16 %v1274, %v1274
    %v1339 = vpack.c.bf16 %v1275, %v1275
    %v1340 = vpack.c.bf16 %v1276, %v1276
    %v1341 = vpack.c.bf16 %v1277, %v1277
    %v1342 = vpack.c.bf16 %v1278, %v1278
    %v1343 = vpack.c.bf16 %v1279, %v1279
    %v1344 = vpack.c.bf16 %v1280, %v1280
    %v1345 = vpack.c.bf16 %v1281, %v1281
    %v1346 = vpack.c.bf16 %v1282, %v1282
    %v1347 = vpack.c.bf16 %v1283, %v1283
    %v1348 = vpack.c.bf16 %v1284, %v1284
    %v1349 = vpack.c.bf16 %v1285, %v1285
    %v1350 = vpack.c.bf16 %v1286, %v1286
    %v1351 = vpack.c.bf16 %v1287, %v1287
    %v1352 = vpack.c.bf16 %v1288, %v1288
    %v1353 = vpack.c.bf16 %v1289, %v1289
    %v1354 = vpack.c.bf16 %v1290, %v1290
    %v1355 = vpack.c.bf16 %v1291, %v1291
    %v1356 = vpack.c.bf16 %v1292, %v1292
    %v1357 = vpack.c.bf16 %v1293, %v1293
    %v1358 = vpack.c.bf16 %v1294, %v1294
    %v1359 = vpack.c.bf16 %v1295, %v1295
    %v1360 = vpack.c.bf16 %v1296, %v1296
    %v1361 = vpack.c.bf16 %v1297, %v1297
    %v1362 = vpack.c.bf16 %v1298, %v1298
    %v1363 = vpack.c.bf16 %v1299, %v1299
    %v1364 = vpack.c.bf16 %v1300, %v1300
    %v1365 = vpack.c.bf16 %v1301, %v1301
    %v1366 = vpack.c.bf16 %v1302, %v1302
    %v1367 = vpack.c.bf16 %v1303, %v1303
    %v1368 = vpack.c.bf16 %v1304, %v1304
    %v1369 = vpack.c.bf16 %v1305, %v1305
    %v1370 = vpack.c.bf16 %v1306, %v1306
    %v1371 = vpack.c.bf16 %v1307, %v1307
    %v1372 = vpack.c.bf16 %v1308, %v1308
    %v1373 = vpack.c.bf16 %v1309, %v1309
    %v1374 = vpack.c.bf16 %v1310, %v1310
    %v1375 = vpack.c.bf16 %v1311, %v1311
    %v1376 = vpack.c.bf16 %v1312, %v1312
    %vm1377 = vcmask 60416
    %1378 = vst.msk [vmem:[%s2] sm:$0xf] %vm1377, %v1313
    %1379 = vst.msk [vmem:[%s2 + $0x4] sm:$0xf] %vm1377, %v1314
    %1380 = vst.msk [vmem:[%s2 + $0x8] sm:$0xf] %vm1377, %v1315
    %1381 = vst.msk [vmem:[%s2 + $0xc] sm:$0xf] %vm1377, %v1316
    %1382 = vst.msk [vmem:[%s2 + $0x10] sm:$0xf] %vm1377, %v1317
    %1383 = vst.msk [vmem:[%s2 + $0x14] sm:$0xf] %vm1377, %v1318
    %1384 = vst.msk [vmem:[%s2 + $0x18] sm:$0xf] %vm1377, %v1319
    %1385 = vst.msk [vmem:[%s2 + $0x1c] sm:$0xf] %vm1377, %v1320
    %1386 = vst.msk [vmem:[%s2 + $0x20] sm:$0xf] %vm1377, %v1321
    %1387 = vst.msk [vmem:[%s2 + $0x24] sm:$0xf] %vm1377, %v1322
    %1388 = vst.msk [vmem:[%s2 + $0x28] sm:$0xf] %vm1377, %v1323
    %1389 = vst.msk [vmem:[%s2 + $0x2c] sm:$0xf] %vm1377, %v1324
    %1390 = vst.msk [vmem:[%s2 + $0x30] sm:$0xf] %vm1377, %v1325
    %1391 = vst.msk [vmem:[%s2 + $0x34] sm:$0xf] %vm1377, %v1326
    %1392 = vst.msk [vmem:[%s2 + $0x38] sm:$0xf] %vm1377, %v1327
    %1393 = vst.msk [vmem:[%s2 + $0x3c] sm:$0xf] %vm1377, %v1328
    %1394 = vst.msk [vmem:[%s2 + $0x40] sm:$0xf] %vm1377, %v1329
    %1395 = vst.msk [vmem:[%s2 + $0x44] sm:$0xf] %vm1377, %v1330
    %1396 = vst.msk [vmem:[%s2 + $0x48] sm:$0xf] %vm1377, %v1331
    %1397 = vst.msk [vmem:[%s2 + $0x4c] sm:$0xf] %vm1377, %v1332
    %1398 = vst.msk [vmem:[%s2 + $0x50] sm:$0xf] %vm1377, %v1333
    %1399 = vst.msk [vmem:[%s2 + $0x54] sm:$0xf] %vm1377, %v1334
    %1400 = vst.msk [vmem:[%s2 + $0x58] sm:$0xf] %vm1377, %v1335
    %1401 = vst.msk [vmem:[%s2 + $0x5c] sm:$0xf] %vm1377, %v1336
    %1402 = vst.msk [vmem:[%s2 + $0x60] sm:$0xf] %vm1377, %v1337
    %1403 = vst.msk [vmem:[%s2 + $0x64] sm:$0xf] %vm1377, %v1338
    %1404 = vst.msk [vmem:[%s2 + $0x68] sm:$0xf] %vm1377, %v1339
    %1405 = vst.msk [vmem:[%s2 + $0x6c] sm:$0xf] %vm1377, %v1340
    %1406 = vst.msk [vmem:[%s2 + $0x70] sm:$0xf] %vm1377, %v1341
    %1407 = vst.msk [vmem:[%s2 + $0x74] sm:$0xf] %vm1377, %v1342
    %1408 = vst.msk [vmem:[%s2 + $0x78] sm:$0xf] %vm1377, %v1343
    %1409 = vst.msk [vmem:[%s2 + $0x7c] sm:$0xf] %vm1377, %v1344
    %1410 = vst.msk [vmem:[%s2 + $0x80] sm:$0xf] %vm1377, %v1345
    %1411 = vst.msk [vmem:[%s2 + $0x84] sm:$0xf] %vm1377, %v1346
    %1412 = vst.msk [vmem:[%s2 + $0x88] sm:$0xf] %vm1377, %v1347
    %1413 = vst.msk [vmem:[%s2 + $0x8c] sm:$0xf] %vm1377, %v1348
    %1414 = vst.msk [vmem:[%s2 + $0x90] sm:$0xf] %vm1377, %v1349
    %1415 = vst.msk [vmem:[%s2 + $0x94] sm:$0xf] %vm1377, %v1350
    %1416 = vst.msk [vmem:[%s2 + $0x98] sm:$0xf] %vm1377, %v1351
    %1417 = vst.msk [vmem:[%s2 + $0x9c] sm:$0xf] %vm1377, %v1352
    %1418 = vst.msk [vmem:[%s2 + $0xa0] sm:$0xf] %vm1377, %v1353
    %1419 = vst.msk [vmem:[%s2 + $0xa4] sm:$0xf] %vm1377, %v1354
    %1420 = vst.msk [vmem:[%s2 + $0xa8] sm:$0xf] %vm1377, %v1355
    %1421 = vst.msk [vmem:[%s2 + $0xac] sm:$0xf] %vm1377, %v1356
    %1422 = vst.msk [vmem:[%s2 + $0xb0] sm:$0xf] %vm1377, %v1357
    %1423 = vst.msk [vmem:[%s2 + $0xb4] sm:$0xf] %vm1377, %v1358
    %1424 = vst.msk [vmem:[%s2 + $0xb8] sm:$0xf] %vm1377, %v1359
    %1425 = vst.msk [vmem:[%s2 + $0xbc] sm:$0xf] %vm1377, %v1360
    %1426 = vst.msk [vmem:[%s2 + $0xc0] sm:$0xf] %vm1377, %v1361
    %1427 = vst.msk [vmem:[%s2 + $0xc4] sm:$0xf] %vm1377, %v1362
    %1428 = vst.msk [vmem:[%s2 + $0xc8] sm:$0xf] %vm1377, %v1363
    %1429 = vst.msk [vmem:[%s2 + $0xcc] sm:$0xf] %vm1377, %v1364
    %1430 = vst.msk [vmem:[%s2 + $0xd0] sm:$0xf] %vm1377, %v1365
    %1431 = vst.msk [vmem:[%s2 + $0xd4] sm:$0xf] %vm1377, %v1366
    %1432 = vst.msk [vmem:[%s2 + $0xd8] sm:$0xf] %vm1377, %v1367
    %1433 = vst.msk [vmem:[%s2 + $0xdc] sm:$0xf] %vm1377, %v1368
    %1434 = vst.msk [vmem:[%s2 + $0xe0] sm:$0xf] %vm1377, %v1369
    %1435 = vst.msk [vmem:[%s2 + $0xe4] sm:$0xf] %vm1377, %v1370
    %1436 = vst.msk [vmem:[%s2 + $0xe8] sm:$0xf] %vm1377, %v1371
    %1437 = vst.msk [vmem:[%s2 + $0xec] sm:$0xf] %vm1377, %v1372
    %1438 = vst.msk [vmem:[%s2 + $0xf0] sm:$0xf] %vm1377, %v1373
    %1439 = vst.msk [vmem:[%s2 + $0xf4] sm:$0xf] %vm1377, %v1374
    %1440 = vst.msk [vmem:[%s2 + $0xf8] sm:$0xf] %vm1377, %v1375
    %1441 = vst.msk [vmem:[%s2 + $0xfc] sm:$0xf] %vm1377, %v1376
  $region17: #{_lambda_.72} parent=0 // pred_fallthru
    _
  // Predicated region
  $region18: #{_lambda_.72} parent=0 // pred_check
    _
  $region19: #{_lambda_.72} parent=0 // pred_check_branch
    %1443 = sbr.rel (0) target = $region21
  $region20: #{_lambda_.72} parent=0 // pred_region
    _
  $region21: #{_lambda_.72} parent=0 // pred_fallthru
    _
  // Predicated region
  $region22: #{_lambda_.72} parent=0 // pred_check
    _
  $region23: #{_lambda_.72} parent=0 // pred_check_branch
    %1445 = sbr.rel (0) target = $region25
  $region24: #{_lambda_.72} parent=0 // pred_region
    _
  $region25: #{_lambda_.72} parent=0 // pred_fallthru
    _

// kernel: _lambda_.76
$region0: #{_lambda_.76}
  #allocation0 [shape = 'u32[]', space=smem, size = 0x4, offset = 0x4, fixed_abs, tag = 'smem constant byte address 0x4 - core index']
  #allocation1 [shape = 'u32[72,128]{1,0:T(1,128)}', space=vmem, size = 0x9000, scoped, tag = 'internal scratch']
  %s0 = inlined_call_operand.vmem [shape: bf16[9,128,8], index: 0, kind: input, shape index: {}]
  %s1 = inlined_call_operand.vmem [shape: f32[128,1], index: 1, kind: input, shape index: {}]
  %s2 = inlined_call_operand.vmem [shape: bf16[128,8], index: 2, kind: output, shape index: {}]
  %s3 = sld [smem:[#allocation0]]
  $region18: #{_lambda_.76} parent=0
    _
  %s5 = ssub.s32 1, %s3
  %s6 = scalar_select 0, %s5, %s3
  // Predicated region
  $region2: #{_lambda_.76} parent=0 // pred_check
    _
  $region3: #{_lambda_.76} parent=0 // pred_check_branch
    %8 = sbr.rel (0) target = $region5
  $region4: #{_lambda_.76} parent=0 // pred_region
    _
  $region5: #{_lambda_.76} parent=0 // pred_fallthru
    _
  // Predicated region
  $region6: #{_lambda_.76} parent=0 // pred_check
    _
  $region7: #{_lambda_.76} parent=0 // pred_check_branch
    %10 = sbr.rel (0) target = $region9
  $region8: #{_lambda_.76} parent=0 // pred_region
    _
  $region9: #{_lambda_.76} parent=0 // pred_fallthru
    _
  %v11 = vld [vmem:[%s0] sm:$0xf]
  %v12 = vld [vmem:[%s0 + $0x4] sm:$0xf]
  %v13 = vld [vmem:[%s0 + $0x8] sm:$0xf]
  %v14 = vld [vmem:[%s0 + $0xc] sm:$0xf]
  %v15 = vld [vmem:[%s0 + $0x10] sm:$0xf]
  %v16 = vld [vmem:[%s0 + $0x14] sm:$0xf]
  %v17 = vld [vmem:[%s0 + $0x18] sm:$0xf]
  %v18 = vld [vmem:[%s0 + $0x1c] sm:$0xf]
  %v19 = vld [vmem:[%s0 + $0x20] sm:$0xf]
  %v20 = vld [vmem:[%s0 + $0x24] sm:$0xf]
  %v21 = vld [vmem:[%s0 + $0x28] sm:$0xf]
  %v22 = vld [vmem:[%s0 + $0x2c] sm:$0xf]
  %v23 = vld [vmem:[%s0 + $0x30] sm:$0xf]
  %v24 = vld [vmem:[%s0 + $0x34] sm:$0xf]
  %v25 = vld [vmem:[%s0 + $0x38] sm:$0xf]
  %v26 = vld [vmem:[%s0 + $0x3c] sm:$0xf]
  %v27 = vunpack.c.l.bf16 %v11
  %v28 = vunpack.c.l.bf16 %v12
  %v29 = vunpack.c.l.bf16 %v13
  %v30 = vunpack.c.l.bf16 %v14
  %v31 = vunpack.c.l.bf16 %v15
  %v32 = vunpack.c.l.bf16 %v16
  %v33 = vunpack.c.l.bf16 %v17
  %v34 = vunpack.c.l.bf16 %v18
  %v35 = vunpack.c.l.bf16 %v19
  %v36 = vunpack.c.l.bf16 %v20
  %v37 = vunpack.c.l.bf16 %v21
  %v38 = vunpack.c.l.bf16 %v22
  %v39 = vunpack.c.l.bf16 %v23
  %v40 = vunpack.c.l.bf16 %v24
  %v41 = vunpack.c.l.bf16 %v25
  %v42 = vunpack.c.l.bf16 %v26
  %s43 = scalar_lea.vmem %s0, 64
  %v44 = vld [vmem:[%s43] sm:$0xf]
  %v45 = vld [vmem:[%s43 + $0x4] sm:$0xf]
  %v46 = vld [vmem:[%s43 + $0x8] sm:$0xf]
  %v47 = vld [vmem:[%s43 + $0xc] sm:$0xf]
  %v48 = vld [vmem:[%s43 + $0x10] sm:$0xf]
  %v49 = vld [vmem:[%s43 + $0x14] sm:$0xf]
  %v50 = vld [vmem:[%s43 + $0x18] sm:$0xf]
  %v51 = vld [vmem:[%s43 + $0x1c] sm:$0xf]
  %v52 = vld [vmem:[%s43 + $0x20] sm:$0xf]
  %v53 = vld [vmem:[%s43 + $0x24] sm:$0xf]
  %v54 = vld [vmem:[%s43 + $0x28] sm:$0xf]
  %v55 = vld [vmem:[%s43 + $0x2c] sm:$0xf]
  %v56 = vld [vmem:[%s43 + $0x30] sm:$0xf]
  %v57 = vld [vmem:[%s43 + $0x34] sm:$0xf]
  %v58 = vld [vmem:[%s43 + $0x38] sm:$0xf]
  %v59 = vld [vmem:[%s43 + $0x3c] sm:$0xf]
  %v60 = vunpack.c.l.bf16 %v44
  %v61 = vunpack.c.l.bf16 %v45
  %v62 = vunpack.c.l.bf16 %v46
  %v63 = vunpack.c.l.bf16 %v47
  %v64 = vunpack.c.l.bf16 %v48
  %v65 = vunpack.c.l.bf16 %v49
  %v66 = vunpack.c.l.bf16 %v50
  %v67 = vunpack.c.l.bf16 %v51
  %v68 = vunpack.c.l.bf16 %v52
  %v69 = vunpack.c.l.bf16 %v53
  %v70 = vunpack.c.l.bf16 %v54
  %v71 = vunpack.c.l.bf16 %v55
  %v72 = vunpack.c.l.bf16 %v56
  %v73 = vunpack.c.l.bf16 %v57
  %v74 = vunpack.c.l.bf16 %v58
  %v75 = vunpack.c.l.bf16 %v59
  %v76 = vmax.f32 %v27, %v60
  %v77 = vmax.f32 %v28, %v61
  %v78 = vmax.f32 %v29, %v62
  %v79 = vmax.f32 %v30, %v63
  %v80 = vmax.f32 %v31, %v64
  %v81 = vmax.f32 %v32, %v65
  %v82 = vmax.f32 %v33, %v66
  %v83 = vmax.f32 %v34, %v67
  %v84 = vmax.f32 %v35, %v68
  %v85 = vmax.f32 %v36, %v69
  %v86 = vmax.f32 %v37, %v70
  %v87 = vmax.f32 %v38, %v71
  %v88 = vmax.f32 %v39, %v72
  %v89 = vmax.f32 %v40, %v73
  %v90 = vmax.f32 %v41, %v74
  %v91 = vmax.f32 %v42, %v75
  %s92 = scalar_lea.vmem %s0, 128
  %v93 = vld [vmem:[%s92] sm:$0xf]
  %v94 = vld [vmem:[%s92 + $0x4] sm:$0xf]
  %v95 = vld [vmem:[%s92 + $0x8] sm:$0xf]
  %v96 = vld [vmem:[%s92 + $0xc] sm:$0xf]
  %v97 = vld [vmem:[%s92 + $0x10] sm:$0xf]
  %v98 = vld [vmem:[%s92 + $0x14] sm:$0xf]
  %v99 = vld [vmem:[%s92 + $0x18] sm:$0xf]
  %v100 = vld [vmem:[%s92 + $0x1c] sm:$0xf]
  %v101 = vld [vmem:[%s92 + $0x20] sm:$0xf]
  %v102 = vld [vmem:[%s92 + $0x24] sm:$0xf]
  %v103 = vld [vmem:[%s92 + $0x28] sm:$0xf]
  %v104 = vld [vmem:[%s92 + $0x2c] sm:$0xf]
  %v105 = vld [vmem:[%s92 + $0x30] sm:$0xf]
  %v106 = vld [vmem:[%s92 + $0x34] sm:$0xf]
  %v107 = vld [vmem:[%s92 + $0x38] sm:$0xf]
  %v108 = vld [vmem:[%s92 + $0x3c] sm:$0xf]
  %v109 = vunpack.c.l.bf16 %v93
  %v110 = vunpack.c.l.bf16 %v94
  %v111 = vunpack.c.l.bf16 %v95
  %v112 = vunpack.c.l.bf16 %v96
  %v113 = vunpack.c.l.bf16 %v97
  %v114 = vunpack.c.l.bf16 %v98
  %v115 = vunpack.c.l.bf16 %v99
  %v116 = vunpack.c.l.bf16 %v100
  %v117 = vunpack.c.l.bf16 %v101
  %v118 = vunpack.c.l.bf16 %v102
  %v119 = vunpack.c.l.bf16 %v103
  %v120 = vunpack.c.l.bf16 %v104
  %v121 = vunpack.c.l.bf16 %v105
  %v122 = vunpack.c.l.bf16 %v106
  %v123 = vunpack.c.l.bf16 %v107
  %v124 = vunpack.c.l.bf16 %v108
  %v125 = vmax.f32 %v76, %v109
  %v126 = vmax.f32 %v77, %v110
  %v127 = vmax.f32 %v78, %v111
  %v128 = vmax.f32 %v79, %v112
  %v129 = vmax.f32 %v80, %v113
  %v130 = vmax.f32 %v81, %v114
  %v131 = vmax.f32 %v82, %v115
  %v132 = vmax.f32 %v83, %v116
  %v133 = vmax.f32 %v84, %v117
  %v134 = vmax.f32 %v85, %v118
  %v135 = vmax.f32 %v86, %v119
  %v136 = vmax.f32 %v87, %v120
  %v137 = vmax.f32 %v88, %v121
  %v138 = vmax.f32 %v89, %v122
  %v139 = vmax.f32 %v90, %v123
  %v140 = vmax.f32 %v91, %v124
  %s141 = scalar_lea.vmem %s0, 192
  %v142 = vld [vmem:[%s141] sm:$0xf]
  %v143 = vld [vmem:[%s141 + $0x4] sm:$0xf]
  %v144 = vld [vmem:[%s141 + $0x8] sm:$0xf]
  %v145 = vld [vmem:[%s141 + $0xc] sm:$0xf]
  %v146 = vld [vmem:[%s141 + $0x10] sm:$0xf]
  %v147 = vld [vmem:[%s141 + $0x14] sm:$0xf]
  %v148 = vld [vmem:[%s141 + $0x18] sm:$0xf]
  %v149 = vld [vmem:[%s141 + $0x1c] sm:$0xf]
  %v150 = vld [vmem:[%s141 + $0x20] sm:$0xf]
  %v151 = vld [vmem:[%s141 + $0x24] sm:$0xf]
  %v152 = vld [vmem:[%s141 + $0x28] sm:$0xf]
  %v153 = vld [vmem:[%s141 + $0x2c] sm:$0xf]
  %v154 = vld [vmem:[%s141 + $0x30] sm:$0xf]
  %v155 = vld [vmem:[%s141 + $0x34] sm:$0xf]
  %v156 = vld [vmem:[%s141 + $0x38] sm:$0xf]
  %v157 = vld [vmem:[%s141 + $0x3c] sm:$0xf]
  %v158 = vunpack.c.l.bf16 %v142
  %v159 = vunpack.c.l.bf16 %v143
  %v160 = vunpack.c.l.bf16 %v144
  %v161 = vunpack.c.l.bf16 %v145
  %v162 = vunpack.c.l.bf16 %v146
  %v163 = vunpack.c.l.bf16 %v147
  %v164 = vunpack.c.l.bf16 %v148
  %v165 = vunpack.c.l.bf16 %v149
  %v166 = vunpack.c.l.bf16 %v150
  %v167 = vunpack.c.l.bf16 %v151
  %v168 = vunpack.c.l.bf16 %v152
  %v169 = vunpack.c.l.bf16 %v153
  %v170 = vunpack.c.l.bf16 %v154
  %v171 = vunpack.c.l.bf16 %v155
  %v172 = vunpack.c.l.bf16 %v156
  %v173 = vunpack.c.l.bf16 %v157
  %v174 = vmax.f32 %v125, %v158
  %v175 = vmax.f32 %v126, %v159
  %v176 = vmax.f32 %v127, %v160
  %v177 = vmax.f32 %v128, %v161
  %v178 = vmax.f32 %v129, %v162
  %v179 = vmax.f32 %v130, %v163
  %v180 = vmax.f32 %v131, %v164
  %v181 = vmax.f32 %v132, %v165
  %v182 = vmax.f32 %v133, %v166
  %v183 = vmax.f32 %v134, %v167
  %v184 = vmax.f32 %v135, %v168
  %v185 = vmax.f32 %v136, %v169
  %v186 = vmax.f32 %v137, %v170
  %v187 = vmax.f32 %v138, %v171
  %v188 = vmax.f32 %v139, %v172
  %v189 = vmax.f32 %v140, %v173
  %s190 = scalar_lea.vmem %s0, 256
  %v191 = vld [vmem:[%s190] sm:$0xf]
  %v192 = vld [vmem:[%s190 + $0x4] sm:$0xf]
  %v193 = vld [vmem:[%s190 + $0x8] sm:$0xf]
  %v194 = vld [vmem:[%s190 + $0xc] sm:$0xf]
  %v195 = vld [vmem:[%s190 + $0x10] sm:$0xf]
  %v196 = vld [vmem:[%s190 + $0x14] sm:$0xf]
  %v197 = vld [vmem:[%s190 + $0x18] sm:$0xf]
  %v198 = vld [vmem:[%s190 + $0x1c] sm:$0xf]
  %v199 = vld [vmem:[%s190 + $0x20] sm:$0xf]
  %v200 = vld [vmem:[%s190 + $0x24] sm:$0xf]
  %v201 = vld [vmem:[%s190 + $0x28] sm:$0xf]
  %v202 = vld [vmem:[%s190 + $0x2c] sm:$0xf]
  %v203 = vld [vmem:[%s190 + $0x30] sm:$0xf]
  %v204 = vld [vmem:[%s190 + $0x34] sm:$0xf]
  %v205 = vld [vmem:[%s190 + $0x38] sm:$0xf]
  %v206 = vld [vmem:[%s190 + $0x3c] sm:$0xf]
  %v207 = vunpack.c.l.bf16 %v191
  %v208 = vunpack.c.l.bf16 %v192
  %v209 = vunpack.c.l.bf16 %v193
  %v210 = vunpack.c.l.bf16 %v194
  %v211 = vunpack.c.l.bf16 %v195
  %v212 = vunpack.c.l.bf16 %v196
  %v213 = vunpack.c.l.bf16 %v197
  %v214 = vunpack.c.l.bf16 %v198
  %v215 = vunpack.c.l.bf16 %v199
  %v216 = vunpack.c.l.bf16 %v200
  %v217 = vunpack.c.l.bf16 %v201
  %v218 = vunpack.c.l.bf16 %v202
  %v219 = vunpack.c.l.bf16 %v203
  %v220 = vunpack.c.l.bf16 %v204
  %v221 = vunpack.c.l.bf16 %v205
  %v222 = vunpack.c.l.bf16 %v206
  %v223 = vmax.f32 %v174, %v207
  %v224 = vmax.f32 %v175, %v208
  %v225 = vmax.f32 %v176, %v209
  %v226 = vmax.f32 %v177, %v210
  %v227 = vmax.f32 %v178, %v211
  %v228 = vmax.f32 %v179, %v212
  %v229 = vmax.f32 %v180, %v213
  %v230 = vmax.f32 %v181, %v214
  %v231 = vmax.f32 %v182, %v215
  %v232 = vmax.f32 %v183, %v216
  %v233 = vmax.f32 %v184, %v217
  %v234 = vmax.f32 %v185, %v218
  %v235 = vmax.f32 %v186, %v219
  %v236 = vmax.f32 %v187, %v220
  %v237 = vmax.f32 %v188, %v221
  %v238 = vmax.f32 %v189, %v222
  %s239 = scalar_lea.vmem %s0, 320
  %v240 = vld [vmem:[%s239] sm:$0xf]
  %v241 = vld [vmem:[%s239 + $0x4] sm:$0xf]
  %v242 = vld [vmem:[%s239 + $0x8] sm:$0xf]
  %v243 = vld [vmem:[%s239 + $0xc] sm:$0xf]
  %v244 = vld [vmem:[%s239 + $0x10] sm:$0xf]
  %v245 = vld [vmem:[%s239 + $0x14] sm:$0xf]
  %v246 = vld [vmem:[%s239 + $0x18] sm:$0xf]
  %v247 = vld [vmem:[%s239 + $0x1c] sm:$0xf]
  %v248 = vld [vmem:[%s239 + $0x20] sm:$0xf]
  %v249 = vld [vmem:[%s239 + $0x24] sm:$0xf]
  %v250 = vld [vmem:[%s239 + $0x28] sm:$0xf]
  %v251 = vld [vmem:[%s239 + $0x2c] sm:$0xf]
  %v252 = vld [vmem:[%s239 + $0x30] sm:$0xf]
  %v253 = vld [vmem:[%s239 + $0x34] sm:$0xf]
  %v254 = vld [vmem:[%s239 + $0x38] sm:$0xf]
  %v255 = vld [vmem:[%s239 + $0x3c] sm:$0xf]
  %v256 = vunpack.c.l.bf16 %v240
  %v257 = vunpack.c.l.bf16 %v241
  %v258 = vunpack.c.l.bf16 %v242
  %v259 = vunpack.c.l.bf16 %v243
  %v260 = vunpack.c.l.bf16 %v244
  %v261 = vunpack.c.l.bf16 %v245
  %v262 = vunpack.c.l.bf16 %v246
  %v263 = vunpack.c.l.bf16 %v247
  %v264 = vunpack.c.l.bf16 %v248
  %v265 = vunpack.c.l.bf16 %v249
  %v266 = vunpack.c.l.bf16 %v250
  %v267 = vunpack.c.l.bf16 %v251
  %v268 = vunpack.c.l.bf16 %v252
  %v269 = vunpack.c.l.bf16 %v253
  %v270 = vunpack.c.l.bf16 %v254
  %v271 = vunpack.c.l.bf16 %v255
  %v272 = vmax.f32 %v223, %v256
  %v273 = vmax.f32 %v224, %v257
  %v274 = vmax.f32 %v225, %v258
  %v275 = vmax.f32 %v226, %v259
  %v276 = vmax.f32 %v227, %v260
  %v277 = vmax.f32 %v228, %v261
  %v278 = vmax.f32 %v229, %v262
  %v279 = vmax.f32 %v230, %v263
  %v280 = vmax.f32 %v231, %v264
  %v281 = vmax.f32 %v232, %v265
  %v282 = vmax.f32 %v233, %v266
  %v283 = vmax.f32 %v234, %v267
  %v284 = vmax.f32 %v235, %v268
  %v285 = vmax.f32 %v236, %v269
  %v286 = vmax.f32 %v237, %v270
  %v287 = vmax.f32 %v238, %v271
  %s288 = scalar_lea.vmem %s0, 384
  %v289 = vld [vmem:[%s288] sm:$0xf]
  %v290 = vld [vmem:[%s288 + $0x4] sm:$0xf]
  %v291 = vld [vmem:[%s288 + $0x8] sm:$0xf]
  %v292 = vld [vmem:[%s288 + $0xc] sm:$0xf]
  %v293 = vld [vmem:[%s288 + $0x10] sm:$0xf]
  %v294 = vld [vmem:[%s288 + $0x14] sm:$0xf]
  %v295 = vld [vmem:[%s288 + $0x18] sm:$0xf]
  %v296 = vld [vmem:[%s288 + $0x1c] sm:$0xf]
  %v297 = vld [vmem:[%s288 + $0x20] sm:$0xf]
  %v298 = vld [vmem:[%s288 + $0x24] sm:$0xf]
  %v299 = vld [vmem:[%s288 + $0x28] sm:$0xf]
  %v300 = vld [vmem:[%s288 + $0x2c] sm:$0xf]
  %v301 = vld [vmem:[%s288 + $0x30] sm:$0xf]
  %v302 = vld [vmem:[%s288 + $0x34] sm:$0xf]
  %v303 = vld [vmem:[%s288 + $0x38] sm:$0xf]
  %v304 = vld [vmem:[%s288 + $0x3c] sm:$0xf]
  %v305 = vunpack.c.l.bf16 %v289
  %v306 = vunpack.c.l.bf16 %v290
  %v307 = vunpack.c.l.bf16 %v291
  %v308 = vunpack.c.l.bf16 %v292
  %v309 = vunpack.c.l.bf16 %v293
  %v310 = vunpack.c.l.bf16 %v294
  %v311 = vunpack.c.l.bf16 %v295
  %v312 = vunpack.c.l.bf16 %v296
  %v313 = vunpack.c.l.bf16 %v297
  %v314 = vunpack.c.l.bf16 %v298
  %v315 = vunpack.c.l.bf16 %v299
  %v316 = vunpack.c.l.bf16 %v300
  %v317 = vunpack.c.l.bf16 %v301
  %v318 = vunpack.c.l.bf16 %v302
  %v319 = vunpack.c.l.bf16 %v303
  %v320 = vunpack.c.l.bf16 %v304
  %v321 = vmax.f32 %v272, %v305
  %v322 = vmax.f32 %v273, %v306
  %v323 = vmax.f32 %v274, %v307
  %v324 = vmax.f32 %v275, %v308
  %v325 = vmax.f32 %v276, %v309
  %v326 = vmax.f32 %v277, %v310
  %v327 = vmax.f32 %v278, %v311
  %v328 = vmax.f32 %v279, %v312
  %v329 = vmax.f32 %v280, %v313
  %v330 = vmax.f32 %v281, %v314
  %v331 = vmax.f32 %v282, %v315
  %v332 = vmax.f32 %v283, %v316
  %v333 = vmax.f32 %v284, %v317
  %v334 = vmax.f32 %v285, %v318
  %v335 = vmax.f32 %v286, %v319
  %v336 = vmax.f32 %v287, %v320
  %s337 = scalar_lea.vmem %s0, 448
  %v338 = vld [vmem:[%s337] sm:$0xf]
  %v339 = vld [vmem:[%s337 + $0x4] sm:$0xf]
  %v340 = vld [vmem:[%s337 + $0x8] sm:$0xf]
  %v341 = vld [vmem:[%s337 + $0xc] sm:$0xf]
  %v342 = vld [vmem:[%s337 + $0x10] sm:$0xf]
  %v343 = vld [vmem:[%s337 + $0x14] sm:$0xf]
  %v344 = vld [vmem:[%s337 + $0x18] sm:$0xf]
  %v345 = vld [vmem:[%s337 + $0x1c] sm:$0xf]
  %v346 = vld [vmem:[%s337 + $0x20] sm:$0xf]
  %v347 = vld [vmem:[%s337 + $0x24] sm:$0xf]
  %v348 = vld [vmem:[%s337 + $0x28] sm:$0xf]
  %v349 = vld [vmem:[%s337 + $0x2c] sm:$0xf]
  %v350 = vld [vmem:[%s337 + $0x30] sm:$0xf]
  %v351 = vld [vmem:[%s337 + $0x34] sm:$0xf]
  %v352 = vld [vmem:[%s337 + $0x38] sm:$0xf]
  %v353 = vld [vmem:[%s337 + $0x3c] sm:$0xf]
  %v354 = vunpack.c.l.bf16 %v338
  %v355 = vunpack.c.l.bf16 %v339
  %v356 = vunpack.c.l.bf16 %v340
  %v357 = vunpack.c.l.bf16 %v341
  %v358 = vunpack.c.l.bf16 %v342
  %v359 = vunpack.c.l.bf16 %v343
  %v360 = vunpack.c.l.bf16 %v344
  %v361 = vunpack.c.l.bf16 %v345
  %v362 = vunpack.c.l.bf16 %v346
  %v363 = vunpack.c.l.bf16 %v347
  %v364 = vunpack.c.l.bf16 %v348
  %v365 = vunpack.c.l.bf16 %v349
  %v366 = vunpack.c.l.bf16 %v350
  %v367 = vunpack.c.l.bf16 %v351
  %v368 = vunpack.c.l.bf16 %v352
  %v369 = vunpack.c.l.bf16 %v353
  %v370 = vmax.f32 %v321, %v354
  %v371 = vmax.f32 %v322, %v355
  %v372 = vmax.f32 %v323, %v356
  %v373 = vmax.f32 %v324, %v357
  %v374 = vmax.f32 %v325, %v358
  %v375 = vmax.f32 %v326, %v359
  %v376 = vmax.f32 %v327, %v360
  %v377 = vmax.f32 %v328, %v361
  %v378 = vmax.f32 %v329, %v362
  %v379 = vmax.f32 %v330, %v363
  %v380 = vmax.f32 %v331, %v364
  %v381 = vmax.f32 %v332, %v365
  %v382 = vmax.f32 %v333, %v366
  %v383 = vmax.f32 %v334, %v367
  %v384 = vmax.f32 %v335, %v368
  %v385 = vmax.f32 %v336, %v369
  %s386 = scalar_lea.vmem %s0, 512
  %v387 = vld [vmem:[%s386] sm:$0xf]
  %v388 = vld [vmem:[%s386 + $0x4] sm:$0xf]
  %v389 = vld [vmem:[%s386 + $0x8] sm:$0xf]
  %v390 = vld [vmem:[%s386 + $0xc] sm:$0xf]
  %v391 = vld [vmem:[%s386 + $0x10] sm:$0xf]
  %v392 = vld [vmem:[%s386 + $0x14] sm:$0xf]
  %v393 = vld [vmem:[%s386 + $0x18] sm:$0xf]
  %v394 = vld [vmem:[%s386 + $0x1c] sm:$0xf]
  %v395 = vld [vmem:[%s386 + $0x20] sm:$0xf]
  %v396 = vld [vmem:[%s386 + $0x24] sm:$0xf]
  %v397 = vld [vmem:[%s386 + $0x28] sm:$0xf]
  %v398 = vld [vmem:[%s386 + $0x2c] sm:$0xf]
  %v399 = vld [vmem:[%s386 + $0x30] sm:$0xf]
  %v400 = vld [vmem:[%s386 + $0x34] sm:$0xf]
  %v401 = vld [vmem:[%s386 + $0x38] sm:$0xf]
  %v402 = vld [vmem:[%s386 + $0x3c] sm:$0xf]
  %v403 = vunpack.c.l.bf16 %v387
  %v404 = vunpack.c.l.bf16 %v388
  %v405 = vunpack.c.l.bf16 %v389
  %v406 = vunpack.c.l.bf16 %v390
  %v407 = vunpack.c.l.bf16 %v391
  %v408 = vunpack.c.l.bf16 %v392
  %v409 = vunpack.c.l.bf16 %v393
  %v410 = vunpack.c.l.bf16 %v394
  %v411 = vunpack.c.l.bf16 %v395
  %v412 = vunpack.c.l.bf16 %v396
  %v413 = vunpack.c.l.bf16 %v397
  %v414 = vunpack.c.l.bf16 %v398
  %v415 = vunpack.c.l.bf16 %v399
  %v416 = vunpack.c.l.bf16 %v400
  %v417 = vunpack.c.l.bf16 %v401
  %v418 = vunpack.c.l.bf16 %v402
  %v419 = vmax.f32 %v370, %v403
  %v420 = vmax.f32 %v371, %v404
  %v421 = vmax.f32 %v372, %v405
  %v422 = vmax.f32 %v373, %v406
  %v423 = vmax.f32 %v374, %v407
  %v424 = vmax.f32 %v375, %v408
  %v425 = vmax.f32 %v376, %v409
  %v426 = vmax.f32 %v377, %v410
  %v427 = vmax.f32 %v378, %v411
  %v428 = vmax.f32 %v379, %v412
  %v429 = vmax.f32 %v380, %v413
  %v430 = vmax.f32 %v381, %v414
  %v431 = vmax.f32 %v382, %v415
  %v432 = vmax.f32 %v383, %v416
  %v433 = vmax.f32 %v384, %v417
  %v434 = vmax.f32 %v385, %v418
  %vm435 = vcmask 64512
  %v436 = vsel %vm435, %v419, 0.0
  %v437 = vsel %vm435, %v420, 0.0
  %v438 = vadd.f32 %v436, %v437
  %v439 = vsel %vm435, %v421, 0.0
  %v440 = vadd.f32 %v438, %v439
  %v441 = vsel %vm435, %v422, 0.0
  %v442 = vadd.f32 %v440, %v441
  %v443 = vsel %vm435, %v423, 0.0
  %v444 = vadd.f32 %v442, %v443
  %v445 = vsel %vm435, %v424, 0.0
  %v446 = vadd.f32 %v444, %v445
  %v447 = vsel %vm435, %v425, 0.0
  %v448 = vadd.f32 %v446, %v447
  %v449 = vsel %vm435, %v426, 0.0
  %v450 = vadd.f32 %v448, %v449
  %v451 = vsel %vm435, %v427, 0.0
  %v452 = vadd.f32 %v450, %v451
  %v453 = vsel %vm435, %v428, 0.0
  %v454 = vadd.f32 %v452, %v453
  %v455 = vsel %vm435, %v429, 0.0
  %v456 = vadd.f32 %v454, %v455
  %v457 = vsel %vm435, %v430, 0.0
  %v458 = vadd.f32 %v456, %v457
  %v459 = vsel %vm435, %v431, 0.0
  %v460 = vadd.f32 %v458, %v459
  %v461 = vsel %vm435, %v432, 0.0
  %v462 = vadd.f32 %v460, %v461
  %v463 = vsel %vm435, %v433, 0.0
  %v464 = vadd.f32 %v462, %v463
  %v465 = vsel %vm435, %v434, 0.0
  %v466 = vadd.f32 %v464, %v465
  %v467 = vrot.slane %v466, 4
  %v468 = vadd.f32 %v466, %v467
  %v469 = vrot.slane %v468, 2
  %v470 = vadd.f32 %v468, %v469
  %v471 = vrot.slane %v470, 1
  %v472 = vadd.f32 %v470, %v471
  %v473 = vmul.f32 %v472, 0.0078125
  %v474 = vsub.f32 %v419, %v473
  %v475 = vsub.f32 %v420, %v473
  %v476 = vsub.f32 %v421, %v473
  %v477 = vsub.f32 %v422, %v473
  %v478 = vsub.f32 %v423, %v473
  %v479 = vsub.f32 %v424, %v473
  %v480 = vsub.f32 %v425, %v473
  %v481 = vsub.f32 %v426, %v473
  %v482 = vsub.f32 %v427, %v473
  %v483 = vsub.f32 %v428, %v473
  %v484 = vsub.f32 %v429, %v473
  %v485 = vsub.f32 %v430, %v473
  %v486 = vsub.f32 %v431, %v473
  %v487 = vsub.f32 %v432, %v473
  %v488 = vsub.f32 %v433, %v473
  %v489 = vsub.f32 %v434, %v473
  %v490 = vmul.f32 %v474, %v474
  %v491 = vmul.f32 %v475, %v475
  %v492 = vmul.f32 %v476, %v476
  %v493 = vmul.f32 %v477, %v477
  %v494 = vmul.f32 %v478, %v478
  %v495 = vmul.f32 %v479, %v479
  %v496 = vmul.f32 %v480, %v480
  %v497 = vmul.f32 %v481, %v481
  %v498 = vmul.f32 %v482, %v482
  %v499 = vmul.f32 %v483, %v483
  %v500 = vmul.f32 %v484, %v484
  %v501 = vmul.f32 %v485, %v485
  %v502 = vmul.f32 %v486, %v486
  %v503 = vmul.f32 %v487, %v487
  %v504 = vmul.f32 %v488, %v488
  %v505 = vmul.f32 %v489, %v489
  %v506 = vsel %vm435, %v490, 0.0
  %v507 = vsel %vm435, %v491, 0.0
  %v508 = vadd.f32 %v506, %v507
  %v509 = vsel %vm435, %v492, 0.0
  %v510 = vadd.f32 %v508, %v509
  %v511 = vsel %vm435, %v493, 0.0
  %v512 = vadd.f32 %v510, %v511
  %v513 = vsel %vm435, %v494, 0.0
  %v514 = vadd.f32 %v512, %v513
  %v515 = vsel %vm435, %v495, 0.0
  %v516 = vadd.f32 %v514, %v515
  %v517 = vsel %vm435, %v496, 0.0
  %v518 = vadd.f32 %v516, %v517
  %v519 = vsel %vm435, %v497, 0.0
  %v520 = vadd.f32 %v518, %v519
  %v521 = vsel %vm435, %v498, 0.0
  %v522 = vadd.f32 %v520, %v521
  %v523 = vsel %vm435, %v499, 0.0
  %v524 = vadd.f32 %v522, %v523
  %v525 = vsel %vm435, %v500, 0.0
  %v526 = vadd.f32 %v524, %v525
  %v527 = vsel %vm435, %v501, 0.0
  %v528 = vadd.f32 %v526, %v527
  %v529 = vsel %vm435, %v502, 0.0
  %v530 = vadd.f32 %v528, %v529
  %v531 = vsel %vm435, %v503, 0.0
  %v532 = vadd.f32 %v530, %v531
  %v533 = vsel %vm435, %v504, 0.0
  %v534 = vadd.f32 %v532, %v533
  %v535 = vsel %vm435, %v505, 0.0
  %v536 = vadd.f32 %v534, %v535
  %v537 = vrot.slane %v536, 4
  %v538 = vadd.f32 %v536, %v537
  %v539 = vrot.slane %v538, 2
  %v540 = vadd.f32 %v538, %v539
  %v541 = vrot.slane %v540, 1
  %v542 = vadd.f32 %v540, %v541
  %v543 = vmul.f32 %v542, 0.0078125
  %v544 = vadd.f32 %v543, 1e-05
  %v545 = vrsqrt.pop %v544
  %v546 = vmul.f32 %v545, %v544
  %v547 = vmul.f32 %v546, %v545
  %v548 = vmul.f32 0.5, %v547
  %v549 = vsub.f32 1.5, %v548
  %v550 = vmul.f32 %v545, %v549
  %vm551 = vweird.f32 %v544
  %vm552 = vweird.f32 %v545
  %vm553 = vmor %vm551, %vm552
  %v554 = vsel %vm553, %v545, %v550
  %v555 = vmul.f32 %v474, %v554
  %v556 = vmul.f32 %v475, %v554
  %v557 = vmul.f32 %v476, %v554
  %v558 = vmul.f32 %v477, %v554
  %v559 = vmul.f32 %v478, %v554
  %v560 = vmul.f32 %v479, %v554
  %v561 = vmul.f32 %v480, %v554
  %v562 = vmul.f32 %v481, %v554
  %v563 = vmul.f32 %v482, %v554
  %v564 = vmul.f32 %v483, %v554
  %v565 = vmul.f32 %v484, %v554
  %v566 = vmul.f32 %v485, %v554
  %v567 = vmul.f32 %v486, %v554
  %v568 = vmul.f32 %v487, %v554
  %v569 = vmul.f32 %v488, %v554
  %v570 = vmul.f32 %v489, %v554
  %v571 = vpack.c.bf16 %v555, %v555
  %v572 = vpack.c.bf16 %v556, %v556
  %v573 = vpack.c.bf16 %v557, %v557
  %v574 = vpack.c.bf16 %v558, %v558
  %v575 = vpack.c.bf16 %v559, %v559
  %v576 = vpack.c.bf16 %v560, %v560
  %v577 = vpack.c.bf16 %v561, %v561
  %v578 = vpack.c.bf16 %v562, %v562
  %v579 = vpack.c.bf16 %v563, %v563
  %v580 = vpack.c.bf16 %v564, %v564
  %v581 = vpack.c.bf16 %v565, %v565
  %v582 = vpack.c.bf16 %v566, %v566
  %v583 = vpack.c.bf16 %v567, %v567
  %v584 = vpack.c.bf16 %v568, %v568
  %v585 = vpack.c.bf16 %v569, %v569
  %v586 = vpack.c.bf16 %v570, %v570
  %vm587 = vcmask 60416
  %588 = vst.msk [vmem:[%s2] sm:$0xf] %vm587, %v571
  %589 = vst.msk [vmem:[%s2 + $0x4] sm:$0xf] %vm587, %v572
  %590 = vst.msk [vmem:[%s2 + $0x8] sm:$0xf] %vm587, %v573
  %591 = vst.msk [vmem:[%s2 + $0xc] sm:$0xf] %vm587, %v574
  %592 = vst.msk [vmem:[%s2 + $0x10] sm:$0xf] %vm587, %v575
  %593 = vst.msk [vmem:[%s2 + $0x14] sm:$0xf] %vm587, %v576
  %594 = vst.msk [vmem:[%s2 + $0x18] sm:$0xf] %vm587, %v577
  %595 = vst.msk [vmem:[%s2 + $0x1c] sm:$0xf] %vm587, %v578
  %596 = vst.msk [vmem:[%s2 + $0x20] sm:$0xf] %vm587, %v579
  %597 = vst.msk [vmem:[%s2 + $0x24] sm:$0xf] %vm587, %v580
  %598 = vst.msk [vmem:[%s2 + $0x28] sm:$0xf] %vm587, %v581
  %599 = vst.msk [vmem:[%s2 + $0x2c] sm:$0xf] %vm587, %v582
  %600 = vst.msk [vmem:[%s2 + $0x30] sm:$0xf] %vm587, %v583
  %601 = vst.msk [vmem:[%s2 + $0x34] sm:$0xf] %vm587, %v584
  %602 = vst.msk [vmem:[%s2 + $0x38] sm:$0xf] %vm587, %v585
  %603 = vst.msk [vmem:[%s2 + $0x3c] sm:$0xf] %vm587, %v586
  // Predicated region
  $region10: #{_lambda_.76} parent=0 // pred_check
    _
  $region11: #{_lambda_.76} parent=0 // pred_check_branch
    %605 = sbr.rel (0) target = $region13
  $region12: #{_lambda_.76} parent=0 // pred_region
    _
  $region13: #{_lambda_.76} parent=0 // pred_fallthru
    _
  // Predicated region
  $region14: #{_lambda_.76} parent=0 // pred_check
    _
  $region15: #{_lambda_.76} parent=0 // pred_check_branch
    %607 = sbr.rel (0) target = $region17
  $region16: #{_lambda_.76} parent=0 // pred_region
    _
  $region17: #{_lambda_.76} parent=0 // pred_fallthru
    _

// kernel: _lambda_.75
$region0: #{_lambda_.75}
  #allocation0 [shape = 'u32[]', space=smem, size = 0x4, offset = 0x4, fixed_abs, tag = 'smem constant byte address 0x4 - core index']
  #allocation1 [shape = 'u32[72,128]{1,0:T(1,128)}', space=vmem, size = 0x9000, scoped, tag = 'internal scratch']
  %s0 = inlined_call_operand.vmem [shape: bf16[9,128,8], index: 0, kind: input, shape index: {}]
  %s1 = inlined_call_operand.vmem [shape: f32[128,1], index: 1, kind: input, shape index: {}]
  %s2 = inlined_call_operand.vmem [shape: bf16[128,8], index: 2, kind: output, shape index: {}]
  %s3 = sld [smem:[#allocation0]]
  $region18: #{_lambda_.75} parent=0
    _
  %s5 = ssub.s32 1, %s3
  %s6 = scalar_select 0, %s5, %s3
  // Predicated region
  $region2: #{_lambda_.75} parent=0 // pred_check
    _
  $region3: #{_lambda_.75} parent=0 // pred_check_branch
    %8 = sbr.rel (0) target = $region5
  $region4: #{_lambda_.75} parent=0 // pred_region
    _
  $region5: #{_lambda_.75} parent=0 // pred_fallthru
    _
  // Predicated region
  $region6: #{_lambda_.75} parent=0 // pred_check
    _
  $region7: #{_lambda_.75} parent=0 // pred_check_branch
    %10 = sbr.rel (0) target = $region9
  $region8: #{_lambda_.75} parent=0 // pred_region
    _
  $region9: #{_lambda_.75} parent=0 // pred_fallthru
    _
  %v11 = vld [vmem:[%s0] sm:$0xf]
  %v12 = vld [vmem:[%s0 + $0x4] sm:$0xf]
  %v13 = vld [vmem:[%s0 + $0x8] sm:$0xf]
  %v14 = vld [vmem:[%s0 + $0xc] sm:$0xf]
  %v15 = vld [vmem:[%s0 + $0x10] sm:$0xf]
  %v16 = vld [vmem:[%s0 + $0x14] sm:$0xf]
  %v17 = vld [vmem:[%s0 + $0x18] sm:$0xf]
  %v18 = vld [vmem:[%s0 + $0x1c] sm:$0xf]
  %v19 = vld [vmem:[%s0 + $0x20] sm:$0xf]
  %v20 = vld [vmem:[%s0 + $0x24] sm:$0xf]
  %v21 = vld [vmem:[%s0 + $0x28] sm:$0xf]
  %v22 = vld [vmem:[%s0 + $0x2c] sm:$0xf]
  %v23 = vld [vmem:[%s0 + $0x30] sm:$0xf]
  %v24 = vld [vmem:[%s0 + $0x34] sm:$0xf]
  %v25 = vld [vmem:[%s0 + $0x38] sm:$0xf]
  %v26 = vld [vmem:[%s0 + $0x3c] sm:$0xf]
  %v27 = vunpack.c.l.bf16 %v11
  %v28 = vunpack.c.l.bf16 %v12
  %v29 = vunpack.c.l.bf16 %v13
  %v30 = vunpack.c.l.bf16 %v14
  %v31 = vunpack.c.l.bf16 %v15
  %v32 = vunpack.c.l.bf16 %v16
  %v33 = vunpack.c.l.bf16 %v17
  %v34 = vunpack.c.l.bf16 %v18
  %v35 = vunpack.c.l.bf16 %v19
  %v36 = vunpack.c.l.bf16 %v20
  %v37 = vunpack.c.l.bf16 %v21
  %v38 = vunpack.c.l.bf16 %v22
  %v39 = vunpack.c.l.bf16 %v23
  %v40 = vunpack.c.l.bf16 %v24
  %v41 = vunpack.c.l.bf16 %v25
  %v42 = vunpack.c.l.bf16 %v26
  %s43 = scalar_lea.vmem %s0, 64
  %v44 = vld [vmem:[%s43] sm:$0xf]
  %v45 = vld [vmem:[%s43 + $0x4] sm:$0xf]
  %v46 = vld [vmem:[%s43 + $0x8] sm:$0xf]
  %v47 = vld [vmem:[%s43 + $0xc] sm:$0xf]
  %v48 = vld [vmem:[%s43 + $0x10] sm:$0xf]
  %v49 = vld [vmem:[%s43 + $0x14] sm:$0xf]
  %v50 = vld [vmem:[%s43 + $0x18] sm:$0xf]
  %v51 = vld [vmem:[%s43 + $0x1c] sm:$0xf]
  %v52 = vld [vmem:[%s43 + $0x20] sm:$0xf]
  %v53 = vld [vmem:[%s43 + $0x24] sm:$0xf]
  %v54 = vld [vmem:[%s43 + $0x28] sm:$0xf]
  %v55 = vld [vmem:[%s43 + $0x2c] sm:$0xf]
  %v56 = vld [vmem:[%s43 + $0x30] sm:$0xf]
  %v57 = vld [vmem:[%s43 + $0x34] sm:$0xf]
  %v58 = vld [vmem:[%s43 + $0x38] sm:$0xf]
  %v59 = vld [vmem:[%s43 + $0x3c] sm:$0xf]
  %v60 = vunpack.c.l.bf16 %v44
  %v61 = vunpack.c.l.bf16 %v45
  %v62 = vunpack.c.l.bf16 %v46
  %v63 = vunpack.c.l.bf16 %v47
  %v64 = vunpack.c.l.bf16 %v48
  %v65 = vunpack.c.l.bf16 %v49
  %v66 = vunpack.c.l.bf16 %v50
  %v67 = vunpack.c.l.bf16 %v51
  %v68 = vunpack.c.l.bf16 %v52
  %v69 = vunpack.c.l.bf16 %v53
  %v70 = vunpack.c.l.bf16 %v54
  %v71 = vunpack.c.l.bf16 %v55
  %v72 = vunpack.c.l.bf16 %v56
  %v73 = vunpack.c.l.bf16 %v57
  %v74 = vunpack.c.l.bf16 %v58
  %v75 = vunpack.c.l.bf16 %v59
  %v76 = vadd.f32 %v27, %v60
  %v77 = vadd.f32 %v28, %v61
  %v78 = vadd.f32 %v29, %v62
  %v79 = vadd.f32 %v30, %v63
  %v80 = vadd.f32 %v31, %v64
  %v81 = vadd.f32 %v32, %v65
  %v82 = vadd.f32 %v33, %v66
  %v83 = vadd.f32 %v34, %v67
  %v84 = vadd.f32 %v35, %v68
  %v85 = vadd.f32 %v36, %v69
  %v86 = vadd.f32 %v37, %v70
  %v87 = vadd.f32 %v38, %v71
  %v88 = vadd.f32 %v39, %v72
  %v89 = vadd.f32 %v40, %v73
  %v90 = vadd.f32 %v41, %v74
  %v91 = vadd.f32 %v42, %v75
  %s92 = scalar_lea.vmem %s0, 128
  %v93 = vld [vmem:[%s92] sm:$0xf]
  %v94 = vld [vmem:[%s92 + $0x4] sm:$0xf]
  %v95 = vld [vmem:[%s92 + $0x8] sm:$0xf]
  %v96 = vld [vmem:[%s92 + $0xc] sm:$0xf]
  %v97 = vld [vmem:[%s92 + $0x10] sm:$0xf]
  %v98 = vld [vmem:[%s92 + $0x14] sm:$0xf]
  %v99 = vld [vmem:[%s92 + $0x18] sm:$0xf]
  %v100 = vld [vmem:[%s92 + $0x1c] sm:$0xf]
  %v101 = vld [vmem:[%s92 + $0x20] sm:$0xf]
  %v102 = vld [vmem:[%s92 + $0x24] sm:$0xf]
  %v103 = vld [vmem:[%s92 + $0x28] sm:$0xf]
  %v104 = vld [vmem:[%s92 + $0x2c] sm:$0xf]
  %v105 = vld [vmem:[%s92 + $0x30] sm:$0xf]
  %v106 = vld [vmem:[%s92 + $0x34] sm:$0xf]
  %v107 = vld [vmem:[%s92 + $0x38] sm:$0xf]
  %v108 = vld [vmem:[%s92 + $0x3c] sm:$0xf]
  %v109 = vunpack.c.l.bf16 %v93
  %v110 = vunpack.c.l.bf16 %v94
  %v111 = vunpack.c.l.bf16 %v95
  %v112 = vunpack.c.l.bf16 %v96
  %v113 = vunpack.c.l.bf16 %v97
  %v114 = vunpack.c.l.bf16 %v98
  %v115 = vunpack.c.l.bf16 %v99
  %v116 = vunpack.c.l.bf16 %v100
  %v117 = vunpack.c.l.bf16 %v101
  %v118 = vunpack.c.l.bf16 %v102
  %v119 = vunpack.c.l.bf16 %v103
  %v120 = vunpack.c.l.bf16 %v104
  %v121 = vunpack.c.l.bf16 %v105
  %v122 = vunpack.c.l.bf16 %v106
  %v123 = vunpack.c.l.bf16 %v107
  %v124 = vunpack.c.l.bf16 %v108
  %v125 = vadd.f32 %v76, %v109
  %v126 = vadd.f32 %v77, %v110
  %v127 = vadd.f32 %v78, %v111
  %v128 = vadd.f32 %v79, %v112
  %v129 = vadd.f32 %v80, %v113
  %v130 = vadd.f32 %v81, %v114
  %v131 = vadd.f32 %v82, %v115
  %v132 = vadd.f32 %v83, %v116
  %v133 = vadd.f32 %v84, %v117
  %v134 = vadd.f32 %v85, %v118
  %v135 = vadd.f32 %v86, %v119
  %v136 = vadd.f32 %v87, %v120
  %v137 = vadd.f32 %v88, %v121
  %v138 = vadd.f32 %v89, %v122
  %v139 = vadd.f32 %v90, %v123
  %v140 = vadd.f32 %v91, %v124
  %s141 = scalar_lea.vmem %s0, 192
  %v142 = vld [vmem:[%s141] sm:$0xf]
  %v143 = vld [vmem:[%s141 + $0x4] sm:$0xf]
  %v144 = vld [vmem:[%s141 + $0x8] sm:$0xf]
  %v145 = vld [vmem:[%s141 + $0xc] sm:$0xf]
  %v146 = vld [vmem:[%s141 + $0x10] sm:$0xf]
  %v147 = vld [vmem:[%s141 + $0x14] sm:$0xf]
  %v148 = vld [vmem:[%s141 + $0x18] sm:$0xf]
  %v149 = vld [vmem:[%s141 + $0x1c] sm:$0xf]
  %v150 = vld [vmem:[%s141 + $0x20] sm:$0xf]
  %v151 = vld [vmem:[%s141 + $0x24] sm:$0xf]
  %v152 = vld [vmem:[%s141 + $0x28] sm:$0xf]
  %v153 = vld [vmem:[%s141 + $0x2c] sm:$0xf]
  %v154 = vld [vmem:[%s141 + $0x30] sm:$0xf]
  %v155 = vld [vmem:[%s141 + $0x34] sm:$0xf]
  %v156 = vld [vmem:[%s141 + $0x38] sm:$0xf]
  %v157 = vld [vmem:[%s141 + $0x3c] sm:$0xf]
  %v158 = vunpack.c.l.bf16 %v142
  %v159 = vunpack.c.l.bf16 %v143
  %v160 = vunpack.c.l.bf16 %v144
  %v161 = vunpack.c.l.bf16 %v145
  %v162 = vunpack.c.l.bf16 %v146
  %v163 = vunpack.c.l.bf16 %v147
  %v164 = vunpack.c.l.bf16 %v148
  %v165 = vunpack.c.l.bf16 %v149
  %v166 = vunpack.c.l.bf16 %v150
  %v167 = vunpack.c.l.bf16 %v151
  %v168 = vunpack.c.l.bf16 %v152
  %v169 = vunpack.c.l.bf16 %v153
  %v170 = vunpack.c.l.bf16 %v154
  %v171 = vunpack.c.l.bf16 %v155
  %v172 = vunpack.c.l.bf16 %v156
  %v173 = vunpack.c.l.bf16 %v157
  %v174 = vadd.f32 %v125, %v158
  %v175 = vadd.f32 %v126, %v159
  %v176 = vadd.f32 %v127, %v160
  %v177 = vadd.f32 %v128, %v161
  %v178 = vadd.f32 %v129, %v162
  %v179 = vadd.f32 %v130, %v163
  %v180 = vadd.f32 %v131, %v164
  %v181 = vadd.f32 %v132, %v165
  %v182 = vadd.f32 %v133, %v166
  %v183 = vadd.f32 %v134, %v167
  %v184 = vadd.f32 %v135, %v168
  %v185 = vadd.f32 %v136, %v169
  %v186 = vadd.f32 %v137, %v170
  %v187 = vadd.f32 %v138, %v171
  %v188 = vadd.f32 %v139, %v172
  %v189 = vadd.f32 %v140, %v173
  %s190 = scalar_lea.vmem %s0, 256
  %v191 = vld [vmem:[%s190] sm:$0xf]
  %v192 = vld [vmem:[%s190 + $0x4] sm:$0xf]
  %v193 = vld [vmem:[%s190 + $0x8] sm:$0xf]
  %v194 = vld [vmem:[%s190 + $0xc] sm:$0xf]
  %v195 = vld [vmem:[%s190 + $0x10] sm:$0xf]
  %v196 = vld [vmem:[%s190 + $0x14] sm:$0xf]
  %v197 = vld [vmem:[%s190 + $0x18] sm:$0xf]
  %v198 = vld [vmem:[%s190 + $0x1c] sm:$0xf]
  %v199 = vld [vmem:[%s190 + $0x20] sm:$0xf]
  %v200 = vld [vmem:[%s190 + $0x24] sm:$0xf]
  %v201 = vld [vmem:[%s190 + $0x28] sm:$0xf]
  %v202 = vld [vmem:[%s190 + $0x2c] sm:$0xf]
  %v203 = vld [vmem:[%s190 + $0x30] sm:$0xf]
  %v204 = vld [vmem:[%s190 + $0x34] sm:$0xf]
  %v205 = vld [vmem:[%s190 + $0x38] sm:$0xf]
  %v206 = vld [vmem:[%s190 + $0x3c] sm:$0xf]
  %v207 = vunpack.c.l.bf16 %v191
  %v208 = vunpack.c.l.bf16 %v192
  %v209 = vunpack.c.l.bf16 %v193
  %v210 = vunpack.c.l.bf16 %v194
  %v211 = vunpack.c.l.bf16 %v195
  %v212 = vunpack.c.l.bf16 %v196
  %v213 = vunpack.c.l.bf16 %v197
  %v214 = vunpack.c.l.bf16 %v198
  %v215 = vunpack.c.l.bf16 %v199
  %v216 = vunpack.c.l.bf16 %v200
  %v217 = vunpack.c.l.bf16 %v201
  %v218 = vunpack.c.l.bf16 %v202
  %v219 = vunpack.c.l.bf16 %v203
  %v220 = vunpack.c.l.bf16 %v204
  %v221 = vunpack.c.l.bf16 %v205
  %v222 = vunpack.c.l.bf16 %v206
  %v223 = vadd.f32 %v174, %v207
  %v224 = vadd.f32 %v175, %v208
  %v225 = vadd.f32 %v176, %v209
  %v226 = vadd.f32 %v177, %v210
  %v227 = vadd.f32 %v178, %v211
  %v228 = vadd.f32 %v179, %v212
  %v229 = vadd.f32 %v180, %v213
  %v230 = vadd.f32 %v181, %v214
  %v231 = vadd.f32 %v182, %v215
  %v232 = vadd.f32 %v183, %v216
  %v233 = vadd.f32 %v184, %v217
  %v234 = vadd.f32 %v185, %v218
  %v235 = vadd.f32 %v186, %v219
  %v236 = vadd.f32 %v187, %v220
  %v237 = vadd.f32 %v188, %v221
  %v238 = vadd.f32 %v189, %v222
  %s239 = scalar_lea.vmem %s0, 320
  %v240 = vld [vmem:[%s239] sm:$0xf]
  %v241 = vld [vmem:[%s239 + $0x4] sm:$0xf]
  %v242 = vld [vmem:[%s239 + $0x8] sm:$0xf]
  %v243 = vld [vmem:[%s239 + $0xc] sm:$0xf]
  %v244 = vld [vmem:[%s239 + $0x10] sm:$0xf]
  %v245 = vld [vmem:[%s239 + $0x14] sm:$0xf]
  %v246 = vld [vmem:[%s239 + $0x18] sm:$0xf]
  %v247 = vld [vmem:[%s239 + $0x1c] sm:$0xf]
  %v248 = vld [vmem:[%s239 + $0x20] sm:$0xf]
  %v249 = vld [vmem:[%s239 + $0x24] sm:$0xf]
  %v250 = vld [vmem:[%s239 + $0x28] sm:$0xf]
  %v251 = vld [vmem:[%s239 + $0x2c] sm:$0xf]
  %v252 = vld [vmem:[%s239 + $0x30] sm:$0xf]
  %v253 = vld [vmem:[%s239 + $0x34] sm:$0xf]
  %v254 = vld [vmem:[%s239 + $0x38] sm:$0xf]
  %v255 = vld [vmem:[%s239 + $0x3c] sm:$0xf]
  %v256 = vunpack.c.l.bf16 %v240
  %v257 = vunpack.c.l.bf16 %v241
  %v258 = vunpack.c.l.bf16 %v242
  %v259 = vunpack.c.l.bf16 %v243
  %v260 = vunpack.c.l.bf16 %v244
  %v261 = vunpack.c.l.bf16 %v245
  %v262 = vunpack.c.l.bf16 %v246
  %v263 = vunpack.c.l.bf16 %v247
  %v264 = vunpack.c.l.bf16 %v248
  %v265 = vunpack.c.l.bf16 %v249
  %v266 = vunpack.c.l.bf16 %v250
  %v267 = vunpack.c.l.bf16 %v251
  %v268 = vunpack.c.l.bf16 %v252
  %v269 = vunpack.c.l.bf16 %v253
  %v270 = vunpack.c.l.bf16 %v254
  %v271 = vunpack.c.l.bf16 %v255
  %v272 = vadd.f32 %v223, %v256
  %v273 = vadd.f32 %v224, %v257
  %v274 = vadd.f32 %v225, %v258
  %v275 = vadd.f32 %v226, %v259
  %v276 = vadd.f32 %v227, %v260
  %v277 = vadd.f32 %v228, %v261
  %v278 = vadd.f32 %v229, %v262
  %v279 = vadd.f32 %v230, %v263
  %v280 = vadd.f32 %v231, %v264
  %v281 = vadd.f32 %v232, %v265
  %v282 = vadd.f32 %v233, %v266
  %v283 = vadd.f32 %v234, %v267
  %v284 = vadd.f32 %v235, %v268
  %v285 = vadd.f32 %v236, %v269
  %v286 = vadd.f32 %v237, %v270
  %v287 = vadd.f32 %v238, %v271
  %s288 = scalar_lea.vmem %s0, 384
  %v289 = vld [vmem:[%s288] sm:$0xf]
  %v290 = vld [vmem:[%s288 + $0x4] sm:$0xf]
  %v291 = vld [vmem:[%s288 + $0x8] sm:$0xf]
  %v292 = vld [vmem:[%s288 + $0xc] sm:$0xf]
  %v293 = vld [vmem:[%s288 + $0x10] sm:$0xf]
  %v294 = vld [vmem:[%s288 + $0x14] sm:$0xf]
  %v295 = vld [vmem:[%s288 + $0x18] sm:$0xf]
  %v296 = vld [vmem:[%s288 + $0x1c] sm:$0xf]
  %v297 = vld [vmem:[%s288 + $0x20] sm:$0xf]
  %v298 = vld [vmem:[%s288 + $0x24] sm:$0xf]
  %v299 = vld [vmem:[%s288 + $0x28] sm:$0xf]
  %v300 = vld [vmem:[%s288 + $0x2c] sm:$0xf]
  %v301 = vld [vmem:[%s288 + $0x30] sm:$0xf]
  %v302 = vld [vmem:[%s288 + $0x34] sm:$0xf]
  %v303 = vld [vmem:[%s288 + $0x38] sm:$0xf]
  %v304 = vld [vmem:[%s288 + $0x3c] sm:$0xf]
  %v305 = vunpack.c.l.bf16 %v289
  %v306 = vunpack.c.l.bf16 %v290
  %v307 = vunpack.c.l.bf16 %v291
  %v308 = vunpack.c.l.bf16 %v292
  %v309 = vunpack.c.l.bf16 %v293
  %v310 = vunpack.c.l.bf16 %v294
  %v311 = vunpack.c.l.bf16 %v295
  %v312 = vunpack.c.l.bf16 %v296
  %v313 = vunpack.c.l.bf16 %v297
  %v314 = vunpack.c.l.bf16 %v298
  %v315 = vunpack.c.l.bf16 %v299
  %v316 = vunpack.c.l.bf16 %v300
  %v317 = vunpack.c.l.bf16 %v301
  %v318 = vunpack.c.l.bf16 %v302
  %v319 = vunpack.c.l.bf16 %v303
  %v320 = vunpack.c.l.bf16 %v304
  %v321 = vadd.f32 %v272, %v305
  %v322 = vadd.f32 %v273, %v306
  %v323 = vadd.f32 %v274, %v307
  %v324 = vadd.f32 %v275, %v308
  %v325 = vadd.f32 %v276, %v309
  %v326 = vadd.f32 %v277, %v310
  %v327 = vadd.f32 %v278, %v311
  %v328 = vadd.f32 %v279, %v312
  %v329 = vadd.f32 %v280, %v313
  %v330 = vadd.f32 %v281, %v314
  %v331 = vadd.f32 %v282, %v315
  %v332 = vadd.f32 %v283, %v316
  %v333 = vadd.f32 %v284, %v317
  %v334 = vadd.f32 %v285, %v318
  %v335 = vadd.f32 %v286, %v319
  %v336 = vadd.f32 %v287, %v320
  %s337 = scalar_lea.vmem %s0, 448
  %v338 = vld [vmem:[%s337] sm:$0xf]
  %v339 = vld [vmem:[%s337 + $0x4] sm:$0xf]
  %v340 = vld [vmem:[%s337 + $0x8] sm:$0xf]
  %v341 = vld [vmem:[%s337 + $0xc] sm:$0xf]
  %v342 = vld [vmem:[%s337 + $0x10] sm:$0xf]
  %v343 = vld [vmem:[%s337 + $0x14] sm:$0xf]
  %v344 = vld [vmem:[%s337 + $0x18] sm:$0xf]
  %v345 = vld [vmem:[%s337 + $0x1c] sm:$0xf]
  %v346 = vld [vmem:[%s337 + $0x20] sm:$0xf]
  %v347 = vld [vmem:[%s337 + $0x24] sm:$0xf]
  %v348 = vld [vmem:[%s337 + $0x28] sm:$0xf]
  %v349 = vld [vmem:[%s337 + $0x2c] sm:$0xf]
  %v350 = vld [vmem:[%s337 + $0x30] sm:$0xf]
  %v351 = vld [vmem:[%s337 + $0x34] sm:$0xf]
  %v352 = vld [vmem:[%s337 + $0x38] sm:$0xf]
  %v353 = vld [vmem:[%s337 + $0x3c] sm:$0xf]
  %v354 = vunpack.c.l.bf16 %v338
  %v355 = vunpack.c.l.bf16 %v339
  %v356 = vunpack.c.l.bf16 %v340
  %v357 = vunpack.c.l.bf16 %v341
  %v358 = vunpack.c.l.bf16 %v342
  %v359 = vunpack.c.l.bf16 %v343
  %v360 = vunpack.c.l.bf16 %v344
  %v361 = vunpack.c.l.bf16 %v345
  %v362 = vunpack.c.l.bf16 %v346
  %v363 = vunpack.c.l.bf16 %v347
  %v364 = vunpack.c.l.bf16 %v348
  %v365 = vunpack.c.l.bf16 %v349
  %v366 = vunpack.c.l.bf16 %v350
  %v367 = vunpack.c.l.bf16 %v351
  %v368 = vunpack.c.l.bf16 %v352
  %v369 = vunpack.c.l.bf16 %v353
  %v370 = vadd.f32 %v321, %v354
  %v371 = vadd.f32 %v322, %v355
  %v372 = vadd.f32 %v323, %v356
  %v373 = vadd.f32 %v324, %v357
  %v374 = vadd.f32 %v325, %v358
  %v375 = vadd.f32 %v326, %v359
  %v376 = vadd.f32 %v327, %v360
  %v377 = vadd.f32 %v328, %v361
  %v378 = vadd.f32 %v329, %v362
  %v379 = vadd.f32 %v330, %v363
  %v380 = vadd.f32 %v331, %v364
  %v381 = vadd.f32 %v332, %v365
  %v382 = vadd.f32 %v333, %v366
  %v383 = vadd.f32 %v334, %v367
  %v384 = vadd.f32 %v335, %v368
  %v385 = vadd.f32 %v336, %v369
  %s386 = scalar_lea.vmem %s0, 512
  %v387 = vld [vmem:[%s386] sm:$0xf]
  %v388 = vld [vmem:[%s386 + $0x4] sm:$0xf]
  %v389 = vld [vmem:[%s386 + $0x8] sm:$0xf]
  %v390 = vld [vmem:[%s386 + $0xc] sm:$0xf]
  %v391 = vld [vmem:[%s386 + $0x10] sm:$0xf]
  %v392 = vld [vmem:[%s386 + $0x14] sm:$0xf]
  %v393 = vld [vmem:[%s386 + $0x18] sm:$0xf]
  %v394 = vld [vmem:[%s386 + $0x1c] sm:$0xf]
  %v395 = vld [vmem:[%s386 + $0x20] sm:$0xf]
  %v396 = vld [vmem:[%s386 + $0x24] sm:$0xf]
  %v397 = vld [vmem:[%s386 + $0x28] sm:$0xf]
  %v398 = vld [vmem:[%s386 + $0x2c] sm:$0xf]
  %v399 = vld [vmem:[%s386 + $0x30] sm:$0xf]
  %v400 = vld [vmem:[%s386 + $0x34] sm:$0xf]
  %v401 = vld [vmem:[%s386 + $0x38] sm:$0xf]
  %v402 = vld [vmem:[%s386 + $0x3c] sm:$0xf]
  %v403 = vunpack.c.l.bf16 %v387
  %v404 = vunpack.c.l.bf16 %v388
  %v405 = vunpack.c.l.bf16 %v389
  %v406 = vunpack.c.l.bf16 %v390
  %v407 = vunpack.c.l.bf16 %v391
  %v408 = vunpack.c.l.bf16 %v392
  %v409 = vunpack.c.l.bf16 %v393
  %v410 = vunpack.c.l.bf16 %v394
  %v411 = vunpack.c.l.bf16 %v395
  %v412 = vunpack.c.l.bf16 %v396
  %v413 = vunpack.c.l.bf16 %v397
  %v414 = vunpack.c.l.bf16 %v398
  %v415 = vunpack.c.l.bf16 %v399
  %v416 = vunpack.c.l.bf16 %v400
  %v417 = vunpack.c.l.bf16 %v401
  %v418 = vunpack.c.l.bf16 %v402
  %v419 = vadd.f32 %v370, %v403
  %v420 = vadd.f32 %v371, %v404
  %v421 = vadd.f32 %v372, %v405
  %v422 = vadd.f32 %v373, %v406
  %v423 = vadd.f32 %v374, %v407
  %v424 = vadd.f32 %v375, %v408
  %v425 = vadd.f32 %v376, %v409
  %v426 = vadd.f32 %v377, %v410
  %v427 = vadd.f32 %v378, %v411
  %v428 = vadd.f32 %v379, %v412
  %v429 = vadd.f32 %v380, %v413
  %v430 = vadd.f32 %v381, %v414
  %v431 = vadd.f32 %v382, %v415
  %v432 = vadd.f32 %v383, %v416
  %v433 = vadd.f32 %v384, %v417
  %v434 = vadd.f32 %v385, %v418
  %v435 = vld [vmem:[%s1] sm:$0xff]
  %v436 = vld [vmem:[%s1 + $0x8] sm:$0xff]
  %v437 = vld [vmem:[%s1 + $0x10] sm:$0xff]
  %v438 = vld [vmem:[%s1 + $0x18] sm:$0xff]
  %v439 = vld [vmem:[%s1 + $0x20] sm:$0xff]
  %v440 = vld [vmem:[%s1 + $0x28] sm:$0xff]
  %v441 = vld [vmem:[%s1 + $0x30] sm:$0xff]
  %v442 = vld [vmem:[%s1 + $0x38] sm:$0xff]
  %v443 = vld [vmem:[%s1 + $0x40] sm:$0xff]
  %v444 = vld [vmem:[%s1 + $0x48] sm:$0xff]
  %v445 = vld [vmem:[%s1 + $0x50] sm:$0xff]
  %v446 = vld [vmem:[%s1 + $0x58] sm:$0xff]
  %v447 = vld [vmem:[%s1 + $0x60] sm:$0xff]
  %v448 = vld [vmem:[%s1 + $0x68] sm:$0xff]
  %v449 = vld [vmem:[%s1 + $0x70] sm:$0xff]
  %v450 = vld [vmem:[%s1 + $0x78] sm:$0xff]
  %452 = vset.pattern.permute.xlu0 0
  %453 = vperm.xlu0 %452, %v435
  %v454 = vpop.permute.xlu0 %453
  %457 = vset.pattern.permute.xlu0 0
  %458 = vperm.xlu0 %457, %v436
  %v459 = vpop.permute.xlu0 %458
  %462 = vset.pattern.permute.xlu0 0
  %463 = vperm.xlu0 %462, %v437
  %v464 = vpop.permute.xlu0 %463
  %467 = vset.pattern.permute.xlu0 0
  %468 = vperm.xlu0 %467, %v438
  %v469 = vpop.permute.xlu0 %468
  %472 = vset.pattern.permute.xlu0 0
  %473 = vperm.xlu0 %472, %v439
  %v474 = vpop.permute.xlu0 %473
  %477 = vset.pattern.permute.xlu0 0
  %478 = vperm.xlu0 %477, %v440
  %v479 = vpop.permute.xlu0 %478
  %482 = vset.pattern.permute.xlu0 0
  %483 = vperm.xlu0 %482, %v441
  %v484 = vpop.permute.xlu0 %483
  %487 = vset.pattern.permute.xlu0 0
  %488 = vperm.xlu0 %487, %v442
  %v489 = vpop.permute.xlu0 %488
  %492 = vset.pattern.permute.xlu0 0
  %493 = vperm.xlu0 %492, %v443
  %v494 = vpop.permute.xlu0 %493
  %497 = vset.pattern.permute.xlu0 0
  %498 = vperm.xlu0 %497, %v444
  %v499 = vpop.permute.xlu0 %498
  %502 = vset.pattern.permute.xlu0 0
  %503 = vperm.xlu0 %502, %v445
  %v504 = vpop.permute.xlu0 %503
  %507 = vset.pattern.permute.xlu0 0
  %508 = vperm.xlu0 %507, %v446
  %v509 = vpop.permute.xlu0 %508
  %512 = vset.pattern.permute.xlu0 0
  %513 = vperm.xlu0 %512, %v447
  %v514 = vpop.permute.xlu0 %513
  %517 = vset.pattern.permute.xlu0 0
  %518 = vperm.xlu0 %517, %v448
  %v519 = vpop.permute.xlu0 %518
  %522 = vset.pattern.permute.xlu0 0
  %523 = vperm.xlu0 %522, %v449
  %v524 = vpop.permute.xlu0 %523
  %527 = vset.pattern.permute.xlu0 0
  %528 = vperm.xlu0 %527, %v450
  %v529 = vpop.permute.xlu0 %528
  %v531 = vmul.f32 %v419, %v454
  %v532 = vmul.f32 %v420, %v459
  %v533 = vmul.f32 %v421, %v464
  %v534 = vmul.f32 %v422, %v469
  %v535 = vmul.f32 %v423, %v474
  %v536 = vmul.f32 %v424, %v479
  %v537 = vmul.f32 %v425, %v484
  %v538 = vmul.f32 %v426, %v489
  %v539 = vmul.f32 %v427, %v494
  %v540 = vmul.f32 %v428, %v499
  %v541 = vmul.f32 %v429, %v504
  %v542 = vmul.f32 %v430, %v509
  %v543 = vmul.f32 %v431, %v514
  %v544 = vmul.f32 %v432, %v519
  %v545 = vmul.f32 %v433, %v524
  %v546 = vmul.f32 %v434, %v529
  %vm547 = vcmask 64512
  %v548 = vsel %vm547, %v531, 0.0
  %v549 = vsel %vm547, %v532, 0.0
  %v550 = vadd.f32 %v548, %v549
  %v551 = vsel %vm547, %v533, 0.0
  %v552 = vadd.f32 %v550, %v551
  %v553 = vsel %vm547, %v534, 0.0
  %v554 = vadd.f32 %v552, %v553
  %v555 = vsel %vm547, %v535, 0.0
  %v556 = vadd.f32 %v554, %v555
  %v557 = vsel %vm547, %v536, 0.0
  %v558 = vadd.f32 %v556, %v557
  %v559 = vsel %vm547, %v537, 0.0
  %v560 = vadd.f32 %v558, %v559
  %v561 = vsel %vm547, %v538, 0.0
  %v562 = vadd.f32 %v560, %v561
  %v563 = vsel %vm547, %v539, 0.0
  %v564 = vadd.f32 %v562, %v563
  %v565 = vsel %vm547, %v540, 0.0
  %v566 = vadd.f32 %v564, %v565
  %v567 = vsel %vm547, %v541, 0.0
  %v568 = vadd.f32 %v566, %v567
  %v569 = vsel %vm547, %v542, 0.0
  %v570 = vadd.f32 %v568, %v569
  %v571 = vsel %vm547, %v543, 0.0
  %v572 = vadd.f32 %v570, %v571
  %v573 = vsel %vm547, %v544, 0.0
  %v574 = vadd.f32 %v572, %v573
  %v575 = vsel %vm547, %v545, 0.0
  %v576 = vadd.f32 %v574, %v575
  %v577 = vsel %vm547, %v546, 0.0
  %v578 = vadd.f32 %v576, %v577
  %v579 = vrot.slane %v578, 4
  %v580 = vadd.f32 %v578, %v579
  %v581 = vrot.slane %v580, 2
  %v582 = vadd.f32 %v580, %v581
  %v583 = vrot.slane %v582, 1
  %v584 = vadd.f32 %v582, %v583
  %v585 = vmul.f32 %v584, 0.0078125
  %v586 = vsub.f32 %v531, %v585
  %v587 = vsub.f32 %v532, %v585
  %v588 = vsub.f32 %v533, %v585
  %v589 = vsub.f32 %v534, %v585
  %v590 = vsub.f32 %v535, %v585
  %v591 = vsub.f32 %v536, %v585
  %v592 = vsub.f32 %v537, %v585
  %v593 = vsub.f32 %v538, %v585
  %v594 = vsub.f32 %v539, %v585
  %v595 = vsub.f32 %v540, %v585
  %v596 = vsub.f32 %v541, %v585
  %v597 = vsub.f32 %v542, %v585
  %v598 = vsub.f32 %v543, %v585
  %v599 = vsub.f32 %v544, %v585
  %v600 = vsub.f32 %v545, %v585
  %v601 = vsub.f32 %v546, %v585
  %v602 = vmul.f32 %v586, %v586
  %v603 = vmul.f32 %v587, %v587
  %v604 = vmul.f32 %v588, %v588
  %v605 = vmul.f32 %v589, %v589
  %v606 = vmul.f32 %v590, %v590
  %v607 = vmul.f32 %v591, %v591
  %v608 = vmul.f32 %v592, %v592
  %v609 = vmul.f32 %v593, %v593
  %v610 = vmul.f32 %v594, %v594
  %v611 = vmul.f32 %v595, %v595
  %v612 = vmul.f32 %v596, %v596
  %v613 = vmul.f32 %v597, %v597
  %v614 = vmul.f32 %v598, %v598
  %v615 = vmul.f32 %v599, %v599
  %v616 = vmul.f32 %v600, %v600
  %v617 = vmul.f32 %v601, %v601
  %v618 = vsel %vm547, %v602, 0.0
  %v619 = vsel %vm547, %v603, 0.0
  %v620 = vadd.f32 %v618, %v619
  %v621 = vsel %vm547, %v604, 0.0
  %v622 = vadd.f32 %v620, %v621
  %v623 = vsel %vm547, %v605, 0.0
  %v624 = vadd.f32 %v622, %v623
  %v625 = vsel %vm547, %v606, 0.0
  %v626 = vadd.f32 %v624, %v625
  %v627 = vsel %vm547, %v607, 0.0
  %v628 = vadd.f32 %v626, %v627
  %v629 = vsel %vm547, %v608, 0.0
  %v630 = vadd.f32 %v628, %v629
  %v631 = vsel %vm547, %v609, 0.0
  %v632 = vadd.f32 %v630, %v631
  %v633 = vsel %vm547, %v610, 0.0
  %v634 = vadd.f32 %v632, %v633
  %v635 = vsel %vm547, %v611, 0.0
  %v636 = vadd.f32 %v634, %v635
  %v637 = vsel %vm547, %v612, 0.0
  %v638 = vadd.f32 %v636, %v637
  %v639 = vsel %vm547, %v613, 0.0
  %v640 = vadd.f32 %v638, %v639
  %v641 = vsel %vm547, %v614, 0.0
  %v642 = vadd.f32 %v640, %v641
  %v643 = vsel %vm547, %v615, 0.0
  %v644 = vadd.f32 %v642, %v643
  %v645 = vsel %vm547, %v616, 0.0
  %v646 = vadd.f32 %v644, %v645
  %v647 = vsel %vm547, %v617, 0.0
  %v648 = vadd.f32 %v646, %v647
  %v649 = vrot.slane %v648, 4
  %v650 = vadd.f32 %v648, %v649
  %v651 = vrot.slane %v650, 2
  %v652 = vadd.f32 %v650, %v651
  %v653 = vrot.slane %v652, 1
  %v654 = vadd.f32 %v652, %v653
  %v655 = vmul.f32 %v654, 0.0078125
  %v656 = vadd.f32 %v655, 1e-05
  %v657 = vrsqrt.pop %v656
  %v658 = vmul.f32 %v657, %v656
  %v659 = vmul.f32 %v658, %v657
  %v660 = vmul.f32 0.5, %v659
  %v661 = vsub.f32 1.5, %v660
  %v662 = vmul.f32 %v657, %v661
  %vm663 = vweird.f32 %v656
  %vm664 = vweird.f32 %v657
  %vm665 = vmor %vm663, %vm664
  %v666 = vsel %vm665, %v657, %v662
  %v667 = vmul.f32 %v586, %v666
  %v668 = vmul.f32 %v587, %v666
  %v669 = vmul.f32 %v588, %v666
  %v670 = vmul.f32 %v589, %v666
  %v671 = vmul.f32 %v590, %v666
  %v672 = vmul.f32 %v591, %v666
  %v673 = vmul.f32 %v592, %v666
  %v674 = vmul.f32 %v593, %v666
  %v675 = vmul.f32 %v594, %v666
  %v676 = vmul.f32 %v595, %v666
  %v677 = vmul.f32 %v596, %v666
  %v678 = vmul.f32 %v597, %v666
  %v679 = vmul.f32 %v598, %v666
  %v680 = vmul.f32 %v599, %v666
  %v681 = vmul.f32 %v600, %v666
  %v682 = vmul.f32 %v601, %v666
  %v683 = vpack.c.bf16 %v667, %v667
  %v684 = vpack.c.bf16 %v668, %v668
  %v685 = vpack.c.bf16 %v669, %v669
  %v686 = vpack.c.bf16 %v670, %v670
  %v687 = vpack.c.bf16 %v671, %v671
  %v688 = vpack.c.bf16 %v672, %v672
  %v689 = vpack.c.bf16 %v673, %v673
  %v690 = vpack.c.bf16 %v674, %v674
  %v691 = vpack.c.bf16 %v675, %v675
  %v692 = vpack.c.bf16 %v676, %v676
  %v693 = vpack.c.bf16 %v677, %v677
  %v694 = vpack.c.bf16 %v678, %v678
  %v695 = vpack.c.bf16 %v679, %v679
  %v696 = vpack.c.bf16 %v680, %v680
  %v697 = vpack.c.bf16 %v681, %v681
  %v698 = vpack.c.bf16 %v682, %v682
  %vm699 = vcmask 60416
  %700 = vst.msk [vmem:[%s2] sm:$0xf] %vm699, %v683
  %701 = vst.msk [vmem:[%s2 + $0x4] sm:$0xf] %vm699, %v684
  %702 = vst.msk [vmem:[%s2 + $0x8] sm:$0xf] %vm699, %v685
  %703 = vst.msk [vmem:[%s2 + $0xc] sm:$0xf] %vm699, %v686
  %704 = vst.msk [vmem:[%s2 + $0x10] sm:$0xf] %vm699, %v687
  %705 = vst.msk [vmem:[%s2 + $0x14] sm:$0xf] %vm699, %v688
  %706 = vst.msk [vmem:[%s2 + $0x18] sm:$0xf] %vm699, %v689
  %707 = vst.msk [vmem:[%s2 + $0x1c] sm:$0xf] %vm699, %v690
  %708 = vst.msk [vmem:[%s2 + $0x20] sm:$0xf] %vm699, %v691
  %709 = vst.msk [vmem:[%s2 + $0x24] sm:$0xf] %vm699, %v692
  %710 = vst.msk [vmem:[%s2 + $0x28] sm:$0xf] %vm699, %v693
  %711 = vst.msk [vmem:[%s2 + $0x2c] sm:$0xf] %vm699, %v694
  %712 = vst.msk [vmem:[%s2 + $0x30] sm:$0xf] %vm699, %v695
  %713 = vst.msk [vmem:[%s2 + $0x34] sm:$0xf] %vm699, %v696
  %714 = vst.msk [vmem:[%s2 + $0x38] sm:$0xf] %vm699, %v697
  %715 = vst.msk [vmem:[%s2 + $0x3c] sm:$0xf] %vm699, %v698
  // Predicated region
  $region10: #{_lambda_.75} parent=0 // pred_check
    _
  $region11: #{_lambda_.75} parent=0 // pred_check_branch
    %717 = sbr.rel (0) target = $region13
  $region12: #{_lambda_.75} parent=0 // pred_region
    _
  $region13: #{_lambda_.75} parent=0 // pred_fallthru
    _
  // Predicated region
  $region14: #{_lambda_.75} parent=0 // pred_check
    _
  $region15: #{_lambda_.75} parent=0 // pred_check_branch
    %719 = sbr.rel (0) target = $region17
  $region16: #{_lambda_.75} parent=0 // pred_region
    _
  $region17: #{_lambda_.75} parent=0 // pred_fallthru
    _

// kernel: _lambda_.88
$region0: #{_lambda_.88}
  #allocation0 [shape = 'u32[]', space=smem, size = 0x4, offset = 0x4, fixed_abs, tag = 'smem constant byte address 0x4 - core index']
  #allocation1 [shape = 'u32[72,128]{1,0:T(1,128)}', space=vmem, size = 0x9000, scoped, tag = 'internal scratch']
  #allocation2 [shape = 'f32[128,8]{1,0:T(8,128)}', space=vmem, size = 0x10000, scoped, tag = 'scratch operand']
  %s0 = inlined_call_operand.vmem [shape: bf16[128,72], index: 0, kind: input, shape index: {}]
  %s1 = inlined_call_operand.vmem [shape: bf16[72,8], index: 1, kind: input, shape index: {}]
  %s2 = inlined_call_operand.vmem [shape: bf16[128,8], index: 2, kind: output, shape index: {}]
  %s3 = sld [smem:[#allocation0]]
  $region26: #{_lambda_.88} parent=0
    _
  %s5 = ssub.s32 1, %s3
  %s6 = scalar_select 0, %s5, %s3
  // Predicated region
  $region2: #{_lambda_.88} parent=0 // pred_check
    _
  $region3: #{_lambda_.88} parent=0 // pred_check_branch
    %8 = sbr.rel (0) target = $region5
  $region4: #{_lambda_.88} parent=0 // pred_region
    _
  $region5: #{_lambda_.88} parent=0 // pred_fallthru
    _
  // Predicated region
  $region6: #{_lambda_.88} parent=0 // pred_check
    _
  $region7: #{_lambda_.88} parent=0 // pred_check_branch
    %10 = sbr.rel (0) target = $region9
  $region8: #{_lambda_.88} parent=0 // pred_region
    _
  $region9: #{_lambda_.88} parent=0 // pred_fallthru
    _
  %p12 = scmp.eq.s32.totalorder 0, 0
  // Predicated region
  $region10: #{_lambda_.88} parent=0 // pred_check
    %p13 = pneg %p12
  $region11: #{_lambda_.88} parent=0 // pred_check_branch
    %15 = sbr.rel (%p13) target = $region13
  $region12: #{_lambda_.88} parent=0 // pred_region
    %vm16 = vcmask 64512
    %17 = vst.msk [vmem:[#allocation2] sm:$0xff] %vm16, 0.0
    %18 = vst.msk [vmem:[#allocation2 + $0x8] sm:$0xff] %vm16, 0.0
    %19 = vst.msk [vmem:[#allocation2 + $0x10] sm:$0xff] %vm16, 0.0
    %20 = vst.msk [vmem:[#allocation2 + $0x18] sm:$0xff] %vm16, 0.0
    %21 = vst.msk [vmem:[#allocation2 + $0x20] sm:$0xff] %vm16, 0.0
    %22 = vst.msk [vmem:[#allocation2 + $0x28] sm:$0xff] %vm16, 0.0
    %23 = vst.msk [vmem:[#allocation2 + $0x30] sm:$0xff] %vm16, 0.0
    %24 = vst.msk [vmem:[#allocation2 + $0x38] sm:$0xff] %vm16, 0.0
    %25 = vst.msk [vmem:[#allocation2 + $0x40] sm:$0xff] %vm16, 0.0
    %26 = vst.msk [vmem:[#allocation2 + $0x48] sm:$0xff] %vm16, 0.0
    %27 = vst.msk [vmem:[#allocation2 + $0x50] sm:$0xff] %vm16, 0.0
    %28 = vst.msk [vmem:[#allocation2 + $0x58] sm:$0xff] %vm16, 0.0
    %29 = vst.msk [vmem:[#allocation2 + $0x60] sm:$0xff] %vm16, 0.0
    %30 = vst.msk [vmem:[#allocation2 + $0x68] sm:$0xff] %vm16, 0.0
    %31 = vst.msk [vmem:[#allocation2 + $0x70] sm:$0xff] %vm16, 0.0
    %32 = vst.msk [vmem:[#allocation2 + $0x78] sm:$0xff] %vm16, 0.0
  $region13: #{_lambda_.88} parent=0 // pred_fallthru
    _
  %v33 = vld [vmem:[%s0] sm:$0xf]
  %v34 = vld [vmem:[%s0 + $0x4] sm:$0xf]
  %v35 = vld [vmem:[%s0 + $0x8] sm:$0xf]
  %v36 = vld [vmem:[%s0 + $0xc] sm:$0xf]
  %v37 = vld [vmem:[%s0 + $0x10] sm:$0xf]
  %v38 = vld [vmem:[%s0 + $0x14] sm:$0xf]
  %v39 = vld [vmem:[%s0 + $0x18] sm:$0xf]
  %v40 = vld [vmem:[%s0 + $0x1c] sm:$0xf]
  %v41 = vld [vmem:[%s0 + $0x20] sm:$0xf]
  %v42 = vld [vmem:[%s0 + $0x24] sm:$0xf]
  %v43 = vld [vmem:[%s0 + $0x28] sm:$0xf]
  %v44 = vld [vmem:[%s0 + $0x2c] sm:$0xf]
  %v45 = vld [vmem:[%s0 + $0x30] sm:$0xf]
  %v46 = vld [vmem:[%s0 + $0x34] sm:$0xf]
  %v47 = vld [vmem:[%s0 + $0x38] sm:$0xf]
  %v48 = vld [vmem:[%s0 + $0x3c] sm:$0xf]
  %v49 = vunpack.c.l.bf16 %v33
  %v50 = vunpack.c.l.bf16 %v34
  %v51 = vunpack.c.l.bf16 %v35
  %v52 = vunpack.c.l.bf16 %v36
  %v53 = vunpack.c.l.bf16 %v37
  %v54 = vunpack.c.l.bf16 %v38
  %v55 = vunpack.c.l.bf16 %v39
  %v56 = vunpack.c.l.bf16 %v40
  %v57 = vunpack.c.l.bf16 %v41
  %v58 = vunpack.c.l.bf16 %v42
  %v59 = vunpack.c.l.bf16 %v43
  %v60 = vunpack.c.l.bf16 %v44
  %v61 = vunpack.c.l.bf16 %v45
  %v62 = vunpack.c.l.bf16 %v46
  %v63 = vunpack.c.l.bf16 %v47
  %v64 = vunpack.c.l.bf16 %v48
  %v65 = vmax.f32 %v49, 0.0
  %v66 = vmax.f32 %v50, 0.0
  %v67 = vmax.f32 %v51, 0.0
  %v68 = vmax.f32 %v52, 0.0
  %v69 = vmax.f32 %v53, 0.0
  %v70 = vmax.f32 %v54, 0.0
  %v71 = vmax.f32 %v55, 0.0
  %v72 = vmax.f32 %v56, 0.0
  %v73 = vmax.f32 %v57, 0.0
  %v74 = vmax.f32 %v58, 0.0
  %v75 = vmax.f32 %v59, 0.0
  %v76 = vmax.f32 %v60, 0.0
  %v77 = vmax.f32 %v61, 0.0
  %v78 = vmax.f32 %v62, 0.0
  %v79 = vmax.f32 %v63, 0.0
  %v80 = vmax.f32 %v64, 0.0
  %v81 = vpack.c.bf16 %v66, %v65
  %v82 = vpack.c.bf16 %v68, %v67
  %v83 = vpack.c.bf16 %v70, %v69
  %v84 = vpack.c.bf16 %v72, %v71
  %v85 = vpack.c.bf16 %v74, %v73
  %v86 = vpack.c.bf16 %v76, %v75
  %v87 = vpack.c.bf16 %v78, %v77
  %v88 = vpack.c.bf16 %v80, %v79
  %v89 = vld [vmem:[#allocation2] sm:$0xff]
  %v90 = vld [vmem:[#allocation2 + $0x8] sm:$0xff]
  %v91 = vld [vmem:[#allocation2 + $0x10] sm:$0xff]
  %v92 = vld [vmem:[#allocation2 + $0x18] sm:$0xff]
  %v93 = vld [vmem:[#allocation2 + $0x20] sm:$0xff]
  %v94 = vld [vmem:[#allocation2 + $0x28] sm:$0xff]
  %v95 = vld [vmem:[#allocation2 + $0x30] sm:$0xff]
  %v96 = vld [vmem:[#allocation2 + $0x38] sm:$0xff]
  %v97 = vld [vmem:[#allocation2 + $0x40] sm:$0xff]
  %v98 = vld [vmem:[#allocation2 + $0x48] sm:$0xff]
  %v99 = vld [vmem:[#allocation2 + $0x50] sm:$0xff]
  %v100 = vld [vmem:[#allocation2 + $0x58] sm:$0xff]
  %v101 = vld [vmem:[#allocation2 + $0x60] sm:$0xff]
  %v102 = vld [vmem:[#allocation2 + $0x68] sm:$0xff]
  %v103 = vld [vmem:[#allocation2 + $0x70] sm:$0xff]
  %v104 = vld [vmem:[#allocation2 + $0x78] sm:$0xff]
  %v105 = vld [vmem:[%s1] sm:$0xf]
  %v106 = vld [vmem:[%s1 + $0x4] sm:$0xf]
  %v107 = vld [vmem:[%s1 + $0x8] sm:$0xf]
  %v108 = vld [vmem:[%s1 + $0xc] sm:$0xf]
  %v109 = vld [vmem:[%s1 + $0x10] sm:$0xf]
  %v110 = vld [vmem:[%s1 + $0x14] sm:$0xf]
  %v111 = vld [vmem:[%s1 + $0x18] sm:$0xf]
  %v112 = vld [vmem:[%s1 + $0x1c] sm:$0xf]
  %v113 = vld [vmem:[%s1 + $0x20] sm:$0xf]
  %v123 = vunpack.c.l.b16 %v105
  %v124 = vunpack.c.l.b16 %v106
  %v125 = vunpack.c.l.b16 %v107
  %v126 = vunpack.c.l.b16 %v108
  %v127 = vunpack.c.l.b16 %v109
  %v128 = vunpack.c.l.b16 %v110
  %v129 = vunpack.c.l.b16 %v111
  %v130 = vunpack.c.l.b16 %v112
  %v131 = vunpack.c.l.b16 %v113
  %v132 = vpack.c.b16 %v124, %v123
  %v133 = vpack.c.b16 %v126, %v125
  %v134 = vpack.c.b16 %v128, %v127
  %v135 = vpack.c.b16 %v130, %v129
  %v136 = vpack.c.b16 %v131, %v131
  %vm141 = vcmask 588800
  %v143 = vsel %vm141, %v81, 0
  %v146 = vsel %vm141, %v82, 0
  %v149 = vsel %vm141, %v83, 0
  %v152 = vsel %vm141, %v84, 0
  %v155 = vsel %vm141, %v85, 0
  %v158 = vsel %vm141, %v86, 0
  %v161 = vsel %vm141, %v87, 0
  %v164 = vsel %vm141, %v88, 0
  %vm166 = vcmask 1043456
  %v168 = vsel %vm166, %v136, 0
  %170 = vmatpush.bf16.msra.mxu0 0
  %171 = vmatpush.bf16.msra.mxu0 0
  %172 = vmatpush.bf16.msra.mxu0 0
  %173 = vmatpush.bf16.msra.mxu0 %v168
  %174 = vmatpush.bf16.msra.mxu0 %v135
  %175 = vmatpush.bf16.msra.mxu0 %v134
  %176 = vmatpush.bf16.msra.mxu0 %v133
  %177 = vmatpush.bf16.msra.mxu0 %v132
  %178 = vmatmul.bf16.gmra.mxu0 %v143
  %v179 = vpop.f32.mrf.mxu0
  %v180 = vadd.f32 0.0, %v179
  %v181 = vpop.f32.mrf.mxu0
  %v182 = vadd.f32 0.0, %v181
  %183 = vmatmul.bf16.gmra.mxu0 %v146
  %v184 = vpop.f32.mrf.mxu0
  %v185 = vadd.f32 0.0, %v184
  %v186 = vpop.f32.mrf.mxu0
  %v187 = vadd.f32 0.0, %v186
  %188 = vmatmul.bf16.gmra.mxu0 %v149
  %v189 = vpop.f32.mrf.mxu0
  %v190 = vadd.f32 0.0, %v189
  %v191 = vpop.f32.mrf.mxu0
  %v192 = vadd.f32 0.0, %v191
  %193 = vmatmul.bf16.gmra.mxu0 %v152
  %v194 = vpop.f32.mrf.mxu0
  %v195 = vadd.f32 0.0, %v194
  %v196 = vpop.f32.mrf.mxu0
  %v197 = vadd.f32 0.0, %v196
  %198 = vmatmul.bf16.gmra.mxu0 %v155
  %v199 = vpop.f32.mrf.mxu0
  %v200 = vadd.f32 0.0, %v199
  %v201 = vpop.f32.mrf.mxu0
  %v202 = vadd.f32 0.0, %v201
  %203 = vmatmul.bf16.gmra.mxu0 %v158
  %v204 = vpop.f32.mrf.mxu0
  %v205 = vadd.f32 0.0, %v204
  %v206 = vpop.f32.mrf.mxu0
  %v207 = vadd.f32 0.0, %v206
  %208 = vmatmul.bf16.gmra.mxu0 %v161
  %v209 = vpop.f32.mrf.mxu0
  %v210 = vadd.f32 0.0, %v209
  %v211 = vpop.f32.mrf.mxu0
  %v212 = vadd.f32 0.0, %v211
  %213 = vmatmul.bf16.gmra.mxu0 %v164
  %v214 = vpop.f32.mrf.mxu0
  %v215 = vadd.f32 0.0, %v214
  %v216 = vpop.f32.mrf.mxu0
  %v217 = vadd.f32 0.0, %v216
  %218 = vdwg.mxu0
  %v219 = vadd.f32 %v89, %v180
  %v220 = vadd.f32 %v90, %v182
  %v221 = vadd.f32 %v91, %v185
  %v222 = vadd.f32 %v92, %v187
  %v223 = vadd.f32 %v93, %v190
  %v224 = vadd.f32 %v94, %v192
  %v225 = vadd.f32 %v95, %v195
  %v226 = vadd.f32 %v96, %v197
  %v227 = vadd.f32 %v97, %v200
  %v228 = vadd.f32 %v98, %v202
  %v229 = vadd.f32 %v99, %v205
  %v230 = vadd.f32 %v100, %v207
  %v231 = vadd.f32 %v101, %v210
  %v232 = vadd.f32 %v102, %v212
  %v233 = vadd.f32 %v103, %v215
  %v234 = vadd.f32 %v104, %v217
  %vm235 = vcmask 64512
  %236 = vst.msk [vmem:[#allocation2] sm:$0xff] %vm235, %v219
  %237 = vst.msk [vmem:[#allocation2 + $0x8] sm:$0xff] %vm235, %v220
  %238 = vst.msk [vmem:[#allocation2 + $0x10] sm:$0xff] %vm235, %v221
  %239 = vst.msk [vmem:[#allocation2 + $0x18] sm:$0xff] %vm235, %v222
  %240 = vst.msk [vmem:[#allocation2 + $0x20] sm:$0xff] %vm235, %v223
  %241 = vst.msk [vmem:[#allocation2 + $0x28] sm:$0xff] %vm235, %v224
  %242 = vst.msk [vmem:[#allocation2 + $0x30] sm:$0xff] %vm235, %v225
  %243 = vst.msk [vmem:[#allocation2 + $0x38] sm:$0xff] %vm235, %v226
  %244 = vst.msk [vmem:[#allocation2 + $0x40] sm:$0xff] %vm235, %v227
  %245 = vst.msk [vmem:[#allocation2 + $0x48] sm:$0xff] %vm235, %v228
  %246 = vst.msk [vmem:[#allocation2 + $0x50] sm:$0xff] %vm235, %v229
  %247 = vst.msk [vmem:[#allocation2 + $0x58] sm:$0xff] %vm235, %v230
  %248 = vst.msk [vmem:[#allocation2 + $0x60] sm:$0xff] %vm235, %v231
  %249 = vst.msk [vmem:[#allocation2 + $0x68] sm:$0xff] %vm235, %v232
  %250 = vst.msk [vmem:[#allocation2 + $0x70] sm:$0xff] %vm235, %v233
  %251 = vst.msk [vmem:[#allocation2 + $0x78] sm:$0xff] %vm235, %v234
  // Predicated region
  $region14: #{_lambda_.88} parent=0 // pred_check
    %p252 = pneg %p12
  $region15: #{_lambda_.88} parent=0 // pred_check_branch
    %254 = sbr.rel (%p252) target = $region17
  $region16: #{_lambda_.88} parent=0 // pred_region
    %v255 = vld [vmem:[#allocation2] sm:$0xff]
    %v256 = vld [vmem:[#allocation2 + $0x8] sm:$0xff]
    %v257 = vld [vmem:[#allocation2 + $0x10] sm:$0xff]
    %v258 = vld [vmem:[#allocation2 + $0x18] sm:$0xff]
    %v259 = vld [vmem:[#allocation2 + $0x20] sm:$0xff]
    %v260 = vld [vmem:[#allocation2 + $0x28] sm:$0xff]
    %v261 = vld [vmem:[#allocation2 + $0x30] sm:$0xff]
    %v262 = vld [vmem:[#allocation2 + $0x38] sm:$0xff]
    %v263 = vld [vmem:[#allocation2 + $0x40] sm:$0xff]
    %v264 = vld [vmem:[#allocation2 + $0x48] sm:$0xff]
    %v265 = vld [vmem:[#allocation2 + $0x50] sm:$0xff]
    %v266 = vld [vmem:[#allocation2 + $0x58] sm:$0xff]
    %v267 = vld [vmem:[#allocation2 + $0x60] sm:$0xff]
    %v268 = vld [vmem:[#allocation2 + $0x68] sm:$0xff]
    %v269 = vld [vmem:[#allocation2 + $0x70] sm:$0xff]
    %v270 = vld [vmem:[#allocation2 + $0x78] sm:$0xff]
    %v271 = vsel %vm235, %v255, 0.0
    %v272 = vsel %vm235, %v256, 0.0
    %v273 = vadd.f32 %v271, %v272
    %v274 = vsel %vm235, %v257, 0.0
    %v275 = vadd.f32 %v273, %v274
    %v276 = vsel %vm235, %v258, 0.0
    %v277 = vadd.f32 %v275, %v276
    %v278 = vsel %vm235, %v259, 0.0
    %v279 = vadd.f32 %v277, %v278
    %v280 = vsel %vm235, %v260, 0.0
    %v281 = vadd.f32 %v279, %v280
    %v282 = vsel %vm235, %v261, 0.0
    %v283 = vadd.f32 %v281, %v282
    %v284 = vsel %vm235, %v262, 0.0
    %v285 = vadd.f32 %v283, %v284
    %v286 = vsel %vm235, %v263, 0.0
    %v287 = vadd.f32 %v285, %v286
    %v288 = vsel %vm235, %v264, 0.0
    %v289 = vadd.f32 %v287, %v288
    %v290 = vsel %vm235, %v265, 0.0
    %v291 = vadd.f32 %v289, %v290
    %v292 = vsel %vm235, %v266, 0.0
    %v293 = vadd.f32 %v291, %v292
    %v294 = vsel %vm235, %v267, 0.0
    %v295 = vadd.f32 %v293, %v294
    %v296 = vsel %vm235, %v268, 0.0
    %v297 = vadd.f32 %v295, %v296
    %v298 = vsel %vm235, %v269, 0.0
    %v299 = vadd.f32 %v297, %v298
    %v300 = vsel %vm235, %v270, 0.0
    %v301 = vadd.f32 %v299, %v300
    %v302 = vrot.slane %v301, 4
    %v303 = vadd.f32 %v301, %v302
    %v304 = vrot.slane %v303, 2
    %v305 = vadd.f32 %v303, %v304
    %v306 = vrot.slane %v305, 1
    %v307 = vadd.f32 %v305, %v306
    %v308 = vmul.f32 %v307, 0.0078125
    %v309 = vsub.f32 %v255, %v308
    %v310 = vsub.f32 %v256, %v308
    %v311 = vsub.f32 %v257, %v308
    %v312 = vsub.f32 %v258, %v308
    %v313 = vsub.f32 %v259, %v308
    %v314 = vsub.f32 %v260, %v308
    %v315 = vsub.f32 %v261, %v308
    %v316 = vsub.f32 %v262, %v308
    %v317 = vsub.f32 %v263, %v308
    %v318 = vsub.f32 %v264, %v308
    %v319 = vsub.f32 %v265, %v308
    %v320 = vsub.f32 %v266, %v308
    %v321 = vsub.f32 %v267, %v308
    %v322 = vsub.f32 %v268, %v308
    %v323 = vsub.f32 %v269, %v308
    %v324 = vsub.f32 %v270, %v308
    %v325 = vmul.f32 %v309, %v309
    %v326 = vmul.f32 %v310, %v310
    %v327 = vmul.f32 %v311, %v311
    %v328 = vmul.f32 %v312, %v312
    %v329 = vmul.f32 %v313, %v313
    %v330 = vmul.f32 %v314, %v314
    %v331 = vmul.f32 %v315, %v315
    %v332 = vmul.f32 %v316, %v316
    %v333 = vmul.f32 %v317, %v317
    %v334 = vmul.f32 %v318, %v318
    %v335 = vmul.f32 %v319, %v319
    %v336 = vmul.f32 %v320, %v320
    %v337 = vmul.f32 %v321, %v321
    %v338 = vmul.f32 %v322, %v322
    %v339 = vmul.f32 %v323, %v323
    %v340 = vmul.f32 %v324, %v324
    %v341 = vsel %vm235, %v325, 0.0
    %v342 = vsel %vm235, %v326, 0.0
    %v343 = vadd.f32 %v341, %v342
    %v344 = vsel %vm235, %v327, 0.0
    %v345 = vadd.f32 %v343, %v344
    %v346 = vsel %vm235, %v328, 0.0
    %v347 = vadd.f32 %v345, %v346
    %v348 = vsel %vm235, %v329, 0.0
    %v349 = vadd.f32 %v347, %v348
    %v350 = vsel %vm235, %v330, 0.0
    %v351 = vadd.f32 %v349, %v350
    %v352 = vsel %vm235, %v331, 0.0
    %v353 = vadd.f32 %v351, %v352
    %v354 = vsel %vm235, %v332, 0.0
    %v355 = vadd.f32 %v353, %v354
    %v356 = vsel %vm235, %v333, 0.0
    %v357 = vadd.f32 %v355, %v356
    %v358 = vsel %vm235, %v334, 0.0
    %v359 = vadd.f32 %v357, %v358
    %v360 = vsel %vm235, %v335, 0.0
    %v361 = vadd.f32 %v359, %v360
    %v362 = vsel %vm235, %v336, 0.0
    %v363 = vadd.f32 %v361, %v362
    %v364 = vsel %vm235, %v337, 0.0
    %v365 = vadd.f32 %v363, %v364
    %v366 = vsel %vm235, %v338, 0.0
    %v367 = vadd.f32 %v365, %v366
    %v368 = vsel %vm235, %v339, 0.0
    %v369 = vadd.f32 %v367, %v368
    %v370 = vsel %vm235, %v340, 0.0
    %v371 = vadd.f32 %v369, %v370
    %v372 = vrot.slane %v371, 4
    %v373 = vadd.f32 %v371, %v372
    %v374 = vrot.slane %v373, 2
    %v375 = vadd.f32 %v373, %v374
    %v376 = vrot.slane %v375, 1
    %v377 = vadd.f32 %v375, %v376
    %v378 = vmul.f32 %v377, 0.0078125
    %v379 = vadd.f32 %v378, 1e-05
    %v380 = vrsqrt.pop %v379
    %v381 = vmul.f32 %v380, %v379
    %v382 = vmul.f32 %v381, %v380
    %v383 = vmul.f32 0.5, %v382
    %v384 = vsub.f32 1.5, %v383
    %v385 = vmul.f32 %v380, %v384
    %vm386 = vweird.f32 %v379
    %vm387 = vweird.f32 %v380
    %vm388 = vmor %vm386, %vm387
    %v389 = vsel %vm388, %v380, %v385
    %v390 = vmul.f32 %v309, %v389
    %v391 = vmul.f32 %v310, %v389
    %v392 = vmul.f32 %v311, %v389
    %v393 = vmul.f32 %v312, %v389
    %v394 = vmul.f32 %v313, %v389
    %v395 = vmul.f32 %v314, %v389
    %v396 = vmul.f32 %v315, %v389
    %v397 = vmul.f32 %v316, %v389
    %v398 = vmul.f32 %v317, %v389
    %v399 = vmul.f32 %v318, %v389
    %v400 = vmul.f32 %v319, %v389
    %v401 = vmul.f32 %v320, %v389
    %v402 = vmul.f32 %v321, %v389
    %v403 = vmul.f32 %v322, %v389
    %v404 = vmul.f32 %v323, %v389
    %v405 = vmul.f32 %v324, %v389
    %v406 = vpack.c.bf16 %v390, %v390
    %v407 = vpack.c.bf16 %v391, %v391
    %v408 = vpack.c.bf16 %v392, %v392
    %v409 = vpack.c.bf16 %v393, %v393
    %v410 = vpack.c.bf16 %v394, %v394
    %v411 = vpack.c.bf16 %v395, %v395
    %v412 = vpack.c.bf16 %v396, %v396
    %v413 = vpack.c.bf16 %v397, %v397
    %v414 = vpack.c.bf16 %v398, %v398
    %v415 = vpack.c.bf16 %v399, %v399
    %v416 = vpack.c.bf16 %v400, %v400
    %v417 = vpack.c.bf16 %v401, %v401
    %v418 = vpack.c.bf16 %v402, %v402
    %v419 = vpack.c.bf16 %v403, %v403
    %v420 = vpack.c.bf16 %v404, %v404
    %v421 = vpack.c.bf16 %v405, %v405
    %vm422 = vcmask 60416
    %423 = vst.msk [vmem:[%s2] sm:$0xf] %vm422, %v406
    %424 = vst.msk [vmem:[%s2 + $0x4] sm:$0xf] %vm422, %v407
    %425 = vst.msk [vmem:[%s2 + $0x8] sm:$0xf] %vm422, %v408
    %426 = vst.msk [vmem:[%s2 + $0xc] sm:$0xf] %vm422, %v409
    %427 = vst.msk [vmem:[%s2 + $0x10] sm:$0xf] %vm422, %v410
    %428 = vst.msk [vmem:[%s2 + $0x14] sm:$0xf] %vm422, %v411
    %429 = vst.msk [vmem:[%s2 + $0x18] sm:$0xf] %vm422, %v412
    %430 = vst.msk [vmem:[%s2 + $0x1c] sm:$0xf] %vm422, %v413
    %431 = vst.msk [vmem:[%s2 + $0x20] sm:$0xf] %vm422, %v414
    %432 = vst.msk [vmem:[%s2 + $0x24] sm:$0xf] %vm422, %v415
    %433 = vst.msk [vmem:[%s2 + $0x28] sm:$0xf] %vm422, %v416
    %434 = vst.msk [vmem:[%s2 + $0x2c] sm:$0xf] %vm422, %v417
    %435 = vst.msk [vmem:[%s2 + $0x30] sm:$0xf] %vm422, %v418
    %436 = vst.msk [vmem:[%s2 + $0x34] sm:$0xf] %vm422, %v419
    %437 = vst.msk [vmem:[%s2 + $0x38] sm:$0xf] %vm422, %v420
    %438 = vst.msk [vmem:[%s2 + $0x3c] sm:$0xf] %vm422, %v421
  $region17: #{_lambda_.88} parent=0 // pred_fallthru
    _
  // Predicated region
  $region18: #{_lambda_.88} parent=0 // pred_check
    _
  $region19: #{_lambda_.88} parent=0 // pred_check_branch
    %440 = sbr.rel (0) target = $region21
  $region20: #{_lambda_.88} parent=0 // pred_region
    _
  $region21: #{_lambda_.88} parent=0 // pred_fallthru
    _
  // Predicated region
  $region22: #{_lambda_.88} parent=0 // pred_check
    _
  $region23: #{_lambda_.88} parent=0 // pred_check_branch
    %442 = sbr.rel (0) target = $region25
  $region24: #{_lambda_.88} parent=0 // pred_region
    _
  $region25: #{_lambda_.88} parent=0 // pred_fallthru
    _

// kernel: _lambda_.78
$region0: #{_lambda_.78}
  #allocation0 [shape = 'u32[]', space=smem, size = 0x4, offset = 0x4, fixed_abs, tag = 'smem constant byte address 0x4 - core index']
  #allocation1 [shape = 'u32[72,128]{1,0:T(1,128)}', space=vmem, size = 0x9000, scoped, tag = 'internal scratch']
  %s0 = inlined_call_operand.vmem [shape: bf16[4,2,512], index: 0, kind: input, shape index: {}]
  %s1 = inlined_call_operand.vmem [shape: f32[2,4], index: 1, kind: input, shape index: {}]
  %s2 = inlined_call_operand.vmem [shape: bf16[2,512], index: 2, kind: output, shape index: {}]
  %s3 = sld [smem:[#allocation0]]
  $region18: #{_lambda_.78} parent=0
    _
  %s5 = ssub.s32 1, %s3
  %s6 = scalar_select 0, %s5, %s3
  // Predicated region
  $region2: #{_lambda_.78} parent=0 // pred_check
    _
  $region3: #{_lambda_.78} parent=0 // pred_check_branch
    %8 = sbr.rel (0) target = $region5
  $region4: #{_lambda_.78} parent=0 // pred_region
    _
  $region5: #{_lambda_.78} parent=0 // pred_fallthru
    _
  // Predicated region
  $region6: #{_lambda_.78} parent=0 // pred_check
    _
  $region7: #{_lambda_.78} parent=0 // pred_check_branch
    %10 = sbr.rel (0) target = $region9
  $region8: #{_lambda_.78} parent=0 // pred_region
    _
  $region9: #{_lambda_.78} parent=0 // pred_fallthru
    _
  %v11 = vld [vmem:[%s1] sm:$0x3]
  %v12 = vld [vmem:[%s0] sm:$0xf]
  %v13 = vunpack.c.l.bf16 %v12
  %15 = vset.pattern.permute.xlu0 0
  %16 = vperm.xlu0 %15, %v11
  %v17 = vpop.permute.xlu0 %16
  %20 = vst [vmem:[#allocation1] ss:$4 sm:$0xff] %v13
  %v21 = vld.sshfl [vmem:[#allocation1] sm:$0xff pattern:$0x73625140]
  %v22 = vld.sshfl [vmem:[#allocation1 + $0x8] sm:$0xff pattern:$0x73625140]
  %v23 = vld.sshfl [vmem:[#allocation1 + $0x10] sm:$0xff pattern:$0x73625140]
  %v24 = vld.sshfl [vmem:[#allocation1 + $0x18] sm:$0xff pattern:$0x73625140]
  %v29 = vmul.f32 %v17, %v21
  %v30 = vmul.f32 %v17, %v22
  %v31 = vmul.f32 %v17, %v23
  %v32 = vmul.f32 %v17, %v24
  %v33 = vld [vmem:[%s1] sm:$0x3]
  %s34 = scalar_lea.vmem %s0, 4
  %v35 = vld [vmem:[%s34] sm:$0xf]
  %v36 = vunpack.c.l.bf16 %v35
  %38 = vset.pattern.permute.xlu0 1
  %39 = vperm.xlu0 %38, %v33
  %v40 = vpop.permute.xlu0 %39
  %43 = vst [vmem:[#allocation1] ss:$4 sm:$0xff] %v36
  %v44 = vld.sshfl [vmem:[#allocation1] sm:$0xff pattern:$0x73625140]
  %v45 = vld.sshfl [vmem:[#allocation1 + $0x8] sm:$0xff pattern:$0x73625140]
  %v46 = vld.sshfl [vmem:[#allocation1 + $0x10] sm:$0xff pattern:$0x73625140]
  %v47 = vld.sshfl [vmem:[#allocation1 + $0x18] sm:$0xff pattern:$0x73625140]
  %v52 = vmul.f32 %v40, %v44
  %v53 = vmul.f32 %v40, %v45
  %v54 = vmul.f32 %v40, %v46
  %v55 = vmul.f32 %v40, %v47
  %v56 = vadd.f32 %v29, %v52
  %v57 = vadd.f32 %v30, %v53
  %v58 = vadd.f32 %v31, %v54
  %v59 = vadd.f32 %v32, %v55
  %v60 = vld [vmem:[%s1] sm:$0x3]
  %s61 = scalar_lea.vmem %s0, 8
  %v62 = vld [vmem:[%s61] sm:$0xf]
  %v63 = vunpack.c.l.bf16 %v62
  %65 = vset.pattern.permute.xlu0 2
  %66 = vperm.xlu0 %65, %v60
  %v67 = vpop.permute.xlu0 %66
  %70 = vst [vmem:[#allocation1] ss:$4 sm:$0xff] %v63
  %v71 = vld.sshfl [vmem:[#allocation1] sm:$0xff pattern:$0x73625140]
  %v72 = vld.sshfl [vmem:[#allocation1 + $0x8] sm:$0xff pattern:$0x73625140]
  %v73 = vld.sshfl [vmem:[#allocation1 + $0x10] sm:$0xff pattern:$0x73625140]
  %v74 = vld.sshfl [vmem:[#allocation1 + $0x18] sm:$0xff pattern:$0x73625140]
  %v79 = vmul.f32 %v67, %v71
  %v80 = vmul.f32 %v67, %v72
  %v81 = vmul.f32 %v67, %v73
  %v82 = vmul.f32 %v67, %v74
  %v83 = vadd.f32 %v56, %v79
  %v84 = vadd.f32 %v57, %v80
  %v85 = vadd.f32 %v58, %v81
  %v86 = vadd.f32 %v59, %v82
  %v87 = vld [vmem:[%s1] sm:$0x3]
  %s88 = scalar_lea.vmem %s0, 12
  %v89 = vld [vmem:[%s88] sm:$0xf]
  %v90 = vunpack.c.l.bf16 %v89
  %92 = vset.pattern.permute.xlu0 3
  %93 = vperm.xlu0 %92, %v87
  %v94 = vpop.permute.xlu0 %93
  %97 = vst [vmem:[#allocation1] ss:$4 sm:$0xff] %v90
  %v98 = vld.sshfl [vmem:[#allocation1] sm:$0xff pattern:$0x73625140]
  %v99 = vld.sshfl [vmem:[#allocation1 + $0x8] sm:$0xff pattern:$0x73625140]
  %v100 = vld.sshfl [vmem:[#allocation1 + $0x10] sm:$0xff pattern:$0x73625140]
  %v101 = vld.sshfl [vmem:[#allocation1 + $0x18] sm:$0xff pattern:$0x73625140]
  %v106 = vmul.f32 %v94, %v98
  %v107 = vmul.f32 %v94, %v99
  %v108 = vmul.f32 %v94, %v100
  %v109 = vmul.f32 %v94, %v101
  %v110 = vadd.f32 %v83, %v106
  %v111 = vadd.f32 %v84, %v107
  %v112 = vadd.f32 %v85, %v108
  %v113 = vadd.f32 %v86, %v109
  %v114 = vpack.c.bf16 %v111, %v110
  %v115 = vpack.c.bf16 %v113, %v112
  %v118 = vrot.slane %v114, 3
  %v119 = vrot.slane %v115, 6
  %v120 = vrot.slane %v115, 1
  %vm121 = vcmask 1040384
  %v124 = vsel %vm121, %v114, %v118
  %vm125 = vcmask 1042434
  %v128 = vsel %vm125, %v119, %v120
  %vm129 = vcmask 1041408
  %v130 = vsel %vm129, %v124, %v128
  %132 = vst [vmem:[%s2] sm:$0xf] %v130
  // Predicated region
  $region10: #{_lambda_.78} parent=0 // pred_check
    _
  $region11: #{_lambda_.78} parent=0 // pred_check_branch
    %134 = sbr.rel (0) target = $region13
  $region12: #{_lambda_.78} parent=0 // pred_region
    _
  $region13: #{_lambda_.78} parent=0 // pred_fallthru
    _
  // Predicated region
  $region14: #{_lambda_.78} parent=0 // pred_check
    _
  $region15: #{_lambda_.78} parent=0 // pred_check_branch
    %136 = sbr.rel (0) target = $region17
  $region16: #{_lambda_.78} parent=0 // pred_region
    _
  $region17: #{_lambda_.78} parent=0 // pred_fallthru
    _

// kernel: _lambda_.87
$region0: #{_lambda_.87}
  #allocation0 [shape = 'u32[]', space=smem, size = 0x4, offset = 0x4, fixed_abs, tag = 'smem constant byte address 0x4 - core index']
  #allocation1 [shape = 'u32[72,128]{1,0:T(1,128)}', space=vmem, size = 0x9000, scoped, tag = 'internal scratch']
  #allocation2 [shape = 'f32[128,4]{1,0:T(8,128)}', space=vmem, size = 0x10000, scoped, tag = 'scratch operand']
  %s0 = inlined_call_operand.vmem [shape: bf16[128,8], index: 0, kind: input, shape index: {}]
  %s1 = inlined_call_operand.vmem [shape: bf16[8,4], index: 1, kind: input, shape index: {}]
  %s2 = inlined_call_operand.vmem [shape: bf16[128,4], index: 2, kind: output, shape index: {}]
  %s3 = sld [smem:[#allocation0]]
  $region26: #{_lambda_.87} parent=0
    _
  %s5 = ssub.s32 1, %s3
  %s6 = scalar_select 0, %s5, %s3
  // Predicated region
  $region2: #{_lambda_.87} parent=0 // pred_check
    _
  $region3: #{_lambda_.87} parent=0 // pred_check_branch
    %8 = sbr.rel (0) target = $region5
  $region4: #{_lambda_.87} parent=0 // pred_region
    _
  $region5: #{_lambda_.87} parent=0 // pred_fallthru
    _
  // Predicated region
  $region6: #{_lambda_.87} parent=0 // pred_check
    _
  $region7: #{_lambda_.87} parent=0 // pred_check_branch
    %10 = sbr.rel (0) target = $region9
  $region8: #{_lambda_.87} parent=0 // pred_region
    _
  $region9: #{_lambda_.87} parent=0 // pred_fallthru
    _
  %p12 = scmp.eq.s32.totalorder 0, 0
  // Predicated region
  $region10: #{_lambda_.87} parent=0 // pred_check
    %p13 = pneg %p12
  $region11: #{_lambda_.87} parent=0 // pred_check_branch
    %15 = sbr.rel (%p13) target = $region13
  $region12: #{_lambda_.87} parent=0 // pred_region
    %vm16 = vcmask 31744
    %17 = vst.msk [vmem:[#allocation2] sm:$0xff] %vm16, 0.0
    %18 = vst.msk [vmem:[#allocation2 + $0x8] sm:$0xff] %vm16, 0.0
    %19 = vst.msk [vmem:[#allocation2 + $0x10] sm:$0xff] %vm16, 0.0
    %20 = vst.msk [vmem:[#allocation2 + $0x18] sm:$0xff] %vm16, 0.0
    %21 = vst.msk [vmem:[#allocation2 + $0x20] sm:$0xff] %vm16, 0.0
    %22 = vst.msk [vmem:[#allocation2 + $0x28] sm:$0xff] %vm16, 0.0
    %23 = vst.msk [vmem:[#allocation2 + $0x30] sm:$0xff] %vm16, 0.0
    %24 = vst.msk [vmem:[#allocation2 + $0x38] sm:$0xff] %vm16, 0.0
    %25 = vst.msk [vmem:[#allocation2 + $0x40] sm:$0xff] %vm16, 0.0
    %26 = vst.msk [vmem:[#allocation2 + $0x48] sm:$0xff] %vm16, 0.0
    %27 = vst.msk [vmem:[#allocation2 + $0x50] sm:$0xff] %vm16, 0.0
    %28 = vst.msk [vmem:[#allocation2 + $0x58] sm:$0xff] %vm16, 0.0
    %29 = vst.msk [vmem:[#allocation2 + $0x60] sm:$0xff] %vm16, 0.0
    %30 = vst.msk [vmem:[#allocation2 + $0x68] sm:$0xff] %vm16, 0.0
    %31 = vst.msk [vmem:[#allocation2 + $0x70] sm:$0xff] %vm16, 0.0
    %32 = vst.msk [vmem:[#allocation2 + $0x78] sm:$0xff] %vm16, 0.0
  $region13: #{_lambda_.87} parent=0 // pred_fallthru
    _
  %v33 = vld [vmem:[%s0] sm:$0xf]
  %v34 = vld [vmem:[%s0 + $0x4] sm:$0xf]
  %v35 = vld [vmem:[%s0 + $0x8] sm:$0xf]
  %v36 = vld [vmem:[%s0 + $0xc] sm:$0xf]
  %v37 = vld [vmem:[%s0 + $0x10] sm:$0xf]
  %v38 = vld [vmem:[%s0 + $0x14] sm:$0xf]
  %v39 = vld [vmem:[%s0 + $0x18] sm:$0xf]
  %v40 = vld [vmem:[%s0 + $0x1c] sm:$0xf]
  %v41 = vld [vmem:[%s0 + $0x20] sm:$0xf]
  %v42 = vld [vmem:[%s0 + $0x24] sm:$0xf]
  %v43 = vld [vmem:[%s0 + $0x28] sm:$0xf]
  %v44 = vld [vmem:[%s0 + $0x2c] sm:$0xf]
  %v45 = vld [vmem:[%s0 + $0x30] sm:$0xf]
  %v46 = vld [vmem:[%s0 + $0x34] sm:$0xf]
  %v47 = vld [vmem:[%s0 + $0x38] sm:$0xf]
  %v48 = vld [vmem:[%s0 + $0x3c] sm:$0xf]
  %v49 = vunpack.c.l.bf16 %v33
  %v50 = vunpack.c.l.bf16 %v34
  %v51 = vunpack.c.l.bf16 %v35
  %v52 = vunpack.c.l.bf16 %v36
  %v53 = vunpack.c.l.bf16 %v37
  %v54 = vunpack.c.l.bf16 %v38
  %v55 = vunpack.c.l.bf16 %v39
  %v56 = vunpack.c.l.bf16 %v40
  %v57 = vunpack.c.l.bf16 %v41
  %v58 = vunpack.c.l.bf16 %v42
  %v59 = vunpack.c.l.bf16 %v43
  %v60 = vunpack.c.l.bf16 %v44
  %v61 = vunpack.c.l.bf16 %v45
  %v62 = vunpack.c.l.bf16 %v46
  %v63 = vunpack.c.l.bf16 %v47
  %v64 = vunpack.c.l.bf16 %v48
  %v65 = vmax.f32 %v49, 0.0
  %v66 = vmax.f32 %v50, 0.0
  %v67 = vmax.f32 %v51, 0.0
  %v68 = vmax.f32 %v52, 0.0
  %v69 = vmax.f32 %v53, 0.0
  %v70 = vmax.f32 %v54, 0.0
  %v71 = vmax.f32 %v55, 0.0
  %v72 = vmax.f32 %v56, 0.0
  %v73 = vmax.f32 %v57, 0.0
  %v74 = vmax.f32 %v58, 0.0
  %v75 = vmax.f32 %v59, 0.0
  %v76 = vmax.f32 %v60, 0.0
  %v77 = vmax.f32 %v61, 0.0
  %v78 = vmax.f32 %v62, 0.0
  %v79 = vmax.f32 %v63, 0.0
  %v80 = vmax.f32 %v64, 0.0
  %v81 = vpack.c.bf16 %v66, %v65
  %v82 = vpack.c.bf16 %v68, %v67
  %v83 = vpack.c.bf16 %v70, %v69
  %v84 = vpack.c.bf16 %v72, %v71
  %v85 = vpack.c.bf16 %v74, %v73
  %v86 = vpack.c.bf16 %v76, %v75
  %v87 = vpack.c.bf16 %v78, %v77
  %v88 = vpack.c.bf16 %v80, %v79
  %v89 = vld [vmem:[#allocation2] sm:$0xff]
  %v90 = vld [vmem:[#allocation2 + $0x8] sm:$0xff]
  %v91 = vld [vmem:[#allocation2 + $0x10] sm:$0xff]
  %v92 = vld [vmem:[#allocation2 + $0x18] sm:$0xff]
  %v93 = vld [vmem:[#allocation2 + $0x20] sm:$0xff]
  %v94 = vld [vmem:[#allocation2 + $0x28] sm:$0xff]
  %v95 = vld [vmem:[#allocation2 + $0x30] sm:$0xff]
  %v96 = vld [vmem:[#allocation2 + $0x38] sm:$0xff]
  %v97 = vld [vmem:[#allocation2 + $0x40] sm:$0xff]
  %v98 = vld [vmem:[#allocation2 + $0x48] sm:$0xff]
  %v99 = vld [vmem:[#allocation2 + $0x50] sm:$0xff]
  %v100 = vld [vmem:[#allocation2 + $0x58] sm:$0xff]
  %v101 = vld [vmem:[#allocation2 + $0x60] sm:$0xff]
  %v102 = vld [vmem:[#allocation2 + $0x68] sm:$0xff]
  %v103 = vld [vmem:[#allocation2 + $0x70] sm:$0xff]
  %v104 = vld [vmem:[#allocation2 + $0x78] sm:$0xff]
  %v105 = vld [vmem:[%s1] sm:$0xf]
  %vm106 = vcmask 64512
  %v108 = vsel %vm106, %v81, 0
  %v111 = vsel %vm106, %v82, 0
  %v114 = vsel %vm106, %v83, 0
  %v117 = vsel %vm106, %v84, 0
  %v120 = vsel %vm106, %v85, 0
  %v123 = vsel %vm106, %v86, 0
  %v126 = vsel %vm106, %v87, 0
  %v129 = vsel %vm106, %v88, 0
  %vm131 = vcmask 1043456
  %v133 = vsel %vm131, %v105, 0
  %135 = vmatpush.bf16.msra.mxu0 0
  %136 = vmatpush.bf16.msra.mxu0 0
  %137 = vmatpush.bf16.msra.mxu0 0
  %138 = vmatpush.bf16.msra.mxu0 0
  %139 = vmatpush.bf16.msra.mxu0 0
  %140 = vmatpush.bf16.msra.mxu0 0
  %141 = vmatpush.bf16.msra.mxu0 0
  %142 = vmatpush.bf16.msra.mxu0 %v133
  %143 = vmatmul.bf16.gmra.mxu0 %v108
  %v144 = vpop.f32.mrf.mxu0
  %v145 = vadd.f32 0.0, %v144
  %v146 = vpop.f32.mrf.mxu0
  %v147 = vadd.f32 0.0, %v146
  %148 = vmatmul.bf16.gmra.mxu0 %v111
  %v149 = vpop.f32.mrf.mxu0
  %v150 = vadd.f32 0.0, %v149
  %v151 = vpop.f32.mrf.mxu0
  %v152 = vadd.f32 0.0, %v151
  %153 = vmatmul.bf16.gmra.mxu0 %v114
  %v154 = vpop.f32.mrf.mxu0
  %v155 = vadd.f32 0.0, %v154
  %v156 = vpop.f32.mrf.mxu0
  %v157 = vadd.f32 0.0, %v156
  %158 = vmatmul.bf16.gmra.mxu0 %v117
  %v159 = vpop.f32.mrf.mxu0
  %v160 = vadd.f32 0.0, %v159
  %v161 = vpop.f32.mrf.mxu0
  %v162 = vadd.f32 0.0, %v161
  %163 = vmatmul.bf16.gmra.mxu0 %v120
  %v164 = vpop.f32.mrf.mxu0
  %v165 = vadd.f32 0.0, %v164
  %v166 = vpop.f32.mrf.mxu0
  %v167 = vadd.f32 0.0, %v166
  %168 = vmatmul.bf16.gmra.mxu0 %v123
  %v169 = vpop.f32.mrf.mxu0
  %v170 = vadd.f32 0.0, %v169
  %v171 = vpop.f32.mrf.mxu0
  %v172 = vadd.f32 0.0, %v171
  %173 = vmatmul.bf16.gmra.mxu0 %v126
  %v174 = vpop.f32.mrf.mxu0
  %v175 = vadd.f32 0.0, %v174
  %v176 = vpop.f32.mrf.mxu0
  %v177 = vadd.f32 0.0, %v176
  %178 = vmatmul.bf16.gmra.mxu0 %v129
  %v179 = vpop.f32.mrf.mxu0
  %v180 = vadd.f32 0.0, %v179
  %v181 = vpop.f32.mrf.mxu0
  %v182 = vadd.f32 0.0, %v181
  %183 = vdwg.mxu0
  %v184 = vadd.f32 %v89, %v145
  %v185 = vadd.f32 %v90, %v147
  %v186 = vadd.f32 %v91, %v150
  %v187 = vadd.f32 %v92, %v152
  %v188 = vadd.f32 %v93, %v155
  %v189 = vadd.f32 %v94, %v157
  %v190 = vadd.f32 %v95, %v160
  %v191 = vadd.f32 %v96, %v162
  %v192 = vadd.f32 %v97, %v165
  %v193 = vadd.f32 %v98, %v167
  %v194 = vadd.f32 %v99, %v170
  %v195 = vadd.f32 %v100, %v172
  %v196 = vadd.f32 %v101, %v175
  %v197 = vadd.f32 %v102, %v177
  %v198 = vadd.f32 %v103, %v180
  %v199 = vadd.f32 %v104, %v182
  %vm200 = vcmask 31744
  %201 = vst.msk [vmem:[#allocation2] sm:$0xff] %vm200, %v184
  %202 = vst.msk [vmem:[#allocation2 + $0x8] sm:$0xff] %vm200, %v185
  %203 = vst.msk [vmem:[#allocation2 + $0x10] sm:$0xff] %vm200, %v186
  %204 = vst.msk [vmem:[#allocation2 + $0x18] sm:$0xff] %vm200, %v187
  %205 = vst.msk [vmem:[#allocation2 + $0x20] sm:$0xff] %vm200, %v188
  %206 = vst.msk [vmem:[#allocation2 + $0x28] sm:$0xff] %vm200, %v189
  %207 = vst.msk [vmem:[#allocation2 + $0x30] sm:$0xff] %vm200, %v190
  %208 = vst.msk [vmem:[#allocation2 + $0x38] sm:$0xff] %vm200, %v191
  %209 = vst.msk [vmem:[#allocation2 + $0x40] sm:$0xff] %vm200, %v192
  %210 = vst.msk [vmem:[#allocation2 + $0x48] sm:$0xff] %vm200, %v193
  %211 = vst.msk [vmem:[#allocation2 + $0x50] sm:$0xff] %vm200, %v194
  %212 = vst.msk [vmem:[#allocation2 + $0x58] sm:$0xff] %vm200, %v195
  %213 = vst.msk [vmem:[#allocation2 + $0x60] sm:$0xff] %vm200, %v196
  %214 = vst.msk [vmem:[#allocation2 + $0x68] sm:$0xff] %vm200, %v197
  %215 = vst.msk [vmem:[#allocation2 + $0x70] sm:$0xff] %vm200, %v198
  %216 = vst.msk [vmem:[#allocation2 + $0x78] sm:$0xff] %vm200, %v199
  // Predicated region
  $region14: #{_lambda_.87} parent=0 // pred_check
    %p217 = pneg %p12
  $region15: #{_lambda_.87} parent=0 // pred_check_branch
    %219 = sbr.rel (%p217) target = $region17
  $region16: #{_lambda_.87} parent=0 // pred_region
    %v220 = vld [vmem:[#allocation2] sm:$0xff]
    %v221 = vld [vmem:[#allocation2 + $0x8] sm:$0xff]
    %v222 = vld [vmem:[#allocation2 + $0x10] sm:$0xff]
    %v223 = vld [vmem:[#allocation2 + $0x18] sm:$0xff]
    %v224 = vld [vmem:[#allocation2 + $0x20] sm:$0xff]
    %v225 = vld [vmem:[#allocation2 + $0x28] sm:$0xff]
    %v226 = vld [vmem:[#allocation2 + $0x30] sm:$0xff]
    %v227 = vld [vmem:[#allocation2 + $0x38] sm:$0xff]
    %v228 = vld [vmem:[#allocation2 + $0x40] sm:$0xff]
    %v229 = vld [vmem:[#allocation2 + $0x48] sm:$0xff]
    %v230 = vld [vmem:[#allocation2 + $0x50] sm:$0xff]
    %v231 = vld [vmem:[#allocation2 + $0x58] sm:$0xff]
    %v232 = vld [vmem:[#allocation2 + $0x60] sm:$0xff]
    %v233 = vld [vmem:[#allocation2 + $0x68] sm:$0xff]
    %v234 = vld [vmem:[#allocation2 + $0x70] sm:$0xff]
    %v235 = vld [vmem:[#allocation2 + $0x78] sm:$0xff]
    %v236 = vsel %vm200, %v220, 0.0
    %v237 = vsel %vm200, %v221, 0.0
    %v238 = vadd.f32 %v236, %v237
    %v239 = vsel %vm200, %v222, 0.0
    %v240 = vadd.f32 %v238, %v239
    %v241 = vsel %vm200, %v223, 0.0
    %v242 = vadd.f32 %v240, %v241
    %v243 = vsel %vm200, %v224, 0.0
    %v244 = vadd.f32 %v242, %v243
    %v245 = vsel %vm200, %v225, 0.0
    %v246 = vadd.f32 %v244, %v245
    %v247 = vsel %vm200, %v226, 0.0
    %v248 = vadd.f32 %v246, %v247
    %v249 = vsel %vm200, %v227, 0.0
    %v250 = vadd.f32 %v248, %v249
    %v251 = vsel %vm200, %v228, 0.0
    %v252 = vadd.f32 %v250, %v251
    %v253 = vsel %vm200, %v229, 0.0
    %v254 = vadd.f32 %v252, %v253
    %v255 = vsel %vm200, %v230, 0.0
    %v256 = vadd.f32 %v254, %v255
    %v257 = vsel %vm200, %v231, 0.0
    %v258 = vadd.f32 %v256, %v257
    %v259 = vsel %vm200, %v232, 0.0
    %v260 = vadd.f32 %v258, %v259
    %v261 = vsel %vm200, %v233, 0.0
    %v262 = vadd.f32 %v260, %v261
    %v263 = vsel %vm200, %v234, 0.0
    %v264 = vadd.f32 %v262, %v263
    %v265 = vsel %vm200, %v235, 0.0
    %v266 = vadd.f32 %v264, %v265
    %v267 = vrot.slane %v266, 4
    %v268 = vadd.f32 %v266, %v267
    %v269 = vrot.slane %v268, 2
    %v270 = vadd.f32 %v268, %v269
    %v271 = vrot.slane %v270, 1
    %v272 = vadd.f32 %v270, %v271
    %v273 = vmul.f32 %v272, 0.0078125
    %v274 = vsub.f32 %v220, %v273
    %v275 = vsub.f32 %v221, %v273
    %v276 = vsub.f32 %v222, %v273
    %v277 = vsub.f32 %v223, %v273
    %v278 = vsub.f32 %v224, %v273
    %v279 = vsub.f32 %v225, %v273
    %v280 = vsub.f32 %v226, %v273
    %v281 = vsub.f32 %v227, %v273
    %v282 = vsub.f32 %v228, %v273
    %v283 = vsub.f32 %v229, %v273
    %v284 = vsub.f32 %v230, %v273
    %v285 = vsub.f32 %v231, %v273
    %v286 = vsub.f32 %v232, %v273
    %v287 = vsub.f32 %v233, %v273
    %v288 = vsub.f32 %v234, %v273
    %v289 = vsub.f32 %v235, %v273
    %v290 = vmul.f32 %v274, %v274
    %v291 = vmul.f32 %v275, %v275
    %v292 = vmul.f32 %v276, %v276
    %v293 = vmul.f32 %v277, %v277
    %v294 = vmul.f32 %v278, %v278
    %v295 = vmul.f32 %v279, %v279
    %v296 = vmul.f32 %v280, %v280
    %v297 = vmul.f32 %v281, %v281
    %v298 = vmul.f32 %v282, %v282
    %v299 = vmul.f32 %v283, %v283
    %v300 = vmul.f32 %v284, %v284
    %v301 = vmul.f32 %v285, %v285
    %v302 = vmul.f32 %v286, %v286
    %v303 = vmul.f32 %v287, %v287
    %v304 = vmul.f32 %v288, %v288
    %v305 = vmul.f32 %v289, %v289
    %v306 = vsel %vm200, %v290, 0.0
    %v307 = vsel %vm200, %v291, 0.0
    %v308 = vadd.f32 %v306, %v307
    %v309 = vsel %vm200, %v292, 0.0
    %v310 = vadd.f32 %v308, %v309
    %v311 = vsel %vm200, %v293, 0.0
    %v312 = vadd.f32 %v310, %v311
    %v313 = vsel %vm200, %v294, 0.0
    %v314 = vadd.f32 %v312, %v313
    %v315 = vsel %vm200, %v295, 0.0
    %v316 = vadd.f32 %v314, %v315
    %v317 = vsel %vm200, %v296, 0.0
    %v318 = vadd.f32 %v316, %v317
    %v319 = vsel %vm200, %v297, 0.0
    %v320 = vadd.f32 %v318, %v319
    %v321 = vsel %vm200, %v298, 0.0
    %v322 = vadd.f32 %v320, %v321
    %v323 = vsel %vm200, %v299, 0.0
    %v324 = vadd.f32 %v322, %v323
    %v325 = vsel %vm200, %v300, 0.0
    %v326 = vadd.f32 %v324, %v325
    %v327 = vsel %vm200, %v301, 0.0
    %v328 = vadd.f32 %v326, %v327
    %v329 = vsel %vm200, %v302, 0.0
    %v330 = vadd.f32 %v328, %v329
    %v331 = vsel %vm200, %v303, 0.0
    %v332 = vadd.f32 %v330, %v331
    %v333 = vsel %vm200, %v304, 0.0
    %v334 = vadd.f32 %v332, %v333
    %v335 = vsel %vm200, %v305, 0.0
    %v336 = vadd.f32 %v334, %v335
    %v337 = vrot.slane %v336, 4
    %v338 = vadd.f32 %v336, %v337
    %v339 = vrot.slane %v338, 2
    %v340 = vadd.f32 %v338, %v339
    %v341 = vrot.slane %v340, 1
    %v342 = vadd.f32 %v340, %v341
    %v343 = vmul.f32 %v342, 0.0078125
    %v344 = vadd.f32 %v343, 1e-05
    %v345 = vrsqrt.pop %v344
    %v346 = vmul.f32 %v345, %v344
    %v347 = vmul.f32 %v346, %v345
    %v348 = vmul.f32 0.5, %v347
    %v349 = vsub.f32 1.5, %v348
    %v350 = vmul.f32 %v345, %v349
    %vm351 = vweird.f32 %v344
    %vm352 = vweird.f32 %v345
    %vm353 = vmor %vm351, %vm352
    %v354 = vsel %vm353, %v345, %v350
    %v355 = vmul.f32 %v274, %v354
    %v356 = vmul.f32 %v275, %v354
    %v357 = vmul.f32 %v276, %v354
    %v358 = vmul.f32 %v277, %v354
    %v359 = vmul.f32 %v278, %v354
    %v360 = vmul.f32 %v279, %v354
    %v361 = vmul.f32 %v280, %v354
    %v362 = vmul.f32 %v281, %v354
    %v363 = vmul.f32 %v282, %v354
    %v364 = vmul.f32 %v283, %v354
    %v365 = vmul.f32 %v284, %v354
    %v366 = vmul.f32 %v285, %v354
    %v367 = vmul.f32 %v286, %v354
    %v368 = vmul.f32 %v287, %v354
    %v369 = vmul.f32 %v288, %v354
    %v370 = vmul.f32 %v289, %v354
    %v371 = vpack.c.bf16 %v355, %v355
    %v372 = vpack.c.bf16 %v356, %v356
    %v373 = vpack.c.bf16 %v357, %v357
    %v374 = vpack.c.bf16 %v358, %v358
    %v375 = vpack.c.bf16 %v359, %v359
    %v376 = vpack.c.bf16 %v360, %v360
    %v377 = vpack.c.bf16 %v361, %v361
    %v378 = vpack.c.bf16 %v362, %v362
    %v379 = vpack.c.bf16 %v363, %v363
    %v380 = vpack.c.bf16 %v364, %v364
    %v381 = vpack.c.bf16 %v365, %v365
    %v382 = vpack.c.bf16 %v366, %v366
    %v383 = vpack.c.bf16 %v367, %v367
    %v384 = vpack.c.bf16 %v368, %v368
    %v385 = vpack.c.bf16 %v369, %v369
    %v386 = vpack.c.bf16 %v370, %v370
    %vm387 = vcmask 27648
    %388 = vst.msk [vmem:[%s2] sm:$0xf] %vm387, %v371
    %389 = vst.msk [vmem:[%s2 + $0x4] sm:$0xf] %vm387, %v372
    %390 = vst.msk [vmem:[%s2 + $0x8] sm:$0xf] %vm387, %v373
    %391 = vst.msk [vmem:[%s2 + $0xc] sm:$0xf] %vm387, %v374
    %392 = vst.msk [vmem:[%s2 + $0x10] sm:$0xf] %vm387, %v375
    %393 = vst.msk [vmem:[%s2 + $0x14] sm:$0xf] %vm387, %v376
    %394 = vst.msk [vmem:[%s2 + $0x18] sm:$0xf] %vm387, %v377
    %395 = vst.msk [vmem:[%s2 + $0x1c] sm:$0xf] %vm387, %v378
    %396 = vst.msk [vmem:[%s2 + $0x20] sm:$0xf] %vm387, %v379
    %397 = vst.msk [vmem:[%s2 + $0x24] sm:$0xf] %vm387, %v380
    %398 = vst.msk [vmem:[%s2 + $0x28] sm:$0xf] %vm387, %v381
    %399 = vst.msk [vmem:[%s2 + $0x2c] sm:$0xf] %vm387, %v382
    %400 = vst.msk [vmem:[%s2 + $0x30] sm:$0xf] %vm387, %v383
    %401 = vst.msk [vmem:[%s2 + $0x34] sm:$0xf] %vm387, %v384
    %402 = vst.msk [vmem:[%s2 + $0x38] sm:$0xf] %vm387, %v385
    %403 = vst.msk [vmem:[%s2 + $0x3c] sm:$0xf] %vm387, %v386
  $region17: #{_lambda_.87} parent=0 // pred_fallthru
    _
  // Predicated region
  $region18: #{_lambda_.87} parent=0 // pred_check
    _
  $region19: #{_lambda_.87} parent=0 // pred_check_branch
    %405 = sbr.rel (0) target = $region21
  $region20: #{_lambda_.87} parent=0 // pred_region
    _
  $region21: #{_lambda_.87} parent=0 // pred_fallthru
    _
  // Predicated region
  $region22: #{_lambda_.87} parent=0 // pred_check
    _
  $region23: #{_lambda_.87} parent=0 // pred_check_branch
    %407 = sbr.rel (0) target = $region25
  $region24: #{_lambda_.87} parent=0 // pred_region
    _
  $region25: #{_lambda_.87} parent=0 // pred_fallthru
    _

// kernel: _lambda_.98
$region0: #{_lambda_.98}
  #allocation0 [shape = 'u32[]', space=smem, size = 0x4, offset = 0x4, fixed_abs, tag = 'smem constant byte address 0x4 - core index']
  #allocation1 [shape = 'u32[72,128]{1,0:T(1,128)}', space=vmem, size = 0x9000, scoped, tag = 'internal scratch']
  #allocation2 [shape = 'f32[128,16]{1,0:T(8,128)}', space=vmem, size = 0x10000, scoped, tag = 'scratch operand']
  %s0 = inlined_call_operand.vmem [shape: bf16[128,16], index: 0, kind: input, shape index: {}]
  %s1 = inlined_call_operand.vmem [shape: bf16[16,16], index: 1, kind: input, shape index: {}]
  %s2 = inlined_call_operand.vmem [shape: bf16[128,16], index: 2, kind: output, shape index: {}]
  %s3 = sld [smem:[#allocation0]]
  $region26: #{_lambda_.98} parent=0
    _
  %s5 = ssub.s32 1, %s3
  %s6 = scalar_select 0, %s5, %s3
  // Predicated region
  $region2: #{_lambda_.98} parent=0 // pred_check
    _
  $region3: #{_lambda_.98} parent=0 // pred_check_branch
    %8 = sbr.rel (0) target = $region5
  $region4: #{_lambda_.98} parent=0 // pred_region
    _
  $region5: #{_lambda_.98} parent=0 // pred_fallthru
    _
  // Predicated region
  $region6: #{_lambda_.98} parent=0 // pred_check
    _
  $region7: #{_lambda_.98} parent=0 // pred_check_branch
    %10 = sbr.rel (0) target = $region9
  $region8: #{_lambda_.98} parent=0 // pred_region
    _
  $region9: #{_lambda_.98} parent=0 // pred_fallthru
    _
  %p12 = scmp.eq.s32.totalorder 0, 0
  // Predicated region
  $region10: #{_lambda_.98} parent=0 // pred_check
    %p13 = pneg %p12
  $region11: #{_lambda_.98} parent=0 // pred_check_branch
    %15 = sbr.rel (%p13) target = $region13
  $region12: #{_lambda_.98} parent=0 // pred_region
    %vm16 = vcmask 130048
    %17 = vst.msk [vmem:[#allocation2] sm:$0xff] %vm16, 0.0
    %18 = vst.msk [vmem:[#allocation2 + $0x8] sm:$0xff] %vm16, 0.0
    %19 = vst.msk [vmem:[#allocation2 + $0x10] sm:$0xff] %vm16, 0.0
    %20 = vst.msk [vmem:[#allocation2 + $0x18] sm:$0xff] %vm16, 0.0
    %21 = vst.msk [vmem:[#allocation2 + $0x20] sm:$0xff] %vm16, 0.0
    %22 = vst.msk [vmem:[#allocation2 + $0x28] sm:$0xff] %vm16, 0.0
    %23 = vst.msk [vmem:[#allocation2 + $0x30] sm:$0xff] %vm16, 0.0
    %24 = vst.msk [vmem:[#allocation2 + $0x38] sm:$0xff] %vm16, 0.0
    %25 = vst.msk [vmem:[#allocation2 + $0x40] sm:$0xff] %vm16, 0.0
    %26 = vst.msk [vmem:[#allocation2 + $0x48] sm:$0xff] %vm16, 0.0
    %27 = vst.msk [vmem:[#allocation2 + $0x50] sm:$0xff] %vm16, 0.0
    %28 = vst.msk [vmem:[#allocation2 + $0x58] sm:$0xff] %vm16, 0.0
    %29 = vst.msk [vmem:[#allocation2 + $0x60] sm:$0xff] %vm16, 0.0
    %30 = vst.msk [vmem:[#allocation2 + $0x68] sm:$0xff] %vm16, 0.0
    %31 = vst.msk [vmem:[#allocation2 + $0x70] sm:$0xff] %vm16, 0.0
    %32 = vst.msk [vmem:[#allocation2 + $0x78] sm:$0xff] %vm16, 0.0
  $region13: #{_lambda_.98} parent=0 // pred_fallthru
    _
  %v33 = vld [vmem:[%s0] sm:$0xf]
  %v34 = vld [vmem:[%s0 + $0x4] sm:$0xf]
  %v35 = vld [vmem:[%s0 + $0x8] sm:$0xf]
  %v36 = vld [vmem:[%s0 + $0xc] sm:$0xf]
  %v37 = vld [vmem:[%s0 + $0x10] sm:$0xf]
  %v38 = vld [vmem:[%s0 + $0x14] sm:$0xf]
  %v39 = vld [vmem:[%s0 + $0x18] sm:$0xf]
  %v40 = vld [vmem:[%s0 + $0x1c] sm:$0xf]
  %v41 = vld [vmem:[%s0 + $0x20] sm:$0xf]
  %v42 = vld [vmem:[%s0 + $0x24] sm:$0xf]
  %v43 = vld [vmem:[%s0 + $0x28] sm:$0xf]
  %v44 = vld [vmem:[%s0 + $0x2c] sm:$0xf]
  %v45 = vld [vmem:[%s0 + $0x30] sm:$0xf]
  %v46 = vld [vmem:[%s0 + $0x34] sm:$0xf]
  %v47 = vld [vmem:[%s0 + $0x38] sm:$0xf]
  %v48 = vld [vmem:[%s0 + $0x3c] sm:$0xf]
  %v49 = vunpack.c.l.bf16 %v33
  %v50 = vunpack.c.l.bf16 %v34
  %v51 = vunpack.c.l.bf16 %v35
  %v52 = vunpack.c.l.bf16 %v36
  %v53 = vunpack.c.l.bf16 %v37
  %v54 = vunpack.c.l.bf16 %v38
  %v55 = vunpack.c.l.bf16 %v39
  %v56 = vunpack.c.l.bf16 %v40
  %v57 = vunpack.c.l.bf16 %v41
  %v58 = vunpack.c.l.bf16 %v42
  %v59 = vunpack.c.l.bf16 %v43
  %v60 = vunpack.c.l.bf16 %v44
  %v61 = vunpack.c.l.bf16 %v45
  %v62 = vunpack.c.l.bf16 %v46
  %v63 = vunpack.c.l.bf16 %v47
  %v64 = vunpack.c.l.bf16 %v48
  %v65 = vmax.f32 %v49, 0.0
  %v66 = vmax.f32 %v50, 0.0
  %v67 = vmax.f32 %v51, 0.0
  %v68 = vmax.f32 %v52, 0.0
  %v69 = vmax.f32 %v53, 0.0
  %v70 = vmax.f32 %v54, 0.0
  %v71 = vmax.f32 %v55, 0.0
  %v72 = vmax.f32 %v56, 0.0
  %v73 = vmax.f32 %v57, 0.0
  %v74 = vmax.f32 %v58, 0.0
  %v75 = vmax.f32 %v59, 0.0
  %v76 = vmax.f32 %v60, 0.0
  %v77 = vmax.f32 %v61, 0.0
  %v78 = vmax.f32 %v62, 0.0
  %v79 = vmax.f32 %v63, 0.0
  %v80 = vmax.f32 %v64, 0.0
  %v81 = vpack.c.bf16 %v66, %v65
  %v82 = vpack.c.bf16 %v68, %v67
  %v83 = vpack.c.bf16 %v70, %v69
  %v84 = vpack.c.bf16 %v72, %v71
  %v85 = vpack.c.bf16 %v74, %v73
  %v86 = vpack.c.bf16 %v76, %v75
  %v87 = vpack.c.bf16 %v78, %v77
  %v88 = vpack.c.bf16 %v80, %v79
  %v89 = vld [vmem:[#allocation2] sm:$0xff]
  %v90 = vld [vmem:[#allocation2 + $0x8] sm:$0xff]
  %v91 = vld [vmem:[#allocation2 + $0x10] sm:$0xff]
  %v92 = vld [vmem:[#allocation2 + $0x18] sm:$0xff]
  %v93 = vld [vmem:[#allocation2 + $0x20] sm:$0xff]
  %v94 = vld [vmem:[#allocation2 + $0x28] sm:$0xff]
  %v95 = vld [vmem:[#allocation2 + $0x30] sm:$0xff]
  %v96 = vld [vmem:[#allocation2 + $0x38] sm:$0xff]
  %v97 = vld [vmem:[#allocation2 + $0x40] sm:$0xff]
  %v98 = vld [vmem:[#allocation2 + $0x48] sm:$0xff]
  %v99 = vld [vmem:[#allocation2 + $0x50] sm:$0xff]
  %v100 = vld [vmem:[#allocation2 + $0x58] sm:$0xff]
  %v101 = vld [vmem:[#allocation2 + $0x60] sm:$0xff]
  %v102 = vld [vmem:[#allocation2 + $0x68] sm:$0xff]
  %v103 = vld [vmem:[#allocation2 + $0x70] sm:$0xff]
  %v104 = vld [vmem:[#allocation2 + $0x78] sm:$0xff]
  %v105 = vld [vmem:[%s1] sm:$0xf]
  %v106 = vld [vmem:[%s1 + $0x4] sm:$0xf]
  %v109 = vunpack.c.l.b16 %v105
  %v110 = vunpack.c.l.b16 %v106
  %v111 = vpack.c.b16 %v110, %v109
  %vm113 = vcmask 130048
  %v115 = vsel %vm113, %v81, 0
  %v118 = vsel %vm113, %v82, 0
  %v121 = vsel %vm113, %v83, 0
  %v124 = vsel %vm113, %v84, 0
  %v127 = vsel %vm113, %v85, 0
  %v130 = vsel %vm113, %v86, 0
  %v133 = vsel %vm113, %v87, 0
  %v136 = vsel %vm113, %v88, 0
  %138 = vmatpush.bf16.msra.mxu0 0
  %139 = vmatpush.bf16.msra.mxu0 0
  %140 = vmatpush.bf16.msra.mxu0 0
  %141 = vmatpush.bf16.msra.mxu0 0
  %142 = vmatpush.bf16.msra.mxu0 0
  %143 = vmatpush.bf16.msra.mxu0 0
  %144 = vmatpush.bf16.msra.mxu0 0
  %145 = vmatpush.bf16.msra.mxu0 %v111
  %146 = vmatmul.bf16.gmra.mxu0 %v115
  %v147 = vpop.f32.mrf.mxu0
  %v148 = vadd.f32 0.0, %v147
  %v149 = vpop.f32.mrf.mxu0
  %v150 = vadd.f32 0.0, %v149
  %151 = vmatmul.bf16.gmra.mxu0 %v118
  %v152 = vpop.f32.mrf.mxu0
  %v153 = vadd.f32 0.0, %v152
  %v154 = vpop.f32.mrf.mxu0
  %v155 = vadd.f32 0.0, %v154
  %156 = vmatmul.bf16.gmra.mxu0 %v121
  %v157 = vpop.f32.mrf.mxu0
  %v158 = vadd.f32 0.0, %v157
  %v159 = vpop.f32.mrf.mxu0
  %v160 = vadd.f32 0.0, %v159
  %161 = vmatmul.bf16.gmra.mxu0 %v124
  %v162 = vpop.f32.mrf.mxu0
  %v163 = vadd.f32 0.0, %v162
  %v164 = vpop.f32.mrf.mxu0
  %v165 = vadd.f32 0.0, %v164
  %166 = vmatmul.bf16.gmra.mxu0 %v127
  %v167 = vpop.f32.mrf.mxu0
  %v168 = vadd.f32 0.0, %v167
  %v169 = vpop.f32.mrf.mxu0
  %v170 = vadd.f32 0.0, %v169
  %171 = vmatmul.bf16.gmra.mxu0 %v130
  %v172 = vpop.f32.mrf.mxu0
  %v173 = vadd.f32 0.0, %v172
  %v174 = vpop.f32.mrf.mxu0
  %v175 = vadd.f32 0.0, %v174
  %176 = vmatmul.bf16.gmra.mxu0 %v133
  %v177 = vpop.f32.mrf.mxu0
  %v178 = vadd.f32 0.0, %v177
  %v179 = vpop.f32.mrf.mxu0
  %v180 = vadd.f32 0.0, %v179
  %181 = vmatmul.bf16.gmra.mxu0 %v136
  %v182 = vpop.f32.mrf.mxu0
  %v183 = vadd.f32 0.0, %v182
  %v184 = vpop.f32.mrf.mxu0
  %v185 = vadd.f32 0.0, %v184
  %186 = vdwg.mxu0
  %v187 = vadd.f32 %v89, %v148
  %v188 = vadd.f32 %v90, %v150
  %v189 = vadd.f32 %v91, %v153
  %v190 = vadd.f32 %v92, %v155
  %v191 = vadd.f32 %v93, %v158
  %v192 = vadd.f32 %v94, %v160
  %v193 = vadd.f32 %v95, %v163
  %v194 = vadd.f32 %v96, %v165
  %v195 = vadd.f32 %v97, %v168
  %v196 = vadd.f32 %v98, %v170
  %v197 = vadd.f32 %v99, %v173
  %v198 = vadd.f32 %v100, %v175
  %v199 = vadd.f32 %v101, %v178
  %v200 = vadd.f32 %v102, %v180
  %v201 = vadd.f32 %v103, %v183
  %v202 = vadd.f32 %v104, %v185
  %203 = vst.msk [vmem:[#allocation2] sm:$0xff] %vm113, %v187
  %204 = vst.msk [vmem:[#allocation2 + $0x8] sm:$0xff] %vm113, %v188
  %205 = vst.msk [vmem:[#allocation2 + $0x10] sm:$0xff] %vm113, %v189
  %206 = vst.msk [vmem:[#allocation2 + $0x18] sm:$0xff] %vm113, %v190
  %207 = vst.msk [vmem:[#allocation2 + $0x20] sm:$0xff] %vm113, %v191
  %208 = vst.msk [vmem:[#allocation2 + $0x28] sm:$0xff] %vm113, %v192
  %209 = vst.msk [vmem:[#allocation2 + $0x30] sm:$0xff] %vm113, %v193
  %210 = vst.msk [vmem:[#allocation2 + $0x38] sm:$0xff] %vm113, %v194
  %211 = vst.msk [vmem:[#allocation2 + $0x40] sm:$0xff] %vm113, %v195
  %212 = vst.msk [vmem:[#allocation2 + $0x48] sm:$0xff] %vm113, %v196
  %213 = vst.msk [vmem:[#allocation2 + $0x50] sm:$0xff] %vm113, %v197
  %214 = vst.msk [vmem:[#allocation2 + $0x58] sm:$0xff] %vm113, %v198
  %215 = vst.msk [vmem:[#allocation2 + $0x60] sm:$0xff] %vm113, %v199
  %216 = vst.msk [vmem:[#allocation2 + $0x68] sm:$0xff] %vm113, %v200
  %217 = vst.msk [vmem:[#allocation2 + $0x70] sm:$0xff] %vm113, %v201
  %218 = vst.msk [vmem:[#allocation2 + $0x78] sm:$0xff] %vm113, %v202
  // Predicated region
  $region14: #{_lambda_.98} parent=0 // pred_check
    %p219 = pneg %p12
  $region15: #{_lambda_.98} parent=0 // pred_check_branch
    %221 = sbr.rel (%p219) target = $region17
  $region16: #{_lambda_.98} parent=0 // pred_region
    %v222 = vld [vmem:[#allocation2] sm:$0xff]
    %v223 = vld [vmem:[#allocation2 + $0x8] sm:$0xff]
    %v224 = vld [vmem:[#allocation2 + $0x10] sm:$0xff]
    %v225 = vld [vmem:[#allocation2 + $0x18] sm:$0xff]
    %v226 = vld [vmem:[#allocation2 + $0x20] sm:$0xff]
    %v227 = vld [vmem:[#allocation2 + $0x28] sm:$0xff]
    %v228 = vld [vmem:[#allocation2 + $0x30] sm:$0xff]
    %v229 = vld [vmem:[#allocation2 + $0x38] sm:$0xff]
    %v230 = vld [vmem:[#allocation2 + $0x40] sm:$0xff]
    %v231 = vld [vmem:[#allocation2 + $0x48] sm:$0xff]
    %v232 = vld [vmem:[#allocation2 + $0x50] sm:$0xff]
    %v233 = vld [vmem:[#allocation2 + $0x58] sm:$0xff]
    %v234 = vld [vmem:[#allocation2 + $0x60] sm:$0xff]
    %v235 = vld [vmem:[#allocation2 + $0x68] sm:$0xff]
    %v236 = vld [vmem:[#allocation2 + $0x70] sm:$0xff]
    %v237 = vld [vmem:[#allocation2 + $0x78] sm:$0xff]
    %v238 = vsel %vm113, %v222, 0.0
    %v239 = vsel %vm113, %v223, 0.0
    %v240 = vadd.f32 %v238, %v239
    %v241 = vsel %vm113, %v224, 0.0
    %v242 = vadd.f32 %v240, %v241
    %v243 = vsel %vm113, %v225, 0.0
    %v244 = vadd.f32 %v242, %v243
    %v245 = vsel %vm113, %v226, 0.0
    %v246 = vadd.f32 %v244, %v245
    %v247 = vsel %vm113, %v227, 0.0
    %v248 = vadd.f32 %v246, %v247
    %v249 = vsel %vm113, %v228, 0.0
    %v250 = vadd.f32 %v248, %v249
    %v251 = vsel %vm113, %v229, 0.0
    %v252 = vadd.f32 %v250, %v251
    %v253 = vsel %vm113, %v230, 0.0
    %v254 = vadd.f32 %v252, %v253
    %v255 = vsel %vm113, %v231, 0.0
    %v256 = vadd.f32 %v254, %v255
    %v257 = vsel %vm113, %v232, 0.0
    %v258 = vadd.f32 %v256, %v257
    %v259 = vsel %vm113, %v233, 0.0
    %v260 = vadd.f32 %v258, %v259
    %v261 = vsel %vm113, %v234, 0.0
    %v262 = vadd.f32 %v260, %v261
    %v263 = vsel %vm113, %v235, 0.0
    %v264 = vadd.f32 %v262, %v263
    %v265 = vsel %vm113, %v236, 0.0
    %v266 = vadd.f32 %v264, %v265
    %v267 = vsel %vm113, %v237, 0.0
    %v268 = vadd.f32 %v266, %v267
    %v269 = vrot.slane %v268, 4
    %v270 = vadd.f32 %v268, %v269
    %v271 = vrot.slane %v270, 2
    %v272 = vadd.f32 %v270, %v271
    %v273 = vrot.slane %v272, 1
    %v274 = vadd.f32 %v272, %v273
    %v275 = vmul.f32 %v274, 0.0078125
    %v276 = vsub.f32 %v222, %v275
    %v277 = vsub.f32 %v223, %v275
    %v278 = vsub.f32 %v224, %v275
    %v279 = vsub.f32 %v225, %v275
    %v280 = vsub.f32 %v226, %v275
    %v281 = vsub.f32 %v227, %v275
    %v282 = vsub.f32 %v228, %v275
    %v283 = vsub.f32 %v229, %v275
    %v284 = vsub.f32 %v230, %v275
    %v285 = vsub.f32 %v231, %v275
    %v286 = vsub.f32 %v232, %v275
    %v287 = vsub.f32 %v233, %v275
    %v288 = vsub.f32 %v234, %v275
    %v289 = vsub.f32 %v235, %v275
    %v290 = vsub.f32 %v236, %v275
    %v291 = vsub.f32 %v237, %v275
    %v292 = vmul.f32 %v276, %v276
    %v293 = vmul.f32 %v277, %v277
    %v294 = vmul.f32 %v278, %v278
    %v295 = vmul.f32 %v279, %v279
    %v296 = vmul.f32 %v280, %v280
    %v297 = vmul.f32 %v281, %v281
    %v298 = vmul.f32 %v282, %v282
    %v299 = vmul.f32 %v283, %v283
    %v300 = vmul.f32 %v284, %v284
    %v301 = vmul.f32 %v285, %v285
    %v302 = vmul.f32 %v286, %v286
    %v303 = vmul.f32 %v287, %v287
    %v304 = vmul.f32 %v288, %v288
    %v305 = vmul.f32 %v289, %v289
    %v306 = vmul.f32 %v290, %v290
    %v307 = vmul.f32 %v291, %v291
    %v308 = vsel %vm113, %v292, 0.0
    %v309 = vsel %vm113, %v293, 0.0
    %v310 = vadd.f32 %v308, %v309
    %v311 = vsel %vm113, %v294, 0.0
    %v312 = vadd.f32 %v310, %v311
    %v313 = vsel %vm113, %v295, 0.0
    %v314 = vadd.f32 %v312, %v313
    %v315 = vsel %vm113, %v296, 0.0
    %v316 = vadd.f32 %v314, %v315
    %v317 = vsel %vm113, %v297, 0.0
    %v318 = vadd.f32 %v316, %v317
    %v319 = vsel %vm113, %v298, 0.0
    %v320 = vadd.f32 %v318, %v319
    %v321 = vsel %vm113, %v299, 0.0
    %v322 = vadd.f32 %v320, %v321
    %v323 = vsel %vm113, %v300, 0.0
    %v324 = vadd.f32 %v322, %v323
    %v325 = vsel %vm113, %v301, 0.0
    %v326 = vadd.f32 %v324, %v325
    %v327 = vsel %vm113, %v302, 0.0
    %v328 = vadd.f32 %v326, %v327
    %v329 = vsel %vm113, %v303, 0.0
    %v330 = vadd.f32 %v328, %v329
    %v331 = vsel %vm113, %v304, 0.0
    %v332 = vadd.f32 %v330, %v331
    %v333 = vsel %vm113, %v305, 0.0
    %v334 = vadd.f32 %v332, %v333
    %v335 = vsel %vm113, %v306, 0.0
    %v336 = vadd.f32 %v334, %v335
    %v337 = vsel %vm113, %v307, 0.0
    %v338 = vadd.f32 %v336, %v337
    %v339 = vrot.slane %v338, 4
    %v340 = vadd.f32 %v338, %v339
    %v341 = vrot.slane %v340, 2
    %v342 = vadd.f32 %v340, %v341
    %v343 = vrot.slane %v342, 1
    %v344 = vadd.f32 %v342, %v343
    %v345 = vmul.f32 %v344, 0.0078125
    %v346 = vadd.f32 %v345, 1e-05
    %v347 = vrsqrt.pop %v346
    %v348 = vmul.f32 %v347, %v346
    %v349 = vmul.f32 %v348, %v347
    %v350 = vmul.f32 0.5, %v349
    %v351 = vsub.f32 1.5, %v350
    %v352 = vmul.f32 %v347, %v351
    %vm353 = vweird.f32 %v346
    %vm354 = vweird.f32 %v347
    %vm355 = vmor %vm353, %vm354
    %v356 = vsel %vm355, %v347, %v352
    %v357 = vmul.f32 %v276, %v356
    %v358 = vmul.f32 %v277, %v356
    %v359 = vmul.f32 %v278, %v356
    %v360 = vmul.f32 %v279, %v356
    %v361 = vmul.f32 %v280, %v356
    %v362 = vmul.f32 %v281, %v356
    %v363 = vmul.f32 %v282, %v356
    %v364 = vmul.f32 %v283, %v356
    %v365 = vmul.f32 %v284, %v356
    %v366 = vmul.f32 %v285, %v356
    %v367 = vmul.f32 %v286, %v356
    %v368 = vmul.f32 %v287, %v356
    %v369 = vmul.f32 %v288, %v356
    %v370 = vmul.f32 %v289, %v356
    %v371 = vmul.f32 %v290, %v356
    %v372 = vmul.f32 %v291, %v356
    %v373 = vpack.c.bf16 %v357, %v357
    %v374 = vpack.c.bf16 %v358, %v358
    %v375 = vpack.c.bf16 %v359, %v359
    %v376 = vpack.c.bf16 %v360, %v360
    %v377 = vpack.c.bf16 %v361, %v361
    %v378 = vpack.c.bf16 %v362, %v362
    %v379 = vpack.c.bf16 %v363, %v363
    %v380 = vpack.c.bf16 %v364, %v364
    %v381 = vpack.c.bf16 %v365, %v365
    %v382 = vpack.c.bf16 %v366, %v366
    %v383 = vpack.c.bf16 %v367, %v367
    %v384 = vpack.c.bf16 %v368, %v368
    %v385 = vpack.c.bf16 %v369, %v369
    %v386 = vpack.c.bf16 %v370, %v370
    %v387 = vpack.c.bf16 %v371, %v371
    %v388 = vpack.c.bf16 %v372, %v372
    %vm389 = vcmask 125952
    %390 = vst.msk [vmem:[%s2] sm:$0xf] %vm389, %v373
    %391 = vst.msk [vmem:[%s2 + $0x4] sm:$0xf] %vm389, %v374
    %392 = vst.msk [vmem:[%s2 + $0x8] sm:$0xf] %vm389, %v375
    %393 = vst.msk [vmem:[%s2 + $0xc] sm:$0xf] %vm389, %v376
    %394 = vst.msk [vmem:[%s2 + $0x10] sm:$0xf] %vm389, %v377
    %395 = vst.msk [vmem:[%s2 + $0x14] sm:$0xf] %vm389, %v378
    %396 = vst.msk [vmem:[%s2 + $0x18] sm:$0xf] %vm389, %v379
    %397 = vst.msk [vmem:[%s2 + $0x1c] sm:$0xf] %vm389, %v380
    %398 = vst.msk [vmem:[%s2 + $0x20] sm:$0xf] %vm389, %v381
    %399 = vst.msk [vmem:[%s2 + $0x24] sm:$0xf] %vm389, %v382
    %400 = vst.msk [vmem:[%s2 + $0x28] sm:$0xf] %vm389, %v383
    %401 = vst.msk [vmem:[%s2 + $0x2c] sm:$0xf] %vm389, %v384
    %402 = vst.msk [vmem:[%s2 + $0x30] sm:$0xf] %vm389, %v385
    %403 = vst.msk [vmem:[%s2 + $0x34] sm:$0xf] %vm389, %v386
    %404 = vst.msk [vmem:[%s2 + $0x38] sm:$0xf] %vm389, %v387
    %405 = vst.msk [vmem:[%s2 + $0x3c] sm:$0xf] %vm389, %v388
  $region17: #{_lambda_.98} parent=0 // pred_fallthru
    _
  // Predicated region
  $region18: #{_lambda_.98} parent=0 // pred_check
    _
  $region19: #{_lambda_.98} parent=0 // pred_check_branch
    %407 = sbr.rel (0) target = $region21
  $region20: #{_lambda_.98} parent=0 // pred_region
    _
  $region21: #{_lambda_.98} parent=0 // pred_fallthru
    _
  // Predicated region
  $region22: #{_lambda_.98} parent=0 // pred_check
    _
  $region23: #{_lambda_.98} parent=0 // pred_check_branch
    %409 = sbr.rel (0) target = $region25
  $region24: #{_lambda_.98} parent=0 // pred_region
    _
  $region25: #{_lambda_.98} parent=0 // pred_fallthru
    _

// kernel: _lambda_.117
$region0: #{_lambda_.117}
  #allocation0 [shape = 'u32[]', space=smem, size = 0x4, offset = 0x4, fixed_abs, tag = 'smem constant byte address 0x4 - core index']
  #allocation1 [shape = 'u32[72,128]{1,0:T(1,128)}', space=vmem, size = 0x9000, scoped, tag = 'internal scratch']
  %s0 = inlined_call_operand.vmem [shape: bf16[2,16,32], index: 0, kind: input, shape index: {}]
  %s1 = inlined_call_operand.vmem [shape: f32[32,10], index: 1, kind: input, shape index: {}]
  %s2 = inlined_call_operand.vmem [shape: f32[1,10], index: 2, kind: input, shape index: {}]
  %s3 = inlined_call_operand.hbm [shape: f32[2,10], index: 3, kind: output, shape index: {}]
  %s4 = sld [smem:[#allocation0]]
  $region22: #{_lambda_.117} parent=0
    _
  %s6 = ssub.s32 1, %s4
  %s7 = scalar_select 0, %s6, %s4
  $region1: #{_lambda_.117} parent=0
    #allocation2 [shape = 'u8[1024]{0}', space=vmem, size = 0x400, scoped, tag = 'output window, operand 0, single buffered']
    #allocation3 [shape = 's32[1]{0}', space=sflag, size = 0x4, scoped, tag = 'scoped memory for _lambda_.117']
    %8 = vsyncpa [#allocation3], 0
    // Predicated region
    $region2: #{_lambda_.117} parent=1 // pred_check
      _
    $region3: #{_lambda_.117} parent=1 // pred_check_branch
      %10 = sbr.rel (0) target = $region5
    $region4: #{_lambda_.117} parent=1 // pred_region
      _
    $region5: #{_lambda_.117} parent=1 // pred_fallthru
      _
    // Predicated region
    $region6: #{_lambda_.117} parent=1 // pred_check
      _
    $region7: #{_lambda_.117} parent=1 // pred_check_branch
      %12 = sbr.rel (0) target = $region9
    $region8: #{_lambda_.117} parent=1 // pred_region
      _
    $region9: #{_lambda_.117} parent=1 // pred_fallthru
      _
    // Predicated region
    $region10: #{_lambda_.117} parent=1 // pred_check
      _
    $region11: #{_lambda_.117} parent=1 // pred_check_branch
      %14 = sbr.rel (0) target = $region13
    $region12: #{_lambda_.117} parent=1 // pred_region
      _
    $region13: #{_lambda_.117} parent=1 // pred_fallthru
      _
    %v15 = vld [vmem:[%s0] sm:$0xf]
    %v16 = vld [vmem:[%s0 + $0x4] sm:$0xf]
    %v17 = vld [vmem:[%s0 + $0x8] sm:$0xf]
    %v18 = vld [vmem:[%s0 + $0xc] sm:$0xf]
    %v19 = vunpack.c.l.bf16 %v15
    %v20 = vunpack.c.l.bf16 %v16
    %v21 = vunpack.c.l.bf16 %v17
    %v22 = vunpack.c.l.bf16 %v18
    %vm23 = vcmask 261120
    %v24 = vsel %vm23, %v19, 0.0
    %v25 = vsel %vm23, %v20, 0.0
    %v26 = vadd.f32 %v24, %v25
    %v27 = vrot.slane %v26, 4
    %v28 = vadd.f32 %v26, %v27
    %v29 = vrot.slane %v28, 2
    %v30 = vadd.f32 %v28, %v29
    %v31 = vrot.slane %v30, 1
    %v32 = vadd.f32 %v30, %v31
    %v33 = vsel %vm23, %v21, 0.0
    %v34 = vsel %vm23, %v22, 0.0
    %v35 = vadd.f32 %v33, %v34
    %v36 = vrot.slane %v35, 4
    %v37 = vadd.f32 %v35, %v36
    %v38 = vrot.slane %v37, 2
    %v39 = vadd.f32 %v37, %v38
    %v40 = vrot.slane %v39, 1
    %v41 = vadd.f32 %v39, %v40
    %v42 = vmul.f32 %v32, 0.0625
    %v43 = vmul.f32 %v41, 0.0625
    %v44 = vld [vmem:[%s1] sm:$0xff]
    %v45 = vld [vmem:[%s1 + $0x8] sm:$0xff]
    %v46 = vld [vmem:[%s1 + $0x10] sm:$0xff]
    %v47 = vld [vmem:[%s1 + $0x18] sm:$0xff]
    %v48 = vld [vmem:[%s2] sm:$0x1]
    %v50 = vperm.slane %v48, 0
    %vm54 = vcmask 1041409
    %v55 = vsel %vm54, %v43, %v42
    %v56 = vsel %vm23, %v55, 0
    %58 = vmatpush.msra.mxu0 0.0
    %59 = vmatpush.msra.mxu0 0.0
    %60 = vmatpush.msra.mxu0 0.0
    %61 = vmatpush.msra.mxu0 0.0
    %62 = vmatpush.msra.mxu0 0.0
    %63 = vmatpush.msra.mxu0 0.0
    %64 = vmatpush.msra.mxu0 0.0
    %65 = vmatpush.msra.mxu0 0.0
    %66 = vmatpush.msra.mxu0 0.0
    %67 = vmatpush.msra.mxu0 0.0
    %68 = vmatpush.msra.mxu0 0.0
    %69 = vmatpush.msra.mxu0 0.0
    %70 = vmatpush.msra.mxu0 %v47
    %71 = vmatpush.msra.mxu0 %v46
    %72 = vmatpush.msra.mxu0 %v45
    %73 = vmatpush.msra.mxu0 %v44
    %74 = vmatmul.f32.gmra.mxu0 %v56
    %v75 = vpop.f32.mrf.mxu0
    %v76 = vadd.f32 %v50, %v75
    %77 = vdwg.mxu0
    %vm78 = vcmask 74752
    %79 = vst.msk [vmem:[#allocation2] sm:$0x3] %vm78, %v76
    // Predicated region
    $region14: #{_lambda_.117} parent=1 // pred_check
      _
    $region15: #{_lambda_.117} parent=1 // pred_check_branch
      %81 = sbr.rel (0) target = $region17
    $region16: #{_lambda_.117} parent=1 // pred_region
      %83 = vsyncadd [#allocation3], 0
      %s85 = sshll.u32 [#allocation2], 4
      %s86 = int_to_ptr.vmem [resolvable:$true] %s85
      %s87 = sshll.u32 %s3, 4
      %s88 = int_to_ptr.hbm [resolvable:$true] %s87
      %90 = dma.vmem_to_hbm [thread:$0]  %s86, 32, %s88, [#allocation3]
    $region17: #{_lambda_.117} parent=1 // pred_fallthru
      _
    // Predicated region
    $region18: #{_lambda_.117} parent=1 // pred_check
      _
    $region19: #{_lambda_.117} parent=1 // pred_check_branch
      %92 = sbr.rel (0) target = $region21
    $region20: #{_lambda_.117} parent=1 // pred_region
      %94 = dma.done [#allocation3], 32
    $region21: #{_lambda_.117} parent=1 // pred_fallthru
      _
    %95 = vsyncpa [#allocation3], 1

</llo_original>
